<compile_context>
chip_gen: v7x
topology: tpu7x:2x2x1
jax: 0.10.0
libtpu: 0.0.40
codegen_flags: <defaults>
</compile_context>

<pallas_src>
import jax
import jax.numpy as jnp
import numpy as np
from jax.experimental import pallas as pl
from jax.experimental.pallas import tpu as pltpu

D_MODEL = 80
N_HEADS = 2
HEAD_DIM = D_MODEL // N_HEADS          # 40 (real head dim)
HEAD_PAD = 128                         # lane-aligned padded head dim
D_FF = 256
N_SPKS = 6000
N_SPKS_PAD = 6144                      # 48 * 128 -> lane-dense logits store
D_IN = 40
EPS = 1e-5                             # nn.LayerNorm default eps


def _layer_norm(z, g, b):
    mu = jnp.mean(z, axis=-1, keepdims=True)
    var = jnp.mean((z - mu) ** 2, axis=-1, keepdims=True)
    return (z - mu) * jax.lax.rsqrt(var + EPS) * g + b


def classifier_kernel(
    mels_ref,                              # (TB, L, 40)
    w_pre_ref, b_pre_ref,                  # (40, D), (1, D)
    g1_ref, be1_ref,                       # (1, D), (1, D)
    w_qkv_ref, b_qkv_ref,                  # (D, 3*H*HP), (1, 3*H*HP)   fused QKV
    w_o_ref, b_o_ref,                      # (H, HP, D), (1, D)
    g2_ref, be2_ref,                       # (1, D), (1, D)
    w_ff1_ref, b_ff1_ref,                  # (D, F), (1, F)
    w_ff2_ref, b_ff2_ref,                  # (F, D), (1, D)
    w_p1_ref, b_p1_ref,                    # (D, D), (1, D)
    w_p2_ref, b_p2_ref,                    # (D, S_pad) bf16, (1, S_pad) f32
    out_ref,                               # (TB, S_pad)
):
    f32 = jnp.float32
    tb, seq, _ = mels_ref.shape
    tokens = tb * seq                      # TB*L (L=8 -> clean sublane reshapes)

    # ---- prenet: Linear(40 -> d_model), all tokens at once ----
    x = mels_ref[...].reshape(tokens, D_IN)
    h = jnp.dot(x, w_pre_ref[...], preferred_element_type=f32) + b_pre_ref[...]

    # ---- TransformerEncoderLayer, norm_first=True (dropout == identity) ----
    # self-attention sub-block: fused QKV projection for all heads
    xn = _layer_norm(h, g1_ref[...], be1_ref[...])
    qkv = jnp.dot(xn, w_qkv_ref[...], preferred_element_type=f32) + b_qkv_ref[...]
    qkv = qkv.reshape(tb, seq, 3 * N_HEADS * HEAD_PAD)

    scale = 1.0 / float(np.sqrt(HEAD_DIM))          # real head dim, not padded
    attn = jnp.zeros((tokens, D_MODEL), f32)
    for hd in range(N_HEADS):                       # static unroll (2 heads)
        q = qkv[:, :, hd * HEAD_PAD:(hd + 1) * HEAD_PAD]                    # (TB,L,HP)
        k = qkv[:, :, (N_HEADS + hd) * HEAD_PAD:(N_HEADS + hd + 1) * HEAD_PAD]
        v = qkv[:, :, (2 * N_HEADS + hd) * HEAD_PAD:(2 * N_HEADS + hd + 1) * HEAD_PAD]
        s = jnp.einsum("bld,bmd->blm", q, k, preferred_element_type=f32) * scale
        s = s - jnp.max(s, axis=-1, keepdims=True)
        p = jnp.exp(s)
        p = p * pl.reciprocal(jnp.sum(p, axis=-1, keepdims=True), approx=True)
        ctx = jnp.einsum("blm,bmd->bld", p, v, preferred_element_type=f32)  # (TB,L,HP)
        attn = attn + jnp.dot(ctx.reshape(tokens, HEAD_PAD), w_o_ref[hd],
                              preferred_element_type=f32)
    attn = attn + b_o_ref[...]
    h = h + attn                                                            # residual

    # feed-forward sub-block
    xn2 = _layer_norm(h, g2_ref[...], be2_ref[...])
    f = jnp.dot(xn2, w_ff1_ref[...], preferred_element_type=f32) + b_ff1_ref[...]
    f = jnp.maximum(f, 0.0)
    f = jnp.dot(f, w_ff2_ref[...], preferred_element_type=f32) + b_ff2_ref[...]
    h = h + f                                                               # residual

    # ---- mean pool over sequence length (sum * 1/L) ----
    stats = jnp.sum(h.reshape(tb, seq, D_MODEL), axis=1) * (1.0 / seq)      # (TB, D)

    # ---- pred_layer: Linear -> ReLU -> Linear (bf16 weights on the MXU) ----
    p1 = jnp.dot(stats, w_p1_ref[...], preferred_element_type=f32) + b_p1_ref[...]
    p1 = jnp.maximum(p1, 0.0)
    logits = jnp.dot(p1.astype(jnp.bfloat16), w_p2_ref[...],
                     preferred_element_type=f32) + b_p2_ref[...]
    out_ref[...] = logits


KERNEL_PARAM_ORDER = [
    "w_pre", "b_pre",
    "g1", "be1",
    "w_qkv", "b_qkv",
    "w_o", "b_o",
    "g2", "be2",
    "w_ff1", "b_ff1", "w_ff2", "b_ff2",
    "w_p1", "b_p1", "w_p2", "b_p2",
]


def _full_spec(shape):
    rank = len(shape)
    return pl.BlockSpec(shape, lambda b, _r=rank: (0,) * _r)


def classifier_forward(mels, kparams, *, tb=8):
    """mels: (B, L, 40) -> logits (B, N_SPKS). L should be a multiple of 8."""
    B, L, _ = mels.shape
    Bp = -(-B // tb) * tb
    if Bp != B:
        mels = jnp.pad(mels, ((0, Bp - B), (0, 0), (0, 0)))
    weights = [kparams[name] for name in KERNEL_PARAM_ORDER]

    in_specs = [pl.BlockSpec((tb, L, D_IN), lambda b: (b, 0, 0))]
    in_specs += [_full_spec(w.shape) for w in weights]
    out_spec = pl.BlockSpec((tb, N_SPKS_PAD), lambda b: (b, 0))

    out = pl.pallas_call(
        classifier_kernel,
        out_shape=jax.ShapeDtypeStruct((Bp, N_SPKS_PAD), jnp.float32),
        grid_spec=pltpu.PrefetchScalarGridSpec(
            num_scalar_prefetch=0,
            grid=(Bp // tb,),
            in_specs=in_specs,
            out_specs=out_spec,
        ),
        compiler_params=pltpu.CompilerParams(dimension_semantics=("parallel",)),
    )(mels, *weights)
    return out[:B, :N_SPKS]


def init_params(key):
    """Logical ('PyTorch-math') parameters in f32."""
    ks = iter(jax.random.split(key, 32))      # 18 rnd() calls below -> plenty of keys

    def rnd(shape, fan_in):
        return (jax.random.normal(next(ks), shape, jnp.float32)
                / np.sqrt(float(fan_in))).astype(jnp.float32)

    P = {}
    P["w_pre"] = rnd((D_IN, D_MODEL), D_IN)
    P["b_pre"] = rnd((1, D_MODEL), D_IN)
    # LayerNorm params: PyTorch default init (gamma=1, beta=0)
    P["g1"] = jnp.ones((1, D_MODEL), jnp.float32)
    P["be1"] = jnp.zeros((1, D_MODEL), jnp.float32)
    P["g2"] = jnp.ones((1, D_MODEL), jnp.float32)
    P["be2"] = jnp.zeros((1, D_MODEL), jnp.float32)
    # MHA projections, per head
    P["w_q"] = rnd((N_HEADS, D_MODEL, HEAD_DIM), D_MODEL)
    P["b_q"] = rnd((N_HEADS, 1, HEAD_DIM), D_MODEL)
    P["w_k"] = rnd((N_HEADS, D_MODEL, HEAD_DIM), D_MODEL)
    P["b_k"] = rnd((N_HEADS, 1, HEAD_DIM), D_MODEL)
    P["w_v"] = rnd((N_HEADS, D_MODEL, HEAD_DIM), D_MODEL)
    P["b_v"] = rnd((N_HEADS, 1, HEAD_DIM), D_MODEL)
    P["w_o"] = rnd((N_HEADS, HEAD_DIM, D_MODEL), D_MODEL)
    P["b_o"] = rnd((1, D_MODEL), D_MODEL)
    # Feed-forward
    P["w_ff1"] = rnd((D_MODEL, D_FF), D_MODEL)
    P["b_ff1"] = rnd((1, D_FF), D_MODEL)
    P["w_ff2"] = rnd((D_FF, D_MODEL), D_FF)
    P["b_ff2"] = rnd((1, D_MODEL), D_FF)
    # pred_layer
    P["w_p1"] = rnd((D_MODEL, D_MODEL), D_MODEL)
    P["b_p1"] = rnd((1, D_MODEL), D_MODEL)
    P["w_p2"] = rnd((D_MODEL, N_SPKS), D_MODEL)
    P["b_p2"] = rnd((1, N_SPKS), D_MODEL)
    return P


def pack_kernel_params(P):
    """Fuse/pad the logical params into the kernel layout."""
    # Fused QKV weight: columns [Q_h0 | Q_h1 | K_h0 | K_h1 | V_h0 | V_h1],
    # each head padded from 40 to 128 lanes with zeros (keeps slices aligned,
    # does not change the attention math).
    w_qkv = jnp.zeros((D_MODEL, 3 * N_HEADS * HEAD_PAD), jnp.float32)
    b_qkv = jnp.zeros((1, 3 * N_HEADS * HEAD_PAD), jnp.float32)
    groups = [(P["w_q"], P["b_q"]), (P["w_k"], P["b_k"]), (P["w_v"], P["b_v"])]
    for grp, (w, b) in enumerate(groups):
        for hd in range(N_HEADS):
            off = (grp * N_HEADS + hd) * HEAD_PAD
            w_qkv = w_qkv.at[:, off:off + HEAD_DIM].set(w[hd])
            b_qkv = b_qkv.at[0, off:off + HEAD_DIM].set(b[hd, 0])

    # Per-head output projection, rows padded 40 -> 128 (padded ctx lanes are 0).
    w_o_pad = jnp.zeros((N_HEADS, HEAD_PAD, D_MODEL), jnp.float32)
    for hd in range(N_HEADS):
        w_o_pad = w_o_pad.at[hd, :HEAD_DIM, :].set(P["w_o"][hd])

    # Classifier head: bf16 storage, N padded to 6144 for lane-dense stores.
    w_p2_pad = jnp.zeros((D_MODEL, N_SPKS_PAD), jnp.bfloat16)
    w_p2_pad = w_p2_pad.at[:, :N_SPKS].set(P["w_p2"].astype(jnp.bfloat16))
    b_p2_pad = jnp.zeros((1, N_SPKS_PAD), jnp.float32)
    b_p2_pad = b_p2_pad.at[:, :N_SPKS].set(P["b_p2"])

    return {
        "w_pre": P["w_pre"], "b_pre": P["b_pre"],
        "g1": P["g1"], "be1": P["be1"],
        "w_qkv": w_qkv, "b_qkv": b_qkv,
        "w_o": w_o_pad, "b_o": P["b_o"],
        "g2": P["g2"], "be2": P["be2"],
        "w_ff1": P["w_ff1"], "b_ff1": P["b_ff1"],
        "w_ff2": P["w_ff2"], "b_ff2": P["b_ff2"],
        "w_p1": P["w_p1"], "b_p1": P["b_p1"],
        "w_p2": w_p2_pad, "b_p2": b_p2_pad,
    }


def reference_forward(mels, P):
    """Pure-JAX reference of the same eval-mode math (for verification)."""
    def ln(z, g, b):
        mu = z.mean(-1, keepdims=True)
        var = ((z - mu) ** 2).mean(-1, keepdims=True)
        return (z - mu) / jnp.sqrt(var + EPS) * g + b

    h = mels @ P["w_pre"] + P["b_pre"]                      # (B, L, D)
    xn = ln(h, P["g1"], P["be1"])
    attn = jnp.zeros_like(h)
    for hd in range(N_HEADS):
        q = xn @ P["w_q"][hd] + P["b_q"][hd]
        k = xn @ P["w_k"][hd] + P["b_k"][hd]
        v = xn @ P["w_v"][hd] + P["b_v"][hd]
        s = jnp.einsum("bld,bmd->blm", q, k) / np.sqrt(HEAD_DIM)
        p = jax.nn.softmax(s, axis=-1)
        attn = attn + jnp.einsum("blm,bmd->bld", p, v) @ P["w_o"][hd]
    attn = attn + P["b_o"]
    h = h + attn
    xn2 = ln(h, P["g2"], P["be2"])
    f = jnp.maximum(xn2 @ P["w_ff1"] + P["b_ff1"], 0.0)
    f = f @ P["w_ff2"] + P["b_ff2"]
    h = h + f
    stats = h.mean(axis=1)                                  # (B, D)
    p1 = jnp.maximum(stats @ P["w_p1"] + P["b_p1"], 0.0)
    # Kernel stores w_p2 in bf16; use the same rounded weights here.
    w_p2 = P["w_p2"].astype(jnp.bfloat16).astype(jnp.float32)
    return p1 @ w_p2 + P["b_p2"]


if __name__ == "__main__":
    key = jax.random.PRNGKey(0)
    kx, kp = jax.random.split(key)
    B, L = 10, 8                       # batch padded to 16 -> 2 parallel grid steps
    mels = jax.random.normal(kx, (B, L, D_IN), jnp.float32)
    params = init_params(kp)
    kparams = pack_kernel_params(params)

    out = classifier_forward(mels, kparams, tb=8)
    out = jax.block_until_ready(out)
    assert out.shape == (B, N_SPKS), out.shape

    ref = reference_forward(mels, params)
    err = float(jnp.max(jnp.abs(out - ref)))
    assert err < 5e-2, f"max abs err {err}"
    print("KERNEL_OK")
</pallas_src>

<mosaic_0001>
module attributes {stable_mosaic.version = 11 : i64} {
  func.func @classifier_kernel(%arg0: i32, %arg1: memref<8x8x40xf32, #tpu.memory_space<vmem>>, %arg2: memref<40x80xf32, #tpu.memory_space<vmem>>, %arg3: memref<1x80xf32, #tpu.memory_space<vmem>>, %arg4: memref<1x80xf32, #tpu.memory_space<vmem>>, %arg5: memref<1x80xf32, #tpu.memory_space<vmem>>, %arg6: memref<80x768xf32, #tpu.memory_space<vmem>>, %arg7: memref<1x768xf32, #tpu.memory_space<vmem>>, %arg8: memref<2x128x80xf32, #tpu.memory_space<vmem>>, %arg9: memref<1x80xf32, #tpu.memory_space<vmem>>, %arg10: memref<1x80xf32, #tpu.memory_space<vmem>>, %arg11: memref<1x80xf32, #tpu.memory_space<vmem>>, %arg12: memref<80x256xf32, #tpu.memory_space<vmem>>, %arg13: memref<1x256xf32, #tpu.memory_space<vmem>>, %arg14: memref<256x80xf32, #tpu.memory_space<vmem>>, %arg15: memref<1x80xf32, #tpu.memory_space<vmem>>, %arg16: memref<80x80xf32, #tpu.memory_space<vmem>>, %arg17: memref<1x80xf32, #tpu.memory_space<vmem>>, %arg18: memref<80x6144xbf16, #tpu.memory_space<vmem>>, %arg19: memref<1x6144xf32, #tpu.memory_space<vmem>>, %arg20: memref<8x6144xf32, #tpu.memory_space<vmem>>) attributes {dimension_semantics = [#tpu.dimension_semantics<parallel>], iteration_bounds = array<i64: 2>, scalar_prefetch = 0 : i64, scratch_operands = 0 : i64, tpu.core_type = #tpu.core_type<tc>, window_params = [{transform_indices = @transform_0, window_bounds = array<i64: 8, 8, 40>}, {pipeline_mode = #tpu.pipeline_mode<synchronous>, transform_indices = @transform_1, window_bounds = array<i64: 40, 80>}, {pipeline_mode = #tpu.pipeline_mode<synchronous>, transform_indices = @transform_2, window_bounds = array<i64: 1, 80>}, {pipeline_mode = #tpu.pipeline_mode<synchronous>, transform_indices = @transform_3, window_bounds = array<i64: 1, 80>}, {pipeline_mode = #tpu.pipeline_mode<synchronous>, transform_indices = @transform_4, window_bounds = array<i64: 1, 80>}, {pipeline_mode = #tpu.pipeline_mode<synchronous>, transform_indices = @transform_5, window_bounds = array<i64: 80, 768>}, {pipeline_mode = #tpu.pipeline_mode<synchronous>, transform_indices = @transform_6, window_bounds = array<i64: 1, 768>}, {pipeline_mode = #tpu.pipeline_mode<synchronous>, transform_indices = @transform_7, window_bounds = array<i64: 2, 128, 80>}, {pipeline_mode = #tpu.pipeline_mode<synchronous>, transform_indices = @transform_8, window_bounds = array<i64: 1, 80>}, {pipeline_mode = #tpu.pipeline_mode<synchronous>, transform_indices = @transform_9, window_bounds = array<i64: 1, 80>}, {pipeline_mode = #tpu.pipeline_mode<synchronous>, transform_indices = @transform_10, window_bounds = array<i64: 1, 80>}, {pipeline_mode = #tpu.pipeline_mode<synchronous>, transform_indices = @transform_11, window_bounds = array<i64: 80, 256>}, {pipeline_mode = #tpu.pipeline_mode<synchronous>, transform_indices = @transform_12, window_bounds = array<i64: 1, 256>}, {pipeline_mode = #tpu.pipeline_mode<synchronous>, transform_indices = @transform_13, window_bounds = array<i64: 256, 80>}, {pipeline_mode = #tpu.pipeline_mode<synchronous>, transform_indices = @transform_14, window_bounds = array<i64: 1, 80>}, {pipeline_mode = #tpu.pipeline_mode<synchronous>, transform_indices = @transform_15, window_bounds = array<i64: 80, 80>}, {pipeline_mode = #tpu.pipeline_mode<synchronous>, transform_indices = @transform_16, window_bounds = array<i64: 1, 80>}, {pipeline_mode = #tpu.pipeline_mode<synchronous>, transform_indices = @transform_17, window_bounds = array<i64: 80, 6144>}, {pipeline_mode = #tpu.pipeline_mode<synchronous>, transform_indices = @transform_18, window_bounds = array<i64: 1, 6144>}, {transform_indices = @transform_19, window_bounds = array<i64: 8, 6144>}]} {
    %c0 = arith.constant 0 : index
    %c0_0 = arith.constant 0 : index
    %c0_1 = arith.constant 0 : index
    %0 = vector.load %arg1[%c0, %c0_0, %c0_1] : memref<8x8x40xf32, #tpu.memory_space<vmem>>, vector<8x8x40xf32>
    %1 = vector.shape_cast %0 : vector<8x8x40xf32> to vector<64x40xf32>
    %c0_2 = arith.constant 0 : index
    %c0_3 = arith.constant 0 : index
    %2 = vector.load %arg2[%c0_2, %c0_3] : memref<40x80xf32, #tpu.memory_space<vmem>>, vector<40x80xf32>
    %cst = arith.constant dense<0.000000e+00> : vector<64x80xf32>
    %3 = tpu.matmul %1, %2, %cst {dimension_numbers = #tpu.dot_dimension_numbers<[1], [0], [0], [1], [0, 0, 1, 1], [], []>} : vector<64x40xf32>, vector<40x80xf32>, vector<64x80xf32> -> vector<64x80xf32>
    %c0_4 = arith.constant 0 : index
    %c0_5 = arith.constant 0 : index
    %4 = vector.load %arg3[%c0_4, %c0_5] : memref<1x80xf32, #tpu.memory_space<vmem>>, vector<1x80xf32>
    %5 = vector.broadcast %4 : vector<1x80xf32> to vector<64x80xf32>
    %6 = arith.addf %3, %5 : vector<64x80xf32>
    %c0_6 = arith.constant 0 : index
    %c0_7 = arith.constant 0 : index
    %7 = vector.load %arg4[%c0_6, %c0_7] : memref<1x80xf32, #tpu.memory_space<vmem>>, vector<1x80xf32>
    %c0_8 = arith.constant 0 : index
    %c0_9 = arith.constant 0 : index
    %8 = vector.load %arg5[%c0_8, %c0_9] : memref<1x80xf32, #tpu.memory_space<vmem>>, vector<1x80xf32>
    %cst_10 = arith.constant dense<0.000000e+00> : vector<64xf32>
    %9 = vector.multi_reduction <add>, %6, %cst_10 [1] : vector<64x80xf32> to vector<64xf32>
    %10 = vector.shape_cast %9 : vector<64xf32> to vector<64x1xf32>
    %cst_11 = arith.constant 8.000000e+01 : f32
    %11 = vector.broadcast %cst_11 : f32 to vector<64x1xf32>
    %12 = arith.divf %10, %11 : vector<64x1xf32>
    %13 = vector.broadcast %12 : vector<64x1xf32> to vector<64x80xf32>
    %14 = arith.subf %6, %13 : vector<64x80xf32>
    %15 = arith.mulf %14, %14 : vector<64x80xf32>
    %cst_12 = arith.constant dense<0.000000e+00> : vector<64xf32>
    %16 = vector.multi_reduction <add>, %15, %cst_12 [1] : vector<64x80xf32> to vector<64xf32>
    %17 = vector.shape_cast %16 : vector<64xf32> to vector<64x1xf32>
    %cst_13 = arith.constant 8.000000e+01 : f32
    %18 = vector.broadcast %cst_13 : f32 to vector<64x1xf32>
    %19 = arith.divf %17, %18 : vector<64x1xf32>
    %20 = vector.broadcast %12 : vector<64x1xf32> to vector<64x80xf32>
    %21 = arith.subf %6, %20 : vector<64x80xf32>
    %cst_14 = arith.constant 9.99999974E-6 : f32
    %22 = vector.broadcast %cst_14 : f32 to vector<64x1xf32>
    %23 = arith.addf %19, %22 : vector<64x1xf32>
    %24 = math.rsqrt %23 : vector<64x1xf32>
    %25 = vector.broadcast %24 : vector<64x1xf32> to vector<64x80xf32>
    %26 = arith.mulf %21, %25 : vector<64x80xf32>
    %27 = vector.broadcast %7 : vector<1x80xf32> to vector<64x80xf32>
    %28 = arith.mulf %26, %27 : vector<64x80xf32>
    %29 = vector.broadcast %8 : vector<1x80xf32> to vector<64x80xf32>
    %30 = arith.addf %28, %29 : vector<64x80xf32>
    %c0_15 = arith.constant 0 : index
    %c0_16 = arith.constant 0 : index
    %31 = vector.load %arg6[%c0_15, %c0_16] : memref<80x768xf32, #tpu.memory_space<vmem>>, vector<80x768xf32>
    %cst_17 = arith.constant dense<0.000000e+00> : vector<64x768xf32>
    %32 = tpu.matmul %30, %31, %cst_17 {dimension_numbers = #tpu.dot_dimension_numbers<[1], [0], [0], [1], [0, 0, 1, 1], [], []>} : vector<64x80xf32>, vector<80x768xf32>, vector<64x768xf32> -> vector<64x768xf32>
    %c0_18 = arith.constant 0 : index
    %c0_19 = arith.constant 0 : index
    %33 = vector.load %arg7[%c0_18, %c0_19] : memref<1x768xf32, #tpu.memory_space<vmem>>, vector<1x768xf32>
    %34 = vector.broadcast %33 : vector<1x768xf32> to vector<64x768xf32>
    %35 = arith.addf %32, %34 : vector<64x768xf32>
    %36 = vector.shape_cast %35 : vector<64x768xf32> to vector<8x8x768xf32>
    %cst_20 = arith.constant 0.000000e+00 : f32
    %37 = vector.broadcast %cst_20 : f32 to vector<64x80xf32>
    %38 = vector.extract_strided_slice %36 {offsets = [0, 0, 0], sizes = [8, 8, 128], strides = [1, 1, 1]} : vector<8x8x768xf32> to vector<8x8x128xf32>
    %39 = vector.extract_strided_slice %36 {offsets = [0, 0, 256], sizes = [8, 8, 128], strides = [1, 1, 1]} : vector<8x8x768xf32> to vector<8x8x128xf32>
    %40 = vector.extract_strided_slice %36 {offsets = [0, 0, 512], sizes = [8, 8, 128], strides = [1, 1, 1]} : vector<8x8x768xf32> to vector<8x8x128xf32>
    "tpu.trace_start"() <{level = 10 : i32, message = "bld,bmd->blm"}> : () -> ()
    %cst_21 = arith.constant dense<0.000000e+00> : vector<8x8x8xf32>
    %41 = tpu.matmul %38, %39, %cst_21 {dimension_numbers = #tpu.dot_dimension_numbers<[2], [2], [1], [1], [0, 0, 0, 1, 1, 1], [0], [0]>} : vector<8x8x128xf32>, vector<8x8x128xf32>, vector<8x8x8xf32> -> vector<8x8x8xf32>
    "tpu.trace_stop"() : () -> ()
    %cst_22 = arith.constant 0.158113882 : f32
    %42 = vector.broadcast %cst_22 : f32 to vector<8x8x8xf32>
    %43 = arith.mulf %41, %42 : vector<8x8x8xf32>
    %cst_23 = arith.constant dense<0xFF800000> : vector<8x8xf32>
    %44 = vector.multi_reduction <maximumf>, %43, %cst_23 [2] : vector<8x8x8xf32> to vector<8x8xf32>
    %45 = vector.shape_cast %44 : vector<8x8xf32> to vector<8x8x1xf32>
    %46 = vector.broadcast %45 : vector<8x8x1xf32> to vector<8x8x8xf32>
    %47 = arith.subf %43, %46 : vector<8x8x8xf32>
    %48 = math.exp %47 : vector<8x8x8xf32>
    %cst_24 = arith.constant dense<0.000000e+00> : vector<8x8xf32>
    %49 = vector.multi_reduction <add>, %48, %cst_24 [2] : vector<8x8x8xf32> to vector<8x8xf32>
    %50 = vector.shape_cast %49 : vector<8x8xf32> to vector<8x8x1xf32>
    %51 = tpu.reciprocal %50 {approx = true} : vector<8x8x1xf32> -> vector<8x8x1xf32>
    %52 = vector.broadcast %51 : vector<8x8x1xf32> to vector<8x8x8xf32>
    %53 = arith.mulf %48, %52 : vector<8x8x8xf32>
    "tpu.trace_start"() <{level = 10 : i32, message = "blm,bmd->bld"}> : () -> ()
    %cst_25 = arith.constant dense<0.000000e+00> : vector<8x8x128xf32>
    %54 = tpu.matmul %53, %40, %cst_25 {dimension_numbers = #tpu.dot_dimension_numbers<[2], [1], [1], [2], [0, 0, 0, 1, 1, 2], [0], [0]>} : vector<8x8x8xf32>, vector<8x8x128xf32>, vector<8x8x128xf32> -> vector<8x8x128xf32>
    "tpu.trace_stop"() : () -> ()
    %55 = vector.shape_cast %54 : vector<8x8x128xf32> to vector<64x128xf32>
    %c0_26 = arith.constant 0 : index
    %c0_27 = arith.constant 0 : index
    %c0_28 = arith.constant 0 : index
    %56 = vector.load %arg8[%c0_26, %c0_27, %c0_28] : memref<2x128x80xf32, #tpu.memory_space<vmem>>, vector<1x128x80xf32>
    %57 = vector.shape_cast %56 : vector<1x128x80xf32> to vector<128x80xf32>
    %cst_29 = arith.constant dense<0.000000e+00> : vector<64x80xf32>
    %58 = tpu.matmul %55, %57, %cst_29 {dimension_numbers = #tpu.dot_dimension_numbers<[1], [0], [0], [1], [0, 0, 1, 1], [], []>} : vector<64x128xf32>, vector<128x80xf32>, vector<64x80xf32> -> vector<64x80xf32>
    %59 = arith.addf %37, %58 : vector<64x80xf32>
    %60 = vector.extract_strided_slice %36 {offsets = [0, 0, 128], sizes = [8, 8, 128], strides = [1, 1, 1]} : vector<8x8x768xf32> to vector<8x8x128xf32>
    %61 = vector.extract_strided_slice %36 {offsets = [0, 0, 384], sizes = [8, 8, 128], strides = [1, 1, 1]} : vector<8x8x768xf32> to vector<8x8x128xf32>
    %62 = vector.extract_strided_slice %36 {offsets = [0, 0, 640], sizes = [8, 8, 128], strides = [1, 1, 1]} : vector<8x8x768xf32> to vector<8x8x128xf32>
    "tpu.trace_start"() <{level = 10 : i32, message = "bld,bmd->blm"}> : () -> ()
    %cst_30 = arith.constant dense<0.000000e+00> : vector<8x8x8xf32>
    %63 = tpu.matmul %60, %61, %cst_30 {dimension_numbers = #tpu.dot_dimension_numbers<[2], [2], [1], [1], [0, 0, 0, 1, 1, 1], [0], [0]>} : vector<8x8x128xf32>, vector<8x8x128xf32>, vector<8x8x8xf32> -> vector<8x8x8xf32>
    "tpu.trace_stop"() : () -> ()
    %cst_31 = arith.constant 0.158113882 : f32
    %64 = vector.broadcast %cst_31 : f32 to vector<8x8x8xf32>
    %65 = arith.mulf %63, %64 : vector<8x8x8xf32>
    %cst_32 = arith.constant dense<0xFF800000> : vector<8x8xf32>
    %66 = vector.multi_reduction <maximumf>, %65, %cst_32 [2] : vector<8x8x8xf32> to vector<8x8xf32>
    %67 = vector.shape_cast %66 : vector<8x8xf32> to vector<8x8x1xf32>
    %68 = vector.broadcast %67 : vector<8x8x1xf32> to vector<8x8x8xf32>
    %69 = arith.subf %65, %68 : vector<8x8x8xf32>
    %70 = math.exp %69 : vector<8x8x8xf32>
    %cst_33 = arith.constant dense<0.000000e+00> : vector<8x8xf32>
    %71 = vector.multi_reduction <add>, %70, %cst_33 [2] : vector<8x8x8xf32> to vector<8x8xf32>
    %72 = vector.shape_cast %71 : vector<8x8xf32> to vector<8x8x1xf32>
    %73 = tpu.reciprocal %72 {approx = true} : vector<8x8x1xf32> -> vector<8x8x1xf32>
    %74 = vector.broadcast %73 : vector<8x8x1xf32> to vector<8x8x8xf32>
    %75 = arith.mulf %70, %74 : vector<8x8x8xf32>
    "tpu.trace_start"() <{level = 10 : i32, message = "blm,bmd->bld"}> : () -> ()
    %cst_34 = arith.constant dense<0.000000e+00> : vector<8x8x128xf32>
    %76 = tpu.matmul %75, %62, %cst_34 {dimension_numbers = #tpu.dot_dimension_numbers<[2], [1], [1], [2], [0, 0, 0, 1, 1, 2], [0], [0]>} : vector<8x8x8xf32>, vector<8x8x128xf32>, vector<8x8x128xf32> -> vector<8x8x128xf32>
    "tpu.trace_stop"() : () -> ()
    %77 = vector.shape_cast %76 : vector<8x8x128xf32> to vector<64x128xf32>
    %c1 = arith.constant 1 : index
    %c0_35 = arith.constant 0 : index
    %c0_36 = arith.constant 0 : index
    %78 = vector.load %arg8[%c1, %c0_35, %c0_36] : memref<2x128x80xf32, #tpu.memory_space<vmem>>, vector<1x128x80xf32>
    %79 = vector.shape_cast %78 : vector<1x128x80xf32> to vector<128x80xf32>
    %cst_37 = arith.constant dense<0.000000e+00> : vector<64x80xf32>
    %80 = tpu.matmul %77, %79, %cst_37 {dimension_numbers = #tpu.dot_dimension_numbers<[1], [0], [0], [1], [0, 0, 1, 1], [], []>} : vector<64x128xf32>, vector<128x80xf32>, vector<64x80xf32> -> vector<64x80xf32>
    %81 = arith.addf %59, %80 : vector<64x80xf32>
    %c0_38 = arith.constant 0 : index
    %c0_39 = arith.constant 0 : index
    %82 = vector.load %arg9[%c0_38, %c0_39] : memref<1x80xf32, #tpu.memory_space<vmem>>, vector<1x80xf32>
    %83 = vector.broadcast %82 : vector<1x80xf32> to vector<64x80xf32>
    %84 = arith.addf %81, %83 : vector<64x80xf32>
    %85 = arith.addf %6, %84 : vector<64x80xf32>
    %c0_40 = arith.constant 0 : index
    %c0_41 = arith.constant 0 : index
    %86 = vector.load %arg10[%c0_40, %c0_41] : memref<1x80xf32, #tpu.memory_space<vmem>>, vector<1x80xf32>
    %c0_42 = arith.constant 0 : index
    %c0_43 = arith.constant 0 : index
    %87 = vector.load %arg11[%c0_42, %c0_43] : memref<1x80xf32, #tpu.memory_space<vmem>>, vector<1x80xf32>
    %cst_44 = arith.constant dense<0.000000e+00> : vector<64xf32>
    %88 = vector.multi_reduction <add>, %85, %cst_44 [1] : vector<64x80xf32> to vector<64xf32>
    %89 = vector.shape_cast %88 : vector<64xf32> to vector<64x1xf32>
    %cst_45 = arith.constant 8.000000e+01 : f32
    %90 = vector.broadcast %cst_45 : f32 to vector<64x1xf32>
    %91 = arith.divf %89, %90 : vector<64x1xf32>
    %92 = vector.broadcast %91 : vector<64x1xf32> to vector<64x80xf32>
    %93 = arith.subf %85, %92 : vector<64x80xf32>
    %94 = arith.mulf %93, %93 : vector<64x80xf32>
    %cst_46 = arith.constant dense<0.000000e+00> : vector<64xf32>
    %95 = vector.multi_reduction <add>, %94, %cst_46 [1] : vector<64x80xf32> to vector<64xf32>
    %96 = vector.shape_cast %95 : vector<64xf32> to vector<64x1xf32>
    %cst_47 = arith.constant 8.000000e+01 : f32
    %97 = vector.broadcast %cst_47 : f32 to vector<64x1xf32>
    %98 = arith.divf %96, %97 : vector<64x1xf32>
    %99 = vector.broadcast %91 : vector<64x1xf32> to vector<64x80xf32>
    %100 = arith.subf %85, %99 : vector<64x80xf32>
    %cst_48 = arith.constant 9.99999974E-6 : f32
    %101 = vector.broadcast %cst_48 : f32 to vector<64x1xf32>
    %102 = arith.addf %98, %101 : vector<64x1xf32>
    %103 = math.rsqrt %102 : vector<64x1xf32>
    %104 = vector.broadcast %103 : vector<64x1xf32> to vector<64x80xf32>
    %105 = arith.mulf %100, %104 : vector<64x80xf32>
    %106 = vector.broadcast %86 : vector<1x80xf32> to vector<64x80xf32>
    %107 = arith.mulf %105, %106 : vector<64x80xf32>
    %108 = vector.broadcast %87 : vector<1x80xf32> to vector<64x80xf32>
    %109 = arith.addf %107, %108 : vector<64x80xf32>
    %c0_49 = arith.constant 0 : index
    %c0_50 = arith.constant 0 : index
    %110 = vector.load %arg12[%c0_49, %c0_50] : memref<80x256xf32, #tpu.memory_space<vmem>>, vector<80x256xf32>
    %cst_51 = arith.constant dense<0.000000e+00> : vector<64x256xf32>
    %111 = tpu.matmul %109, %110, %cst_51 {dimension_numbers = #tpu.dot_dimension_numbers<[1], [0], [0], [1], [0, 0, 1, 1], [], []>} : vector<64x80xf32>, vector<80x256xf32>, vector<64x256xf32> -> vector<64x256xf32>
    %c0_52 = arith.constant 0 : index
    %c0_53 = arith.constant 0 : index
    %112 = vector.load %arg13[%c0_52, %c0_53] : memref<1x256xf32, #tpu.memory_space<vmem>>, vector<1x256xf32>
    %113 = vector.broadcast %112 : vector<1x256xf32> to vector<64x256xf32>
    %114 = arith.addf %111, %113 : vector<64x256xf32>
    %cst_54 = arith.constant 0.000000e+00 : f32
    %115 = vector.broadcast %cst_54 : f32 to vector<64x256xf32>
    %116 = arith.maximumf %114, %115 : vector<64x256xf32>
    %c0_55 = arith.constant 0 : index
    %c0_56 = arith.constant 0 : index
    %117 = vector.load %arg14[%c0_55, %c0_56] : memref<256x80xf32, #tpu.memory_space<vmem>>, vector<256x80xf32>
    %cst_57 = arith.constant dense<0.000000e+00> : vector<64x80xf32>
    %118 = tpu.matmul %116, %117, %cst_57 {dimension_numbers = #tpu.dot_dimension_numbers<[1], [0], [0], [1], [0, 0, 1, 1], [], []>} : vector<64x256xf32>, vector<256x80xf32>, vector<64x80xf32> -> vector<64x80xf32>
    %c0_58 = arith.constant 0 : index
    %c0_59 = arith.constant 0 : index
    %119 = vector.load %arg15[%c0_58, %c0_59] : memref<1x80xf32, #tpu.memory_space<vmem>>, vector<1x80xf32>
    %120 = vector.broadcast %119 : vector<1x80xf32> to vector<64x80xf32>
    %121 = arith.addf %118, %120 : vector<64x80xf32>
    %122 = arith.addf %85, %121 : vector<64x80xf32>
    %123 = vector.shape_cast %122 : vector<64x80xf32> to vector<8x8x80xf32>
    %cst_60 = arith.constant dense<0.000000e+00> : vector<8x80xf32>
    %124 = vector.multi_reduction <add>, %123, %cst_60 [1] : vector<8x8x80xf32> to vector<8x80xf32>
    %cst_61 = arith.constant 1.250000e-01 : f32
    %125 = vector.broadcast %cst_61 : f32 to vector<8x80xf32>
    %126 = arith.mulf %124, %125 : vector<8x80xf32>
    %c0_62 = arith.constant 0 : index
    %c0_63 = arith.constant 0 : index
    %127 = vector.load %arg16[%c0_62, %c0_63] : memref<80x80xf32, #tpu.memory_space<vmem>>, vector<80x80xf32>
    %cst_64 = arith.constant dense<0.000000e+00> : vector<8x80xf32>
    %128 = tpu.matmul %126, %127, %cst_64 {dimension_numbers = #tpu.dot_dimension_numbers<[1], [0], [0], [1], [0, 0, 1, 1], [], []>} : vector<8x80xf32>, vector<80x80xf32>, vector<8x80xf32> -> vector<8x80xf32>
    %c0_65 = arith.constant 0 : index
    %c0_66 = arith.constant 0 : index
    %129 = vector.load %arg17[%c0_65, %c0_66] : memref<1x80xf32, #tpu.memory_space<vmem>>, vector<1x80xf32>
    %130 = vector.broadcast %129 : vector<1x80xf32> to vector<8x80xf32>
    %131 = arith.addf %128, %130 : vector<8x80xf32>
    %cst_67 = arith.constant 0.000000e+00 : f32
    %132 = vector.broadcast %cst_67 : f32 to vector<8x80xf32>
    %133 = arith.maximumf %131, %132 : vector<8x80xf32>
    %134 = arith.truncf %133 : vector<8x80xf32> to vector<8x80xbf16>
    %c0_68 = arith.constant 0 : index
    %c0_69 = arith.constant 0 : index
    %135 = vector.load %arg18[%c0_68, %c0_69] : memref<80x6144xbf16, #tpu.memory_space<vmem>>, vector<80x6144xbf16>
    %cst_70 = arith.constant dense<0.000000e+00> : vector<8x6144xf32>
    %136 = tpu.matmul %134, %135, %cst_70 {dimension_numbers = #tpu.dot_dimension_numbers<[1], [0], [0], [1], [0, 0, 1, 1], [], []>} : vector<8x80xbf16>, vector<80x6144xbf16>, vector<8x6144xf32> -> vector<8x6144xf32>
    %c0_71 = arith.constant 0 : index
    %c0_72 = arith.constant 0 : index
    %137 = vector.load %arg19[%c0_71, %c0_72] : memref<1x6144xf32, #tpu.memory_space<vmem>>, vector<1x6144xf32>
    %138 = vector.broadcast %137 : vector<1x6144xf32> to vector<8x6144xf32>
    %139 = arith.addf %136, %138 : vector<8x6144xf32>
    %c0_73 = arith.constant 0 : index
    %c0_74 = arith.constant 0 : index
    %140 = vector.load %arg20[%c0_73, %c0_74] : memref<8x6144xf32, #tpu.memory_space<vmem>>, vector<8x6144xf32>
    tpu.vector_store %arg20[%c0_73, %c0_74], %139 {strides = array<i32>} : memref<8x6144xf32, #tpu.memory_space<vmem>>, vector<8x6144xf32>,
    return
  }
  func.func @transform_0(%arg0: i32) -> (i32, i32, i32) {
    %c0_i32 = arith.constant 0 : i32
    %c0_i32_0 = arith.constant 0 : i32
    %c0_i32_1 = arith.constant 0 : i32
    return %arg0, %c0_i32, %c0_i32_0 : i32, i32, i32
  }
  func.func @transform_1(%arg0: i32) -> (i32, i32) {
    %c0_i32 = arith.constant 0 : i32
    %c0_i32_0 = arith.constant 0 : i32
    %c0_i32_1 = arith.constant 0 : i32
    return %c0_i32, %c0_i32_0 : i32, i32
  }
  func.func @transform_2(%arg0: i32) -> (i32, i32) {
    %c0_i32 = arith.constant 0 : i32
    %c0_i32_0 = arith.constant 0 : i32
    %c0_i32_1 = arith.constant 0 : i32
    return %c0_i32, %c0_i32_0 : i32, i32
  }
  func.func @transform_3(%arg0: i32) -> (i32, i32) {
    %c0_i32 = arith.constant 0 : i32
    %c0_i32_0 = arith.constant 0 : i32
    %c0_i32_1 = arith.constant 0 : i32
    return %c0_i32, %c0_i32_0 : i32, i32
  }
  func.func @transform_4(%arg0: i32) -> (i32, i32) {
    %c0_i32 = arith.constant 0 : i32
    %c0_i32_0 = arith.constant 0 : i32
    %c0_i32_1 = arith.constant 0 : i32
    return %c0_i32, %c0_i32_0 : i32, i32
  }
  func.func @transform_5(%arg0: i32) -> (i32, i32) {
    %c0_i32 = arith.constant 0 : i32
    %c0_i32_0 = arith.constant 0 : i32
    %c0_i32_1 = arith.constant 0 : i32
    return %c0_i32, %c0_i32_0 : i32, i32
  }
  func.func @transform_6(%arg0: i32) -> (i32, i32) {
    %c0_i32 = arith.constant 0 : i32
    %c0_i32_0 = arith.constant 0 : i32
    %c0_i32_1 = arith.constant 0 : i32
    return %c0_i32, %c0_i32_0 : i32, i32
  }
  func.func @transform_7(%arg0: i32) -> (i32, i32, i32) {
    %c0_i32 = arith.constant 0 : i32
    %c0_i32_0 = arith.constant 0 : i32
    %c0_i32_1 = arith.constant 0 : i32
    %c0_i32_2 = arith.constant 0 : i32
    return %c0_i32, %c0_i32_0, %c0_i32_1 : i32, i32, i32
  }
  func.func @transform_8(%arg0: i32) -> (i32, i32) {
    %c0_i32 = arith.constant 0 : i32
    %c0_i32_0 = arith.constant 0 : i32
    %c0_i32_1 = arith.constant 0 : i32
    return %c0_i32, %c0_i32_0 : i32, i32
  }
  func.func @transform_9(%arg0: i32) -> (i32, i32) {
    %c0_i32 = arith.constant 0 : i32
    %c0_i32_0 = arith.constant 0 : i32
    %c0_i32_1 = arith.constant 0 : i32
    return %c0_i32, %c0_i32_0 : i32, i32
  }
  func.func @transform_10(%arg0: i32) -> (i32, i32) {
    %c0_i32 = arith.constant 0 : i32
    %c0_i32_0 = arith.constant 0 : i32
    %c0_i32_1 = arith.constant 0 : i32
    return %c0_i32, %c0_i32_0 : i32, i32
  }
  func.func @transform_11(%arg0: i32) -> (i32, i32) {
    %c0_i32 = arith.constant 0 : i32
    %c0_i32_0 = arith.constant 0 : i32
    %c0_i32_1 = arith.constant 0 : i32
    return %c0_i32, %c0_i32_0 : i32, i32
  }
  func.func @transform_12(%arg0: i32) -> (i32, i32) {
    %c0_i32 = arith.constant 0 : i32
    %c0_i32_0 = arith.constant 0 : i32
    %c0_i32_1 = arith.constant 0 : i32
    return %c0_i32, %c0_i32_0 : i32, i32
  }
  func.func @transform_13(%arg0: i32) -> (i32, i32) {
    %c0_i32 = arith.constant 0 : i32
    %c0_i32_0 = arith.constant 0 : i32
    %c0_i32_1 = arith.constant 0 : i32
    return %c0_i32, %c0_i32_0 : i32, i32
  }
  func.func @transform_14(%arg0: i32) -> (i32, i32) {
    %c0_i32 = arith.constant 0 : i32
    %c0_i32_0 = arith.constant 0 : i32
    %c0_i32_1 = arith.constant 0 : i32
    return %c0_i32, %c0_i32_0 : i32, i32
  }
  func.func @transform_15(%arg0: i32) -> (i32, i32) {
    %c0_i32 = arith.constant 0 : i32
    %c0_i32_0 = arith.constant 0 : i32
    %c0_i32_1 = arith.constant 0 : i32
    return %c0_i32, %c0_i32_0 : i32, i32
  }
  func.func @transform_16(%arg0: i32) -> (i32, i32) {
    %c0_i32 = arith.constant 0 : i32
    %c0_i32_0 = arith.constant 0 : i32
    %c0_i32_1 = arith.constant 0 : i32
    return %c0_i32, %c0_i32_0 : i32, i32
  }
  func.func @transform_17(%arg0: i32) -> (i32, i32) {
    %c0_i32 = arith.constant 0 : i32
    %c0_i32_0 = arith.constant 0 : i32
    %c0_i32_1 = arith.constant 0 : i32
    return %c0_i32, %c0_i32_0 : i32, i32
  }
  func.func @transform_18(%arg0: i32) -> (i32, i32) {
    %c0_i32 = arith.constant 0 : i32
    %c0_i32_0 = arith.constant 0 : i32
    %c0_i32_1 = arith.constant 0 : i32
    return %c0_i32, %c0_i32_0 : i32, i32
  }
  func.func @transform_19(%arg0: i32) -> (i32, i32) {
    %c0_i32 = arith.constant 0 : i32
    %c0_i32_0 = arith.constant 0 : i32
    return %arg0, %c0_i32 : i32, i32
  }
}

</mosaic_0001>

<llo_original>
// kernel: tpu_custom_call.1
$region0: #{tpu_custom_call.1}
  #allocation0 [shape = 'u32[]', space=smem, size = 0x4, offset = 0x4, fixed_abs, tag = 'smem constant byte address 0x4 - core index']
  #allocation1 [shape = 'u32[144,128]{1,0:T(1,128)}', space=vmem, size = 0x12000, scoped, tag = 'internal scratch']
  %s0 = inlined_call_operand.hbm [shape: f32[16,8,40], index: 0, kind: input, shape index: {}]
  %s1 = inlined_call_operand.hbm [shape: f32[40,80], index: 1, kind: input, shape index: {}]
  %s2 = inlined_call_operand.hbm [shape: f32[1,80], index: 2, kind: input, shape index: {}]
  %s3 = inlined_call_operand.hbm [shape: f32[1,80], index: 3, kind: input, shape index: {}]
  %s4 = inlined_call_operand.hbm [shape: f32[1,80], index: 4, kind: input, shape index: {}]
  %s5 = inlined_call_operand.vmem [shape: f32[80,768], index: 5, kind: input, shape index: {}]
  %s6 = inlined_call_operand.vmem [shape: f32[1,768], index: 6, kind: input, shape index: {}]
  %s7 = inlined_call_operand.vmem [shape: f32[2,128,80], index: 7, kind: input, shape index: {}]
  %s8 = inlined_call_operand.hbm [shape: f32[1,80], index: 8, kind: input, shape index: {}]
  %s9 = inlined_call_operand.hbm [shape: f32[1,80], index: 9, kind: input, shape index: {}]
  %s10 = inlined_call_operand.hbm [shape: f32[1,80], index: 10, kind: input, shape index: {}]
  %s11 = inlined_call_operand.vmem [shape: f32[80,256], index: 11, kind: input, shape index: {}]
  %s12 = inlined_call_operand.vmem [shape: f32[1,256], index: 12, kind: input, shape index: {}]
  %s13 = inlined_call_operand.vmem [shape: f32[256,80], index: 13, kind: input, shape index: {}]
  %s14 = inlined_call_operand.hbm [shape: f32[1,80], index: 14, kind: input, shape index: {}]
  %s15 = inlined_call_operand.vmem [shape: f32[80,80], index: 15, kind: input, shape index: {}]
  %s16 = inlined_call_operand.hbm [shape: f32[1,80], index: 16, kind: input, shape index: {}]
  %s17 = inlined_call_operand.hbm [shape: bf16[80,6144], index: 17, kind: input, shape index: {}]
  %s18 = inlined_call_operand.hbm [shape: f32[1,6144], index: 18, kind: input, shape index: {}]
  %s19 = inlined_call_operand.hbm [shape: f32[16,6144], index: 19, kind: output, shape index: {}]
  %s20 = sld [smem:[#allocation0]]
  $region157: #{tpu_custom_call.1} parent=0
    _
  %s22 = ssub.s32 1, %s20
  %s23 = scalar_select 0, %s22, %s20
  $region1: #{tpu_custom_call.1} parent=0
    #allocation2 [shape = 'u8[65536]{0}', space=vmem, size = 0x10000, scoped, tag = 'input window, operand 0']
    #allocation3 [shape = 's32[2]{0}', space=sflag, size = 0x8, scoped, tag = 'scoped memory for tpu_custom_call.1']
    #allocation4 [shape = 's32[2]{0}', space=sflag, size = 0x8, scoped, tag = 'scoped memory for tpu_custom_call.1']
    #allocation5 [shape = 'u8[20480]{0}', space=vmem, size = 0x5000, scoped, tag = 'input window, operand 1, single buffered']
    #allocation6 [shape = 's32[1]{0}', space=sflag, size = 0x4, scoped, tag = 'scoped memory for tpu_custom_call.1']
    #allocation7 [shape = 'u8[512]{0}', space=vmem, size = 0x400, scoped, tag = 'input window, operand 2, single buffered']
    #allocation8 [shape = 'u8[512]{0}', space=vmem, size = 0x400, scoped, tag = 'input window, operand 3, single buffered']
    #allocation9 [shape = 's32[1]{0}', space=sflag, size = 0x4, scoped, tag = 'scoped memory for tpu_custom_call.1']
    #allocation10 [shape = 'u8[512]{0}', space=vmem, size = 0x400, scoped, tag = 'input window, operand 4, single buffered']
    #allocation11 [shape = 'u8[512]{0}', space=vmem, size = 0x400, scoped, tag = 'input window, operand 8, single buffered']
    #allocation12 [shape = 's32[1]{0}', space=sflag, size = 0x4, scoped, tag = 'scoped memory for tpu_custom_call.1']
    #allocation13 [shape = 'u8[512]{0}', space=vmem, size = 0x400, scoped, tag = 'input window, operand 9, single buffered']
    #allocation14 [shape = 'u8[512]{0}', space=vmem, size = 0x400, scoped, tag = 'input window, operand 10, single buffered']
    #allocation15 [shape = 's32[1]{0}', space=sflag, size = 0x4, scoped, tag = 'scoped memory for tpu_custom_call.1']
    #allocation16 [shape = 'u8[512]{0}', space=vmem, size = 0x400, scoped, tag = 'input window, operand 14, single buffered']
    #allocation17 [shape = 'u8[512]{0}', space=vmem, size = 0x400, scoped, tag = 'input window, operand 16, single buffered']
    #allocation18 [shape = 's32[1]{0}', space=sflag, size = 0x4, scoped, tag = 'scoped memory for tpu_custom_call.1']
    #allocation19 [shape = 'u8[983040]{0}', space=vmem, size = 0xf0000, scoped, tag = 'input window, operand 17, single buffered']
    #allocation20 [shape = 'u8[24576]{0}', space=vmem, size = 0x6000, scoped, tag = 'input window, operand 18, single buffered']
    #allocation21 [shape = 's32[1]{0}', space=sflag, size = 0x4, scoped, tag = 'scoped memory for tpu_custom_call.1']
    #allocation22 [shape = 'u8[393216]{0}', space=vmem, size = 0x60000, scoped, tag = 'output window, operand 0']
    %24 = vsyncpa [#allocation3], 0
    %s25 = scalar_lea.sflag [#allocation3], 1
    %26 = vsyncpa %s25, 0
    %27 = vsyncpa [#allocation6], 0
    %28 = vsyncpa [#allocation9], 0
    %29 = vsyncpa [#allocation12], 0
    %30 = vsyncpa [#allocation15], 0
    %31 = vsyncpa [#allocation18], 0
    %32 = vsyncpa [#allocation21], 0
    %33 = vsyncpa [#allocation4], 0
    %s34 = scalar_lea.sflag [#allocation4], 1
    %35 = vsyncpa %s34, 0
    loop: start=0, step=1, limit=4
    $region2: #{tpu_custom_call.1} parent=1 // loop_pre_header
      _
    $region3: #{tpu_custom_call.1} parent=1 // loop_header
      %s37 = sphi 0, %s41
      %p38 = scmp.ge.s32.totalorder %s37, 4
      %s47 = sphi 0, %s49
      %s50 = sphi 0, %s47
      %s51 = sphi 0, %s50
      %s67 = sphi 0, %s51
      %s71 = sphi 0, %s71
      %s73 = sphi 0, %s71
      %s74 = sphi 0, %s73
      %s88 = sphi 0, %s74
      %s92 = sphi 0, %s92
      %s94 = sphi 0, %s92
      %s95 = sphi 0, %s94
      %s109 = sphi 0, %s95
      %s113 = sphi 0, %s113
      %s115 = sphi 0, %s113
      %s116 = sphi 0, %s115
      %s130 = sphi 0, %s116
      %s134 = sphi 0, %s134
      %s136 = sphi 0, %s134
      %s137 = sphi 0, %s136
      %s151 = sphi 0, %s137
      %s155 = sphi 0, %s155
      %s157 = sphi 0, %s155
      %s158 = sphi 0, %s157
      %s172 = sphi 0, %s158
      %s176 = sphi 0, %s176
      %s178 = sphi 0, %s176
      %s179 = sphi 0, %s178
      %s193 = sphi 0, %s179
      %s197 = sphi 0, %s197
      %s199 = sphi 0, %s197
      %s200 = sphi 0, %s199
      %s214 = sphi 0, %s200
      %s218 = sphi 0, %s218
      %s220 = sphi 0, %s218
      %s221 = sphi 0, %s220
      %s235 = sphi 0, %s221
      %s239 = sphi 0, %s239
      %s241 = sphi 0, %s239
      %s242 = sphi 0, %s241
      %s256 = sphi 0, %s242
      %s260 = sphi 0, %s260
      %s262 = sphi 0, %s260
      %s263 = sphi 0, %s262
      %s277 = sphi 0, %s263
      %s281 = sphi 0, %s281
      %s283 = sphi 0, %s281
      %s284 = sphi 0, %s283
      %s298 = sphi 0, %s284
      %s302 = sphi 0, %s302
      %s304 = sphi 0, %s302
      %s305 = sphi 0, %s304
      %s319 = sphi 0, %s305
      %s323 = sphi 0, %s323
      %s325 = sphi 0, %s323
      %s326 = sphi 0, %s325
      %s340 = sphi 0, %s326
      %s344 = sphi 0, %s344
      %s346 = sphi 0, %s344
      %s347 = sphi 0, %s346
      %s361 = sphi 0, %s347
      %s365 = sphi 0, %s365
      %s367 = sphi 0, %s365
      %s368 = sphi 0, %s367
      %s382 = sphi 0, %s368
      %s386 = sphi 0, %s386
      %s388 = sphi 0, %s386
      %s389 = sphi 0, %s388
      %s403 = sphi 0, %s389
      %s407 = sphi 0, %s407
      %s409 = sphi 0, %s407
      %s410 = sphi 0, %s409
      %s424 = sphi 0, %s410
      %s428 = sphi 0, %s428
      %s430 = sphi 0, %s428
      %s431 = sphi 0, %s430
      %s445 = sphi 0, %s431
      %s451 = sphi 0, %s453
      %s454 = sphi 0, %s451
      %s455 = sphi 0, %s454
      %s471 = sphi 0, %s455
    $region4: #{tpu_custom_call.1} parent=1 // loop_header_branch
      %40 = sbr.rel (%p38) target = $region8
    $region5: #{tpu_custom_call.1} parent=1 // loop_body
      %s42 = ssub.s32 %s37, 1
      %s43 = ssub.s32 %s37, 2
      %s44 = sadd.s32 %s37, 1
      %s45 = ssub.s32 %s37, %s44
      %p46 = scmp.eq.s32.totalorder %s45, 0
      %s48 = sadd.s32 %s47, 1
      %s49 = scalar_select %p46, %s47, %s48
      %p52 = pneg %p46
      %p53 = scmp.eq.s32.totalorder %s37, 1
      %p54 = por %p52, %p53
      %p55 = scmp.ne.s32.totalorder %s47, %s50
      %p56 = scmp.eq.s32.totalorder %s37, 0
      %p57 = por %p55, %p56
      %p58 = scmp.ne.s32.totalorder %s47, %s50
      %p59 = scmp.eq.s32.totalorder %s42, 1
      %p60 = por %p58, %p59
      %p61 = scmp.ne.s32.totalorder %s50, %s51
      %p62 = scmp.eq.s32.totalorder %s42, 0
      %p63 = por %p61, %p62
      %p64 = scmp.ne.s32.totalorder %s50, %s51
      %p65 = scmp.eq.s32.totalorder %s43, 1
      %p66 = por %p64, %p65
      %p68 = scmp.ne.s32.totalorder %s51, %s67
      %p69 = scmp.eq.s32.totalorder %s43, 0
      %p70 = por %p68, %p69
      %s72 = sadd.s32 %s71, 1
      %p75 = scmp.eq.s32.totalorder %s37, 1
      %p76 = scmp.ne.s32.totalorder %s71, %s73
      %p77 = scmp.eq.s32.totalorder %s37, 0
      %p78 = por %p76, %p77
      %p79 = scmp.ne.s32.totalorder %s71, %s73
      %p80 = scmp.eq.s32.totalorder %s42, 1
      %p81 = por %p79, %p80
      %p82 = scmp.ne.s32.totalorder %s73, %s74
      %p83 = scmp.eq.s32.totalorder %s42, 0
      %p84 = por %p82, %p83
      %p85 = scmp.ne.s32.totalorder %s73, %s74
      %p86 = scmp.eq.s32.totalorder %s43, 1
      %p87 = por %p85, %p86
      %p89 = scmp.ne.s32.totalorder %s74, %s88
      %p90 = scmp.eq.s32.totalorder %s43, 0
      %p91 = por %p89, %p90
      %s93 = sadd.s32 %s92, 1
      %p96 = scmp.eq.s32.totalorder %s37, 1
      %p97 = scmp.ne.s32.totalorder %s92, %s94
      %p98 = scmp.eq.s32.totalorder %s37, 0
      %p99 = por %p97, %p98
      %p100 = scmp.ne.s32.totalorder %s92, %s94
      %p101 = scmp.eq.s32.totalorder %s42, 1
      %p102 = por %p100, %p101
      %p103 = scmp.ne.s32.totalorder %s94, %s95
      %p104 = scmp.eq.s32.totalorder %s42, 0
      %p105 = por %p103, %p104
      %p106 = scmp.ne.s32.totalorder %s94, %s95
      %p107 = scmp.eq.s32.totalorder %s43, 1
      %p108 = por %p106, %p107
      %p110 = scmp.ne.s32.totalorder %s95, %s109
      %p111 = scmp.eq.s32.totalorder %s43, 0
      %p112 = por %p110, %p111
      %s114 = sadd.s32 %s113, 1
      %p117 = scmp.eq.s32.totalorder %s37, 1
      %p118 = scmp.ne.s32.totalorder %s113, %s115
      %p119 = scmp.eq.s32.totalorder %s37, 0
      %p120 = por %p118, %p119
      %p121 = scmp.ne.s32.totalorder %s113, %s115
      %p122 = scmp.eq.s32.totalorder %s42, 1
      %p123 = por %p121, %p122
      %p124 = scmp.ne.s32.totalorder %s115, %s116
      %p125 = scmp.eq.s32.totalorder %s42, 0
      %p126 = por %p124, %p125
      %p127 = scmp.ne.s32.totalorder %s115, %s116
      %p128 = scmp.eq.s32.totalorder %s43, 1
      %p129 = por %p127, %p128
      %p131 = scmp.ne.s32.totalorder %s116, %s130
      %p132 = scmp.eq.s32.totalorder %s43, 0
      %p133 = por %p131, %p132
      %s135 = sadd.s32 %s134, 1
      %p138 = scmp.eq.s32.totalorder %s37, 1
      %p139 = scmp.ne.s32.totalorder %s134, %s136
      %p140 = scmp.eq.s32.totalorder %s37, 0
      %p141 = por %p139, %p140
      %p142 = scmp.ne.s32.totalorder %s134, %s136
      %p143 = scmp.eq.s32.totalorder %s42, 1
      %p144 = por %p142, %p143
      %p145 = scmp.ne.s32.totalorder %s136, %s137
      %p146 = scmp.eq.s32.totalorder %s42, 0
      %p147 = por %p145, %p146
      %p148 = scmp.ne.s32.totalorder %s136, %s137
      %p149 = scmp.eq.s32.totalorder %s43, 1
      %p150 = por %p148, %p149
      %p152 = scmp.ne.s32.totalorder %s137, %s151
      %p153 = scmp.eq.s32.totalorder %s43, 0
      %p154 = por %p152, %p153
      %s156 = sadd.s32 %s155, 1
      %p159 = scmp.eq.s32.totalorder %s37, 1
      %p160 = scmp.ne.s32.totalorder %s155, %s157
      %p161 = scmp.eq.s32.totalorder %s37, 0
      %p162 = por %p160, %p161
      %p163 = scmp.ne.s32.totalorder %s155, %s157
      %p164 = scmp.eq.s32.totalorder %s42, 1
      %p165 = por %p163, %p164
      %p166 = scmp.ne.s32.totalorder %s157, %s158
      %p167 = scmp.eq.s32.totalorder %s42, 0
      %p168 = por %p166, %p167
      %p169 = scmp.ne.s32.totalorder %s157, %s158
      %p170 = scmp.eq.s32.totalorder %s43, 1
      %p171 = por %p169, %p170
      %p173 = scmp.ne.s32.totalorder %s158, %s172
      %p174 = scmp.eq.s32.totalorder %s43, 0
      %p175 = por %p173, %p174
      %s177 = sadd.s32 %s176, 1
      %p180 = scmp.eq.s32.totalorder %s37, 1
      %p181 = scmp.ne.s32.totalorder %s176, %s178
      %p182 = scmp.eq.s32.totalorder %s37, 0
      %p183 = por %p181, %p182
      %p184 = scmp.ne.s32.totalorder %s176, %s178
      %p185 = scmp.eq.s32.totalorder %s42, 1
      %p186 = por %p184, %p185
      %p187 = scmp.ne.s32.totalorder %s178, %s179
      %p188 = scmp.eq.s32.totalorder %s42, 0
      %p189 = por %p187, %p188
      %p190 = scmp.ne.s32.totalorder %s178, %s179
      %p191 = scmp.eq.s32.totalorder %s43, 1
      %p192 = por %p190, %p191
      %p194 = scmp.ne.s32.totalorder %s179, %s193
      %p195 = scmp.eq.s32.totalorder %s43, 0
      %p196 = por %p194, %p195
      %s198 = sadd.s32 %s197, 1
      %p201 = scmp.eq.s32.totalorder %s37, 1
      %p202 = scmp.ne.s32.totalorder %s197, %s199
      %p203 = scmp.eq.s32.totalorder %s37, 0
      %p204 = por %p202, %p203
      %p205 = scmp.ne.s32.totalorder %s197, %s199
      %p206 = scmp.eq.s32.totalorder %s42, 1
      %p207 = por %p205, %p206
      %p208 = scmp.ne.s32.totalorder %s199, %s200
      %p209 = scmp.eq.s32.totalorder %s42, 0
      %p210 = por %p208, %p209
      %p211 = scmp.ne.s32.totalorder %s199, %s200
      %p212 = scmp.eq.s32.totalorder %s43, 1
      %p213 = por %p211, %p212
      %p215 = scmp.ne.s32.totalorder %s200, %s214
      %p216 = scmp.eq.s32.totalorder %s43, 0
      %p217 = por %p215, %p216
      %s219 = sadd.s32 %s218, 1
      %p222 = scmp.eq.s32.totalorder %s37, 1
      %p223 = scmp.ne.s32.totalorder %s218, %s220
      %p224 = scmp.eq.s32.totalorder %s37, 0
      %p225 = por %p223, %p224
      %p226 = scmp.ne.s32.totalorder %s218, %s220
      %p227 = scmp.eq.s32.totalorder %s42, 1
      %p228 = por %p226, %p227
      %p229 = scmp.ne.s32.totalorder %s220, %s221
      %p230 = scmp.eq.s32.totalorder %s42, 0
      %p231 = por %p229, %p230
      %p232 = scmp.ne.s32.totalorder %s220, %s221
      %p233 = scmp.eq.s32.totalorder %s43, 1
      %p234 = por %p232, %p233
      %p236 = scmp.ne.s32.totalorder %s221, %s235
      %p237 = scmp.eq.s32.totalorder %s43, 0
      %p238 = por %p236, %p237
      %s240 = sadd.s32 %s239, 1
      %p243 = scmp.eq.s32.totalorder %s37, 1
      %p244 = scmp.ne.s32.totalorder %s239, %s241
      %p245 = scmp.eq.s32.totalorder %s37, 0
      %p246 = por %p244, %p245
      %p247 = scmp.ne.s32.totalorder %s239, %s241
      %p248 = scmp.eq.s32.totalorder %s42, 1
      %p249 = por %p247, %p248
      %p250 = scmp.ne.s32.totalorder %s241, %s242
      %p251 = scmp.eq.s32.totalorder %s42, 0
      %p252 = por %p250, %p251
      %p253 = scmp.ne.s32.totalorder %s241, %s242
      %p254 = scmp.eq.s32.totalorder %s43, 1
      %p255 = por %p253, %p254
      %p257 = scmp.ne.s32.totalorder %s242, %s256
      %p258 = scmp.eq.s32.totalorder %s43, 0
      %p259 = por %p257, %p258
      %s261 = sadd.s32 %s260, 1
      %p264 = scmp.eq.s32.totalorder %s37, 1
      %p265 = scmp.ne.s32.totalorder %s260, %s262
      %p266 = scmp.eq.s32.totalorder %s37, 0
      %p267 = por %p265, %p266
      %p268 = scmp.ne.s32.totalorder %s260, %s262
      %p269 = scmp.eq.s32.totalorder %s42, 1
      %p270 = por %p268, %p269
      %p271 = scmp.ne.s32.totalorder %s262, %s263
      %p272 = scmp.eq.s32.totalorder %s42, 0
      %p273 = por %p271, %p272
      %p274 = scmp.ne.s32.totalorder %s262, %s263
      %p275 = scmp.eq.s32.totalorder %s43, 1
      %p276 = por %p274, %p275
      %p278 = scmp.ne.s32.totalorder %s263, %s277
      %p279 = scmp.eq.s32.totalorder %s43, 0
      %p280 = por %p278, %p279
      %s282 = sadd.s32 %s281, 1
      %p285 = scmp.eq.s32.totalorder %s37, 1
      %p286 = scmp.ne.s32.totalorder %s281, %s283
      %p287 = scmp.eq.s32.totalorder %s37, 0
      %p288 = por %p286, %p287
      %p289 = scmp.ne.s32.totalorder %s281, %s283
      %p290 = scmp.eq.s32.totalorder %s42, 1
      %p291 = por %p289, %p290
      %p292 = scmp.ne.s32.totalorder %s283, %s284
      %p293 = scmp.eq.s32.totalorder %s42, 0
      %p294 = por %p292, %p293
      %p295 = scmp.ne.s32.totalorder %s283, %s284
      %p296 = scmp.eq.s32.totalorder %s43, 1
      %p297 = por %p295, %p296
      %p299 = scmp.ne.s32.totalorder %s284, %s298
      %p300 = scmp.eq.s32.totalorder %s43, 0
      %p301 = por %p299, %p300
      %s303 = sadd.s32 %s302, 1
      %p306 = scmp.eq.s32.totalorder %s37, 1
      %p307 = scmp.ne.s32.totalorder %s302, %s304
      %p308 = scmp.eq.s32.totalorder %s37, 0
      %p309 = por %p307, %p308
      %p310 = scmp.ne.s32.totalorder %s302, %s304
      %p311 = scmp.eq.s32.totalorder %s42, 1
      %p312 = por %p310, %p311
      %p313 = scmp.ne.s32.totalorder %s304, %s305
      %p314 = scmp.eq.s32.totalorder %s42, 0
      %p315 = por %p313, %p314
      %p316 = scmp.ne.s32.totalorder %s304, %s305
      %p317 = scmp.eq.s32.totalorder %s43, 1
      %p318 = por %p316, %p317
      %p320 = scmp.ne.s32.totalorder %s305, %s319
      %p321 = scmp.eq.s32.totalorder %s43, 0
      %p322 = por %p320, %p321
      %s324 = sadd.s32 %s323, 1
      %p327 = scmp.eq.s32.totalorder %s37, 1
      %p328 = scmp.ne.s32.totalorder %s323, %s325
      %p329 = scmp.eq.s32.totalorder %s37, 0
      %p330 = por %p328, %p329
      %p331 = scmp.ne.s32.totalorder %s323, %s325
      %p332 = scmp.eq.s32.totalorder %s42, 1
      %p333 = por %p331, %p332
      %p334 = scmp.ne.s32.totalorder %s325, %s326
      %p335 = scmp.eq.s32.totalorder %s42, 0
      %p336 = por %p334, %p335
      %p337 = scmp.ne.s32.totalorder %s325, %s326
      %p338 = scmp.eq.s32.totalorder %s43, 1
      %p339 = por %p337, %p338
      %p341 = scmp.ne.s32.totalorder %s326, %s340
      %p342 = scmp.eq.s32.totalorder %s43, 0
      %p343 = por %p341, %p342
      %s345 = sadd.s32 %s344, 1
      %p348 = scmp.eq.s32.totalorder %s37, 1
      %p349 = scmp.ne.s32.totalorder %s344, %s346
      %p350 = scmp.eq.s32.totalorder %s37, 0
      %p351 = por %p349, %p350
      %p352 = scmp.ne.s32.totalorder %s344, %s346
      %p353 = scmp.eq.s32.totalorder %s42, 1
      %p354 = por %p352, %p353
      %p355 = scmp.ne.s32.totalorder %s346, %s347
      %p356 = scmp.eq.s32.totalorder %s42, 0
      %p357 = por %p355, %p356
      %p358 = scmp.ne.s32.totalorder %s346, %s347
      %p359 = scmp.eq.s32.totalorder %s43, 1
      %p360 = por %p358, %p359
      %p362 = scmp.ne.s32.totalorder %s347, %s361
      %p363 = scmp.eq.s32.totalorder %s43, 0
      %p364 = por %p362, %p363
      %s366 = sadd.s32 %s365, 1
      %p369 = scmp.eq.s32.totalorder %s37, 1
      %p370 = scmp.ne.s32.totalorder %s365, %s367
      %p371 = scmp.eq.s32.totalorder %s37, 0
      %p372 = por %p370, %p371
      %p373 = scmp.ne.s32.totalorder %s365, %s367
      %p374 = scmp.eq.s32.totalorder %s42, 1
      %p375 = por %p373, %p374
      %p376 = scmp.ne.s32.totalorder %s367, %s368
      %p377 = scmp.eq.s32.totalorder %s42, 0
      %p378 = por %p376, %p377
      %p379 = scmp.ne.s32.totalorder %s367, %s368
      %p380 = scmp.eq.s32.totalorder %s43, 1
      %p381 = por %p379, %p380
      %p383 = scmp.ne.s32.totalorder %s368, %s382
      %p384 = scmp.eq.s32.totalorder %s43, 0
      %p385 = por %p383, %p384
      %s387 = sadd.s32 %s386, 1
      %p390 = scmp.eq.s32.totalorder %s37, 1
      %p391 = scmp.ne.s32.totalorder %s386, %s388
      %p392 = scmp.eq.s32.totalorder %s37, 0
      %p393 = por %p391, %p392
      %p394 = scmp.ne.s32.totalorder %s386, %s388
      %p395 = scmp.eq.s32.totalorder %s42, 1
      %p396 = por %p394, %p395
      %p397 = scmp.ne.s32.totalorder %s388, %s389
      %p398 = scmp.eq.s32.totalorder %s42, 0
      %p399 = por %p397, %p398
      %p400 = scmp.ne.s32.totalorder %s388, %s389
      %p401 = scmp.eq.s32.totalorder %s43, 1
      %p402 = por %p400, %p401
      %p404 = scmp.ne.s32.totalorder %s389, %s403
      %p405 = scmp.eq.s32.totalorder %s43, 0
      %p406 = por %p404, %p405
      %s408 = sadd.s32 %s407, 1
      %p411 = scmp.eq.s32.totalorder %s37, 1
      %p412 = scmp.ne.s32.totalorder %s407, %s409
      %p413 = scmp.eq.s32.totalorder %s37, 0
      %p414 = por %p412, %p413
      %p415 = scmp.ne.s32.totalorder %s407, %s409
      %p416 = scmp.eq.s32.totalorder %s42, 1
      %p417 = por %p415, %p416
      %p418 = scmp.ne.s32.totalorder %s409, %s410
      %p419 = scmp.eq.s32.totalorder %s42, 0
      %p420 = por %p418, %p419
      %p421 = scmp.ne.s32.totalorder %s409, %s410
      %p422 = scmp.eq.s32.totalorder %s43, 1
      %p423 = por %p421, %p422
      %p425 = scmp.ne.s32.totalorder %s410, %s424
      %p426 = scmp.eq.s32.totalorder %s43, 0
      %p427 = por %p425, %p426
      %s429 = sadd.s32 %s428, 1
      %p432 = scmp.eq.s32.totalorder %s37, 1
      %p433 = scmp.ne.s32.totalorder %s428, %s430
      %p434 = scmp.eq.s32.totalorder %s37, 0
      %p435 = por %p433, %p434
      %p436 = scmp.ne.s32.totalorder %s428, %s430
      %p437 = scmp.eq.s32.totalorder %s42, 1
      %p438 = por %p436, %p437
      %p439 = scmp.ne.s32.totalorder %s430, %s431
      %p440 = scmp.eq.s32.totalorder %s42, 0
      %p441 = por %p439, %p440
      %p442 = scmp.ne.s32.totalorder %s430, %s431
      %p443 = scmp.eq.s32.totalorder %s43, 1
      %p444 = por %p442, %p443
      %p446 = scmp.ne.s32.totalorder %s431, %s445
      %p447 = scmp.eq.s32.totalorder %s43, 0
      %p448 = por %p446, %p447
      %s449 = ssub.s32 %s37, %s44
      %p450 = scmp.eq.s32.totalorder %s449, 0
      %s452 = sadd.s32 %s451, 1
      %s453 = scalar_select %p450, %s451, %s452
      %p456 = pneg %p450
      %p457 = scmp.eq.s32.totalorder %s37, 1
      %p458 = por %p456, %p457
      %p459 = scmp.ne.s32.totalorder %s451, %s454
      %p460 = scmp.eq.s32.totalorder %s37, 0
      %p461 = por %p459, %p460
      %p462 = scmp.ne.s32.totalorder %s451, %s454
      %p463 = scmp.eq.s32.totalorder %s42, 1
      %p464 = por %p462, %p463
      %p465 = scmp.ne.s32.totalorder %s454, %s455
      %p466 = scmp.eq.s32.totalorder %s42, 0
      %p467 = por %p465, %p466
      %p468 = scmp.ne.s32.totalorder %s454, %s455
      %p469 = scmp.eq.s32.totalorder %s43, 1
      %p470 = por %p468, %p469
      %p472 = scmp.ne.s32.totalorder %s455, %s471
      %p473 = scmp.eq.s32.totalorder %s43, 0
      %p474 = por %p472, %p473
      %p475 = scmp.le.s32.totalorder 1, %s37
      %p476 = scmp.lt.s32.totalorder %s37, 3
      %p477 = pnand %p475, %p476
      %p478 = pneg %p477
      // Predicated region
      $region9: #{tpu_custom_call.1} parent=5 // pred_check
        _
      $region10: #{tpu_custom_call.1} parent=5 // pred_check_branch
        %480 = sbr.rel (%p477) target = $region12
      $region11: #{tpu_custom_call.1} parent=5 // pred_region
        %s481 = ssub.s32 %s37, 1
        // Predicated region
        $region13: #{tpu_custom_call.1} parent=11 // pred_check
          %p482 = pneg %p84
        $region14: #{tpu_custom_call.1} parent=11 // pred_check_branch
          %484 = sbr.rel (%p482) target = $region16
        $region15: #{tpu_custom_call.1} parent=11 // pred_region
          %s486 = ssub.s32 640, 640
          %487 = vsyncadd [#allocation6], %s486
          %s488 = sshll.u32 [#allocation5], 4
          %s489 = int_to_ptr.vmem [resolvable:$true] %s488
          %494 = dma.hbm_to_vmem [thread:$0]  %s1, 640, %s489, [#allocation6], 128, 128, 8
        $region16: #{tpu_custom_call.1} parent=11 // pred_fallthru
          _
        // Predicated region
        $region17: #{tpu_custom_call.1} parent=11 // pred_check
          %p495 = pneg %p105
        $region18: #{tpu_custom_call.1} parent=11 // pred_check_branch
          %497 = sbr.rel (%p495) target = $region20
        $region19: #{tpu_custom_call.1} parent=11 // pred_region
          %s499 = ssub.s32 16, 16
          %500 = vsyncadd [#allocation6], %s499
          %s502 = sshll.u32 [#allocation7], 4
          %s503 = int_to_ptr.vmem [resolvable:$true] %s502
          %505 = dma.hbm_to_vmem [thread:$0]  %s2, 16, %s503, [#allocation6]
        $region20: #{tpu_custom_call.1} parent=11 // pred_fallthru
          _
        // Predicated region
        $region21: #{tpu_custom_call.1} parent=11 // pred_check
          %p506 = pneg %p126
        $region22: #{tpu_custom_call.1} parent=11 // pred_check_branch
          %508 = sbr.rel (%p506) target = $region24
        $region23: #{tpu_custom_call.1} parent=11 // pred_region
          %s510 = ssub.s32 16, 16
          %511 = vsyncadd [#allocation9], %s510
          %s513 = sshll.u32 [#allocation8], 4
          %s514 = int_to_ptr.vmem [resolvable:$true] %s513
          %516 = dma.hbm_to_vmem [thread:$0]  %s3, 16, %s514, [#allocation9]
        $region24: #{tpu_custom_call.1} parent=11 // pred_fallthru
          _
        // Predicated region
        $region25: #{tpu_custom_call.1} parent=11 // pred_check
          %p517 = pneg %p147
        $region26: #{tpu_custom_call.1} parent=11 // pred_check_branch
          %519 = sbr.rel (%p517) target = $region28
        $region27: #{tpu_custom_call.1} parent=11 // pred_region
          %s521 = ssub.s32 16, 16
          %522 = vsyncadd [#allocation9], %s521
          %s524 = sshll.u32 [#allocation10], 4
          %s525 = int_to_ptr.vmem [resolvable:$true] %s524
          %527 = dma.hbm_to_vmem [thread:$0]  %s4, 16, %s525, [#allocation9]
        $region28: #{tpu_custom_call.1} parent=11 // pred_fallthru
          _
        // Predicated region
        $region29: #{tpu_custom_call.1} parent=11 // pred_check
          %p528 = pneg %p168
        $region30: #{tpu_custom_call.1} parent=11 // pred_check_branch
          %530 = sbr.rel (%p528) target = $region32
        $region31: #{tpu_custom_call.1} parent=11 // pred_region
          _
        $region32: #{tpu_custom_call.1} parent=11 // pred_fallthru
          _
        // Predicated region
        $region33: #{tpu_custom_call.1} parent=11 // pred_check
          %p531 = pneg %p189
        $region34: #{tpu_custom_call.1} parent=11 // pred_check_branch
          %533 = sbr.rel (%p531) target = $region36
        $region35: #{tpu_custom_call.1} parent=11 // pred_region
          _
        $region36: #{tpu_custom_call.1} parent=11 // pred_fallthru
          _
        // Predicated region
        $region37: #{tpu_custom_call.1} parent=11 // pred_check
          %p534 = pneg %p210
        $region38: #{tpu_custom_call.1} parent=11 // pred_check_branch
          %536 = sbr.rel (%p534) target = $region40
        $region39: #{tpu_custom_call.1} parent=11 // pred_region
          _
        $region40: #{tpu_custom_call.1} parent=11 // pred_fallthru
          _
        // Predicated region
        $region41: #{tpu_custom_call.1} parent=11 // pred_check
          %p537 = pneg %p231
        $region42: #{tpu_custom_call.1} parent=11 // pred_check_branch
          %539 = sbr.rel (%p537) target = $region44
        $region43: #{tpu_custom_call.1} parent=11 // pred_region
          %s541 = ssub.s32 16, 16
          %542 = vsyncadd [#allocation12], %s541
          %s544 = sshll.u32 [#allocation11], 4
          %s545 = int_to_ptr.vmem [resolvable:$true] %s544
          %547 = dma.hbm_to_vmem [thread:$0]  %s8, 16, %s545, [#allocation12]
        $region44: #{tpu_custom_call.1} parent=11 // pred_fallthru
          _
        // Predicated region
        $region45: #{tpu_custom_call.1} parent=11 // pred_check
          %p548 = pneg %p252
        $region46: #{tpu_custom_call.1} parent=11 // pred_check_branch
          %550 = sbr.rel (%p548) target = $region48
        $region47: #{tpu_custom_call.1} parent=11 // pred_region
          %s552 = ssub.s32 16, 16
          %553 = vsyncadd [#allocation12], %s552
          %s555 = sshll.u32 [#allocation13], 4
          %s556 = int_to_ptr.vmem [resolvable:$true] %s555
          %558 = dma.hbm_to_vmem [thread:$0]  %s9, 16, %s556, [#allocation12]
        $region48: #{tpu_custom_call.1} parent=11 // pred_fallthru
          _
        // Predicated region
        $region49: #{tpu_custom_call.1} parent=11 // pred_check
          %p559 = pneg %p273
        $region50: #{tpu_custom_call.1} parent=11 // pred_check_branch
          %561 = sbr.rel (%p559) target = $region52
        $region51: #{tpu_custom_call.1} parent=11 // pred_region
          %s563 = ssub.s32 16, 16
          %564 = vsyncadd [#allocation15], %s563
          %s566 = sshll.u32 [#allocation14], 4
          %s567 = int_to_ptr.vmem [resolvable:$true] %s566
          %569 = dma.hbm_to_vmem [thread:$0]  %s10, 16, %s567, [#allocation15]
        $region52: #{tpu_custom_call.1} parent=11 // pred_fallthru
          _
        // Predicated region
        $region53: #{tpu_custom_call.1} parent=11 // pred_check
          %p570 = pneg %p294
        $region54: #{tpu_custom_call.1} parent=11 // pred_check_branch
          %572 = sbr.rel (%p570) target = $region56
        $region55: #{tpu_custom_call.1} parent=11 // pred_region
          _
        $region56: #{tpu_custom_call.1} parent=11 // pred_fallthru
          _
        // Predicated region
        $region57: #{tpu_custom_call.1} parent=11 // pred_check
          %p573 = pneg %p315
        $region58: #{tpu_custom_call.1} parent=11 // pred_check_branch
          %575 = sbr.rel (%p573) target = $region60
        $region59: #{tpu_custom_call.1} parent=11 // pred_region
          _
        $region60: #{tpu_custom_call.1} parent=11 // pred_fallthru
          _
        // Predicated region
        $region61: #{tpu_custom_call.1} parent=11 // pred_check
          %p576 = pneg %p336
        $region62: #{tpu_custom_call.1} parent=11 // pred_check_branch
          %578 = sbr.rel (%p576) target = $region64
        $region63: #{tpu_custom_call.1} parent=11 // pred_region
          _
        $region64: #{tpu_custom_call.1} parent=11 // pred_fallthru
          _
        // Predicated region
        $region65: #{tpu_custom_call.1} parent=11 // pred_check
          %p579 = pneg %p357
        $region66: #{tpu_custom_call.1} parent=11 // pred_check_branch
          %581 = sbr.rel (%p579) target = $region68
        $region67: #{tpu_custom_call.1} parent=11 // pred_region
          %s583 = ssub.s32 16, 16
          %584 = vsyncadd [#allocation15], %s583
          %s586 = sshll.u32 [#allocation16], 4
          %s587 = int_to_ptr.vmem [resolvable:$true] %s586
          %589 = dma.hbm_to_vmem [thread:$0]  %s14, 16, %s587, [#allocation15]
        $region68: #{tpu_custom_call.1} parent=11 // pred_fallthru
          _
        // Predicated region
        $region69: #{tpu_custom_call.1} parent=11 // pred_check
          %p590 = pneg %p378
        $region70: #{tpu_custom_call.1} parent=11 // pred_check_branch
          %592 = sbr.rel (%p590) target = $region72
        $region71: #{tpu_custom_call.1} parent=11 // pred_region
          _
        $region72: #{tpu_custom_call.1} parent=11 // pred_fallthru
          _
        // Predicated region
        $region73: #{tpu_custom_call.1} parent=11 // pred_check
          %p593 = pneg %p399
        $region74: #{tpu_custom_call.1} parent=11 // pred_check_branch
          %595 = sbr.rel (%p593) target = $region76
        $region75: #{tpu_custom_call.1} parent=11 // pred_region
          %s597 = ssub.s32 16, 16
          %598 = vsyncadd [#allocation18], %s597
          %s600 = sshll.u32 [#allocation17], 4
          %s601 = int_to_ptr.vmem [resolvable:$true] %s600
          %603 = dma.hbm_to_vmem [thread:$0]  %s16, 16, %s601, [#allocation18]
        $region76: #{tpu_custom_call.1} parent=11 // pred_fallthru
          _
        // Predicated region
        $region77: #{tpu_custom_call.1} parent=11 // pred_check
          %p604 = pneg %p420
        $region78: #{tpu_custom_call.1} parent=11 // pred_check_branch
          %606 = sbr.rel (%p604) target = $region80
        $region79: #{tpu_custom_call.1} parent=11 // pred_region
          %s608 = ssub.s32 30720, 30720
          %609 = vsyncadd [#allocation18], %s608
          %s610 = sshll.u32 [#allocation19], 4
          %s611 = int_to_ptr.vmem [resolvable:$true] %s610
          %616 = dma.hbm_to_vmem [thread:$0]  %s17, 30720, %s611, [#allocation18], 3072, 3072, 192
        $region80: #{tpu_custom_call.1} parent=11 // pred_fallthru
          _
        // Predicated region
        $region81: #{tpu_custom_call.1} parent=11 // pred_check
          %p617 = pneg %p441
        $region82: #{tpu_custom_call.1} parent=11 // pred_check_branch
          %619 = sbr.rel (%p617) target = $region84
        $region83: #{tpu_custom_call.1} parent=11 // pred_region
          %s621 = ssub.s32 768, 768
          %622 = vsyncadd [#allocation21], %s621
          %s624 = sshll.u32 [#allocation20], 4
          %s625 = int_to_ptr.vmem [resolvable:$true] %s624
          %627 = dma.hbm_to_vmem [thread:$0]  %s18, 768, %s625, [#allocation21]
        $region84: #{tpu_custom_call.1} parent=11 // pred_fallthru
          _
      $region12: #{tpu_custom_call.1} parent=5 // pred_fallthru
        _
      %p628 = scmp.lt.s32.totalorder %s37, 2
      // Predicated region
      $region85: #{tpu_custom_call.1} parent=5 // pred_check
        %p629 = pneg %p628
      $region86: #{tpu_custom_call.1} parent=5 // pred_check_branch
        %631 = sbr.rel (%p629) target = $region88
      $region87: #{tpu_custom_call.1} parent=5 // pred_region
        // Predicated region
        $region89: #{tpu_custom_call.1} parent=87 // pred_check
          %p632 = pneg %p57
        $region90: #{tpu_custom_call.1} parent=87 // pred_check_branch
          %634 = sbr.rel (%p632) target = $region92
        $region91: #{tpu_custom_call.1} parent=87 // pred_region
          %s635 = sand.u32 %s47, 1
          %s636 = scalar_lea.sflag [#allocation3], %s635
          %s637 = sand.u32 %s47, 1
          %s638 = smul.addr %s637, 64
          %s639 = scalar_lea.vmem [#allocation2], %s638
          %s640 = smul.u32 8, %s37
          %s642 = ssub.s32 1024, 1024
          %643 = vsyncadd %s636, %s642
          %s644 = smul.addr %s640, 128
          %s645 = scalar_lea.hbm %s0, %s644
          %s646 = sshll.u32 %s639, 4
          %s647 = int_to_ptr.vmem [resolvable:$true] %s646
          %652 = dma.hbm_to_vmem [thread:$0]  %s645, 1024, %s647, %s636, 128, 128, 8
        $region92: #{tpu_custom_call.1} parent=87 // pred_fallthru
          _
      $region88: #{tpu_custom_call.1} parent=5 // pred_fallthru
        _
      %p653 = scmp.le.s32.totalorder 1, %s37
      %p654 = scmp.lt.s32.totalorder %s37, 3
      %p655 = pnand %p653, %p654
      %p656 = pneg %p655
      // Predicated region
      $region93: #{tpu_custom_call.1} parent=5 // pred_check
        _
      $region94: #{tpu_custom_call.1} parent=5 // pred_check_branch
        %658 = sbr.rel (%p655) target = $region96
      $region95: #{tpu_custom_call.1} parent=5 // pred_region
        %s659 = ssub.s32 %s37, 1
        %s660 = sand.u32 %s50, 1
        %s661 = scalar_lea.sflag [#allocation3], %s660
        %s662 = sand.u32 %s50, 1
        %s663 = smul.addr %s662, 64
        %s664 = scalar_lea.vmem [#allocation2], %s663
        // Predicated region
        $region97: #{tpu_custom_call.1} parent=95 // pred_check
          %p665 = pneg %p63
        $region98: #{tpu_custom_call.1} parent=95 // pred_check_branch
          %667 = sbr.rel (%p665) target = $region100
        $region99: #{tpu_custom_call.1} parent=95 // pred_region
          %668 = dma.done %s661, 1024
        $region100: #{tpu_custom_call.1} parent=95 // pred_fallthru
          _
        // Predicated region
        $region101: #{tpu_custom_call.1} parent=95 // pred_check
          %p669 = pneg %p84
        $region102: #{tpu_custom_call.1} parent=95 // pred_check_branch
          %671 = sbr.rel (%p669) target = $region104
        $region103: #{tpu_custom_call.1} parent=95 // pred_region
          %672 = dma.done [#allocation6], 640
        $region104: #{tpu_custom_call.1} parent=95 // pred_fallthru
          _
        // Predicated region
        $region105: #{tpu_custom_call.1} parent=95 // pred_check
          %p673 = pneg %p105
        $region106: #{tpu_custom_call.1} parent=95 // pred_check_branch
          %675 = sbr.rel (%p673) target = $region108
        $region107: #{tpu_custom_call.1} parent=95 // pred_region
          %676 = dma.done [#allocation6], 16
        $region108: #{tpu_custom_call.1} parent=95 // pred_fallthru
          _
        // Predicated region
        $region109: #{tpu_custom_call.1} parent=95 // pred_check
          %p677 = pneg %p126
        $region110: #{tpu_custom_call.1} parent=95 // pred_check_branch
          %679 = sbr.rel (%p677) target = $region112
        $region111: #{tpu_custom_call.1} parent=95 // pred_region
          %680 = dma.done [#allocation9], 16
        $region112: #{tpu_custom_call.1} parent=95 // pred_fallthru
          _
        // Predicated region
        $region113: #{tpu_custom_call.1} parent=95 // pred_check
          %p681 = pneg %p147
        $region114: #{tpu_custom_call.1} parent=95 // pred_check_branch
          %683 = sbr.rel (%p681) target = $region116
        $region115: #{tpu_custom_call.1} parent=95 // pred_region
          %684 = dma.done [#allocation9], 16
        $region116: #{tpu_custom_call.1} parent=95 // pred_fallthru
          _
        // Predicated region
        $region117: #{tpu_custom_call.1} parent=95 // pred_check
          %p685 = pneg %p231
        $region118: #{tpu_custom_call.1} parent=95 // pred_check_branch
          %687 = sbr.rel (%p685) target = $region120
        $region119: #{tpu_custom_call.1} parent=95 // pred_region
          %688 = dma.done [#allocation12], 16
        $region120: #{tpu_custom_call.1} parent=95 // pred_fallthru
          _
        // Predicated region
        $region121: #{tpu_custom_call.1} parent=95 // pred_check
          %p689 = pneg %p252
        $region122: #{tpu_custom_call.1} parent=95 // pred_check_branch
          %691 = sbr.rel (%p689) target = $region124
        $region123: #{tpu_custom_call.1} parent=95 // pred_region
          %692 = dma.done [#allocation12], 16
        $region124: #{tpu_custom_call.1} parent=95 // pred_fallthru
          _
        // Predicated region
        $region125: #{tpu_custom_call.1} parent=95 // pred_check
          %p693 = pneg %p273
        $region126: #{tpu_custom_call.1} parent=95 // pred_check_branch
          %695 = sbr.rel (%p693) target = $region128
        $region127: #{tpu_custom_call.1} parent=95 // pred_region
          %696 = dma.done [#allocation15], 16
        $region128: #{tpu_custom_call.1} parent=95 // pred_fallthru
          _
        // Predicated region
        $region129: #{tpu_custom_call.1} parent=95 // pred_check
          %p697 = pneg %p357
        $region130: #{tpu_custom_call.1} parent=95 // pred_check_branch
          %699 = sbr.rel (%p697) target = $region132
        $region131: #{tpu_custom_call.1} parent=95 // pred_region
          %700 = dma.done [#allocation15], 16
        $region132: #{tpu_custom_call.1} parent=95 // pred_fallthru
          _
        // Predicated region
        $region133: #{tpu_custom_call.1} parent=95 // pred_check
          %p701 = pneg %p399
        $region134: #{tpu_custom_call.1} parent=95 // pred_check_branch
          %703 = sbr.rel (%p701) target = $region136
        $region135: #{tpu_custom_call.1} parent=95 // pred_region
          %704 = dma.done [#allocation18], 16
        $region136: #{tpu_custom_call.1} parent=95 // pred_fallthru
          _
        // Predicated region
        $region137: #{tpu_custom_call.1} parent=95 // pred_check
          %p705 = pneg %p420
        $region138: #{tpu_custom_call.1} parent=95 // pred_check_branch
          %707 = sbr.rel (%p705) target = $region140
        $region139: #{tpu_custom_call.1} parent=95 // pred_region
          %708 = dma.done [#allocation18], 30720
        $region140: #{tpu_custom_call.1} parent=95 // pred_fallthru
          _
        // Predicated region
        $region141: #{tpu_custom_call.1} parent=95 // pred_check
          %p709 = pneg %p441
        $region142: #{tpu_custom_call.1} parent=95 // pred_check_branch
          %711 = sbr.rel (%p709) target = $region144
        $region143: #{tpu_custom_call.1} parent=95 // pred_region
          %712 = dma.done [#allocation21], 768
        $region144: #{tpu_custom_call.1} parent=95 // pred_fallthru
          _
        %s713 = sand.u32 %s50, 1
        %s714 = scalar_lea.sflag [#allocation3], %s713
        %s715 = sand.u32 %s50, 1
        %s716 = smul.addr %s715, 64
        %s717 = scalar_lea.vmem [#allocation2], %s716
        %p718 = pneg %p63
        %p719 = pneg %p60
        %p720 = pneg %p84
        %p721 = pneg %p81
        %p722 = pneg %p105
        %p723 = pneg %p102
        %p724 = pneg %p126
        %p725 = pneg %p123
        %p726 = pneg %p147
        %p727 = pneg %p144
        %p728 = pneg %p168
        %p729 = pneg %p165
        %p730 = pneg %p189
        %p731 = pneg %p186
        %p732 = pneg %p210
        %p733 = pneg %p207
        %p734 = pneg %p231
        %p735 = pneg %p228
        %p736 = pneg %p252
        %p737 = pneg %p249
        %p738 = pneg %p273
        %p739 = pneg %p270
        %p740 = pneg %p294
        %p741 = pneg %p291
        %p742 = pneg %p315
        %p743 = pneg %p312
        %p744 = pneg %p336
        %p745 = pneg %p333
        %p746 = pneg %p357
        %p747 = pneg %p354
        %p748 = pneg %p378
        %p749 = pneg %p375
        %p750 = pneg %p399
        %p751 = pneg %p396
        %p752 = pneg %p420
        %p753 = pneg %p417
        %p754 = pneg %p441
        %p755 = pneg %p438
        %p756 = pneg %p467
        %p757 = pneg %p464
        %s758 = sand.u32 %s454, 1
        %s759 = scalar_lea.sflag [#allocation4], %s758
        %s760 = sand.u32 %s454, 1
        %s761 = smul.addr %s760, 384
        %s762 = scalar_lea.vmem [#allocation22], %s761
        %s763 = smul.u32 8, %s42
        %v765 = vld [vmem:[%s664] sm:$0xff]
        %v766 = vld [vmem:[%s664 + $0x8] sm:$0xff]
        %v767 = vld [vmem:[%s664 + $0x10] sm:$0xff]
        %v768 = vld [vmem:[%s664 + $0x18] sm:$0xff]
        %v769 = vld [vmem:[%s664 + $0x20] sm:$0xff]
        %v770 = vld [vmem:[%s664 + $0x28] sm:$0xff]
        %v771 = vld [vmem:[%s664 + $0x30] sm:$0xff]
        %v772 = vld [vmem:[%s664 + $0x38] sm:$0xff]
        %v773 = vld [vmem:[#allocation5] sm:$0xff]
        %v774 = vld [vmem:[#allocation5 + $0x8] sm:$0xff]
        %v775 = vld [vmem:[#allocation5 + $0x10] sm:$0xff]
        %v776 = vld [vmem:[#allocation5 + $0x18] sm:$0xff]
        %v777 = vld [vmem:[#allocation5 + $0x20] sm:$0xff]
        %v778 = vld [vmem:[#allocation7] sm:$0x1]
        %v780 = vlaneseq
        %v781 = vshrl.u32 %v780, 7
        %v782 = vsub.s32 0, %v781
        %v783 = vrot.slane %v778, %v782
        %vm785 = vcmask 326656
        %v787 = vsel %vm785, %v765, 0
        %v790 = vsel %vm785, %v766, 0
        %v793 = vsel %vm785, %v767, 0
        %v796 = vsel %vm785, %v768, 0
        %v799 = vsel %vm785, %v769, 0
        %v802 = vsel %vm785, %v770, 0
        %v805 = vsel %vm785, %v771, 0
        %v808 = vsel %vm785, %v772, 0
        %810 = vmatprep.subr.mxu0 0.0
        %811 = vmatpush1.msra.mxu0 %v773
        %812 = vmatprep.subr.mxu0 0.0
        %813 = vmatpush1.msra.mxu0 %v774
        %814 = vmatprep.subr.mxu0 0.0
        %815 = vmatpush1.msra.mxu0 %v775
        %816 = vmatprep.subr.mxu0 0.0
        %817 = vmatpush1.msra.mxu0 %v776
        %818 = vmatprep.subr.mxu0 0.0
        %819 = vmatpush1.msra.mxu0 %v777
        %820 = vmatprep.subr.mxu0 0.0
        %821 = vmatpush1.msra.mxu0 0.0
        %822 = vmatprep.subr.mxu0 0.0
        %823 = vmatpush1.msra.mxu0 0.0
        %824 = vmatprep.subr.mxu0 0.0
        %825 = vmatpush1.msra.mxu0 0.0
        %826 = vmatprep.subr.mxu0 0.0
        %827 = vmatpush1.msra.mxu0 0.0
        %828 = vmatprep.subr.mxu0 0.0
        %829 = vmatpush1.msra.mxu0 0.0
        %830 = vmatprep.subr.mxu0 0.0
        %831 = vmatpush1.msra.mxu0 0.0
        %832 = vmatprep.subr.mxu0 0.0
        %833 = vmatpush1.msra.mxu0 0.0
        %834 = vmatprep.subr.mxu0 0.0
        %835 = vmatpush1.msra.mxu0 0.0
        %836 = vmatprep.subr.mxu0 0.0
        %837 = vmatpush1.msra.mxu0 0.0
        %838 = vmatprep.subr.mxu0 0.0
        %839 = vmatpush1.msra.mxu0 0.0
        %840 = vmatprep.subr.mxu0 0.0
        %841 = vmatpush1.msra.mxu0 0.0
        %842 = vmatprep.subr.mxu0 0.0
        %843 = vmatpush1.msra.mxu0 0.0
        %844 = vmatprep.subr.mxu0 0.0
        %845 = vmatpush1.msra.mxu0 0.0
        %846 = vmatprep.subr.mxu0 0.0
        %847 = vmatpush1.msra.mxu0 0.0
        %848 = vmatprep.subr.mxu0 0.0
        %849 = vmatpush1.msra.mxu0 0.0
        %850 = vmatprep.subr.mxu0 0.0
        %851 = vmatpush1.msra.mxu0 0.0
        %852 = vmatprep.subr.mxu0 0.0
        %853 = vmatpush1.msra.mxu0 0.0
        %854 = vmatprep.subr.mxu0 0.0
        %855 = vmatpush1.msra.mxu0 0.0
        %856 = vmatprep.subr.mxu0 0.0
        %857 = vmatpush1.msra.mxu0 0.0
        %858 = vmatprep.subr.mxu0 0.0
        %859 = vmatpush1.msra.mxu0 0.0
        %860 = vmatprep.subr.mxu0 0.0
        %861 = vmatpush1.msra.mxu0 0.0
        %862 = vmatprep.subr.mxu0 0.0
        %863 = vmatpush1.msra.mxu0 0.0
        %864 = vmatprep.subr.mxu0 0.0
        %865 = vmatpush1.msra.mxu0 0.0
        %866 = vmatprep.subr.mxu0 0.0
        %867 = vmatpush1.msra.mxu0 0.0
        %868 = vmatprep.subr.mxu0 0.0
        %869 = vmatpush1.msra.mxu0 0.0
        %870 = vmatprep.subr.mxu0 0.0
        %871 = vmatpush1.msra.mxu0 0.0
        %872 = vmatprep.subr.mxu0 0.0
        %873 = vmatpush1.msra.mxu0 0.0
        %874 = vmatprep.mubr.f32.mxu0 0.0
        %875 = vmatmul.mubr.f32.gmra.mrb[0].mxu0 %v787
        %v876 = vpop.f32.mrb[0].mxu0
        %v877 = vadd.f32 %v783, %v876
        %v878 = vpop.f32.mrb[0].mxu0
        %879 = vmatprep.mubr.f32.mxu0 0.0
        %880 = vmatmul.mubr.f32.gmra.mrb[0].mxu0 %v790
        %v881 = vpop.f32.mrb[0].mxu0
        %v882 = vadd.f32 %v783, %v881
        %v883 = vpop.f32.mrb[0].mxu0
        %884 = vmatprep.mubr.f32.mxu0 0.0
        %885 = vmatmul.mubr.f32.gmra.mrb[0].mxu0 %v793
        %v886 = vpop.f32.mrb[0].mxu0
        %v887 = vadd.f32 %v783, %v886
        %v888 = vpop.f32.mrb[0].mxu0
        %889 = vmatprep.mubr.f32.mxu0 0.0
        %890 = vmatmul.mubr.f32.gmra.mrb[0].mxu0 %v796
        %v891 = vpop.f32.mrb[0].mxu0
        %v892 = vadd.f32 %v783, %v891
        %v893 = vpop.f32.mrb[0].mxu0
        %894 = vmatprep.mubr.f32.mxu0 0.0
        %895 = vmatmul.mubr.f32.gmra.mrb[0].mxu0 %v799
        %v896 = vpop.f32.mrb[0].mxu0
        %v897 = vadd.f32 %v783, %v896
        %v898 = vpop.f32.mrb[0].mxu0
        %899 = vmatprep.mubr.f32.mxu0 0.0
        %900 = vmatmul.mubr.f32.gmra.mrb[0].mxu0 %v802
        %v901 = vpop.f32.mrb[0].mxu0
        %v902 = vadd.f32 %v783, %v901
        %v903 = vpop.f32.mrb[0].mxu0
        %904 = vmatprep.mubr.f32.mxu0 0.0
        %905 = vmatmul.mubr.f32.gmra.mrb[0].mxu0 %v805
        %v906 = vpop.f32.mrb[0].mxu0
        %v907 = vadd.f32 %v783, %v906
        %v908 = vpop.f32.mrb[0].mxu0
        %909 = vmatprep.mubr.f32.mxu0 0.0
        %910 = vmatmul.mubr.f32.gmra.mrb[0].mxu0 %v808
        %v911 = vpop.f32.mrb[0].mxu0
        %v912 = vadd.f32 %v783, %v911
        %v913 = vpop.f32.mrb[0].mxu0
        %914 = vdwg.mxu0
        %v915 = vld [vmem:[#allocation8] sm:$0x1]
        %v916 = vld [vmem:[#allocation10] sm:$0x1]
        %vm917 = vcmask 654336
        %v918 = vsel %vm917, %v877, 0.0
        %919 = vadd.xlane.f32.xlu0 %v918
        %v920 = vpop.xlane.xlu0 %919
        %v921 = vsel %vm917, %v882, 0.0
        %922 = vadd.xlane.f32.xlu0 %v921
        %v923 = vpop.xlane.xlu0 %922
        %v924 = vsel %vm917, %v887, 0.0
        %925 = vadd.xlane.f32.xlu0 %v924
        %v926 = vpop.xlane.xlu0 %925
        %v927 = vsel %vm917, %v892, 0.0
        %928 = vadd.xlane.f32.xlu0 %v927
        %v929 = vpop.xlane.xlu0 %928
        %v930 = vsel %vm917, %v897, 0.0
        %931 = vadd.xlane.f32.xlu0 %v930
        %v932 = vpop.xlane.xlu0 %931
        %v933 = vsel %vm917, %v902, 0.0
        %934 = vadd.xlane.f32.xlu0 %v933
        %v935 = vpop.xlane.xlu0 %934
        %v936 = vsel %vm917, %v907, 0.0
        %937 = vadd.xlane.f32.xlu0 %v936
        %v938 = vpop.xlane.xlu0 %937
        %v939 = vsel %vm917, %v912, 0.0
        %940 = vadd.xlane.f32.xlu0 %v939
        %v941 = vpop.xlane.xlu0 %940
        %v942 = vrcp.pop 80.0
        %v943 = vmul.f32 %v920, %v942
        %v944 = vmul.f32 %v923, %v942
        %v945 = vmul.f32 %v926, %v942
        %v946 = vmul.f32 %v929, %v942
        %v947 = vmul.f32 %v932, %v942
        %v948 = vmul.f32 %v935, %v942
        %v949 = vmul.f32 %v938, %v942
        %v950 = vmul.f32 %v941, %v942
        %v951 = vsub.f32 %v877, %v943
        %v952 = vsub.f32 %v882, %v944
        %v953 = vsub.f32 %v887, %v945
        %v954 = vsub.f32 %v892, %v946
        %v955 = vsub.f32 %v897, %v947
        %v956 = vsub.f32 %v902, %v948
        %v957 = vsub.f32 %v907, %v949
        %v958 = vsub.f32 %v912, %v950
        %v959 = vmul.f32 %v951, %v951
        %v960 = vmul.f32 %v952, %v952
        %v961 = vmul.f32 %v953, %v953
        %v962 = vmul.f32 %v954, %v954
        %v963 = vmul.f32 %v955, %v955
        %v964 = vmul.f32 %v956, %v956
        %v965 = vmul.f32 %v957, %v957
        %v966 = vmul.f32 %v958, %v958
        %v967 = vsel %vm917, %v959, 0.0
        %968 = vadd.xlane.f32.xlu0 %v967
        %v969 = vpop.xlane.xlu0 %968
        %v970 = vsel %vm917, %v960, 0.0
        %971 = vadd.xlane.f32.xlu0 %v970
        %v972 = vpop.xlane.xlu0 %971
        %v973 = vsel %vm917, %v961, 0.0
        %974 = vadd.xlane.f32.xlu0 %v973
        %v975 = vpop.xlane.xlu0 %974
        %v976 = vsel %vm917, %v962, 0.0
        %977 = vadd.xlane.f32.xlu0 %v976
        %v978 = vpop.xlane.xlu0 %977
        %v979 = vsel %vm917, %v963, 0.0
        %980 = vadd.xlane.f32.xlu0 %v979
        %v981 = vpop.xlane.xlu0 %980
        %v982 = vsel %vm917, %v964, 0.0
        %983 = vadd.xlane.f32.xlu0 %v982
        %v984 = vpop.xlane.xlu0 %983
        %v985 = vsel %vm917, %v965, 0.0
        %986 = vadd.xlane.f32.xlu0 %v985
        %v987 = vpop.xlane.xlu0 %986
        %v988 = vsel %vm917, %v966, 0.0
        %989 = vadd.xlane.f32.xlu0 %v988
        %v990 = vpop.xlane.xlu0 %989
        %v991 = vmul.f32 %v969, %v942
        %v992 = vmul.f32 %v972, %v942
        %v993 = vmul.f32 %v975, %v942
        %v994 = vmul.f32 %v978, %v942
        %v995 = vmul.f32 %v981, %v942
        %v996 = vmul.f32 %v984, %v942
        %v997 = vmul.f32 %v987, %v942
        %v998 = vmul.f32 %v990, %v942
        %v999 = vadd.f32 %v991, 1e-05
        %v1000 = vadd.f32 %v992, 1e-05
        %v1001 = vadd.f32 %v993, 1e-05
        %v1002 = vadd.f32 %v994, 1e-05
        %v1003 = vadd.f32 %v995, 1e-05
        %v1004 = vadd.f32 %v996, 1e-05
        %v1005 = vadd.f32 %v997, 1e-05
        %v1006 = vadd.f32 %v998, 1e-05
        %v1007 = vrsqrt.pop %v999
        %v1008 = vrsqrt.pop %v1000
        %v1009 = vrsqrt.pop %v1001
        %v1010 = vrsqrt.pop %v1002
        %v1011 = vrsqrt.pop %v1003
        %v1012 = vrsqrt.pop %v1004
        %v1013 = vrsqrt.pop %v1005
        %v1014 = vrsqrt.pop %v1006
        %v1015 = vmul.f32 %v951, %v1007
        %v1016 = vmul.f32 %v952, %v1008
        %v1017 = vmul.f32 %v953, %v1009
        %v1018 = vmul.f32 %v954, %v1010
        %v1019 = vmul.f32 %v955, %v1011
        %v1020 = vmul.f32 %v956, %v1012
        %v1021 = vmul.f32 %v957, %v1013
        %v1022 = vmul.f32 %v958, %v1014
        %v1024 = vlaneseq
        %v1025 = vshrl.u32 %v1024, 7
        %v1026 = vsub.s32 0, %v1025
        %v1027 = vrot.slane %v915, %v1026
        %v1029 = vmul.f32 %v1015, %v1027
        %v1030 = vmul.f32 %v1016, %v1027
        %v1031 = vmul.f32 %v1017, %v1027
        %v1032 = vmul.f32 %v1018, %v1027
        %v1033 = vmul.f32 %v1019, %v1027
        %v1034 = vmul.f32 %v1020, %v1027
        %v1035 = vmul.f32 %v1021, %v1027
        %v1036 = vmul.f32 %v1022, %v1027
        %v1038 = vlaneseq
        %v1039 = vshrl.u32 %v1038, 7
        %v1040 = vsub.s32 0, %v1039
        %v1041 = vrot.slane %v916, %v1040
        %v1043 = vadd.f32 %v1029, %v1041
        %v1044 = vadd.f32 %v1030, %v1041
        %v1045 = vadd.f32 %v1031, %v1041
        %v1046 = vadd.f32 %v1032, %v1041
        %v1047 = vadd.f32 %v1033, %v1041
        %v1048 = vadd.f32 %v1034, %v1041
        %v1049 = vadd.f32 %v1035, %v1041
        %v1050 = vadd.f32 %v1036, %v1041
        %v1051 = vld [vmem:[%s5] sm:$0xff]
        %v1052 = vld [vmem:[%s5 + $0x8] sm:$0xff]
        %v1053 = vld [vmem:[%s5 + $0x10] sm:$0xff]
        %v1054 = vld [vmem:[%s5 + $0x18] sm:$0xff]
        %v1055 = vld [vmem:[%s5 + $0x20] sm:$0xff]
        %v1056 = vld [vmem:[%s5 + $0x28] sm:$0xff]
        %v1057 = vld [vmem:[%s5 + $0x30] sm:$0xff]
        %v1058 = vld [vmem:[%s5 + $0x38] sm:$0xff]
        %v1059 = vld [vmem:[%s5 + $0x40] sm:$0xff]
        %v1060 = vld [vmem:[%s5 + $0x48] sm:$0xff]
        %v1061 = vld [vmem:[%s5 + $0x50] sm:$0xff]
        %v1062 = vld [vmem:[%s5 + $0x58] sm:$0xff]
        %v1063 = vld [vmem:[%s5 + $0x60] sm:$0xff]
        %v1064 = vld [vmem:[%s5 + $0x68] sm:$0xff]
        %v1065 = vld [vmem:[%s5 + $0x70] sm:$0xff]
        %v1066 = vld [vmem:[%s5 + $0x78] sm:$0xff]
        %v1067 = vld [vmem:[%s5 + $0x80] sm:$0xff]
        %v1068 = vld [vmem:[%s5 + $0x88] sm:$0xff]
        %v1069 = vld [vmem:[%s5 + $0x90] sm:$0xff]
        %v1070 = vld [vmem:[%s5 + $0x98] sm:$0xff]
        %v1071 = vld [vmem:[%s5 + $0xa0] sm:$0xff]
        %v1072 = vld [vmem:[%s5 + $0xa8] sm:$0xff]
        %v1073 = vld [vmem:[%s5 + $0xb0] sm:$0xff]
        %v1074 = vld [vmem:[%s5 + $0xb8] sm:$0xff]
        %v1075 = vld [vmem:[%s5 + $0xc0] sm:$0xff]
        %v1076 = vld [vmem:[%s5 + $0xc8] sm:$0xff]
        %v1077 = vld [vmem:[%s5 + $0xd0] sm:$0xff]
        %v1078 = vld [vmem:[%s5 + $0xd8] sm:$0xff]
        %v1079 = vld [vmem:[%s5 + $0xe0] sm:$0xff]
        %v1080 = vld [vmem:[%s5 + $0xe8] sm:$0xff]
        %v1081 = vld [vmem:[%s5 + $0xf0] sm:$0xff]
        %v1082 = vld [vmem:[%s5 + $0xf8] sm:$0xff]
        %v1083 = vld [vmem:[%s5 + $0x100] sm:$0xff]
        %v1084 = vld [vmem:[%s5 + $0x108] sm:$0xff]
        %v1085 = vld [vmem:[%s5 + $0x110] sm:$0xff]
        %v1086 = vld [vmem:[%s5 + $0x118] sm:$0xff]
        %v1087 = vld [vmem:[%s5 + $0x120] sm:$0xff]
        %v1088 = vld [vmem:[%s5 + $0x128] sm:$0xff]
        %v1089 = vld [vmem:[%s5 + $0x130] sm:$0xff]
        %v1090 = vld [vmem:[%s5 + $0x138] sm:$0xff]
        %v1091 = vld [vmem:[%s5 + $0x140] sm:$0xff]
        %v1092 = vld [vmem:[%s5 + $0x148] sm:$0xff]
        %v1093 = vld [vmem:[%s5 + $0x150] sm:$0xff]
        %v1094 = vld [vmem:[%s5 + $0x158] sm:$0xff]
        %v1095 = vld [vmem:[%s5 + $0x160] sm:$0xff]
        %v1096 = vld [vmem:[%s5 + $0x168] sm:$0xff]
        %v1097 = vld [vmem:[%s5 + $0x170] sm:$0xff]
        %v1098 = vld [vmem:[%s5 + $0x178] sm:$0xff]
        %v1099 = vld [vmem:[%s5 + $0x180] sm:$0xff]
        %v1100 = vld [vmem:[%s5 + $0x188] sm:$0xff]
        %v1101 = vld [vmem:[%s5 + $0x190] sm:$0xff]
        %v1102 = vld [vmem:[%s5 + $0x198] sm:$0xff]
        %v1103 = vld [vmem:[%s5 + $0x1a0] sm:$0xff]
        %v1104 = vld [vmem:[%s5 + $0x1a8] sm:$0xff]
        %v1105 = vld [vmem:[%s5 + $0x1b0] sm:$0xff]
        %v1106 = vld [vmem:[%s5 + $0x1b8] sm:$0xff]
        %v1107 = vld [vmem:[%s5 + $0x1c0] sm:$0xff]
        %v1108 = vld [vmem:[%s5 + $0x1c8] sm:$0xff]
        %v1109 = vld [vmem:[%s5 + $0x1d0] sm:$0xff]
        %v1110 = vld [vmem:[%s5 + $0x1d8] sm:$0xff]
        %v1111 = vld [vmem:[%s6] sm:$0x3f]
        %v1113 = vlaneseq
        %v1114 = vshrl.u32 %v1113, 7
        %v1115 = vsub.s32 0, %v1114
        %v1116 = vrot.slane %v1111, %v1115
        %v1117 = vlaneseq
        %v1118 = vshrl.u32 %v1117, 7
        %v1119 = vsub.s32 1, %v1118
        %v1120 = vrot.slane %v1111, %v1119
        %v1121 = vlaneseq
        %v1122 = vshrl.u32 %v1121, 7
        %v1123 = vsub.s32 2, %v1122
        %v1124 = vrot.slane %v1111, %v1123
        %v1125 = vlaneseq
        %v1126 = vshrl.u32 %v1125, 7
        %v1127 = vsub.s32 3, %v1126
        %v1128 = vrot.slane %v1111, %v1127
        %v1129 = vlaneseq
        %v1130 = vshrl.u32 %v1129, 7
        %v1131 = vsub.s32 4, %v1130
        %v1132 = vrot.slane %v1111, %v1131
        %v1133 = vlaneseq
        %v1134 = vshrl.u32 %v1133, 7
        %v1135 = vsub.s32 5, %v1134
        %v1136 = vrot.slane %v1111, %v1135
        %v1144 = vsel %vm917, %v1043, 0
        %v1147 = vsel %vm917, %v1044, 0
        %v1150 = vsel %vm917, %v1045, 0
        %v1153 = vsel %vm917, %v1046, 0
        %v1156 = vsel %vm917, %v1047, 0
        %v1159 = vsel %vm917, %v1048, 0
        %v1162 = vsel %vm917, %v1049, 0
        %v1165 = vsel %vm917, %v1050, 0
        %1167 = vmatprep.subr.mxu0 %v1052
        %1168 = vmatpush1.msra.mxu0 %v1051
        %1169 = vmatprep.subr.mxu0 %v1058
        %1170 = vmatpush1.msra.mxu0 %v1057
        %1171 = vmatprep.subr.mxu0 %v1064
        %1172 = vmatpush1.msra.mxu0 %v1063
        %1173 = vmatprep.subr.mxu0 %v1070
        %1174 = vmatpush1.msra.mxu0 %v1069
        %1175 = vmatprep.subr.mxu0 %v1076
        %1176 = vmatpush1.msra.mxu0 %v1075
        %1177 = vmatprep.subr.mxu0 %v1082
        %1178 = vmatpush1.msra.mxu0 %v1081
        %1179 = vmatprep.subr.mxu0 %v1088
        %1180 = vmatpush1.msra.mxu0 %v1087
        %1181 = vmatprep.subr.mxu0 %v1094
        %1182 = vmatpush1.msra.mxu0 %v1093
        %1183 = vmatprep.subr.mxu0 %v1100
        %1184 = vmatpush1.msra.mxu0 %v1099
        %1185 = vmatprep.subr.mxu0 %v1106
        %1186 = vmatpush1.msra.mxu0 %v1105
        %1187 = vmatprep.subr.mxu0 0.0
        %1188 = vmatpush1.msra.mxu0 0.0
        %1189 = vmatprep.subr.mxu0 0.0
        %1190 = vmatpush1.msra.mxu0 0.0
        %1191 = vmatprep.subr.mxu0 0.0
        %1192 = vmatpush1.msra.mxu0 0.0
        %1193 = vmatprep.subr.mxu0 0.0
        %1194 = vmatpush1.msra.mxu0 0.0
        %1195 = vmatprep.subr.mxu0 0.0
        %1196 = vmatpush1.msra.mxu0 0.0
        %1197 = vmatprep.subr.mxu0 0.0
        %1198 = vmatpush1.msra.mxu0 0.0
        %1199 = vmatprep.subr.mxu0 0.0
        %1200 = vmatpush1.msra.mxu0 0.0
        %1201 = vmatprep.subr.mxu0 0.0
        %1202 = vmatpush1.msra.mxu0 0.0
        %1203 = vmatprep.subr.mxu0 0.0
        %1204 = vmatpush1.msra.mxu0 0.0
        %1205 = vmatprep.subr.mxu0 0.0
        %1206 = vmatpush1.msra.mxu0 0.0
        %1207 = vmatprep.subr.mxu0 0.0
        %1208 = vmatpush1.msra.mxu0 0.0
        %1209 = vmatprep.subr.mxu0 0.0
        %1210 = vmatpush1.msra.mxu0 0.0
        %1211 = vmatprep.subr.mxu0 0.0
        %1212 = vmatpush1.msra.mxu0 0.0
        %1213 = vmatprep.subr.mxu0 0.0
        %1214 = vmatpush1.msra.mxu0 0.0
        %1215 = vmatprep.subr.mxu0 0.0
        %1216 = vmatpush1.msra.mxu0 0.0
        %1217 = vmatprep.subr.mxu0 0.0
        %1218 = vmatpush1.msra.mxu0 0.0
        %1219 = vmatprep.subr.mxu0 0.0
        %1220 = vmatpush1.msra.mxu0 0.0
        %1221 = vmatprep.subr.mxu0 0.0
        %1222 = vmatpush1.msra.mxu0 0.0
        %1223 = vmatprep.subr.mxu0 0.0
        %1224 = vmatpush1.msra.mxu0 0.0
        %1225 = vmatprep.subr.mxu0 0.0
        %1226 = vmatpush1.msra.mxu0 0.0
        %1227 = vmatprep.subr.mxu0 0.0
        %1228 = vmatpush1.msra.mxu0 0.0
        %1229 = vmatprep.subr.mxu0 0.0
        %1230 = vmatpush1.msra.mxu0 0.0
        %1231 = vmatprep.mubr.f32.mxu0 0.0
        %1232 = vmatmul.mubr.f32.gmra.mrb[0].mxu0 %v1144
        %v1233 = vpop.f32.mrb[0].mxu0
        %v1234 = vadd.f32 %v1116, %v1233
        %v1235 = vpop.f32.mrb[0].mxu0
        %v1236 = vadd.f32 %v1120, %v1235
        %1237 = vmatprep.mubr.f32.mxu0 0.0
        %1238 = vmatmul.mubr.f32.gmra.mrb[0].mxu0 %v1147
        %v1239 = vpop.f32.mrb[0].mxu0
        %v1240 = vadd.f32 %v1116, %v1239
        %v1241 = vpop.f32.mrb[0].mxu0
        %v1242 = vadd.f32 %v1120, %v1241
        %1243 = vmatprep.mubr.f32.mxu0 0.0
        %1244 = vmatmul.mubr.f32.gmra.mrb[0].mxu0 %v1150
        %v1245 = vpop.f32.mrb[0].mxu0
        %v1246 = vadd.f32 %v1116, %v1245
        %v1247 = vpop.f32.mrb[0].mxu0
        %v1248 = vadd.f32 %v1120, %v1247
        %1249 = vmatprep.mubr.f32.mxu0 0.0
        %1250 = vmatmul.mubr.f32.gmra.mrb[0].mxu0 %v1153
        %v1251 = vpop.f32.mrb[0].mxu0
        %v1252 = vadd.f32 %v1116, %v1251
        %v1253 = vpop.f32.mrb[0].mxu0
        %v1254 = vadd.f32 %v1120, %v1253
        %1255 = vmatprep.mubr.f32.mxu0 0.0
        %1256 = vmatmul.mubr.f32.gmra.mrb[0].mxu0 %v1156
        %v1257 = vpop.f32.mrb[0].mxu0
        %v1258 = vadd.f32 %v1116, %v1257
        %v1259 = vpop.f32.mrb[0].mxu0
        %v1260 = vadd.f32 %v1120, %v1259
        %1261 = vmatprep.mubr.f32.mxu0 0.0
        %1262 = vmatmul.mubr.f32.gmra.mrb[0].mxu0 %v1159
        %v1263 = vpop.f32.mrb[0].mxu0
        %v1264 = vadd.f32 %v1116, %v1263
        %v1265 = vpop.f32.mrb[0].mxu0
        %v1266 = vadd.f32 %v1120, %v1265
        %1267 = vmatprep.mubr.f32.mxu0 0.0
        %1268 = vmatmul.mubr.f32.gmra.mrb[0].mxu0 %v1162
        %v1269 = vpop.f32.mrb[0].mxu0
        %v1270 = vadd.f32 %v1116, %v1269
        %v1271 = vpop.f32.mrb[0].mxu0
        %v1272 = vadd.f32 %v1120, %v1271
        %1273 = vmatprep.mubr.f32.mxu0 0.0
        %1274 = vmatmul.mubr.f32.gmra.mrb[0].mxu0 %v1165
        %v1275 = vpop.f32.mrb[0].mxu0
        %v1276 = vadd.f32 %v1116, %v1275
        %v1277 = vpop.f32.mrb[0].mxu0
        %v1278 = vadd.f32 %v1120, %v1277
        %1279 = vdwg.mxu0
        %1280 = vmatprep.subr.mxu0 %v1054
        %1281 = vmatpush1.msra.mxu0 %v1053
        %1282 = vmatprep.subr.mxu0 %v1060
        %1283 = vmatpush1.msra.mxu0 %v1059
        %1284 = vmatprep.subr.mxu0 %v1066
        %1285 = vmatpush1.msra.mxu0 %v1065
        %1286 = vmatprep.subr.mxu0 %v1072
        %1287 = vmatpush1.msra.mxu0 %v1071
        %1288 = vmatprep.subr.mxu0 %v1078
        %1289 = vmatpush1.msra.mxu0 %v1077
        %1290 = vmatprep.subr.mxu0 %v1084
        %1291 = vmatpush1.msra.mxu0 %v1083
        %1292 = vmatprep.subr.mxu0 %v1090
        %1293 = vmatpush1.msra.mxu0 %v1089
        %1294 = vmatprep.subr.mxu0 %v1096
        %1295 = vmatpush1.msra.mxu0 %v1095
        %1296 = vmatprep.subr.mxu0 %v1102
        %1297 = vmatpush1.msra.mxu0 %v1101
        %1298 = vmatprep.subr.mxu0 %v1108
        %1299 = vmatpush1.msra.mxu0 %v1107
        %1300 = vmatprep.subr.mxu0 0.0
        %1301 = vmatpush1.msra.mxu0 0.0
        %1302 = vmatprep.subr.mxu0 0.0
        %1303 = vmatpush1.msra.mxu0 0.0
        %1304 = vmatprep.subr.mxu0 0.0
        %1305 = vmatpush1.msra.mxu0 0.0
        %1306 = vmatprep.subr.mxu0 0.0
        %1307 = vmatpush1.msra.mxu0 0.0
        %1308 = vmatprep.subr.mxu0 0.0
        %1309 = vmatpush1.msra.mxu0 0.0
        %1310 = vmatprep.subr.mxu0 0.0
        %1311 = vmatpush1.msra.mxu0 0.0
        %1312 = vmatprep.subr.mxu0 0.0
        %1313 = vmatpush1.msra.mxu0 0.0
        %1314 = vmatprep.subr.mxu0 0.0
        %1315 = vmatpush1.msra.mxu0 0.0
        %1316 = vmatprep.subr.mxu0 0.0
        %1317 = vmatpush1.msra.mxu0 0.0
        %1318 = vmatprep.subr.mxu0 0.0
        %1319 = vmatpush1.msra.mxu0 0.0
        %1320 = vmatprep.subr.mxu0 0.0
        %1321 = vmatpush1.msra.mxu0 0.0
        %1322 = vmatprep.subr.mxu0 0.0
        %1323 = vmatpush1.msra.mxu0 0.0
        %1324 = vmatprep.subr.mxu0 0.0
        %1325 = vmatpush1.msra.mxu0 0.0
        %1326 = vmatprep.subr.mxu0 0.0
        %1327 = vmatpush1.msra.mxu0 0.0
        %1328 = vmatprep.subr.mxu0 0.0
        %1329 = vmatpush1.msra.mxu0 0.0
        %1330 = vmatprep.subr.mxu0 0.0
        %1331 = vmatpush1.msra.mxu0 0.0
        %1332 = vmatprep.subr.mxu0 0.0
        %1333 = vmatpush1.msra.mxu0 0.0
        %1334 = vmatprep.subr.mxu0 0.0
        %1335 = vmatpush1.msra.mxu0 0.0
        %1336 = vmatprep.subr.mxu0 0.0
        %1337 = vmatpush1.msra.mxu0 0.0
        %1338 = vmatprep.subr.mxu0 0.0
        %1339 = vmatpush1.msra.mxu0 0.0
        %1340 = vmatprep.subr.mxu0 0.0
        %1341 = vmatpush1.msra.mxu0 0.0
        %1342 = vmatprep.subr.mxu0 0.0
        %1343 = vmatpush1.msra.mxu0 0.0
        %1344 = vmatprep.mubr.f32.mxu0 0.0
        %1345 = vmatmul.mubr.f32.gmra.mrb[0].mxu0 %v1144
        %v1346 = vpop.f32.mrb[0].mxu0
        %v1347 = vadd.f32 %v1124, %v1346
        %v1348 = vpop.f32.mrb[0].mxu0
        %v1349 = vadd.f32 %v1128, %v1348
        %1350 = vmatprep.mubr.f32.mxu0 0.0
        %1351 = vmatmul.mubr.f32.gmra.mrb[0].mxu0 %v1147
        %v1352 = vpop.f32.mrb[0].mxu0
        %v1353 = vadd.f32 %v1124, %v1352
        %v1354 = vpop.f32.mrb[0].mxu0
        %v1355 = vadd.f32 %v1128, %v1354
        %1356 = vmatprep.mubr.f32.mxu0 0.0
        %1357 = vmatmul.mubr.f32.gmra.mrb[0].mxu0 %v1150
        %v1358 = vpop.f32.mrb[0].mxu0
        %v1359 = vadd.f32 %v1124, %v1358
        %v1360 = vpop.f32.mrb[0].mxu0
        %v1361 = vadd.f32 %v1128, %v1360
        %1362 = vmatprep.mubr.f32.mxu0 0.0
        %1363 = vmatmul.mubr.f32.gmra.mrb[0].mxu0 %v1153
        %v1364 = vpop.f32.mrb[0].mxu0
        %v1365 = vadd.f32 %v1124, %v1364
        %v1366 = vpop.f32.mrb[0].mxu0
        %v1367 = vadd.f32 %v1128, %v1366
        %1368 = vmatprep.mubr.f32.mxu0 0.0
        %1369 = vmatmul.mubr.f32.gmra.mrb[0].mxu0 %v1156
        %v1370 = vpop.f32.mrb[0].mxu0
        %v1371 = vadd.f32 %v1124, %v1370
        %v1372 = vpop.f32.mrb[0].mxu0
        %v1373 = vadd.f32 %v1128, %v1372
        %1374 = vmatprep.mubr.f32.mxu0 0.0
        %1375 = vmatmul.mubr.f32.gmra.mrb[0].mxu0 %v1159
        %v1376 = vpop.f32.mrb[0].mxu0
        %v1377 = vadd.f32 %v1124, %v1376
        %v1378 = vpop.f32.mrb[0].mxu0
        %v1379 = vadd.f32 %v1128, %v1378
        %1380 = vmatprep.mubr.f32.mxu0 0.0
        %1381 = vmatmul.mubr.f32.gmra.mrb[0].mxu0 %v1162
        %v1382 = vpop.f32.mrb[0].mxu0
        %v1383 = vadd.f32 %v1124, %v1382
        %v1384 = vpop.f32.mrb[0].mxu0
        %v1385 = vadd.f32 %v1128, %v1384
        %1386 = vmatprep.mubr.f32.mxu0 0.0
        %1387 = vmatmul.mubr.f32.gmra.mrb[0].mxu0 %v1165
        %v1388 = vpop.f32.mrb[0].mxu0
        %v1389 = vadd.f32 %v1124, %v1388
        %v1390 = vpop.f32.mrb[0].mxu0
        %v1391 = vadd.f32 %v1128, %v1390
        %1392 = vdwg.mxu0
        %1393 = vmatprep.subr.mxu0 %v1056
        %1394 = vmatpush1.msra.mxu0 %v1055
        %1395 = vmatprep.subr.mxu0 %v1062
        %1396 = vmatpush1.msra.mxu0 %v1061
        %1397 = vmatprep.subr.mxu0 %v1068
        %1398 = vmatpush1.msra.mxu0 %v1067
        %1399 = vmatprep.subr.mxu0 %v1074
        %1400 = vmatpush1.msra.mxu0 %v1073
        %1401 = vmatprep.subr.mxu0 %v1080
        %1402 = vmatpush1.msra.mxu0 %v1079
        %1403 = vmatprep.subr.mxu0 %v1086
        %1404 = vmatpush1.msra.mxu0 %v1085
        %1405 = vmatprep.subr.mxu0 %v1092
        %1406 = vmatpush1.msra.mxu0 %v1091
        %1407 = vmatprep.subr.mxu0 %v1098
        %1408 = vmatpush1.msra.mxu0 %v1097
        %1409 = vmatprep.subr.mxu0 %v1104
        %1410 = vmatpush1.msra.mxu0 %v1103
        %1411 = vmatprep.subr.mxu0 %v1110
        %1412 = vmatpush1.msra.mxu0 %v1109
        %1413 = vmatprep.subr.mxu0 0.0
        %1414 = vmatpush1.msra.mxu0 0.0
        %1415 = vmatprep.subr.mxu0 0.0
        %1416 = vmatpush1.msra.mxu0 0.0
        %1417 = vmatprep.subr.mxu0 0.0
        %1418 = vmatpush1.msra.mxu0 0.0
        %1419 = vmatprep.subr.mxu0 0.0
        %1420 = vmatpush1.msra.mxu0 0.0
        %1421 = vmatprep.subr.mxu0 0.0
        %1422 = vmatpush1.msra.mxu0 0.0
        %1423 = vmatprep.subr.mxu0 0.0
        %1424 = vmatpush1.msra.mxu0 0.0
        %1425 = vmatprep.subr.mxu0 0.0
        %1426 = vmatpush1.msra.mxu0 0.0
        %1427 = vmatprep.subr.mxu0 0.0
        %1428 = vmatpush1.msra.mxu0 0.0
        %1429 = vmatprep.subr.mxu0 0.0
        %1430 = vmatpush1.msra.mxu0 0.0
        %1431 = vmatprep.subr.mxu0 0.0
        %1432 = vmatpush1.msra.mxu0 0.0
        %1433 = vmatprep.subr.mxu0 0.0
        %1434 = vmatpush1.msra.mxu0 0.0
        %1435 = vmatprep.subr.mxu0 0.0
        %1436 = vmatpush1.msra.mxu0 0.0
        %1437 = vmatprep.subr.mxu0 0.0
        %1438 = vmatpush1.msra.mxu0 0.0
        %1439 = vmatprep.subr.mxu0 0.0
        %1440 = vmatpush1.msra.mxu0 0.0
        %1441 = vmatprep.subr.mxu0 0.0
        %1442 = vmatpush1.msra.mxu0 0.0
        %1443 = vmatprep.subr.mxu0 0.0
        %1444 = vmatpush1.msra.mxu0 0.0
        %1445 = vmatprep.subr.mxu0 0.0
        %1446 = vmatpush1.msra.mxu0 0.0
        %1447 = vmatprep.subr.mxu0 0.0
        %1448 = vmatpush1.msra.mxu0 0.0
        %1449 = vmatprep.subr.mxu0 0.0
        %1450 = vmatpush1.msra.mxu0 0.0
        %1451 = vmatprep.subr.mxu0 0.0
        %1452 = vmatpush1.msra.mxu0 0.0
        %1453 = vmatprep.subr.mxu0 0.0
        %1454 = vmatpush1.msra.mxu0 0.0
        %1455 = vmatprep.subr.mxu0 0.0
        %1456 = vmatpush1.msra.mxu0 0.0
        %1457 = vmatprep.mubr.f32.mxu0 0.0
        %1458 = vmatmul.mubr.f32.gmra.mrb[0].mxu0 %v1144
        %v1459 = vpop.f32.mrb[0].mxu0
        %v1460 = vadd.f32 %v1132, %v1459
        %v1461 = vpop.f32.mrb[0].mxu0
        %v1462 = vadd.f32 %v1136, %v1461
        %1463 = vmatprep.mubr.f32.mxu0 0.0
        %1464 = vmatmul.mubr.f32.gmra.mrb[0].mxu0 %v1147
        %v1465 = vpop.f32.mrb[0].mxu0
        %v1466 = vadd.f32 %v1132, %v1465
        %v1467 = vpop.f32.mrb[0].mxu0
        %v1468 = vadd.f32 %v1136, %v1467
        %1469 = vmatprep.mubr.f32.mxu0 0.0
        %1470 = vmatmul.mubr.f32.gmra.mrb[0].mxu0 %v1150
        %v1471 = vpop.f32.mrb[0].mxu0
        %v1472 = vadd.f32 %v1132, %v1471
        %v1473 = vpop.f32.mrb[0].mxu0
        %v1474 = vadd.f32 %v1136, %v1473
        %1475 = vmatprep.mubr.f32.mxu0 0.0
        %1476 = vmatmul.mubr.f32.gmra.mrb[0].mxu0 %v1153
        %v1477 = vpop.f32.mrb[0].mxu0
        %v1478 = vadd.f32 %v1132, %v1477
        %v1479 = vpop.f32.mrb[0].mxu0
        %v1480 = vadd.f32 %v1136, %v1479
        %1481 = vmatprep.mubr.f32.mxu0 0.0
        %1482 = vmatmul.mubr.f32.gmra.mrb[0].mxu0 %v1156
        %v1483 = vpop.f32.mrb[0].mxu0
        %v1484 = vadd.f32 %v1132, %v1483
        %v1485 = vpop.f32.mrb[0].mxu0
        %v1486 = vadd.f32 %v1136, %v1485
        %1487 = vmatprep.mubr.f32.mxu0 0.0
        %1488 = vmatmul.mubr.f32.gmra.mrb[0].mxu0 %v1159
        %v1489 = vpop.f32.mrb[0].mxu0
        %v1490 = vadd.f32 %v1132, %v1489
        %v1491 = vpop.f32.mrb[0].mxu0
        %v1492 = vadd.f32 %v1136, %v1491
        %1493 = vmatprep.mubr.f32.mxu0 0.0
        %1494 = vmatmul.mubr.f32.gmra.mrb[0].mxu0 %v1162
        %v1495 = vpop.f32.mrb[0].mxu0
        %v1496 = vadd.f32 %v1132, %v1495
        %v1497 = vpop.f32.mrb[0].mxu0
        %v1498 = vadd.f32 %v1136, %v1497
        %1499 = vmatprep.mubr.f32.mxu0 0.0
        %1500 = vmatmul.mubr.f32.gmra.mrb[0].mxu0 %v1165
        %v1501 = vpop.f32.mrb[0].mxu0
        %v1502 = vadd.f32 %v1132, %v1501
        %v1503 = vpop.f32.mrb[0].mxu0
        %v1504 = vadd.f32 %v1136, %v1503
        %1505 = vdwg.mxu0
        %1506 = vmatprep.subr.mxu0 0.0
        %1507 = vmatpush1.xpose.msra.mxu0 %v1347
        %1508 = vmatprep.subr.mxu0 0.0
        %1509 = vmatpush1.xpose.msra.mxu0 0.0
        %1510 = vmatprep.subr.mxu0 0.0
        %1511 = vmatpush1.xpose.msra.mxu0 0.0
        %1512 = vmatprep.subr.mxu0 0.0
        %1513 = vmatpush1.xpose.msra.mxu0 0.0
        %1514 = vmatprep.subr.mxu0 0.0
        %1515 = vmatpush1.xpose.msra.mxu0 0.0
        %1516 = vmatprep.subr.mxu0 0.0
        %1517 = vmatpush1.xpose.msra.mxu0 0.0
        %1518 = vmatprep.subr.mxu0 0.0
        %1519 = vmatpush1.xpose.msra.mxu0 0.0
        %1520 = vmatprep.subr.mxu0 0.0
        %1521 = vmatpush1.xpose.msra.mxu0 0.0
        %1522 = vmatprep.subr.mxu0 0.0
        %1523 = vmatpush1.xpose.msra.mxu0 0.0
        %1524 = vmatprep.subr.mxu0 0.0
        %1525 = vmatpush1.xpose.msra.mxu0 0.0
        %1526 = vmatprep.subr.mxu0 0.0
        %1527 = vmatpush1.xpose.msra.mxu0 0.0
        %1528 = vmatprep.subr.mxu0 0.0
        %1529 = vmatpush1.xpose.msra.mxu0 0.0
        %1530 = vmatprep.subr.mxu0 0.0
        %1531 = vmatpush1.xpose.msra.mxu0 0.0
        %1532 = vmatprep.subr.mxu0 0.0
        %1533 = vmatpush1.xpose.msra.mxu0 0.0
        %1534 = vmatprep.subr.mxu0 0.0
        %1535 = vmatpush1.xpose.msra.mxu0 0.0
        %1536 = vmatprep.subr.mxu0 0.0
        %1537 = vmatpush1.xpose.msra.mxu0 0.0
        %1538 = vmatprep.subr.mxu0 0.0
        %1539 = vmatpush1.xpose.msra.mxu0 0.0
        %1540 = vmatprep.subr.mxu0 0.0
        %1541 = vmatpush1.xpose.msra.mxu0 0.0
        %1542 = vmatprep.subr.mxu0 0.0
        %1543 = vmatpush1.xpose.msra.mxu0 0.0
        %1544 = vmatprep.subr.mxu0 0.0
        %1545 = vmatpush1.xpose.msra.mxu0 0.0
        %1546 = vmatprep.subr.mxu0 0.0
        %1547 = vmatpush1.xpose.msra.mxu0 0.0
        %1548 = vmatprep.subr.mxu0 0.0
        %1549 = vmatpush1.xpose.msra.mxu0 0.0
        %1550 = vmatprep.subr.mxu0 0.0
        %1551 = vmatpush1.xpose.msra.mxu0 0.0
        %1552 = vmatprep.subr.mxu0 0.0
        %1553 = vmatpush1.xpose.msra.mxu0 0.0
        %1554 = vmatprep.subr.mxu0 0.0
        %1555 = vmatpush1.xpose.msra.mxu0 0.0
        %1556 = vmatprep.subr.mxu0 0.0
        %1557 = vmatpush1.xpose.msra.mxu0 0.0
        %1558 = vmatprep.subr.mxu0 0.0
        %1559 = vmatpush1.xpose.msra.mxu0 0.0
        %1560 = vmatprep.subr.mxu0 0.0
        %1561 = vmatpush1.xpose.msra.mxu0 0.0
        %1562 = vmatprep.subr.mxu0 0.0
        %1563 = vmatpush1.xpose.msra.mxu0 0.0
        %1564 = vmatprep.subr.mxu0 0.0
        %1565 = vmatpush1.xpose.msra.mxu0 0.0
        %1566 = vmatprep.subr.mxu0 0.0
        %1567 = vmatpush1.xpose.msra.mxu0 0.0
        %1568 = vmatprep.subr.mxu0 0.0
        %1569 = vmatpush1.xpose.msra.mxu0 0.0
        %1570 = vmatprep.mubr.f32.mxu0 0.0
        %1571 = vmatmul.mubr.f32.gmra.mrb[0].mxu0 %v1234
        %v1572 = vpop.f32.mrb[0].mxu0
        %v1573 = vadd.f32 0.0, %v1572
        %v1574 = vpop.f32.mrb[0].mxu0
        %1575 = vdwg.mxu0
        %1576 = vmatprep.subr.mxu0 0.0
        %1577 = vmatpush1.xpose.msra.mxu0 %v1353
        %1578 = vmatprep.subr.mxu0 0.0
        %1579 = vmatpush1.xpose.msra.mxu0 0.0
        %1580 = vmatprep.subr.mxu0 0.0
        %1581 = vmatpush1.xpose.msra.mxu0 0.0
        %1582 = vmatprep.subr.mxu0 0.0
        %1583 = vmatpush1.xpose.msra.mxu0 0.0
        %1584 = vmatprep.subr.mxu0 0.0
        %1585 = vmatpush1.xpose.msra.mxu0 0.0
        %1586 = vmatprep.subr.mxu0 0.0
        %1587 = vmatpush1.xpose.msra.mxu0 0.0
        %1588 = vmatprep.subr.mxu0 0.0
        %1589 = vmatpush1.xpose.msra.mxu0 0.0
        %1590 = vmatprep.subr.mxu0 0.0
        %1591 = vmatpush1.xpose.msra.mxu0 0.0
        %1592 = vmatprep.subr.mxu0 0.0
        %1593 = vmatpush1.xpose.msra.mxu0 0.0
        %1594 = vmatprep.subr.mxu0 0.0
        %1595 = vmatpush1.xpose.msra.mxu0 0.0
        %1596 = vmatprep.subr.mxu0 0.0
        %1597 = vmatpush1.xpose.msra.mxu0 0.0
        %1598 = vmatprep.subr.mxu0 0.0
        %1599 = vmatpush1.xpose.msra.mxu0 0.0
        %1600 = vmatprep.subr.mxu0 0.0
        %1601 = vmatpush1.xpose.msra.mxu0 0.0
        %1602 = vmatprep.subr.mxu0 0.0
        %1603 = vmatpush1.xpose.msra.mxu0 0.0
        %1604 = vmatprep.subr.mxu0 0.0
        %1605 = vmatpush1.xpose.msra.mxu0 0.0
        %1606 = vmatprep.subr.mxu0 0.0
        %1607 = vmatpush1.xpose.msra.mxu0 0.0
        %1608 = vmatprep.subr.mxu0 0.0
        %1609 = vmatpush1.xpose.msra.mxu0 0.0
        %1610 = vmatprep.subr.mxu0 0.0
        %1611 = vmatpush1.xpose.msra.mxu0 0.0
        %1612 = vmatprep.subr.mxu0 0.0
        %1613 = vmatpush1.xpose.msra.mxu0 0.0
        %1614 = vmatprep.subr.mxu0 0.0
        %1615 = vmatpush1.xpose.msra.mxu0 0.0
        %1616 = vmatprep.subr.mxu0 0.0
        %1617 = vmatpush1.xpose.msra.mxu0 0.0
        %1618 = vmatprep.subr.mxu0 0.0
        %1619 = vmatpush1.xpose.msra.mxu0 0.0
        %1620 = vmatprep.subr.mxu0 0.0
        %1621 = vmatpush1.xpose.msra.mxu0 0.0
        %1622 = vmatprep.subr.mxu0 0.0
        %1623 = vmatpush1.xpose.msra.mxu0 0.0
        %1624 = vmatprep.subr.mxu0 0.0
        %1625 = vmatpush1.xpose.msra.mxu0 0.0
        %1626 = vmatprep.subr.mxu0 0.0
        %1627 = vmatpush1.xpose.msra.mxu0 0.0
        %1628 = vmatprep.subr.mxu0 0.0
        %1629 = vmatpush1.xpose.msra.mxu0 0.0
        %1630 = vmatprep.subr.mxu0 0.0
        %1631 = vmatpush1.xpose.msra.mxu0 0.0
        %1632 = vmatprep.subr.mxu0 0.0
        %1633 = vmatpush1.xpose.msra.mxu0 0.0
        %1634 = vmatprep.subr.mxu0 0.0
        %1635 = vmatpush1.xpose.msra.mxu0 0.0
        %1636 = vmatprep.subr.mxu0 0.0
        %1637 = vmatpush1.xpose.msra.mxu0 0.0
        %1638 = vmatprep.subr.mxu0 0.0
        %1639 = vmatpush1.xpose.msra.mxu0 0.0
        %1640 = vmatprep.mubr.f32.mxu0 0.0
        %1641 = vmatmul.mubr.f32.gmra.mrb[0].mxu0 %v1240
        %v1642 = vpop.f32.mrb[0].mxu0
        %v1643 = vadd.f32 0.0, %v1642
        %v1644 = vpop.f32.mrb[0].mxu0
        %1645 = vdwg.mxu0
        %1646 = vmatprep.subr.mxu0 0.0
        %1647 = vmatpush1.xpose.msra.mxu0 %v1359
        %1648 = vmatprep.subr.mxu0 0.0
        %1649 = vmatpush1.xpose.msra.mxu0 0.0
        %1650 = vmatprep.subr.mxu0 0.0
        %1651 = vmatpush1.xpose.msra.mxu0 0.0
        %1652 = vmatprep.subr.mxu0 0.0
        %1653 = vmatpush1.xpose.msra.mxu0 0.0
        %1654 = vmatprep.subr.mxu0 0.0
        %1655 = vmatpush1.xpose.msra.mxu0 0.0
        %1656 = vmatprep.subr.mxu0 0.0
        %1657 = vmatpush1.xpose.msra.mxu0 0.0
        %1658 = vmatprep.subr.mxu0 0.0
        %1659 = vmatpush1.xpose.msra.mxu0 0.0
        %1660 = vmatprep.subr.mxu0 0.0
        %1661 = vmatpush1.xpose.msra.mxu0 0.0
        %1662 = vmatprep.subr.mxu0 0.0
        %1663 = vmatpush1.xpose.msra.mxu0 0.0
        %1664 = vmatprep.subr.mxu0 0.0
        %1665 = vmatpush1.xpose.msra.mxu0 0.0
        %1666 = vmatprep.subr.mxu0 0.0
        %1667 = vmatpush1.xpose.msra.mxu0 0.0
        %1668 = vmatprep.subr.mxu0 0.0
        %1669 = vmatpush1.xpose.msra.mxu0 0.0
        %1670 = vmatprep.subr.mxu0 0.0
        %1671 = vmatpush1.xpose.msra.mxu0 0.0
        %1672 = vmatprep.subr.mxu0 0.0
        %1673 = vmatpush1.xpose.msra.mxu0 0.0
        %1674 = vmatprep.subr.mxu0 0.0
        %1675 = vmatpush1.xpose.msra.mxu0 0.0
        %1676 = vmatprep.subr.mxu0 0.0
        %1677 = vmatpush1.xpose.msra.mxu0 0.0
        %1678 = vmatprep.subr.mxu0 0.0
        %1679 = vmatpush1.xpose.msra.mxu0 0.0
        %1680 = vmatprep.subr.mxu0 0.0
        %1681 = vmatpush1.xpose.msra.mxu0 0.0
        %1682 = vmatprep.subr.mxu0 0.0
        %1683 = vmatpush1.xpose.msra.mxu0 0.0
        %1684 = vmatprep.subr.mxu0 0.0
        %1685 = vmatpush1.xpose.msra.mxu0 0.0
        %1686 = vmatprep.subr.mxu0 0.0
        %1687 = vmatpush1.xpose.msra.mxu0 0.0
        %1688 = vmatprep.subr.mxu0 0.0
        %1689 = vmatpush1.xpose.msra.mxu0 0.0
        %1690 = vmatprep.subr.mxu0 0.0
        %1691 = vmatpush1.xpose.msra.mxu0 0.0
        %1692 = vmatprep.subr.mxu0 0.0
        %1693 = vmatpush1.xpose.msra.mxu0 0.0
        %1694 = vmatprep.subr.mxu0 0.0
        %1695 = vmatpush1.xpose.msra.mxu0 0.0
        %1696 = vmatprep.subr.mxu0 0.0
        %1697 = vmatpush1.xpose.msra.mxu0 0.0
        %1698 = vmatprep.subr.mxu0 0.0
        %1699 = vmatpush1.xpose.msra.mxu0 0.0
        %1700 = vmatprep.subr.mxu0 0.0
        %1701 = vmatpush1.xpose.msra.mxu0 0.0
        %1702 = vmatprep.subr.mxu0 0.0
        %1703 = vmatpush1.xpose.msra.mxu0 0.0
        %1704 = vmatprep.subr.mxu0 0.0
        %1705 = vmatpush1.xpose.msra.mxu0 0.0
        %1706 = vmatprep.subr.mxu0 0.0
        %1707 = vmatpush1.xpose.msra.mxu0 0.0
        %1708 = vmatprep.subr.mxu0 0.0
        %1709 = vmatpush1.xpose.msra.mxu0 0.0
        %1710 = vmatprep.mubr.f32.mxu0 0.0
        %1711 = vmatmul.mubr.f32.gmra.mrb[0].mxu0 %v1246
        %v1712 = vpop.f32.mrb[0].mxu0
        %v1713 = vadd.f32 0.0, %v1712
        %v1714 = vpop.f32.mrb[0].mxu0
        %1715 = vdwg.mxu0
        %1716 = vmatprep.subr.mxu0 0.0
        %1717 = vmatpush1.xpose.msra.mxu0 %v1365
        %1718 = vmatprep.subr.mxu0 0.0
        %1719 = vmatpush1.xpose.msra.mxu0 0.0
        %1720 = vmatprep.subr.mxu0 0.0
        %1721 = vmatpush1.xpose.msra.mxu0 0.0
        %1722 = vmatprep.subr.mxu0 0.0
        %1723 = vmatpush1.xpose.msra.mxu0 0.0
        %1724 = vmatprep.subr.mxu0 0.0
        %1725 = vmatpush1.xpose.msra.mxu0 0.0
        %1726 = vmatprep.subr.mxu0 0.0
        %1727 = vmatpush1.xpose.msra.mxu0 0.0
        %1728 = vmatprep.subr.mxu0 0.0
        %1729 = vmatpush1.xpose.msra.mxu0 0.0
        %1730 = vmatprep.subr.mxu0 0.0
        %1731 = vmatpush1.xpose.msra.mxu0 0.0
        %1732 = vmatprep.subr.mxu0 0.0
        %1733 = vmatpush1.xpose.msra.mxu0 0.0
        %1734 = vmatprep.subr.mxu0 0.0
        %1735 = vmatpush1.xpose.msra.mxu0 0.0
        %1736 = vmatprep.subr.mxu0 0.0
        %1737 = vmatpush1.xpose.msra.mxu0 0.0
        %1738 = vmatprep.subr.mxu0 0.0
        %1739 = vmatpush1.xpose.msra.mxu0 0.0
        %1740 = vmatprep.subr.mxu0 0.0
        %1741 = vmatpush1.xpose.msra.mxu0 0.0
        %1742 = vmatprep.subr.mxu0 0.0
        %1743 = vmatpush1.xpose.msra.mxu0 0.0
        %1744 = vmatprep.subr.mxu0 0.0
        %1745 = vmatpush1.xpose.msra.mxu0 0.0
        %1746 = vmatprep.subr.mxu0 0.0
        %1747 = vmatpush1.xpose.msra.mxu0 0.0
        %1748 = vmatprep.subr.mxu0 0.0
        %1749 = vmatpush1.xpose.msra.mxu0 0.0
        %1750 = vmatprep.subr.mxu0 0.0
        %1751 = vmatpush1.xpose.msra.mxu0 0.0
        %1752 = vmatprep.subr.mxu0 0.0
        %1753 = vmatpush1.xpose.msra.mxu0 0.0
        %1754 = vmatprep.subr.mxu0 0.0
        %1755 = vmatpush1.xpose.msra.mxu0 0.0
        %1756 = vmatprep.subr.mxu0 0.0
        %1757 = vmatpush1.xpose.msra.mxu0 0.0
        %1758 = vmatprep.subr.mxu0 0.0
        %1759 = vmatpush1.xpose.msra.mxu0 0.0
        %1760 = vmatprep.subr.mxu0 0.0
        %1761 = vmatpush1.xpose.msra.mxu0 0.0
        %1762 = vmatprep.subr.mxu0 0.0
        %1763 = vmatpush1.xpose.msra.mxu0 0.0
        %1764 = vmatprep.subr.mxu0 0.0
        %1765 = vmatpush1.xpose.msra.mxu0 0.0
        %1766 = vmatprep.subr.mxu0 0.0
        %1767 = vmatpush1.xpose.msra.mxu0 0.0
        %1768 = vmatprep.subr.mxu0 0.0
        %1769 = vmatpush1.xpose.msra.mxu0 0.0
        %1770 = vmatprep.subr.mxu0 0.0
        %1771 = vmatpush1.xpose.msra.mxu0 0.0
        %1772 = vmatprep.subr.mxu0 0.0
        %1773 = vmatpush1.xpose.msra.mxu0 0.0
        %1774 = vmatprep.subr.mxu0 0.0
        %1775 = vmatpush1.xpose.msra.mxu0 0.0
        %1776 = vmatprep.subr.mxu0 0.0
        %1777 = vmatpush1.xpose.msra.mxu0 0.0
        %1778 = vmatprep.subr.mxu0 0.0
        %1779 = vmatpush1.xpose.msra.mxu0 0.0
        %1780 = vmatprep.mubr.f32.mxu0 0.0
        %1781 = vmatmul.mubr.f32.gmra.mrb[0].mxu0 %v1252
        %v1782 = vpop.f32.mrb[0].mxu0
        %v1783 = vadd.f32 0.0, %v1782
        %v1784 = vpop.f32.mrb[0].mxu0
        %1785 = vdwg.mxu0
        %1786 = vmatprep.subr.mxu0 0.0
        %1787 = vmatpush1.xpose.msra.mxu0 %v1371
        %1788 = vmatprep.subr.mxu0 0.0
        %1789 = vmatpush1.xpose.msra.mxu0 0.0
        %1790 = vmatprep.subr.mxu0 0.0
        %1791 = vmatpush1.xpose.msra.mxu0 0.0
        %1792 = vmatprep.subr.mxu0 0.0
        %1793 = vmatpush1.xpose.msra.mxu0 0.0
        %1794 = vmatprep.subr.mxu0 0.0
        %1795 = vmatpush1.xpose.msra.mxu0 0.0
        %1796 = vmatprep.subr.mxu0 0.0
        %1797 = vmatpush1.xpose.msra.mxu0 0.0
        %1798 = vmatprep.subr.mxu0 0.0
        %1799 = vmatpush1.xpose.msra.mxu0 0.0
        %1800 = vmatprep.subr.mxu0 0.0
        %1801 = vmatpush1.xpose.msra.mxu0 0.0
        %1802 = vmatprep.subr.mxu0 0.0
        %1803 = vmatpush1.xpose.msra.mxu0 0.0
        %1804 = vmatprep.subr.mxu0 0.0
        %1805 = vmatpush1.xpose.msra.mxu0 0.0
        %1806 = vmatprep.subr.mxu0 0.0
        %1807 = vmatpush1.xpose.msra.mxu0 0.0
        %1808 = vmatprep.subr.mxu0 0.0
        %1809 = vmatpush1.xpose.msra.mxu0 0.0
        %1810 = vmatprep.subr.mxu0 0.0
        %1811 = vmatpush1.xpose.msra.mxu0 0.0
        %1812 = vmatprep.subr.mxu0 0.0
        %1813 = vmatpush1.xpose.msra.mxu0 0.0
        %1814 = vmatprep.subr.mxu0 0.0
        %1815 = vmatpush1.xpose.msra.mxu0 0.0
        %1816 = vmatprep.subr.mxu0 0.0
        %1817 = vmatpush1.xpose.msra.mxu0 0.0
        %1818 = vmatprep.subr.mxu0 0.0
        %1819 = vmatpush1.xpose.msra.mxu0 0.0
        %1820 = vmatprep.subr.mxu0 0.0
        %1821 = vmatpush1.xpose.msra.mxu0 0.0
        %1822 = vmatprep.subr.mxu0 0.0
        %1823 = vmatpush1.xpose.msra.mxu0 0.0
        %1824 = vmatprep.subr.mxu0 0.0
        %1825 = vmatpush1.xpose.msra.mxu0 0.0
        %1826 = vmatprep.subr.mxu0 0.0
        %1827 = vmatpush1.xpose.msra.mxu0 0.0
        %1828 = vmatprep.subr.mxu0 0.0
        %1829 = vmatpush1.xpose.msra.mxu0 0.0
        %1830 = vmatprep.subr.mxu0 0.0
        %1831 = vmatpush1.xpose.msra.mxu0 0.0
        %1832 = vmatprep.subr.mxu0 0.0
        %1833 = vmatpush1.xpose.msra.mxu0 0.0
        %1834 = vmatprep.subr.mxu0 0.0
        %1835 = vmatpush1.xpose.msra.mxu0 0.0
        %1836 = vmatprep.subr.mxu0 0.0
        %1837 = vmatpush1.xpose.msra.mxu0 0.0
        %1838 = vmatprep.subr.mxu0 0.0
        %1839 = vmatpush1.xpose.msra.mxu0 0.0
        %1840 = vmatprep.subr.mxu0 0.0
        %1841 = vmatpush1.xpose.msra.mxu0 0.0
        %1842 = vmatprep.subr.mxu0 0.0
        %1843 = vmatpush1.xpose.msra.mxu0 0.0
        %1844 = vmatprep.subr.mxu0 0.0
        %1845 = vmatpush1.xpose.msra.mxu0 0.0
        %1846 = vmatprep.subr.mxu0 0.0
        %1847 = vmatpush1.xpose.msra.mxu0 0.0
        %1848 = vmatprep.subr.mxu0 0.0
        %1849 = vmatpush1.xpose.msra.mxu0 0.0
        %1850 = vmatprep.mubr.f32.mxu0 0.0
        %1851 = vmatmul.mubr.f32.gmra.mrb[0].mxu0 %v1258
        %v1852 = vpop.f32.mrb[0].mxu0
        %v1853 = vadd.f32 0.0, %v1852
        %v1854 = vpop.f32.mrb[0].mxu0
        %1855 = vdwg.mxu0
        %1856 = vmatprep.subr.mxu0 0.0
        %1857 = vmatpush1.xpose.msra.mxu0 %v1377
        %1858 = vmatprep.subr.mxu0 0.0
        %1859 = vmatpush1.xpose.msra.mxu0 0.0
        %1860 = vmatprep.subr.mxu0 0.0
        %1861 = vmatpush1.xpose.msra.mxu0 0.0
        %1862 = vmatprep.subr.mxu0 0.0
        %1863 = vmatpush1.xpose.msra.mxu0 0.0
        %1864 = vmatprep.subr.mxu0 0.0
        %1865 = vmatpush1.xpose.msra.mxu0 0.0
        %1866 = vmatprep.subr.mxu0 0.0
        %1867 = vmatpush1.xpose.msra.mxu0 0.0
        %1868 = vmatprep.subr.mxu0 0.0
        %1869 = vmatpush1.xpose.msra.mxu0 0.0
        %1870 = vmatprep.subr.mxu0 0.0
        %1871 = vmatpush1.xpose.msra.mxu0 0.0
        %1872 = vmatprep.subr.mxu0 0.0
        %1873 = vmatpush1.xpose.msra.mxu0 0.0
        %1874 = vmatprep.subr.mxu0 0.0
        %1875 = vmatpush1.xpose.msra.mxu0 0.0
        %1876 = vmatprep.subr.mxu0 0.0
        %1877 = vmatpush1.xpose.msra.mxu0 0.0
        %1878 = vmatprep.subr.mxu0 0.0
        %1879 = vmatpush1.xpose.msra.mxu0 0.0
        %1880 = vmatprep.subr.mxu0 0.0
        %1881 = vmatpush1.xpose.msra.mxu0 0.0
        %1882 = vmatprep.subr.mxu0 0.0
        %1883 = vmatpush1.xpose.msra.mxu0 0.0
        %1884 = vmatprep.subr.mxu0 0.0
        %1885 = vmatpush1.xpose.msra.mxu0 0.0
        %1886 = vmatprep.subr.mxu0 0.0
        %1887 = vmatpush1.xpose.msra.mxu0 0.0
        %1888 = vmatprep.subr.mxu0 0.0
        %1889 = vmatpush1.xpose.msra.mxu0 0.0
        %1890 = vmatprep.subr.mxu0 0.0
        %1891 = vmatpush1.xpose.msra.mxu0 0.0
        %1892 = vmatprep.subr.mxu0 0.0
        %1893 = vmatpush1.xpose.msra.mxu0 0.0
        %1894 = vmatprep.subr.mxu0 0.0
        %1895 = vmatpush1.xpose.msra.mxu0 0.0
        %1896 = vmatprep.subr.mxu0 0.0
        %1897 = vmatpush1.xpose.msra.mxu0 0.0
        %1898 = vmatprep.subr.mxu0 0.0
        %1899 = vmatpush1.xpose.msra.mxu0 0.0
        %1900 = vmatprep.subr.mxu0 0.0
        %1901 = vmatpush1.xpose.msra.mxu0 0.0
        %1902 = vmatprep.subr.mxu0 0.0
        %1903 = vmatpush1.xpose.msra.mxu0 0.0
        %1904 = vmatprep.subr.mxu0 0.0
        %1905 = vmatpush1.xpose.msra.mxu0 0.0
        %1906 = vmatprep.subr.mxu0 0.0
        %1907 = vmatpush1.xpose.msra.mxu0 0.0
        %1908 = vmatprep.subr.mxu0 0.0
        %1909 = vmatpush1.xpose.msra.mxu0 0.0
        %1910 = vmatprep.subr.mxu0 0.0
        %1911 = vmatpush1.xpose.msra.mxu0 0.0
        %1912 = vmatprep.subr.mxu0 0.0
        %1913 = vmatpush1.xpose.msra.mxu0 0.0
        %1914 = vmatprep.subr.mxu0 0.0
        %1915 = vmatpush1.xpose.msra.mxu0 0.0
        %1916 = vmatprep.subr.mxu0 0.0
        %1917 = vmatpush1.xpose.msra.mxu0 0.0
        %1918 = vmatprep.subr.mxu0 0.0
        %1919 = vmatpush1.xpose.msra.mxu0 0.0
        %1920 = vmatprep.mubr.f32.mxu0 0.0
        %1921 = vmatmul.mubr.f32.gmra.mrb[0].mxu0 %v1264
        %v1922 = vpop.f32.mrb[0].mxu0
        %v1923 = vadd.f32 0.0, %v1922
        %v1924 = vpop.f32.mrb[0].mxu0
        %1925 = vdwg.mxu0
        %1926 = vmatprep.subr.mxu0 0.0
        %1927 = vmatpush1.xpose.msra.mxu0 %v1383
        %1928 = vmatprep.subr.mxu0 0.0
        %1929 = vmatpush1.xpose.msra.mxu0 0.0
        %1930 = vmatprep.subr.mxu0 0.0
        %1931 = vmatpush1.xpose.msra.mxu0 0.0
        %1932 = vmatprep.subr.mxu0 0.0
        %1933 = vmatpush1.xpose.msra.mxu0 0.0
        %1934 = vmatprep.subr.mxu0 0.0
        %1935 = vmatpush1.xpose.msra.mxu0 0.0
        %1936 = vmatprep.subr.mxu0 0.0
        %1937 = vmatpush1.xpose.msra.mxu0 0.0
        %1938 = vmatprep.subr.mxu0 0.0
        %1939 = vmatpush1.xpose.msra.mxu0 0.0
        %1940 = vmatprep.subr.mxu0 0.0
        %1941 = vmatpush1.xpose.msra.mxu0 0.0
        %1942 = vmatprep.subr.mxu0 0.0
        %1943 = vmatpush1.xpose.msra.mxu0 0.0
        %1944 = vmatprep.subr.mxu0 0.0
        %1945 = vmatpush1.xpose.msra.mxu0 0.0
        %1946 = vmatprep.subr.mxu0 0.0
        %1947 = vmatpush1.xpose.msra.mxu0 0.0
        %1948 = vmatprep.subr.mxu0 0.0
        %1949 = vmatpush1.xpose.msra.mxu0 0.0
        %1950 = vmatprep.subr.mxu0 0.0
        %1951 = vmatpush1.xpose.msra.mxu0 0.0
        %1952 = vmatprep.subr.mxu0 0.0
        %1953 = vmatpush1.xpose.msra.mxu0 0.0
        %1954 = vmatprep.subr.mxu0 0.0
        %1955 = vmatpush1.xpose.msra.mxu0 0.0
        %1956 = vmatprep.subr.mxu0 0.0
        %1957 = vmatpush1.xpose.msra.mxu0 0.0
        %1958 = vmatprep.subr.mxu0 0.0
        %1959 = vmatpush1.xpose.msra.mxu0 0.0
        %1960 = vmatprep.subr.mxu0 0.0
        %1961 = vmatpush1.xpose.msra.mxu0 0.0
        %1962 = vmatprep.subr.mxu0 0.0
        %1963 = vmatpush1.xpose.msra.mxu0 0.0
        %1964 = vmatprep.subr.mxu0 0.0
        %1965 = vmatpush1.xpose.msra.mxu0 0.0
        %1966 = vmatprep.subr.mxu0 0.0
        %1967 = vmatpush1.xpose.msra.mxu0 0.0
        %1968 = vmatprep.subr.mxu0 0.0
        %1969 = vmatpush1.xpose.msra.mxu0 0.0
        %1970 = vmatprep.subr.mxu0 0.0
        %1971 = vmatpush1.xpose.msra.mxu0 0.0
        %1972 = vmatprep.subr.mxu0 0.0
        %1973 = vmatpush1.xpose.msra.mxu0 0.0
        %1974 = vmatprep.subr.mxu0 0.0
        %1975 = vmatpush1.xpose.msra.mxu0 0.0
        %1976 = vmatprep.subr.mxu0 0.0
        %1977 = vmatpush1.xpose.msra.mxu0 0.0
        %1978 = vmatprep.subr.mxu0 0.0
        %1979 = vmatpush1.xpose.msra.mxu0 0.0
        %1980 = vmatprep.subr.mxu0 0.0
        %1981 = vmatpush1.xpose.msra.mxu0 0.0
        %1982 = vmatprep.subr.mxu0 0.0
        %1983 = vmatpush1.xpose.msra.mxu0 0.0
        %1984 = vmatprep.subr.mxu0 0.0
        %1985 = vmatpush1.xpose.msra.mxu0 0.0
        %1986 = vmatprep.subr.mxu0 0.0
        %1987 = vmatpush1.xpose.msra.mxu0 0.0
        %1988 = vmatprep.subr.mxu0 0.0
        %1989 = vmatpush1.xpose.msra.mxu0 0.0
        %1990 = vmatprep.mubr.f32.mxu0 0.0
        %1991 = vmatmul.mubr.f32.gmra.mrb[0].mxu0 %v1270
        %v1992 = vpop.f32.mrb[0].mxu0
        %v1993 = vadd.f32 0.0, %v1992
        %v1994 = vpop.f32.mrb[0].mxu0
        %1995 = vdwg.mxu0
        %1996 = vmatprep.subr.mxu0 0.0
        %1997 = vmatpush1.xpose.msra.mxu0 %v1389
        %1998 = vmatprep.subr.mxu0 0.0
        %1999 = vmatpush1.xpose.msra.mxu0 0.0
        %2000 = vmatprep.subr.mxu0 0.0
        %2001 = vmatpush1.xpose.msra.mxu0 0.0
        %2002 = vmatprep.subr.mxu0 0.0
        %2003 = vmatpush1.xpose.msra.mxu0 0.0
        %2004 = vmatprep.subr.mxu0 0.0
        %2005 = vmatpush1.xpose.msra.mxu0 0.0
        %2006 = vmatprep.subr.mxu0 0.0
        %2007 = vmatpush1.xpose.msra.mxu0 0.0
        %2008 = vmatprep.subr.mxu0 0.0
        %2009 = vmatpush1.xpose.msra.mxu0 0.0
        %2010 = vmatprep.subr.mxu0 0.0
        %2011 = vmatpush1.xpose.msra.mxu0 0.0
        %2012 = vmatprep.subr.mxu0 0.0
        %2013 = vmatpush1.xpose.msra.mxu0 0.0
        %2014 = vmatprep.subr.mxu0 0.0
        %2015 = vmatpush1.xpose.msra.mxu0 0.0
        %2016 = vmatprep.subr.mxu0 0.0
        %2017 = vmatpush1.xpose.msra.mxu0 0.0
        %2018 = vmatprep.subr.mxu0 0.0
        %2019 = vmatpush1.xpose.msra.mxu0 0.0
        %2020 = vmatprep.subr.mxu0 0.0
        %2021 = vmatpush1.xpose.msra.mxu0 0.0
        %2022 = vmatprep.subr.mxu0 0.0
        %2023 = vmatpush1.xpose.msra.mxu0 0.0
        %2024 = vmatprep.subr.mxu0 0.0
        %2025 = vmatpush1.xpose.msra.mxu0 0.0
        %2026 = vmatprep.subr.mxu0 0.0
        %2027 = vmatpush1.xpose.msra.mxu0 0.0
        %2028 = vmatprep.subr.mxu0 0.0
        %2029 = vmatpush1.xpose.msra.mxu0 0.0
        %2030 = vmatprep.subr.mxu0 0.0
        %2031 = vmatpush1.xpose.msra.mxu0 0.0
        %2032 = vmatprep.subr.mxu0 0.0
        %2033 = vmatpush1.xpose.msra.mxu0 0.0
        %2034 = vmatprep.subr.mxu0 0.0
        %2035 = vmatpush1.xpose.msra.mxu0 0.0
        %2036 = vmatprep.subr.mxu0 0.0
        %2037 = vmatpush1.xpose.msra.mxu0 0.0
        %2038 = vmatprep.subr.mxu0 0.0
        %2039 = vmatpush1.xpose.msra.mxu0 0.0
        %2040 = vmatprep.subr.mxu0 0.0
        %2041 = vmatpush1.xpose.msra.mxu0 0.0
        %2042 = vmatprep.subr.mxu0 0.0
        %2043 = vmatpush1.xpose.msra.mxu0 0.0
        %2044 = vmatprep.subr.mxu0 0.0
        %2045 = vmatpush1.xpose.msra.mxu0 0.0
        %2046 = vmatprep.subr.mxu0 0.0
        %2047 = vmatpush1.xpose.msra.mxu0 0.0
        %2048 = vmatprep.subr.mxu0 0.0
        %2049 = vmatpush1.xpose.msra.mxu0 0.0
        %2050 = vmatprep.subr.mxu0 0.0
        %2051 = vmatpush1.xpose.msra.mxu0 0.0
        %2052 = vmatprep.subr.mxu0 0.0
        %2053 = vmatpush1.xpose.msra.mxu0 0.0
        %2054 = vmatprep.subr.mxu0 0.0
        %2055 = vmatpush1.xpose.msra.mxu0 0.0
        %2056 = vmatprep.subr.mxu0 0.0
        %2057 = vmatpush1.xpose.msra.mxu0 0.0
        %2058 = vmatprep.subr.mxu0 0.0
        %2059 = vmatpush1.xpose.msra.mxu0 0.0
        %2060 = vmatprep.mubr.f32.mxu0 0.0
        %2061 = vmatmul.mubr.f32.gmra.mrb[0].mxu0 %v1276
        %v2062 = vpop.f32.mrb[0].mxu0
        %v2063 = vadd.f32 0.0, %v2062
        %v2064 = vpop.f32.mrb[0].mxu0
        %2065 = vdwg.mxu0
        %v2066 = vmul.f32 %v1573, 0.15811388
        %v2067 = vmul.f32 %v1643, 0.15811388
        %v2068 = vmul.f32 %v1713, 0.15811388
        %v2069 = vmul.f32 %v1783, 0.15811388
        %v2070 = vmul.f32 %v1853, 0.15811388
        %v2071 = vmul.f32 %v1923, 0.15811388
        %v2072 = vmul.f32 %v1993, 0.15811388
        %v2073 = vmul.f32 %v2063, 0.15811388
        %vm2074 = vcmask 64512
        %v2075 = vsel %vm2074, %v2066, -inf
        %2076 = vmax.xlane.f32.xlu0 %v2075
        %v2077 = vpop.xlane.xlu0 %2076
        %v2078 = vsel %vm2074, %v2067, -inf
        %2079 = vmax.xlane.f32.xlu0 %v2078
        %v2080 = vpop.xlane.xlu0 %2079
        %v2081 = vsel %vm2074, %v2068, -inf
        %2082 = vmax.xlane.f32.xlu0 %v2081
        %v2083 = vpop.xlane.xlu0 %2082
        %v2084 = vsel %vm2074, %v2069, -inf
        %2085 = vmax.xlane.f32.xlu0 %v2084
        %v2086 = vpop.xlane.xlu0 %2085
        %v2087 = vsel %vm2074, %v2070, -inf
        %2088 = vmax.xlane.f32.xlu0 %v2087
        %v2089 = vpop.xlane.xlu0 %2088
        %v2090 = vsel %vm2074, %v2071, -inf
        %2091 = vmax.xlane.f32.xlu0 %v2090
        %v2092 = vpop.xlane.xlu0 %2091
        %v2093 = vsel %vm2074, %v2072, -inf
        %2094 = vmax.xlane.f32.xlu0 %v2093
        %v2095 = vpop.xlane.xlu0 %2094
        %v2096 = vsel %vm2074, %v2073, -inf
        %2097 = vmax.xlane.f32.xlu0 %v2096
        %v2098 = vpop.xlane.xlu0 %2097
        %v2099 = vsub.f32 %v2066, %v2077
        %v2100 = vsub.f32 %v2067, %v2080
        %v2101 = vsub.f32 %v2068, %v2083
        %v2102 = vsub.f32 %v2069, %v2086
        %v2103 = vsub.f32 %v2070, %v2089
        %v2104 = vsub.f32 %v2071, %v2092
        %v2105 = vsub.f32 %v2072, %v2095
        %v2106 = vsub.f32 %v2073, %v2098
        %v2107 = vmul.f32 %v2099, 1.442695
        %v2108 = vpow.pop %v2107
        %v2109 = vmul.f32 %v2100, 1.442695
        %v2110 = vpow.pop %v2109
        %v2111 = vmul.f32 %v2101, 1.442695
        %v2112 = vpow.pop %v2111
        %v2113 = vmul.f32 %v2102, 1.442695
        %v2114 = vpow.pop %v2113
        %v2115 = vmul.f32 %v2103, 1.442695
        %v2116 = vpow.pop %v2115
        %v2117 = vmul.f32 %v2104, 1.442695
        %v2118 = vpow.pop %v2117
        %v2119 = vmul.f32 %v2105, 1.442695
        %v2120 = vpow.pop %v2119
        %v2121 = vmul.f32 %v2106, 1.442695
        %v2122 = vpow.pop %v2121
        %v2123 = vsel %vm2074, %v2108, 0.0
        %2124 = vadd.xlane.f32.xlu0 %v2123
        %v2125 = vpop.xlane.xlu0 %2124
        %v2126 = vsel %vm2074, %v2110, 0.0
        %2127 = vadd.xlane.f32.xlu0 %v2126
        %v2128 = vpop.xlane.xlu0 %2127
        %v2129 = vsel %vm2074, %v2112, 0.0
        %2130 = vadd.xlane.f32.xlu0 %v2129
        %v2131 = vpop.xlane.xlu0 %2130
        %v2132 = vsel %vm2074, %v2114, 0.0
        %2133 = vadd.xlane.f32.xlu0 %v2132
        %v2134 = vpop.xlane.xlu0 %2133
        %v2135 = vsel %vm2074, %v2116, 0.0
        %2136 = vadd.xlane.f32.xlu0 %v2135
        %v2137 = vpop.xlane.xlu0 %2136
        %v2138 = vsel %vm2074, %v2118, 0.0
        %2139 = vadd.xlane.f32.xlu0 %v2138
        %v2140 = vpop.xlane.xlu0 %2139
        %v2141 = vsel %vm2074, %v2120, 0.0
        %2142 = vadd.xlane.f32.xlu0 %v2141
        %v2143 = vpop.xlane.xlu0 %2142
        %v2144 = vsel %vm2074, %v2122, 0.0
        %2145 = vadd.xlane.f32.xlu0 %v2144
        %v2146 = vpop.xlane.xlu0 %2145
        %v2147 = vrcp.pop %v2125
        %v2148 = vrcp.pop %v2128
        %v2149 = vrcp.pop %v2131
        %v2150 = vrcp.pop %v2134
        %v2151 = vrcp.pop %v2137
        %v2152 = vrcp.pop %v2140
        %v2153 = vrcp.pop %v2143
        %v2154 = vrcp.pop %v2146
        %v2155 = vmul.f32 %v2108, %v2147
        %v2156 = vmul.f32 %v2110, %v2148
        %v2157 = vmul.f32 %v2112, %v2149
        %v2158 = vmul.f32 %v2114, %v2150
        %v2159 = vmul.f32 %v2116, %v2151
        %v2160 = vmul.f32 %v2118, %v2152
        %v2161 = vmul.f32 %v2120, %v2153
        %v2162 = vmul.f32 %v2122, %v2154
        %v2164 = vsel %vm2074, %v2155, 0
        %2166 = vmatprep.subr.mxu0 0.0
        %2167 = vmatpush1.msra.mxu0 %v1460
        %2168 = vmatprep.subr.mxu0 0.0
        %2169 = vmatpush1.msra.mxu0 0.0
        %2170 = vmatprep.subr.mxu0 0.0
        %2171 = vmatpush1.msra.mxu0 0.0
        %2172 = vmatprep.subr.mxu0 0.0
        %2173 = vmatpush1.msra.mxu0 0.0
        %2174 = vmatprep.subr.mxu0 0.0
        %2175 = vmatpush1.msra.mxu0 0.0
        %2176 = vmatprep.subr.mxu0 0.0
        %2177 = vmatpush1.msra.mxu0 0.0
        %2178 = vmatprep.subr.mxu0 0.0
        %2179 = vmatpush1.msra.mxu0 0.0
        %2180 = vmatprep.subr.mxu0 0.0
        %2181 = vmatpush1.msra.mxu0 0.0
        %2182 = vmatprep.subr.mxu0 0.0
        %2183 = vmatpush1.msra.mxu0 0.0
        %2184 = vmatprep.subr.mxu0 0.0
        %2185 = vmatpush1.msra.mxu0 0.0
        %2186 = vmatprep.subr.mxu0 0.0
        %2187 = vmatpush1.msra.mxu0 0.0
        %2188 = vmatprep.subr.mxu0 0.0
        %2189 = vmatpush1.msra.mxu0 0.0
        %2190 = vmatprep.subr.mxu0 0.0
        %2191 = vmatpush1.msra.mxu0 0.0
        %2192 = vmatprep.subr.mxu0 0.0
        %2193 = vmatpush1.msra.mxu0 0.0
        %2194 = vmatprep.subr.mxu0 0.0
        %2195 = vmatpush1.msra.mxu0 0.0
        %2196 = vmatprep.subr.mxu0 0.0
        %2197 = vmatpush1.msra.mxu0 0.0
        %2198 = vmatprep.subr.mxu0 0.0
        %2199 = vmatpush1.msra.mxu0 0.0
        %2200 = vmatprep.subr.mxu0 0.0
        %2201 = vmatpush1.msra.mxu0 0.0
        %2202 = vmatprep.subr.mxu0 0.0
        %2203 = vmatpush1.msra.mxu0 0.0
        %2204 = vmatprep.subr.mxu0 0.0
        %2205 = vmatpush1.msra.mxu0 0.0
        %2206 = vmatprep.subr.mxu0 0.0
        %2207 = vmatpush1.msra.mxu0 0.0
        %2208 = vmatprep.subr.mxu0 0.0
        %2209 = vmatpush1.msra.mxu0 0.0
        %2210 = vmatprep.subr.mxu0 0.0
        %2211 = vmatpush1.msra.mxu0 0.0
        %2212 = vmatprep.subr.mxu0 0.0
        %2213 = vmatpush1.msra.mxu0 0.0
        %2214 = vmatprep.subr.mxu0 0.0
        %2215 = vmatpush1.msra.mxu0 0.0
        %2216 = vmatprep.subr.mxu0 0.0
        %2217 = vmatpush1.msra.mxu0 0.0
        %2218 = vmatprep.subr.mxu0 0.0
        %2219 = vmatpush1.msra.mxu0 0.0
        %2220 = vmatprep.subr.mxu0 0.0
        %2221 = vmatpush1.msra.mxu0 0.0
        %2222 = vmatprep.subr.mxu0 0.0
        %2223 = vmatpush1.msra.mxu0 0.0
        %2224 = vmatprep.subr.mxu0 0.0
        %2225 = vmatpush1.msra.mxu0 0.0
        %2226 = vmatprep.subr.mxu0 0.0
        %2227 = vmatpush1.msra.mxu0 0.0
        %2228 = vmatprep.subr.mxu0 0.0
        %2229 = vmatpush1.msra.mxu0 0.0
        %2230 = vmatprep.mubr.f32.mxu0 0.0
        %2231 = vmatmul.mubr.f32.gmra.mrb[0].mxu0 %v2164
        %v2232 = vpop.f32.mrb[0].mxu0
        %v2233 = vadd.f32 0.0, %v2232
        %v2234 = vpop.f32.mrb[0].mxu0
        %2235 = vdwg.mxu0
        %v2237 = vsel %vm2074, %v2156, 0
        %2239 = vmatprep.subr.mxu0 0.0
        %2240 = vmatpush1.msra.mxu0 %v1466
        %2241 = vmatprep.subr.mxu0 0.0
        %2242 = vmatpush1.msra.mxu0 0.0
        %2243 = vmatprep.subr.mxu0 0.0
        %2244 = vmatpush1.msra.mxu0 0.0
        %2245 = vmatprep.subr.mxu0 0.0
        %2246 = vmatpush1.msra.mxu0 0.0
        %2247 = vmatprep.subr.mxu0 0.0
        %2248 = vmatpush1.msra.mxu0 0.0
        %2249 = vmatprep.subr.mxu0 0.0
        %2250 = vmatpush1.msra.mxu0 0.0
        %2251 = vmatprep.subr.mxu0 0.0
        %2252 = vmatpush1.msra.mxu0 0.0
        %2253 = vmatprep.subr.mxu0 0.0
        %2254 = vmatpush1.msra.mxu0 0.0
        %2255 = vmatprep.subr.mxu0 0.0
        %2256 = vmatpush1.msra.mxu0 0.0
        %2257 = vmatprep.subr.mxu0 0.0
        %2258 = vmatpush1.msra.mxu0 0.0
        %2259 = vmatprep.subr.mxu0 0.0
        %2260 = vmatpush1.msra.mxu0 0.0
        %2261 = vmatprep.subr.mxu0 0.0
        %2262 = vmatpush1.msra.mxu0 0.0
        %2263 = vmatprep.subr.mxu0 0.0
        %2264 = vmatpush1.msra.mxu0 0.0
        %2265 = vmatprep.subr.mxu0 0.0
        %2266 = vmatpush1.msra.mxu0 0.0
        %2267 = vmatprep.subr.mxu0 0.0
        %2268 = vmatpush1.msra.mxu0 0.0
        %2269 = vmatprep.subr.mxu0 0.0
        %2270 = vmatpush1.msra.mxu0 0.0
        %2271 = vmatprep.subr.mxu0 0.0
        %2272 = vmatpush1.msra.mxu0 0.0
        %2273 = vmatprep.subr.mxu0 0.0
        %2274 = vmatpush1.msra.mxu0 0.0
        %2275 = vmatprep.subr.mxu0 0.0
        %2276 = vmatpush1.msra.mxu0 0.0
        %2277 = vmatprep.subr.mxu0 0.0
        %2278 = vmatpush1.msra.mxu0 0.0
        %2279 = vmatprep.subr.mxu0 0.0
        %2280 = vmatpush1.msra.mxu0 0.0
        %2281 = vmatprep.subr.mxu0 0.0
        %2282 = vmatpush1.msra.mxu0 0.0
        %2283 = vmatprep.subr.mxu0 0.0
        %2284 = vmatpush1.msra.mxu0 0.0
        %2285 = vmatprep.subr.mxu0 0.0
        %2286 = vmatpush1.msra.mxu0 0.0
        %2287 = vmatprep.subr.mxu0 0.0
        %2288 = vmatpush1.msra.mxu0 0.0
        %2289 = vmatprep.subr.mxu0 0.0
        %2290 = vmatpush1.msra.mxu0 0.0
        %2291 = vmatprep.subr.mxu0 0.0
        %2292 = vmatpush1.msra.mxu0 0.0
        %2293 = vmatprep.subr.mxu0 0.0
        %2294 = vmatpush1.msra.mxu0 0.0
        %2295 = vmatprep.subr.mxu0 0.0
        %2296 = vmatpush1.msra.mxu0 0.0
        %2297 = vmatprep.subr.mxu0 0.0
        %2298 = vmatpush1.msra.mxu0 0.0
        %2299 = vmatprep.subr.mxu0 0.0
        %2300 = vmatpush1.msra.mxu0 0.0
        %2301 = vmatprep.subr.mxu0 0.0
        %2302 = vmatpush1.msra.mxu0 0.0
        %2303 = vmatprep.mubr.f32.mxu0 0.0
        %2304 = vmatmul.mubr.f32.gmra.mrb[0].mxu0 %v2237
        %v2305 = vpop.f32.mrb[0].mxu0
        %v2306 = vadd.f32 0.0, %v2305
        %v2307 = vpop.f32.mrb[0].mxu0
        %2308 = vdwg.mxu0
        %v2310 = vsel %vm2074, %v2157, 0
        %2312 = vmatprep.subr.mxu0 0.0
        %2313 = vmatpush1.msra.mxu0 %v1472
        %2314 = vmatprep.subr.mxu0 0.0
        %2315 = vmatpush1.msra.mxu0 0.0
        %2316 = vmatprep.subr.mxu0 0.0
        %2317 = vmatpush1.msra.mxu0 0.0
        %2318 = vmatprep.subr.mxu0 0.0
        %2319 = vmatpush1.msra.mxu0 0.0
        %2320 = vmatprep.subr.mxu0 0.0
        %2321 = vmatpush1.msra.mxu0 0.0
        %2322 = vmatprep.subr.mxu0 0.0
        %2323 = vmatpush1.msra.mxu0 0.0
        %2324 = vmatprep.subr.mxu0 0.0
        %2325 = vmatpush1.msra.mxu0 0.0
        %2326 = vmatprep.subr.mxu0 0.0
        %2327 = vmatpush1.msra.mxu0 0.0
        %2328 = vmatprep.subr.mxu0 0.0
        %2329 = vmatpush1.msra.mxu0 0.0
        %2330 = vmatprep.subr.mxu0 0.0
        %2331 = vmatpush1.msra.mxu0 0.0
        %2332 = vmatprep.subr.mxu0 0.0
        %2333 = vmatpush1.msra.mxu0 0.0
        %2334 = vmatprep.subr.mxu0 0.0
        %2335 = vmatpush1.msra.mxu0 0.0
        %2336 = vmatprep.subr.mxu0 0.0
        %2337 = vmatpush1.msra.mxu0 0.0
        %2338 = vmatprep.subr.mxu0 0.0
        %2339 = vmatpush1.msra.mxu0 0.0
        %2340 = vmatprep.subr.mxu0 0.0
        %2341 = vmatpush1.msra.mxu0 0.0
        %2342 = vmatprep.subr.mxu0 0.0
        %2343 = vmatpush1.msra.mxu0 0.0
        %2344 = vmatprep.subr.mxu0 0.0
        %2345 = vmatpush1.msra.mxu0 0.0
        %2346 = vmatprep.subr.mxu0 0.0
        %2347 = vmatpush1.msra.mxu0 0.0
        %2348 = vmatprep.subr.mxu0 0.0
        %2349 = vmatpush1.msra.mxu0 0.0
        %2350 = vmatprep.subr.mxu0 0.0
        %2351 = vmatpush1.msra.mxu0 0.0
        %2352 = vmatprep.subr.mxu0 0.0
        %2353 = vmatpush1.msra.mxu0 0.0
        %2354 = vmatprep.subr.mxu0 0.0
        %2355 = vmatpush1.msra.mxu0 0.0
        %2356 = vmatprep.subr.mxu0 0.0
        %2357 = vmatpush1.msra.mxu0 0.0
        %2358 = vmatprep.subr.mxu0 0.0
        %2359 = vmatpush1.msra.mxu0 0.0
        %2360 = vmatprep.subr.mxu0 0.0
        %2361 = vmatpush1.msra.mxu0 0.0
        %2362 = vmatprep.subr.mxu0 0.0
        %2363 = vmatpush1.msra.mxu0 0.0
        %2364 = vmatprep.subr.mxu0 0.0
        %2365 = vmatpush1.msra.mxu0 0.0
        %2366 = vmatprep.subr.mxu0 0.0
        %2367 = vmatpush1.msra.mxu0 0.0
        %2368 = vmatprep.subr.mxu0 0.0
        %2369 = vmatpush1.msra.mxu0 0.0
        %2370 = vmatprep.subr.mxu0 0.0
        %2371 = vmatpush1.msra.mxu0 0.0
        %2372 = vmatprep.subr.mxu0 0.0
        %2373 = vmatpush1.msra.mxu0 0.0
        %2374 = vmatprep.subr.mxu0 0.0
        %2375 = vmatpush1.msra.mxu0 0.0
        %2376 = vmatprep.mubr.f32.mxu0 0.0
        %2377 = vmatmul.mubr.f32.gmra.mrb[0].mxu0 %v2310
        %v2378 = vpop.f32.mrb[0].mxu0
        %v2379 = vadd.f32 0.0, %v2378
        %v2380 = vpop.f32.mrb[0].mxu0
        %2381 = vdwg.mxu0
        %v2383 = vsel %vm2074, %v2158, 0
        %2385 = vmatprep.subr.mxu0 0.0
        %2386 = vmatpush1.msra.mxu0 %v1478
        %2387 = vmatprep.subr.mxu0 0.0
        %2388 = vmatpush1.msra.mxu0 0.0
        %2389 = vmatprep.subr.mxu0 0.0
        %2390 = vmatpush1.msra.mxu0 0.0
        %2391 = vmatprep.subr.mxu0 0.0
        %2392 = vmatpush1.msra.mxu0 0.0
        %2393 = vmatprep.subr.mxu0 0.0
        %2394 = vmatpush1.msra.mxu0 0.0
        %2395 = vmatprep.subr.mxu0 0.0
        %2396 = vmatpush1.msra.mxu0 0.0
        %2397 = vmatprep.subr.mxu0 0.0
        %2398 = vmatpush1.msra.mxu0 0.0
        %2399 = vmatprep.subr.mxu0 0.0
        %2400 = vmatpush1.msra.mxu0 0.0
        %2401 = vmatprep.subr.mxu0 0.0
        %2402 = vmatpush1.msra.mxu0 0.0
        %2403 = vmatprep.subr.mxu0 0.0
        %2404 = vmatpush1.msra.mxu0 0.0
        %2405 = vmatprep.subr.mxu0 0.0
        %2406 = vmatpush1.msra.mxu0 0.0
        %2407 = vmatprep.subr.mxu0 0.0
        %2408 = vmatpush1.msra.mxu0 0.0
        %2409 = vmatprep.subr.mxu0 0.0
        %2410 = vmatpush1.msra.mxu0 0.0
        %2411 = vmatprep.subr.mxu0 0.0
        %2412 = vmatpush1.msra.mxu0 0.0
        %2413 = vmatprep.subr.mxu0 0.0
        %2414 = vmatpush1.msra.mxu0 0.0
        %2415 = vmatprep.subr.mxu0 0.0
        %2416 = vmatpush1.msra.mxu0 0.0
        %2417 = vmatprep.subr.mxu0 0.0
        %2418 = vmatpush1.msra.mxu0 0.0
        %2419 = vmatprep.subr.mxu0 0.0
        %2420 = vmatpush1.msra.mxu0 0.0
        %2421 = vmatprep.subr.mxu0 0.0
        %2422 = vmatpush1.msra.mxu0 0.0
        %2423 = vmatprep.subr.mxu0 0.0
        %2424 = vmatpush1.msra.mxu0 0.0
        %2425 = vmatprep.subr.mxu0 0.0
        %2426 = vmatpush1.msra.mxu0 0.0
        %2427 = vmatprep.subr.mxu0 0.0
        %2428 = vmatpush1.msra.mxu0 0.0
        %2429 = vmatprep.subr.mxu0 0.0
        %2430 = vmatpush1.msra.mxu0 0.0
        %2431 = vmatprep.subr.mxu0 0.0
        %2432 = vmatpush1.msra.mxu0 0.0
        %2433 = vmatprep.subr.mxu0 0.0
        %2434 = vmatpush1.msra.mxu0 0.0
        %2435 = vmatprep.subr.mxu0 0.0
        %2436 = vmatpush1.msra.mxu0 0.0
        %2437 = vmatprep.subr.mxu0 0.0
        %2438 = vmatpush1.msra.mxu0 0.0
        %2439 = vmatprep.subr.mxu0 0.0
        %2440 = vmatpush1.msra.mxu0 0.0
        %2441 = vmatprep.subr.mxu0 0.0
        %2442 = vmatpush1.msra.mxu0 0.0
        %2443 = vmatprep.subr.mxu0 0.0
        %2444 = vmatpush1.msra.mxu0 0.0
        %2445 = vmatprep.subr.mxu0 0.0
        %2446 = vmatpush1.msra.mxu0 0.0
        %2447 = vmatprep.subr.mxu0 0.0
        %2448 = vmatpush1.msra.mxu0 0.0
        %2449 = vmatprep.mubr.f32.mxu0 0.0
        %2450 = vmatmul.mubr.f32.gmra.mrb[0].mxu0 %v2383
        %v2451 = vpop.f32.mrb[0].mxu0
        %v2452 = vadd.f32 0.0, %v2451
        %v2453 = vpop.f32.mrb[0].mxu0
        %2454 = vdwg.mxu0
        %v2456 = vsel %vm2074, %v2159, 0
        %2458 = vmatprep.subr.mxu0 0.0
        %2459 = vmatpush1.msra.mxu0 %v1484
        %2460 = vmatprep.subr.mxu0 0.0
        %2461 = vmatpush1.msra.mxu0 0.0
        %2462 = vmatprep.subr.mxu0 0.0
        %2463 = vmatpush1.msra.mxu0 0.0
        %2464 = vmatprep.subr.mxu0 0.0
        %2465 = vmatpush1.msra.mxu0 0.0
        %2466 = vmatprep.subr.mxu0 0.0
        %2467 = vmatpush1.msra.mxu0 0.0
        %2468 = vmatprep.subr.mxu0 0.0
        %2469 = vmatpush1.msra.mxu0 0.0
        %2470 = vmatprep.subr.mxu0 0.0
        %2471 = vmatpush1.msra.mxu0 0.0
        %2472 = vmatprep.subr.mxu0 0.0
        %2473 = vmatpush1.msra.mxu0 0.0
        %2474 = vmatprep.subr.mxu0 0.0
        %2475 = vmatpush1.msra.mxu0 0.0
        %2476 = vmatprep.subr.mxu0 0.0
        %2477 = vmatpush1.msra.mxu0 0.0
        %2478 = vmatprep.subr.mxu0 0.0
        %2479 = vmatpush1.msra.mxu0 0.0
        %2480 = vmatprep.subr.mxu0 0.0
        %2481 = vmatpush1.msra.mxu0 0.0
        %2482 = vmatprep.subr.mxu0 0.0
        %2483 = vmatpush1.msra.mxu0 0.0
        %2484 = vmatprep.subr.mxu0 0.0
        %2485 = vmatpush1.msra.mxu0 0.0
        %2486 = vmatprep.subr.mxu0 0.0
        %2487 = vmatpush1.msra.mxu0 0.0
        %2488 = vmatprep.subr.mxu0 0.0
        %2489 = vmatpush1.msra.mxu0 0.0
        %2490 = vmatprep.subr.mxu0 0.0
        %2491 = vmatpush1.msra.mxu0 0.0
        %2492 = vmatprep.subr.mxu0 0.0
        %2493 = vmatpush1.msra.mxu0 0.0
        %2494 = vmatprep.subr.mxu0 0.0
        %2495 = vmatpush1.msra.mxu0 0.0
        %2496 = vmatprep.subr.mxu0 0.0
        %2497 = vmatpush1.msra.mxu0 0.0
        %2498 = vmatprep.subr.mxu0 0.0
        %2499 = vmatpush1.msra.mxu0 0.0
        %2500 = vmatprep.subr.mxu0 0.0
        %2501 = vmatpush1.msra.mxu0 0.0
        %2502 = vmatprep.subr.mxu0 0.0
        %2503 = vmatpush1.msra.mxu0 0.0
        %2504 = vmatprep.subr.mxu0 0.0
        %2505 = vmatpush1.msra.mxu0 0.0
        %2506 = vmatprep.subr.mxu0 0.0
        %2507 = vmatpush1.msra.mxu0 0.0
        %2508 = vmatprep.subr.mxu0 0.0
        %2509 = vmatpush1.msra.mxu0 0.0
        %2510 = vmatprep.subr.mxu0 0.0
        %2511 = vmatpush1.msra.mxu0 0.0
        %2512 = vmatprep.subr.mxu0 0.0
        %2513 = vmatpush1.msra.mxu0 0.0
        %2514 = vmatprep.subr.mxu0 0.0
        %2515 = vmatpush1.msra.mxu0 0.0
        %2516 = vmatprep.subr.mxu0 0.0
        %2517 = vmatpush1.msra.mxu0 0.0
        %2518 = vmatprep.subr.mxu0 0.0
        %2519 = vmatpush1.msra.mxu0 0.0
        %2520 = vmatprep.subr.mxu0 0.0
        %2521 = vmatpush1.msra.mxu0 0.0
        %2522 = vmatprep.mubr.f32.mxu0 0.0
        %2523 = vmatmul.mubr.f32.gmra.mrb[0].mxu0 %v2456
        %v2524 = vpop.f32.mrb[0].mxu0
        %v2525 = vadd.f32 0.0, %v2524
        %v2526 = vpop.f32.mrb[0].mxu0
        %2527 = vdwg.mxu0
        %v2529 = vsel %vm2074, %v2160, 0
        %2531 = vmatprep.subr.mxu0 0.0
        %2532 = vmatpush1.msra.mxu0 %v1490
        %2533 = vmatprep.subr.mxu0 0.0
        %2534 = vmatpush1.msra.mxu0 0.0
        %2535 = vmatprep.subr.mxu0 0.0
        %2536 = vmatpush1.msra.mxu0 0.0
        %2537 = vmatprep.subr.mxu0 0.0
        %2538 = vmatpush1.msra.mxu0 0.0
        %2539 = vmatprep.subr.mxu0 0.0
        %2540 = vmatpush1.msra.mxu0 0.0
        %2541 = vmatprep.subr.mxu0 0.0
        %2542 = vmatpush1.msra.mxu0 0.0
        %2543 = vmatprep.subr.mxu0 0.0
        %2544 = vmatpush1.msra.mxu0 0.0
        %2545 = vmatprep.subr.mxu0 0.0
        %2546 = vmatpush1.msra.mxu0 0.0
        %2547 = vmatprep.subr.mxu0 0.0
        %2548 = vmatpush1.msra.mxu0 0.0
        %2549 = vmatprep.subr.mxu0 0.0
        %2550 = vmatpush1.msra.mxu0 0.0
        %2551 = vmatprep.subr.mxu0 0.0
        %2552 = vmatpush1.msra.mxu0 0.0
        %2553 = vmatprep.subr.mxu0 0.0
        %2554 = vmatpush1.msra.mxu0 0.0
        %2555 = vmatprep.subr.mxu0 0.0
        %2556 = vmatpush1.msra.mxu0 0.0
        %2557 = vmatprep.subr.mxu0 0.0
        %2558 = vmatpush1.msra.mxu0 0.0
        %2559 = vmatprep.subr.mxu0 0.0
        %2560 = vmatpush1.msra.mxu0 0.0
        %2561 = vmatprep.subr.mxu0 0.0
        %2562 = vmatpush1.msra.mxu0 0.0
        %2563 = vmatprep.subr.mxu0 0.0
        %2564 = vmatpush1.msra.mxu0 0.0
        %2565 = vmatprep.subr.mxu0 0.0
        %2566 = vmatpush1.msra.mxu0 0.0
        %2567 = vmatprep.subr.mxu0 0.0
        %2568 = vmatpush1.msra.mxu0 0.0
        %2569 = vmatprep.subr.mxu0 0.0
        %2570 = vmatpush1.msra.mxu0 0.0
        %2571 = vmatprep.subr.mxu0 0.0
        %2572 = vmatpush1.msra.mxu0 0.0
        %2573 = vmatprep.subr.mxu0 0.0
        %2574 = vmatpush1.msra.mxu0 0.0
        %2575 = vmatprep.subr.mxu0 0.0
        %2576 = vmatpush1.msra.mxu0 0.0
        %2577 = vmatprep.subr.mxu0 0.0
        %2578 = vmatpush1.msra.mxu0 0.0
        %2579 = vmatprep.subr.mxu0 0.0
        %2580 = vmatpush1.msra.mxu0 0.0
        %2581 = vmatprep.subr.mxu0 0.0
        %2582 = vmatpush1.msra.mxu0 0.0
        %2583 = vmatprep.subr.mxu0 0.0
        %2584 = vmatpush1.msra.mxu0 0.0
        %2585 = vmatprep.subr.mxu0 0.0
        %2586 = vmatpush1.msra.mxu0 0.0
        %2587 = vmatprep.subr.mxu0 0.0
        %2588 = vmatpush1.msra.mxu0 0.0
        %2589 = vmatprep.subr.mxu0 0.0
        %2590 = vmatpush1.msra.mxu0 0.0
        %2591 = vmatprep.subr.mxu0 0.0
        %2592 = vmatpush1.msra.mxu0 0.0
        %2593 = vmatprep.subr.mxu0 0.0
        %2594 = vmatpush1.msra.mxu0 0.0
        %2595 = vmatprep.mubr.f32.mxu0 0.0
        %2596 = vmatmul.mubr.f32.gmra.mrb[0].mxu0 %v2529
        %v2597 = vpop.f32.mrb[0].mxu0
        %v2598 = vadd.f32 0.0, %v2597
        %v2599 = vpop.f32.mrb[0].mxu0
        %2600 = vdwg.mxu0
        %v2602 = vsel %vm2074, %v2161, 0
        %2604 = vmatprep.subr.mxu0 0.0
        %2605 = vmatpush1.msra.mxu0 %v1496
        %2606 = vmatprep.subr.mxu0 0.0
        %2607 = vmatpush1.msra.mxu0 0.0
        %2608 = vmatprep.subr.mxu0 0.0
        %2609 = vmatpush1.msra.mxu0 0.0
        %2610 = vmatprep.subr.mxu0 0.0
        %2611 = vmatpush1.msra.mxu0 0.0
        %2612 = vmatprep.subr.mxu0 0.0
        %2613 = vmatpush1.msra.mxu0 0.0
        %2614 = vmatprep.subr.mxu0 0.0
        %2615 = vmatpush1.msra.mxu0 0.0
        %2616 = vmatprep.subr.mxu0 0.0
        %2617 = vmatpush1.msra.mxu0 0.0
        %2618 = vmatprep.subr.mxu0 0.0
        %2619 = vmatpush1.msra.mxu0 0.0
        %2620 = vmatprep.subr.mxu0 0.0
        %2621 = vmatpush1.msra.mxu0 0.0
        %2622 = vmatprep.subr.mxu0 0.0
        %2623 = vmatpush1.msra.mxu0 0.0
        %2624 = vmatprep.subr.mxu0 0.0
        %2625 = vmatpush1.msra.mxu0 0.0
        %2626 = vmatprep.subr.mxu0 0.0
        %2627 = vmatpush1.msra.mxu0 0.0
        %2628 = vmatprep.subr.mxu0 0.0
        %2629 = vmatpush1.msra.mxu0 0.0
        %2630 = vmatprep.subr.mxu0 0.0
        %2631 = vmatpush1.msra.mxu0 0.0
        %2632 = vmatprep.subr.mxu0 0.0
        %2633 = vmatpush1.msra.mxu0 0.0
        %2634 = vmatprep.subr.mxu0 0.0
        %2635 = vmatpush1.msra.mxu0 0.0
        %2636 = vmatprep.subr.mxu0 0.0
        %2637 = vmatpush1.msra.mxu0 0.0
        %2638 = vmatprep.subr.mxu0 0.0
        %2639 = vmatpush1.msra.mxu0 0.0
        %2640 = vmatprep.subr.mxu0 0.0
        %2641 = vmatpush1.msra.mxu0 0.0
        %2642 = vmatprep.subr.mxu0 0.0
        %2643 = vmatpush1.msra.mxu0 0.0
        %2644 = vmatprep.subr.mxu0 0.0
        %2645 = vmatpush1.msra.mxu0 0.0
        %2646 = vmatprep.subr.mxu0 0.0
        %2647 = vmatpush1.msra.mxu0 0.0
        %2648 = vmatprep.subr.mxu0 0.0
        %2649 = vmatpush1.msra.mxu0 0.0
        %2650 = vmatprep.subr.mxu0 0.0
        %2651 = vmatpush1.msra.mxu0 0.0
        %2652 = vmatprep.subr.mxu0 0.0
        %2653 = vmatpush1.msra.mxu0 0.0
        %2654 = vmatprep.subr.mxu0 0.0
        %2655 = vmatpush1.msra.mxu0 0.0
        %2656 = vmatprep.subr.mxu0 0.0
        %2657 = vmatpush1.msra.mxu0 0.0
        %2658 = vmatprep.subr.mxu0 0.0
        %2659 = vmatpush1.msra.mxu0 0.0
        %2660 = vmatprep.subr.mxu0 0.0
        %2661 = vmatpush1.msra.mxu0 0.0
        %2662 = vmatprep.subr.mxu0 0.0
        %2663 = vmatpush1.msra.mxu0 0.0
        %2664 = vmatprep.subr.mxu0 0.0
        %2665 = vmatpush1.msra.mxu0 0.0
        %2666 = vmatprep.subr.mxu0 0.0
        %2667 = vmatpush1.msra.mxu0 0.0
        %2668 = vmatprep.mubr.f32.mxu0 0.0
        %2669 = vmatmul.mubr.f32.gmra.mrb[0].mxu0 %v2602
        %v2670 = vpop.f32.mrb[0].mxu0
        %v2671 = vadd.f32 0.0, %v2670
        %v2672 = vpop.f32.mrb[0].mxu0
        %2673 = vdwg.mxu0
        %v2675 = vsel %vm2074, %v2162, 0
        %2677 = vmatprep.subr.mxu0 0.0
        %2678 = vmatpush1.msra.mxu0 %v1502
        %2679 = vmatprep.subr.mxu0 0.0
        %2680 = vmatpush1.msra.mxu0 0.0
        %2681 = vmatprep.subr.mxu0 0.0
        %2682 = vmatpush1.msra.mxu0 0.0
        %2683 = vmatprep.subr.mxu0 0.0
        %2684 = vmatpush1.msra.mxu0 0.0
        %2685 = vmatprep.subr.mxu0 0.0
        %2686 = vmatpush1.msra.mxu0 0.0
        %2687 = vmatprep.subr.mxu0 0.0
        %2688 = vmatpush1.msra.mxu0 0.0
        %2689 = vmatprep.subr.mxu0 0.0
        %2690 = vmatpush1.msra.mxu0 0.0
        %2691 = vmatprep.subr.mxu0 0.0
        %2692 = vmatpush1.msra.mxu0 0.0
        %2693 = vmatprep.subr.mxu0 0.0
        %2694 = vmatpush1.msra.mxu0 0.0
        %2695 = vmatprep.subr.mxu0 0.0
        %2696 = vmatpush1.msra.mxu0 0.0
        %2697 = vmatprep.subr.mxu0 0.0
        %2698 = vmatpush1.msra.mxu0 0.0
        %2699 = vmatprep.subr.mxu0 0.0
        %2700 = vmatpush1.msra.mxu0 0.0
        %2701 = vmatprep.subr.mxu0 0.0
        %2702 = vmatpush1.msra.mxu0 0.0
        %2703 = vmatprep.subr.mxu0 0.0
        %2704 = vmatpush1.msra.mxu0 0.0
        %2705 = vmatprep.subr.mxu0 0.0
        %2706 = vmatpush1.msra.mxu0 0.0
        %2707 = vmatprep.subr.mxu0 0.0
        %2708 = vmatpush1.msra.mxu0 0.0
        %2709 = vmatprep.subr.mxu0 0.0
        %2710 = vmatpush1.msra.mxu0 0.0
        %2711 = vmatprep.subr.mxu0 0.0
        %2712 = vmatpush1.msra.mxu0 0.0
        %2713 = vmatprep.subr.mxu0 0.0
        %2714 = vmatpush1.msra.mxu0 0.0
        %2715 = vmatprep.subr.mxu0 0.0
        %2716 = vmatpush1.msra.mxu0 0.0
        %2717 = vmatprep.subr.mxu0 0.0
        %2718 = vmatpush1.msra.mxu0 0.0
        %2719 = vmatprep.subr.mxu0 0.0
        %2720 = vmatpush1.msra.mxu0 0.0
        %2721 = vmatprep.subr.mxu0 0.0
        %2722 = vmatpush1.msra.mxu0 0.0
        %2723 = vmatprep.subr.mxu0 0.0
        %2724 = vmatpush1.msra.mxu0 0.0
        %2725 = vmatprep.subr.mxu0 0.0
        %2726 = vmatpush1.msra.mxu0 0.0
        %2727 = vmatprep.subr.mxu0 0.0
        %2728 = vmatpush1.msra.mxu0 0.0
        %2729 = vmatprep.subr.mxu0 0.0
        %2730 = vmatpush1.msra.mxu0 0.0
        %2731 = vmatprep.subr.mxu0 0.0
        %2732 = vmatpush1.msra.mxu0 0.0
        %2733 = vmatprep.subr.mxu0 0.0
        %2734 = vmatpush1.msra.mxu0 0.0
        %2735 = vmatprep.subr.mxu0 0.0
        %2736 = vmatpush1.msra.mxu0 0.0
        %2737 = vmatprep.subr.mxu0 0.0
        %2738 = vmatpush1.msra.mxu0 0.0
        %2739 = vmatprep.subr.mxu0 0.0
        %2740 = vmatpush1.msra.mxu0 0.0
        %2741 = vmatprep.mubr.f32.mxu0 0.0
        %2742 = vmatmul.mubr.f32.gmra.mrb[0].mxu0 %v2675
        %v2743 = vpop.f32.mrb[0].mxu0
        %v2744 = vadd.f32 0.0, %v2743
        %v2745 = vpop.f32.mrb[0].mxu0
        %2746 = vdwg.mxu0
        %v2747 = vld [vmem:[%s7] sm:$0xff]
        %v2748 = vld [vmem:[%s7 + $0x8] sm:$0xff]
        %v2749 = vld [vmem:[%s7 + $0x10] sm:$0xff]
        %v2750 = vld [vmem:[%s7 + $0x18] sm:$0xff]
        %v2751 = vld [vmem:[%s7 + $0x20] sm:$0xff]
        %v2752 = vld [vmem:[%s7 + $0x28] sm:$0xff]
        %v2753 = vld [vmem:[%s7 + $0x30] sm:$0xff]
        %v2754 = vld [vmem:[%s7 + $0x38] sm:$0xff]
        %v2755 = vld [vmem:[%s7 + $0x40] sm:$0xff]
        %v2756 = vld [vmem:[%s7 + $0x48] sm:$0xff]
        %v2757 = vld [vmem:[%s7 + $0x50] sm:$0xff]
        %v2758 = vld [vmem:[%s7 + $0x58] sm:$0xff]
        %v2759 = vld [vmem:[%s7 + $0x60] sm:$0xff]
        %v2760 = vld [vmem:[%s7 + $0x68] sm:$0xff]
        %v2761 = vld [vmem:[%s7 + $0x70] sm:$0xff]
        %v2762 = vld [vmem:[%s7 + $0x78] sm:$0xff]
        %2763 = vmatprep.subr.mxu0 0.0
        %2764 = vmatpush1.xpose.msra.mxu0 %v1349
        %2765 = vmatprep.subr.mxu0 0.0
        %2766 = vmatpush1.xpose.msra.mxu0 0.0
        %2767 = vmatprep.subr.mxu0 0.0
        %2768 = vmatpush1.xpose.msra.mxu0 0.0
        %2769 = vmatprep.subr.mxu0 0.0
        %2770 = vmatpush1.xpose.msra.mxu0 0.0
        %2771 = vmatprep.subr.mxu0 0.0
        %2772 = vmatpush1.xpose.msra.mxu0 0.0
        %2773 = vmatprep.subr.mxu0 0.0
        %2774 = vmatpush1.xpose.msra.mxu0 0.0
        %2775 = vmatprep.subr.mxu0 0.0
        %2776 = vmatpush1.xpose.msra.mxu0 0.0
        %2777 = vmatprep.subr.mxu0 0.0
        %2778 = vmatpush1.xpose.msra.mxu0 0.0
        %2779 = vmatprep.subr.mxu0 0.0
        %2780 = vmatpush1.xpose.msra.mxu0 0.0
        %2781 = vmatprep.subr.mxu0 0.0
        %2782 = vmatpush1.xpose.msra.mxu0 0.0
        %2783 = vmatprep.subr.mxu0 0.0
        %2784 = vmatpush1.xpose.msra.mxu0 0.0
        %2785 = vmatprep.subr.mxu0 0.0
        %2786 = vmatpush1.xpose.msra.mxu0 0.0
        %2787 = vmatprep.subr.mxu0 0.0
        %2788 = vmatpush1.xpose.msra.mxu0 0.0
        %2789 = vmatprep.subr.mxu0 0.0
        %2790 = vmatpush1.xpose.msra.mxu0 0.0
        %2791 = vmatprep.subr.mxu0 0.0
        %2792 = vmatpush1.xpose.msra.mxu0 0.0
        %2793 = vmatprep.subr.mxu0 0.0
        %2794 = vmatpush1.xpose.msra.mxu0 0.0
        %2795 = vmatprep.subr.mxu0 0.0
        %2796 = vmatpush1.xpose.msra.mxu0 0.0
        %2797 = vmatprep.subr.mxu0 0.0
        %2798 = vmatpush1.xpose.msra.mxu0 0.0
        %2799 = vmatprep.subr.mxu0 0.0
        %2800 = vmatpush1.xpose.msra.mxu0 0.0
        %2801 = vmatprep.subr.mxu0 0.0
        %2802 = vmatpush1.xpose.msra.mxu0 0.0
        %2803 = vmatprep.subr.mxu0 0.0
        %2804 = vmatpush1.xpose.msra.mxu0 0.0
        %2805 = vmatprep.subr.mxu0 0.0
        %2806 = vmatpush1.xpose.msra.mxu0 0.0
        %2807 = vmatprep.subr.mxu0 0.0
        %2808 = vmatpush1.xpose.msra.mxu0 0.0
        %2809 = vmatprep.subr.mxu0 0.0
        %2810 = vmatpush1.xpose.msra.mxu0 0.0
        %2811 = vmatprep.subr.mxu0 0.0
        %2812 = vmatpush1.xpose.msra.mxu0 0.0
        %2813 = vmatprep.subr.mxu0 0.0
        %2814 = vmatpush1.xpose.msra.mxu0 0.0
        %2815 = vmatprep.subr.mxu0 0.0
        %2816 = vmatpush1.xpose.msra.mxu0 0.0
        %2817 = vmatprep.subr.mxu0 0.0
        %2818 = vmatpush1.xpose.msra.mxu0 0.0
        %2819 = vmatprep.subr.mxu0 0.0
        %2820 = vmatpush1.xpose.msra.mxu0 0.0
        %2821 = vmatprep.subr.mxu0 0.0
        %2822 = vmatpush1.xpose.msra.mxu0 0.0
        %2823 = vmatprep.subr.mxu0 0.0
        %2824 = vmatpush1.xpose.msra.mxu0 0.0
        %2825 = vmatprep.subr.mxu0 0.0
        %2826 = vmatpush1.xpose.msra.mxu0 0.0
        %2827 = vmatprep.mubr.f32.mxu0 0.0
        %2828 = vmatmul.mubr.f32.gmra.mrb[0].mxu0 %v1236
        %v2829 = vpop.f32.mrb[0].mxu0
        %v2830 = vadd.f32 0.0, %v2829
        %v2831 = vpop.f32.mrb[0].mxu0
        %2832 = vdwg.mxu0
        %2833 = vmatprep.subr.mxu0 0.0
        %2834 = vmatpush1.xpose.msra.mxu0 %v1355
        %2835 = vmatprep.subr.mxu0 0.0
        %2836 = vmatpush1.xpose.msra.mxu0 0.0
        %2837 = vmatprep.subr.mxu0 0.0
        %2838 = vmatpush1.xpose.msra.mxu0 0.0
        %2839 = vmatprep.subr.mxu0 0.0
        %2840 = vmatpush1.xpose.msra.mxu0 0.0
        %2841 = vmatprep.subr.mxu0 0.0
        %2842 = vmatpush1.xpose.msra.mxu0 0.0
        %2843 = vmatprep.subr.mxu0 0.0
        %2844 = vmatpush1.xpose.msra.mxu0 0.0
        %2845 = vmatprep.subr.mxu0 0.0
        %2846 = vmatpush1.xpose.msra.mxu0 0.0
        %2847 = vmatprep.subr.mxu0 0.0
        %2848 = vmatpush1.xpose.msra.mxu0 0.0
        %2849 = vmatprep.subr.mxu0 0.0
        %2850 = vmatpush1.xpose.msra.mxu0 0.0
        %2851 = vmatprep.subr.mxu0 0.0
        %2852 = vmatpush1.xpose.msra.mxu0 0.0
        %2853 = vmatprep.subr.mxu0 0.0
        %2854 = vmatpush1.xpose.msra.mxu0 0.0
        %2855 = vmatprep.subr.mxu0 0.0
        %2856 = vmatpush1.xpose.msra.mxu0 0.0
        %2857 = vmatprep.subr.mxu0 0.0
        %2858 = vmatpush1.xpose.msra.mxu0 0.0
        %2859 = vmatprep.subr.mxu0 0.0
        %2860 = vmatpush1.xpose.msra.mxu0 0.0
        %2861 = vmatprep.subr.mxu0 0.0
        %2862 = vmatpush1.xpose.msra.mxu0 0.0
        %2863 = vmatprep.subr.mxu0 0.0
        %2864 = vmatpush1.xpose.msra.mxu0 0.0
        %2865 = vmatprep.subr.mxu0 0.0
        %2866 = vmatpush1.xpose.msra.mxu0 0.0
        %2867 = vmatprep.subr.mxu0 0.0
        %2868 = vmatpush1.xpose.msra.mxu0 0.0
        %2869 = vmatprep.subr.mxu0 0.0
        %2870 = vmatpush1.xpose.msra.mxu0 0.0
        %2871 = vmatprep.subr.mxu0 0.0
        %2872 = vmatpush1.xpose.msra.mxu0 0.0
        %2873 = vmatprep.subr.mxu0 0.0
        %2874 = vmatpush1.xpose.msra.mxu0 0.0
        %2875 = vmatprep.subr.mxu0 0.0
        %2876 = vmatpush1.xpose.msra.mxu0 0.0
        %2877 = vmatprep.subr.mxu0 0.0
        %2878 = vmatpush1.xpose.msra.mxu0 0.0
        %2879 = vmatprep.subr.mxu0 0.0
        %2880 = vmatpush1.xpose.msra.mxu0 0.0
        %2881 = vmatprep.subr.mxu0 0.0
        %2882 = vmatpush1.xpose.msra.mxu0 0.0
        %2883 = vmatprep.subr.mxu0 0.0
        %2884 = vmatpush1.xpose.msra.mxu0 0.0
        %2885 = vmatprep.subr.mxu0 0.0
        %2886 = vmatpush1.xpose.msra.mxu0 0.0
        %2887 = vmatprep.subr.mxu0 0.0
        %2888 = vmatpush1.xpose.msra.mxu0 0.0
        %2889 = vmatprep.subr.mxu0 0.0
        %2890 = vmatpush1.xpose.msra.mxu0 0.0
        %2891 = vmatprep.subr.mxu0 0.0
        %2892 = vmatpush1.xpose.msra.mxu0 0.0
        %2893 = vmatprep.subr.mxu0 0.0
        %2894 = vmatpush1.xpose.msra.mxu0 0.0
        %2895 = vmatprep.subr.mxu0 0.0
        %2896 = vmatpush1.xpose.msra.mxu0 0.0
        %2897 = vmatprep.mubr.f32.mxu0 0.0
        %2898 = vmatmul.mubr.f32.gmra.mrb[0].mxu0 %v1242
        %v2899 = vpop.f32.mrb[0].mxu0
        %v2900 = vadd.f32 0.0, %v2899
        %v2901 = vpop.f32.mrb[0].mxu0
        %2902 = vdwg.mxu0
        %2903 = vmatprep.subr.mxu0 0.0
        %2904 = vmatpush1.xpose.msra.mxu0 %v1361
        %2905 = vmatprep.subr.mxu0 0.0
        %2906 = vmatpush1.xpose.msra.mxu0 0.0
        %2907 = vmatprep.subr.mxu0 0.0
        %2908 = vmatpush1.xpose.msra.mxu0 0.0
        %2909 = vmatprep.subr.mxu0 0.0
        %2910 = vmatpush1.xpose.msra.mxu0 0.0
        %2911 = vmatprep.subr.mxu0 0.0
        %2912 = vmatpush1.xpose.msra.mxu0 0.0
        %2913 = vmatprep.subr.mxu0 0.0
        %2914 = vmatpush1.xpose.msra.mxu0 0.0
        %2915 = vmatprep.subr.mxu0 0.0
        %2916 = vmatpush1.xpose.msra.mxu0 0.0
        %2917 = vmatprep.subr.mxu0 0.0
        %2918 = vmatpush1.xpose.msra.mxu0 0.0
        %2919 = vmatprep.subr.mxu0 0.0
        %2920 = vmatpush1.xpose.msra.mxu0 0.0
        %2921 = vmatprep.subr.mxu0 0.0
        %2922 = vmatpush1.xpose.msra.mxu0 0.0
        %2923 = vmatprep.subr.mxu0 0.0
        %2924 = vmatpush1.xpose.msra.mxu0 0.0
        %2925 = vmatprep.subr.mxu0 0.0
        %2926 = vmatpush1.xpose.msra.mxu0 0.0
        %2927 = vmatprep.subr.mxu0 0.0
        %2928 = vmatpush1.xpose.msra.mxu0 0.0
        %2929 = vmatprep.subr.mxu0 0.0
        %2930 = vmatpush1.xpose.msra.mxu0 0.0
        %2931 = vmatprep.subr.mxu0 0.0
        %2932 = vmatpush1.xpose.msra.mxu0 0.0
        %2933 = vmatprep.subr.mxu0 0.0
        %2934 = vmatpush1.xpose.msra.mxu0 0.0
        %2935 = vmatprep.subr.mxu0 0.0
        %2936 = vmatpush1.xpose.msra.mxu0 0.0
        %2937 = vmatprep.subr.mxu0 0.0
        %2938 = vmatpush1.xpose.msra.mxu0 0.0
        %2939 = vmatprep.subr.mxu0 0.0
        %2940 = vmatpush1.xpose.msra.mxu0 0.0
        %2941 = vmatprep.subr.mxu0 0.0
        %2942 = vmatpush1.xpose.msra.mxu0 0.0
        %2943 = vmatprep.subr.mxu0 0.0
        %2944 = vmatpush1.xpose.msra.mxu0 0.0
        %2945 = vmatprep.subr.mxu0 0.0
        %2946 = vmatpush1.xpose.msra.mxu0 0.0
        %2947 = vmatprep.subr.mxu0 0.0
        %2948 = vmatpush1.xpose.msra.mxu0 0.0
        %2949 = vmatprep.subr.mxu0 0.0
        %2950 = vmatpush1.xpose.msra.mxu0 0.0
        %2951 = vmatprep.subr.mxu0 0.0
        %2952 = vmatpush1.xpose.msra.mxu0 0.0
        %2953 = vmatprep.subr.mxu0 0.0
        %2954 = vmatpush1.xpose.msra.mxu0 0.0
        %2955 = vmatprep.subr.mxu0 0.0
        %2956 = vmatpush1.xpose.msra.mxu0 0.0
        %2957 = vmatprep.subr.mxu0 0.0
        %2958 = vmatpush1.xpose.msra.mxu0 0.0
        %2959 = vmatprep.subr.mxu0 0.0
        %2960 = vmatpush1.xpose.msra.mxu0 0.0
        %2961 = vmatprep.subr.mxu0 0.0
        %2962 = vmatpush1.xpose.msra.mxu0 0.0
        %2963 = vmatprep.subr.mxu0 0.0
        %2964 = vmatpush1.xpose.msra.mxu0 0.0
        %2965 = vmatprep.subr.mxu0 0.0
        %2966 = vmatpush1.xpose.msra.mxu0 0.0
        %2967 = vmatprep.mubr.f32.mxu0 0.0
        %2968 = vmatmul.mubr.f32.gmra.mrb[0].mxu0 %v1248
        %v2969 = vpop.f32.mrb[0].mxu0
        %v2970 = vadd.f32 0.0, %v2969
        %v2971 = vpop.f32.mrb[0].mxu0
        %2972 = vdwg.mxu0
        %2973 = vmatprep.subr.mxu0 0.0
        %2974 = vmatpush1.xpose.msra.mxu0 %v1367
        %2975 = vmatprep.subr.mxu0 0.0
        %2976 = vmatpush1.xpose.msra.mxu0 0.0
        %2977 = vmatprep.subr.mxu0 0.0
        %2978 = vmatpush1.xpose.msra.mxu0 0.0
        %2979 = vmatprep.subr.mxu0 0.0
        %2980 = vmatpush1.xpose.msra.mxu0 0.0
        %2981 = vmatprep.subr.mxu0 0.0
        %2982 = vmatpush1.xpose.msra.mxu0 0.0
        %2983 = vmatprep.subr.mxu0 0.0
        %2984 = vmatpush1.xpose.msra.mxu0 0.0
        %2985 = vmatprep.subr.mxu0 0.0
        %2986 = vmatpush1.xpose.msra.mxu0 0.0
        %2987 = vmatprep.subr.mxu0 0.0
        %2988 = vmatpush1.xpose.msra.mxu0 0.0
        %2989 = vmatprep.subr.mxu0 0.0
        %2990 = vmatpush1.xpose.msra.mxu0 0.0
        %2991 = vmatprep.subr.mxu0 0.0
        %2992 = vmatpush1.xpose.msra.mxu0 0.0
        %2993 = vmatprep.subr.mxu0 0.0
        %2994 = vmatpush1.xpose.msra.mxu0 0.0
        %2995 = vmatprep.subr.mxu0 0.0
        %2996 = vmatpush1.xpose.msra.mxu0 0.0
        %2997 = vmatprep.subr.mxu0 0.0
        %2998 = vmatpush1.xpose.msra.mxu0 0.0
        %2999 = vmatprep.subr.mxu0 0.0
        %3000 = vmatpush1.xpose.msra.mxu0 0.0
        %3001 = vmatprep.subr.mxu0 0.0
        %3002 = vmatpush1.xpose.msra.mxu0 0.0
        %3003 = vmatprep.subr.mxu0 0.0
        %3004 = vmatpush1.xpose.msra.mxu0 0.0
        %3005 = vmatprep.subr.mxu0 0.0
        %3006 = vmatpush1.xpose.msra.mxu0 0.0
        %3007 = vmatprep.subr.mxu0 0.0
        %3008 = vmatpush1.xpose.msra.mxu0 0.0
        %3009 = vmatprep.subr.mxu0 0.0
        %3010 = vmatpush1.xpose.msra.mxu0 0.0
        %3011 = vmatprep.subr.mxu0 0.0
        %3012 = vmatpush1.xpose.msra.mxu0 0.0
        %3013 = vmatprep.subr.mxu0 0.0
        %3014 = vmatpush1.xpose.msra.mxu0 0.0
        %3015 = vmatprep.subr.mxu0 0.0
        %3016 = vmatpush1.xpose.msra.mxu0 0.0
        %3017 = vmatprep.subr.mxu0 0.0
        %3018 = vmatpush1.xpose.msra.mxu0 0.0
        %3019 = vmatprep.subr.mxu0 0.0
        %3020 = vmatpush1.xpose.msra.mxu0 0.0
        %3021 = vmatprep.subr.mxu0 0.0
        %3022 = vmatpush1.xpose.msra.mxu0 0.0
        %3023 = vmatprep.subr.mxu0 0.0
        %3024 = vmatpush1.xpose.msra.mxu0 0.0
        %3025 = vmatprep.subr.mxu0 0.0
        %3026 = vmatpush1.xpose.msra.mxu0 0.0
        %3027 = vmatprep.subr.mxu0 0.0
        %3028 = vmatpush1.xpose.msra.mxu0 0.0
        %3029 = vmatprep.subr.mxu0 0.0
        %3030 = vmatpush1.xpose.msra.mxu0 0.0
        %3031 = vmatprep.subr.mxu0 0.0
        %3032 = vmatpush1.xpose.msra.mxu0 0.0
        %3033 = vmatprep.subr.mxu0 0.0
        %3034 = vmatpush1.xpose.msra.mxu0 0.0
        %3035 = vmatprep.subr.mxu0 0.0
        %3036 = vmatpush1.xpose.msra.mxu0 0.0
        %3037 = vmatprep.mubr.f32.mxu0 0.0
        %3038 = vmatmul.mubr.f32.gmra.mrb[0].mxu0 %v1254
        %v3039 = vpop.f32.mrb[0].mxu0
        %v3040 = vadd.f32 0.0, %v3039
        %v3041 = vpop.f32.mrb[0].mxu0
        %3042 = vdwg.mxu0
        %3043 = vmatprep.subr.mxu0 0.0
        %3044 = vmatpush1.xpose.msra.mxu0 %v1373
        %3045 = vmatprep.subr.mxu0 0.0
        %3046 = vmatpush1.xpose.msra.mxu0 0.0
        %3047 = vmatprep.subr.mxu0 0.0
        %3048 = vmatpush1.xpose.msra.mxu0 0.0
        %3049 = vmatprep.subr.mxu0 0.0
        %3050 = vmatpush1.xpose.msra.mxu0 0.0
        %3051 = vmatprep.subr.mxu0 0.0
        %3052 = vmatpush1.xpose.msra.mxu0 0.0
        %3053 = vmatprep.subr.mxu0 0.0
        %3054 = vmatpush1.xpose.msra.mxu0 0.0
        %3055 = vmatprep.subr.mxu0 0.0
        %3056 = vmatpush1.xpose.msra.mxu0 0.0
        %3057 = vmatprep.subr.mxu0 0.0
        %3058 = vmatpush1.xpose.msra.mxu0 0.0
        %3059 = vmatprep.subr.mxu0 0.0
        %3060 = vmatpush1.xpose.msra.mxu0 0.0
        %3061 = vmatprep.subr.mxu0 0.0
        %3062 = vmatpush1.xpose.msra.mxu0 0.0
        %3063 = vmatprep.subr.mxu0 0.0
        %3064 = vmatpush1.xpose.msra.mxu0 0.0
        %3065 = vmatprep.subr.mxu0 0.0
        %3066 = vmatpush1.xpose.msra.mxu0 0.0
        %3067 = vmatprep.subr.mxu0 0.0
        %3068 = vmatpush1.xpose.msra.mxu0 0.0
        %3069 = vmatprep.subr.mxu0 0.0
        %3070 = vmatpush1.xpose.msra.mxu0 0.0
        %3071 = vmatprep.subr.mxu0 0.0
        %3072 = vmatpush1.xpose.msra.mxu0 0.0
        %3073 = vmatprep.subr.mxu0 0.0
        %3074 = vmatpush1.xpose.msra.mxu0 0.0
        %3075 = vmatprep.subr.mxu0 0.0
        %3076 = vmatpush1.xpose.msra.mxu0 0.0
        %3077 = vmatprep.subr.mxu0 0.0
        %3078 = vmatpush1.xpose.msra.mxu0 0.0
        %3079 = vmatprep.subr.mxu0 0.0
        %3080 = vmatpush1.xpose.msra.mxu0 0.0
        %3081 = vmatprep.subr.mxu0 0.0
        %3082 = vmatpush1.xpose.msra.mxu0 0.0
        %3083 = vmatprep.subr.mxu0 0.0
        %3084 = vmatpush1.xpose.msra.mxu0 0.0
        %3085 = vmatprep.subr.mxu0 0.0
        %3086 = vmatpush1.xpose.msra.mxu0 0.0
        %3087 = vmatprep.subr.mxu0 0.0
        %3088 = vmatpush1.xpose.msra.mxu0 0.0
        %3089 = vmatprep.subr.mxu0 0.0
        %3090 = vmatpush1.xpose.msra.mxu0 0.0
        %3091 = vmatprep.subr.mxu0 0.0
        %3092 = vmatpush1.xpose.msra.mxu0 0.0
        %3093 = vmatprep.subr.mxu0 0.0
        %3094 = vmatpush1.xpose.msra.mxu0 0.0
        %3095 = vmatprep.subr.mxu0 0.0
        %3096 = vmatpush1.xpose.msra.mxu0 0.0
        %3097 = vmatprep.subr.mxu0 0.0
        %3098 = vmatpush1.xpose.msra.mxu0 0.0
        %3099 = vmatprep.subr.mxu0 0.0
        %3100 = vmatpush1.xpose.msra.mxu0 0.0
        %3101 = vmatprep.subr.mxu0 0.0
        %3102 = vmatpush1.xpose.msra.mxu0 0.0
        %3103 = vmatprep.subr.mxu0 0.0
        %3104 = vmatpush1.xpose.msra.mxu0 0.0
        %3105 = vmatprep.subr.mxu0 0.0
        %3106 = vmatpush1.xpose.msra.mxu0 0.0
        %3107 = vmatprep.mubr.f32.mxu0 0.0
        %3108 = vmatmul.mubr.f32.gmra.mrb[0].mxu0 %v1260
        %v3109 = vpop.f32.mrb[0].mxu0
        %v3110 = vadd.f32 0.0, %v3109
        %v3111 = vpop.f32.mrb[0].mxu0
        %3112 = vdwg.mxu0
        %3113 = vmatprep.subr.mxu0 0.0
        %3114 = vmatpush1.xpose.msra.mxu0 %v1379
        %3115 = vmatprep.subr.mxu0 0.0
        %3116 = vmatpush1.xpose.msra.mxu0 0.0
        %3117 = vmatprep.subr.mxu0 0.0
        %3118 = vmatpush1.xpose.msra.mxu0 0.0
        %3119 = vmatprep.subr.mxu0 0.0
        %3120 = vmatpush1.xpose.msra.mxu0 0.0
        %3121 = vmatprep.subr.mxu0 0.0
        %3122 = vmatpush1.xpose.msra.mxu0 0.0
        %3123 = vmatprep.subr.mxu0 0.0
        %3124 = vmatpush1.xpose.msra.mxu0 0.0
        %3125 = vmatprep.subr.mxu0 0.0
        %3126 = vmatpush1.xpose.msra.mxu0 0.0
        %3127 = vmatprep.subr.mxu0 0.0
        %3128 = vmatpush1.xpose.msra.mxu0 0.0
        %3129 = vmatprep.subr.mxu0 0.0
        %3130 = vmatpush1.xpose.msra.mxu0 0.0
        %3131 = vmatprep.subr.mxu0 0.0
        %3132 = vmatpush1.xpose.msra.mxu0 0.0
        %3133 = vmatprep.subr.mxu0 0.0
        %3134 = vmatpush1.xpose.msra.mxu0 0.0
        %3135 = vmatprep.subr.mxu0 0.0
        %3136 = vmatpush1.xpose.msra.mxu0 0.0
        %3137 = vmatprep.subr.mxu0 0.0
        %3138 = vmatpush1.xpose.msra.mxu0 0.0
        %3139 = vmatprep.subr.mxu0 0.0
        %3140 = vmatpush1.xpose.msra.mxu0 0.0
        %3141 = vmatprep.subr.mxu0 0.0
        %3142 = vmatpush1.xpose.msra.mxu0 0.0
        %3143 = vmatprep.subr.mxu0 0.0
        %3144 = vmatpush1.xpose.msra.mxu0 0.0
        %3145 = vmatprep.subr.mxu0 0.0
        %3146 = vmatpush1.xpose.msra.mxu0 0.0
        %3147 = vmatprep.subr.mxu0 0.0
        %3148 = vmatpush1.xpose.msra.mxu0 0.0
        %3149 = vmatprep.subr.mxu0 0.0
        %3150 = vmatpush1.xpose.msra.mxu0 0.0
        %3151 = vmatprep.subr.mxu0 0.0
        %3152 = vmatpush1.xpose.msra.mxu0 0.0
        %3153 = vmatprep.subr.mxu0 0.0
        %3154 = vmatpush1.xpose.msra.mxu0 0.0
        %3155 = vmatprep.subr.mxu0 0.0
        %3156 = vmatpush1.xpose.msra.mxu0 0.0
        %3157 = vmatprep.subr.mxu0 0.0
        %3158 = vmatpush1.xpose.msra.mxu0 0.0
        %3159 = vmatprep.subr.mxu0 0.0
        %3160 = vmatpush1.xpose.msra.mxu0 0.0
        %3161 = vmatprep.subr.mxu0 0.0
        %3162 = vmatpush1.xpose.msra.mxu0 0.0
        %3163 = vmatprep.subr.mxu0 0.0
        %3164 = vmatpush1.xpose.msra.mxu0 0.0
        %3165 = vmatprep.subr.mxu0 0.0
        %3166 = vmatpush1.xpose.msra.mxu0 0.0
        %3167 = vmatprep.subr.mxu0 0.0
        %3168 = vmatpush1.xpose.msra.mxu0 0.0
        %3169 = vmatprep.subr.mxu0 0.0
        %3170 = vmatpush1.xpose.msra.mxu0 0.0
        %3171 = vmatprep.subr.mxu0 0.0
        %3172 = vmatpush1.xpose.msra.mxu0 0.0
        %3173 = vmatprep.subr.mxu0 0.0
        %3174 = vmatpush1.xpose.msra.mxu0 0.0
        %3175 = vmatprep.subr.mxu0 0.0
        %3176 = vmatpush1.xpose.msra.mxu0 0.0
        %3177 = vmatprep.mubr.f32.mxu0 0.0
        %3178 = vmatmul.mubr.f32.gmra.mrb[0].mxu0 %v1266
        %v3179 = vpop.f32.mrb[0].mxu0
        %v3180 = vadd.f32 0.0, %v3179
        %v3181 = vpop.f32.mrb[0].mxu0
        %3182 = vdwg.mxu0
        %3183 = vmatprep.subr.mxu0 0.0
        %3184 = vmatpush1.xpose.msra.mxu0 %v1385
        %3185 = vmatprep.subr.mxu0 0.0
        %3186 = vmatpush1.xpose.msra.mxu0 0.0
        %3187 = vmatprep.subr.mxu0 0.0
        %3188 = vmatpush1.xpose.msra.mxu0 0.0
        %3189 = vmatprep.subr.mxu0 0.0
        %3190 = vmatpush1.xpose.msra.mxu0 0.0
        %3191 = vmatprep.subr.mxu0 0.0
        %3192 = vmatpush1.xpose.msra.mxu0 0.0
        %3193 = vmatprep.subr.mxu0 0.0
        %3194 = vmatpush1.xpose.msra.mxu0 0.0
        %3195 = vmatprep.subr.mxu0 0.0
        %3196 = vmatpush1.xpose.msra.mxu0 0.0
        %3197 = vmatprep.subr.mxu0 0.0
        %3198 = vmatpush1.xpose.msra.mxu0 0.0
        %3199 = vmatprep.subr.mxu0 0.0
        %3200 = vmatpush1.xpose.msra.mxu0 0.0
        %3201 = vmatprep.subr.mxu0 0.0
        %3202 = vmatpush1.xpose.msra.mxu0 0.0
        %3203 = vmatprep.subr.mxu0 0.0
        %3204 = vmatpush1.xpose.msra.mxu0 0.0
        %3205 = vmatprep.subr.mxu0 0.0
        %3206 = vmatpush1.xpose.msra.mxu0 0.0
        %3207 = vmatprep.subr.mxu0 0.0
        %3208 = vmatpush1.xpose.msra.mxu0 0.0
        %3209 = vmatprep.subr.mxu0 0.0
        %3210 = vmatpush1.xpose.msra.mxu0 0.0
        %3211 = vmatprep.subr.mxu0 0.0
        %3212 = vmatpush1.xpose.msra.mxu0 0.0
        %3213 = vmatprep.subr.mxu0 0.0
        %3214 = vmatpush1.xpose.msra.mxu0 0.0
        %3215 = vmatprep.subr.mxu0 0.0
        %3216 = vmatpush1.xpose.msra.mxu0 0.0
        %3217 = vmatprep.subr.mxu0 0.0
        %3218 = vmatpush1.xpose.msra.mxu0 0.0
        %3219 = vmatprep.subr.mxu0 0.0
        %3220 = vmatpush1.xpose.msra.mxu0 0.0
        %3221 = vmatprep.subr.mxu0 0.0
        %3222 = vmatpush1.xpose.msra.mxu0 0.0
        %3223 = vmatprep.subr.mxu0 0.0
        %3224 = vmatpush1.xpose.msra.mxu0 0.0
        %3225 = vmatprep.subr.mxu0 0.0
        %3226 = vmatpush1.xpose.msra.mxu0 0.0
        %3227 = vmatprep.subr.mxu0 0.0
        %3228 = vmatpush1.xpose.msra.mxu0 0.0
        %3229 = vmatprep.subr.mxu0 0.0
        %3230 = vmatpush1.xpose.msra.mxu0 0.0
        %3231 = vmatprep.subr.mxu0 0.0
        %3232 = vmatpush1.xpose.msra.mxu0 0.0
        %3233 = vmatprep.subr.mxu0 0.0
        %3234 = vmatpush1.xpose.msra.mxu0 0.0
        %3235 = vmatprep.subr.mxu0 0.0
        %3236 = vmatpush1.xpose.msra.mxu0 0.0
        %3237 = vmatprep.subr.mxu0 0.0
        %3238 = vmatpush1.xpose.msra.mxu0 0.0
        %3239 = vmatprep.subr.mxu0 0.0
        %3240 = vmatpush1.xpose.msra.mxu0 0.0
        %3241 = vmatprep.subr.mxu0 0.0
        %3242 = vmatpush1.xpose.msra.mxu0 0.0
        %3243 = vmatprep.subr.mxu0 0.0
        %3244 = vmatpush1.xpose.msra.mxu0 0.0
        %3245 = vmatprep.subr.mxu0 0.0
        %3246 = vmatpush1.xpose.msra.mxu0 0.0
        %3247 = vmatprep.mubr.f32.mxu0 0.0
        %3248 = vmatmul.mubr.f32.gmra.mrb[0].mxu0 %v1272
        %v3249 = vpop.f32.mrb[0].mxu0
        %v3250 = vadd.f32 0.0, %v3249
        %v3251 = vpop.f32.mrb[0].mxu0
        %3252 = vdwg.mxu0
        %3253 = vmatprep.subr.mxu0 0.0
        %3254 = vmatpush1.xpose.msra.mxu0 %v1391
        %3255 = vmatprep.subr.mxu0 0.0
        %3256 = vmatpush1.xpose.msra.mxu0 0.0
        %3257 = vmatprep.subr.mxu0 0.0
        %3258 = vmatpush1.xpose.msra.mxu0 0.0
        %3259 = vmatprep.subr.mxu0 0.0
        %3260 = vmatpush1.xpose.msra.mxu0 0.0
        %3261 = vmatprep.subr.mxu0 0.0
        %3262 = vmatpush1.xpose.msra.mxu0 0.0
        %3263 = vmatprep.subr.mxu0 0.0
        %3264 = vmatpush1.xpose.msra.mxu0 0.0
        %3265 = vmatprep.subr.mxu0 0.0
        %3266 = vmatpush1.xpose.msra.mxu0 0.0
        %3267 = vmatprep.subr.mxu0 0.0
        %3268 = vmatpush1.xpose.msra.mxu0 0.0
        %3269 = vmatprep.subr.mxu0 0.0
        %3270 = vmatpush1.xpose.msra.mxu0 0.0
        %3271 = vmatprep.subr.mxu0 0.0
        %3272 = vmatpush1.xpose.msra.mxu0 0.0
        %3273 = vmatprep.subr.mxu0 0.0
        %3274 = vmatpush1.xpose.msra.mxu0 0.0
        %3275 = vmatprep.subr.mxu0 0.0
        %3276 = vmatpush1.xpose.msra.mxu0 0.0
        %3277 = vmatprep.subr.mxu0 0.0
        %3278 = vmatpush1.xpose.msra.mxu0 0.0
        %3279 = vmatprep.subr.mxu0 0.0
        %3280 = vmatpush1.xpose.msra.mxu0 0.0
        %3281 = vmatprep.subr.mxu0 0.0
        %3282 = vmatpush1.xpose.msra.mxu0 0.0
        %3283 = vmatprep.subr.mxu0 0.0
        %3284 = vmatpush1.xpose.msra.mxu0 0.0
        %3285 = vmatprep.subr.mxu0 0.0
        %3286 = vmatpush1.xpose.msra.mxu0 0.0
        %3287 = vmatprep.subr.mxu0 0.0
        %3288 = vmatpush1.xpose.msra.mxu0 0.0
        %3289 = vmatprep.subr.mxu0 0.0
        %3290 = vmatpush1.xpose.msra.mxu0 0.0
        %3291 = vmatprep.subr.mxu0 0.0
        %3292 = vmatpush1.xpose.msra.mxu0 0.0
        %3293 = vmatprep.subr.mxu0 0.0
        %3294 = vmatpush1.xpose.msra.mxu0 0.0
        %3295 = vmatprep.subr.mxu0 0.0
        %3296 = vmatpush1.xpose.msra.mxu0 0.0
        %3297 = vmatprep.subr.mxu0 0.0
        %3298 = vmatpush1.xpose.msra.mxu0 0.0
        %3299 = vmatprep.subr.mxu0 0.0
        %3300 = vmatpush1.xpose.msra.mxu0 0.0
        %3301 = vmatprep.subr.mxu0 0.0
        %3302 = vmatpush1.xpose.msra.mxu0 0.0
        %3303 = vmatprep.subr.mxu0 0.0
        %3304 = vmatpush1.xpose.msra.mxu0 0.0
        %3305 = vmatprep.subr.mxu0 0.0
        %3306 = vmatpush1.xpose.msra.mxu0 0.0
        %3307 = vmatprep.subr.mxu0 0.0
        %3308 = vmatpush1.xpose.msra.mxu0 0.0
        %3309 = vmatprep.subr.mxu0 0.0
        %3310 = vmatpush1.xpose.msra.mxu0 0.0
        %3311 = vmatprep.subr.mxu0 0.0
        %3312 = vmatpush1.xpose.msra.mxu0 0.0
        %3313 = vmatprep.subr.mxu0 0.0
        %3314 = vmatpush1.xpose.msra.mxu0 0.0
        %3315 = vmatprep.subr.mxu0 0.0
        %3316 = vmatpush1.xpose.msra.mxu0 0.0
        %3317 = vmatprep.mubr.f32.mxu0 0.0
        %3318 = vmatmul.mubr.f32.gmra.mrb[0].mxu0 %v1278
        %v3319 = vpop.f32.mrb[0].mxu0
        %v3320 = vadd.f32 0.0, %v3319
        %v3321 = vpop.f32.mrb[0].mxu0
        %3322 = vdwg.mxu0
        %v3323 = vmul.f32 %v2830, 0.15811388
        %v3324 = vmul.f32 %v2900, 0.15811388
        %v3325 = vmul.f32 %v2970, 0.15811388
        %v3326 = vmul.f32 %v3040, 0.15811388
        %v3327 = vmul.f32 %v3110, 0.15811388
        %v3328 = vmul.f32 %v3180, 0.15811388
        %v3329 = vmul.f32 %v3250, 0.15811388
        %v3330 = vmul.f32 %v3320, 0.15811388
        %v3331 = vsel %vm2074, %v3323, -inf
        %3332 = vmax.xlane.f32.xlu0 %v3331
        %v3333 = vpop.xlane.xlu0 %3332
        %v3334 = vsel %vm2074, %v3324, -inf
        %3335 = vmax.xlane.f32.xlu0 %v3334
        %v3336 = vpop.xlane.xlu0 %3335
        %v3337 = vsel %vm2074, %v3325, -inf
        %3338 = vmax.xlane.f32.xlu0 %v3337
        %v3339 = vpop.xlane.xlu0 %3338
        %v3340 = vsel %vm2074, %v3326, -inf
        %3341 = vmax.xlane.f32.xlu0 %v3340
        %v3342 = vpop.xlane.xlu0 %3341
        %v3343 = vsel %vm2074, %v3327, -inf
        %3344 = vmax.xlane.f32.xlu0 %v3343
        %v3345 = vpop.xlane.xlu0 %3344
        %v3346 = vsel %vm2074, %v3328, -inf
        %3347 = vmax.xlane.f32.xlu0 %v3346
        %v3348 = vpop.xlane.xlu0 %3347
        %v3349 = vsel %vm2074, %v3329, -inf
        %3350 = vmax.xlane.f32.xlu0 %v3349
        %v3351 = vpop.xlane.xlu0 %3350
        %v3352 = vsel %vm2074, %v3330, -inf
        %3353 = vmax.xlane.f32.xlu0 %v3352
        %v3354 = vpop.xlane.xlu0 %3353
        %v3355 = vsub.f32 %v3323, %v3333
        %v3356 = vsub.f32 %v3324, %v3336
        %v3357 = vsub.f32 %v3325, %v3339
        %v3358 = vsub.f32 %v3326, %v3342
        %v3359 = vsub.f32 %v3327, %v3345
        %v3360 = vsub.f32 %v3328, %v3348
        %v3361 = vsub.f32 %v3329, %v3351
        %v3362 = vsub.f32 %v3330, %v3354
        %v3363 = vmul.f32 %v3355, 1.442695
        %v3364 = vpow.pop %v3363
        %v3365 = vmul.f32 %v3356, 1.442695
        %v3366 = vpow.pop %v3365
        %v3367 = vmul.f32 %v3357, 1.442695
        %v3368 = vpow.pop %v3367
        %v3369 = vmul.f32 %v3358, 1.442695
        %v3370 = vpow.pop %v3369
        %v3371 = vmul.f32 %v3359, 1.442695
        %v3372 = vpow.pop %v3371
        %v3373 = vmul.f32 %v3360, 1.442695
        %v3374 = vpow.pop %v3373
        %v3375 = vmul.f32 %v3361, 1.442695
        %v3376 = vpow.pop %v3375
        %v3377 = vmul.f32 %v3362, 1.442695
        %v3378 = vpow.pop %v3377
        %v3379 = vsel %vm2074, %v3364, 0.0
        %3380 = vadd.xlane.f32.xlu0 %v3379
        %v3381 = vpop.xlane.xlu0 %3380
        %v3382 = vsel %vm2074, %v3366, 0.0
        %3383 = vadd.xlane.f32.xlu0 %v3382
        %v3384 = vpop.xlane.xlu0 %3383
        %v3385 = vsel %vm2074, %v3368, 0.0
        %3386 = vadd.xlane.f32.xlu0 %v3385
        %v3387 = vpop.xlane.xlu0 %3386
        %v3388 = vsel %vm2074, %v3370, 0.0
        %3389 = vadd.xlane.f32.xlu0 %v3388
        %v3390 = vpop.xlane.xlu0 %3389
        %v3391 = vsel %vm2074, %v3372, 0.0
        %3392 = vadd.xlane.f32.xlu0 %v3391
        %v3393 = vpop.xlane.xlu0 %3392
        %v3394 = vsel %vm2074, %v3374, 0.0
        %3395 = vadd.xlane.f32.xlu0 %v3394
        %v3396 = vpop.xlane.xlu0 %3395
        %v3397 = vsel %vm2074, %v3376, 0.0
        %3398 = vadd.xlane.f32.xlu0 %v3397
        %v3399 = vpop.xlane.xlu0 %3398
        %v3400 = vsel %vm2074, %v3378, 0.0
        %3401 = vadd.xlane.f32.xlu0 %v3400
        %v3402 = vpop.xlane.xlu0 %3401
        %v3403 = vrcp.pop %v3381
        %v3404 = vrcp.pop %v3384
        %v3405 = vrcp.pop %v3387
        %v3406 = vrcp.pop %v3390
        %v3407 = vrcp.pop %v3393
        %v3408 = vrcp.pop %v3396
        %v3409 = vrcp.pop %v3399
        %v3410 = vrcp.pop %v3402
        %v3411 = vmul.f32 %v3364, %v3403
        %v3412 = vmul.f32 %v3366, %v3404
        %v3413 = vmul.f32 %v3368, %v3405
        %v3414 = vmul.f32 %v3370, %v3406
        %v3415 = vmul.f32 %v3372, %v3407
        %v3416 = vmul.f32 %v3374, %v3408
        %v3417 = vmul.f32 %v3376, %v3409
        %v3418 = vmul.f32 %v3378, %v3410
        %v3420 = vsel %vm2074, %v3411, 0
        %3422 = vmatprep.subr.mxu0 0.0
        %3423 = vmatpush1.msra.mxu0 %v1462
        %3424 = vmatprep.subr.mxu0 0.0
        %3425 = vmatpush1.msra.mxu0 0.0
        %3426 = vmatprep.subr.mxu0 0.0
        %3427 = vmatpush1.msra.mxu0 0.0
        %3428 = vmatprep.subr.mxu0 0.0
        %3429 = vmatpush1.msra.mxu0 0.0
        %3430 = vmatprep.subr.mxu0 0.0
        %3431 = vmatpush1.msra.mxu0 0.0
        %3432 = vmatprep.subr.mxu0 0.0
        %3433 = vmatpush1.msra.mxu0 0.0
        %3434 = vmatprep.subr.mxu0 0.0
        %3435 = vmatpush1.msra.mxu0 0.0
        %3436 = vmatprep.subr.mxu0 0.0
        %3437 = vmatpush1.msra.mxu0 0.0
        %3438 = vmatprep.subr.mxu0 0.0
        %3439 = vmatpush1.msra.mxu0 0.0
        %3440 = vmatprep.subr.mxu0 0.0
        %3441 = vmatpush1.msra.mxu0 0.0
        %3442 = vmatprep.subr.mxu0 0.0
        %3443 = vmatpush1.msra.mxu0 0.0
        %3444 = vmatprep.subr.mxu0 0.0
        %3445 = vmatpush1.msra.mxu0 0.0
        %3446 = vmatprep.subr.mxu0 0.0
        %3447 = vmatpush1.msra.mxu0 0.0
        %3448 = vmatprep.subr.mxu0 0.0
        %3449 = vmatpush1.msra.mxu0 0.0
        %3450 = vmatprep.subr.mxu0 0.0
        %3451 = vmatpush1.msra.mxu0 0.0
        %3452 = vmatprep.subr.mxu0 0.0
        %3453 = vmatpush1.msra.mxu0 0.0
        %3454 = vmatprep.subr.mxu0 0.0
        %3455 = vmatpush1.msra.mxu0 0.0
        %3456 = vmatprep.subr.mxu0 0.0
        %3457 = vmatpush1.msra.mxu0 0.0
        %3458 = vmatprep.subr.mxu0 0.0
        %3459 = vmatpush1.msra.mxu0 0.0
        %3460 = vmatprep.subr.mxu0 0.0
        %3461 = vmatpush1.msra.mxu0 0.0
        %3462 = vmatprep.subr.mxu0 0.0
        %3463 = vmatpush1.msra.mxu0 0.0
        %3464 = vmatprep.subr.mxu0 0.0
        %3465 = vmatpush1.msra.mxu0 0.0
        %3466 = vmatprep.subr.mxu0 0.0
        %3467 = vmatpush1.msra.mxu0 0.0
        %3468 = vmatprep.subr.mxu0 0.0
        %3469 = vmatpush1.msra.mxu0 0.0
        %3470 = vmatprep.subr.mxu0 0.0
        %3471 = vmatpush1.msra.mxu0 0.0
        %3472 = vmatprep.subr.mxu0 0.0
        %3473 = vmatpush1.msra.mxu0 0.0
        %3474 = vmatprep.subr.mxu0 0.0
        %3475 = vmatpush1.msra.mxu0 0.0
        %3476 = vmatprep.subr.mxu0 0.0
        %3477 = vmatpush1.msra.mxu0 0.0
        %3478 = vmatprep.subr.mxu0 0.0
        %3479 = vmatpush1.msra.mxu0 0.0
        %3480 = vmatprep.subr.mxu0 0.0
        %3481 = vmatpush1.msra.mxu0 0.0
        %3482 = vmatprep.subr.mxu0 0.0
        %3483 = vmatpush1.msra.mxu0 0.0
        %3484 = vmatprep.subr.mxu0 0.0
        %3485 = vmatpush1.msra.mxu0 0.0
        %3486 = vmatprep.mubr.f32.mxu0 0.0
        %3487 = vmatmul.mubr.f32.gmra.mrb[0].mxu0 %v3420
        %v3488 = vpop.f32.mrb[0].mxu0
        %v3489 = vadd.f32 0.0, %v3488
        %v3490 = vpop.f32.mrb[0].mxu0
        %3491 = vdwg.mxu0
        %v3493 = vsel %vm2074, %v3412, 0
        %3495 = vmatprep.subr.mxu0 0.0
        %3496 = vmatpush1.msra.mxu0 %v1468
        %3497 = vmatprep.subr.mxu0 0.0
        %3498 = vmatpush1.msra.mxu0 0.0
        %3499 = vmatprep.subr.mxu0 0.0
        %3500 = vmatpush1.msra.mxu0 0.0
        %3501 = vmatprep.subr.mxu0 0.0
        %3502 = vmatpush1.msra.mxu0 0.0
        %3503 = vmatprep.subr.mxu0 0.0
        %3504 = vmatpush1.msra.mxu0 0.0
        %3505 = vmatprep.subr.mxu0 0.0
        %3506 = vmatpush1.msra.mxu0 0.0
        %3507 = vmatprep.subr.mxu0 0.0
        %3508 = vmatpush1.msra.mxu0 0.0
        %3509 = vmatprep.subr.mxu0 0.0
        %3510 = vmatpush1.msra.mxu0 0.0
        %3511 = vmatprep.subr.mxu0 0.0
        %3512 = vmatpush1.msra.mxu0 0.0
        %3513 = vmatprep.subr.mxu0 0.0
        %3514 = vmatpush1.msra.mxu0 0.0
        %3515 = vmatprep.subr.mxu0 0.0
        %3516 = vmatpush1.msra.mxu0 0.0
        %3517 = vmatprep.subr.mxu0 0.0
        %3518 = vmatpush1.msra.mxu0 0.0
        %3519 = vmatprep.subr.mxu0 0.0
        %3520 = vmatpush1.msra.mxu0 0.0
        %3521 = vmatprep.subr.mxu0 0.0
        %3522 = vmatpush1.msra.mxu0 0.0
        %3523 = vmatprep.subr.mxu0 0.0
        %3524 = vmatpush1.msra.mxu0 0.0
        %3525 = vmatprep.subr.mxu0 0.0
        %3526 = vmatpush1.msra.mxu0 0.0
        %3527 = vmatprep.subr.mxu0 0.0
        %3528 = vmatpush1.msra.mxu0 0.0
        %3529 = vmatprep.subr.mxu0 0.0
        %3530 = vmatpush1.msra.mxu0 0.0
        %3531 = vmatprep.subr.mxu0 0.0
        %3532 = vmatpush1.msra.mxu0 0.0
        %3533 = vmatprep.subr.mxu0 0.0
        %3534 = vmatpush1.msra.mxu0 0.0
        %3535 = vmatprep.subr.mxu0 0.0
        %3536 = vmatpush1.msra.mxu0 0.0
        %3537 = vmatprep.subr.mxu0 0.0
        %3538 = vmatpush1.msra.mxu0 0.0
        %3539 = vmatprep.subr.mxu0 0.0
        %3540 = vmatpush1.msra.mxu0 0.0
        %3541 = vmatprep.subr.mxu0 0.0
        %3542 = vmatpush1.msra.mxu0 0.0
        %3543 = vmatprep.subr.mxu0 0.0
        %3544 = vmatpush1.msra.mxu0 0.0
        %3545 = vmatprep.subr.mxu0 0.0
        %3546 = vmatpush1.msra.mxu0 0.0
        %3547 = vmatprep.subr.mxu0 0.0
        %3548 = vmatpush1.msra.mxu0 0.0
        %3549 = vmatprep.subr.mxu0 0.0
        %3550 = vmatpush1.msra.mxu0 0.0
        %3551 = vmatprep.subr.mxu0 0.0
        %3552 = vmatpush1.msra.mxu0 0.0
        %3553 = vmatprep.subr.mxu0 0.0
        %3554 = vmatpush1.msra.mxu0 0.0
        %3555 = vmatprep.subr.mxu0 0.0
        %3556 = vmatpush1.msra.mxu0 0.0
        %3557 = vmatprep.subr.mxu0 0.0
        %3558 = vmatpush1.msra.mxu0 0.0
        %3559 = vmatprep.mubr.f32.mxu0 0.0
        %3560 = vmatmul.mubr.f32.gmra.mrb[0].mxu0 %v3493
        %v3561 = vpop.f32.mrb[0].mxu0
        %v3562 = vadd.f32 0.0, %v3561
        %v3563 = vpop.f32.mrb[0].mxu0
        %3564 = vdwg.mxu0
        %v3566 = vsel %vm2074, %v3413, 0
        %3568 = vmatprep.subr.mxu0 0.0
        %3569 = vmatpush1.msra.mxu0 %v1474
        %3570 = vmatprep.subr.mxu0 0.0
        %3571 = vmatpush1.msra.mxu0 0.0
        %3572 = vmatprep.subr.mxu0 0.0
        %3573 = vmatpush1.msra.mxu0 0.0
        %3574 = vmatprep.subr.mxu0 0.0
        %3575 = vmatpush1.msra.mxu0 0.0
        %3576 = vmatprep.subr.mxu0 0.0
        %3577 = vmatpush1.msra.mxu0 0.0
        %3578 = vmatprep.subr.mxu0 0.0
        %3579 = vmatpush1.msra.mxu0 0.0
        %3580 = vmatprep.subr.mxu0 0.0
        %3581 = vmatpush1.msra.mxu0 0.0
        %3582 = vmatprep.subr.mxu0 0.0
        %3583 = vmatpush1.msra.mxu0 0.0
        %3584 = vmatprep.subr.mxu0 0.0
        %3585 = vmatpush1.msra.mxu0 0.0
        %3586 = vmatprep.subr.mxu0 0.0
        %3587 = vmatpush1.msra.mxu0 0.0
        %3588 = vmatprep.subr.mxu0 0.0
        %3589 = vmatpush1.msra.mxu0 0.0
        %3590 = vmatprep.subr.mxu0 0.0
        %3591 = vmatpush1.msra.mxu0 0.0
        %3592 = vmatprep.subr.mxu0 0.0
        %3593 = vmatpush1.msra.mxu0 0.0
        %3594 = vmatprep.subr.mxu0 0.0
        %3595 = vmatpush1.msra.mxu0 0.0
        %3596 = vmatprep.subr.mxu0 0.0
        %3597 = vmatpush1.msra.mxu0 0.0
        %3598 = vmatprep.subr.mxu0 0.0
        %3599 = vmatpush1.msra.mxu0 0.0
        %3600 = vmatprep.subr.mxu0 0.0
        %3601 = vmatpush1.msra.mxu0 0.0
        %3602 = vmatprep.subr.mxu0 0.0
        %3603 = vmatpush1.msra.mxu0 0.0
        %3604 = vmatprep.subr.mxu0 0.0
        %3605 = vmatpush1.msra.mxu0 0.0
        %3606 = vmatprep.subr.mxu0 0.0
        %3607 = vmatpush1.msra.mxu0 0.0
        %3608 = vmatprep.subr.mxu0 0.0
        %3609 = vmatpush1.msra.mxu0 0.0
        %3610 = vmatprep.subr.mxu0 0.0
        %3611 = vmatpush1.msra.mxu0 0.0
        %3612 = vmatprep.subr.mxu0 0.0
        %3613 = vmatpush1.msra.mxu0 0.0
        %3614 = vmatprep.subr.mxu0 0.0
        %3615 = vmatpush1.msra.mxu0 0.0
        %3616 = vmatprep.subr.mxu0 0.0
        %3617 = vmatpush1.msra.mxu0 0.0
        %3618 = vmatprep.subr.mxu0 0.0
        %3619 = vmatpush1.msra.mxu0 0.0
        %3620 = vmatprep.subr.mxu0 0.0
        %3621 = vmatpush1.msra.mxu0 0.0
        %3622 = vmatprep.subr.mxu0 0.0
        %3623 = vmatpush1.msra.mxu0 0.0
        %3624 = vmatprep.subr.mxu0 0.0
        %3625 = vmatpush1.msra.mxu0 0.0
        %3626 = vmatprep.subr.mxu0 0.0
        %3627 = vmatpush1.msra.mxu0 0.0
        %3628 = vmatprep.subr.mxu0 0.0
        %3629 = vmatpush1.msra.mxu0 0.0
        %3630 = vmatprep.subr.mxu0 0.0
        %3631 = vmatpush1.msra.mxu0 0.0
        %3632 = vmatprep.mubr.f32.mxu0 0.0
        %3633 = vmatmul.mubr.f32.gmra.mrb[0].mxu0 %v3566
        %v3634 = vpop.f32.mrb[0].mxu0
        %v3635 = vadd.f32 0.0, %v3634
        %v3636 = vpop.f32.mrb[0].mxu0
        %3637 = vdwg.mxu0
        %v3639 = vsel %vm2074, %v3414, 0
        %3641 = vmatprep.subr.mxu0 0.0
        %3642 = vmatpush1.msra.mxu0 %v1480
        %3643 = vmatprep.subr.mxu0 0.0
        %3644 = vmatpush1.msra.mxu0 0.0
        %3645 = vmatprep.subr.mxu0 0.0
        %3646 = vmatpush1.msra.mxu0 0.0
        %3647 = vmatprep.subr.mxu0 0.0
        %3648 = vmatpush1.msra.mxu0 0.0
        %3649 = vmatprep.subr.mxu0 0.0
        %3650 = vmatpush1.msra.mxu0 0.0
        %3651 = vmatprep.subr.mxu0 0.0
        %3652 = vmatpush1.msra.mxu0 0.0
        %3653 = vmatprep.subr.mxu0 0.0
        %3654 = vmatpush1.msra.mxu0 0.0
        %3655 = vmatprep.subr.mxu0 0.0
        %3656 = vmatpush1.msra.mxu0 0.0
        %3657 = vmatprep.subr.mxu0 0.0
        %3658 = vmatpush1.msra.mxu0 0.0
        %3659 = vmatprep.subr.mxu0 0.0
        %3660 = vmatpush1.msra.mxu0 0.0
        %3661 = vmatprep.subr.mxu0 0.0
        %3662 = vmatpush1.msra.mxu0 0.0
        %3663 = vmatprep.subr.mxu0 0.0
        %3664 = vmatpush1.msra.mxu0 0.0
        %3665 = vmatprep.subr.mxu0 0.0
        %3666 = vmatpush1.msra.mxu0 0.0
        %3667 = vmatprep.subr.mxu0 0.0
        %3668 = vmatpush1.msra.mxu0 0.0
        %3669 = vmatprep.subr.mxu0 0.0
        %3670 = vmatpush1.msra.mxu0 0.0
        %3671 = vmatprep.subr.mxu0 0.0
        %3672 = vmatpush1.msra.mxu0 0.0
        %3673 = vmatprep.subr.mxu0 0.0
        %3674 = vmatpush1.msra.mxu0 0.0
        %3675 = vmatprep.subr.mxu0 0.0
        %3676 = vmatpush1.msra.mxu0 0.0
        %3677 = vmatprep.subr.mxu0 0.0
        %3678 = vmatpush1.msra.mxu0 0.0
        %3679 = vmatprep.subr.mxu0 0.0
        %3680 = vmatpush1.msra.mxu0 0.0
        %3681 = vmatprep.subr.mxu0 0.0
        %3682 = vmatpush1.msra.mxu0 0.0
        %3683 = vmatprep.subr.mxu0 0.0
        %3684 = vmatpush1.msra.mxu0 0.0
        %3685 = vmatprep.subr.mxu0 0.0
        %3686 = vmatpush1.msra.mxu0 0.0
        %3687 = vmatprep.subr.mxu0 0.0
        %3688 = vmatpush1.msra.mxu0 0.0
        %3689 = vmatprep.subr.mxu0 0.0
        %3690 = vmatpush1.msra.mxu0 0.0
        %3691 = vmatprep.subr.mxu0 0.0
        %3692 = vmatpush1.msra.mxu0 0.0
        %3693 = vmatprep.subr.mxu0 0.0
        %3694 = vmatpush1.msra.mxu0 0.0
        %3695 = vmatprep.subr.mxu0 0.0
        %3696 = vmatpush1.msra.mxu0 0.0
        %3697 = vmatprep.subr.mxu0 0.0
        %3698 = vmatpush1.msra.mxu0 0.0
        %3699 = vmatprep.subr.mxu0 0.0
        %3700 = vmatpush1.msra.mxu0 0.0
        %3701 = vmatprep.subr.mxu0 0.0
        %3702 = vmatpush1.msra.mxu0 0.0
        %3703 = vmatprep.subr.mxu0 0.0
        %3704 = vmatpush1.msra.mxu0 0.0
        %3705 = vmatprep.mubr.f32.mxu0 0.0
        %3706 = vmatmul.mubr.f32.gmra.mrb[0].mxu0 %v3639
        %v3707 = vpop.f32.mrb[0].mxu0
        %v3708 = vadd.f32 0.0, %v3707
        %v3709 = vpop.f32.mrb[0].mxu0
        %3710 = vdwg.mxu0
        %v3712 = vsel %vm2074, %v3415, 0
        %3714 = vmatprep.subr.mxu0 0.0
        %3715 = vmatpush1.msra.mxu0 %v1486
        %3716 = vmatprep.subr.mxu0 0.0
        %3717 = vmatpush1.msra.mxu0 0.0
        %3718 = vmatprep.subr.mxu0 0.0
        %3719 = vmatpush1.msra.mxu0 0.0
        %3720 = vmatprep.subr.mxu0 0.0
        %3721 = vmatpush1.msra.mxu0 0.0
        %3722 = vmatprep.subr.mxu0 0.0
        %3723 = vmatpush1.msra.mxu0 0.0
        %3724 = vmatprep.subr.mxu0 0.0
        %3725 = vmatpush1.msra.mxu0 0.0
        %3726 = vmatprep.subr.mxu0 0.0
        %3727 = vmatpush1.msra.mxu0 0.0
        %3728 = vmatprep.subr.mxu0 0.0
        %3729 = vmatpush1.msra.mxu0 0.0
        %3730 = vmatprep.subr.mxu0 0.0
        %3731 = vmatpush1.msra.mxu0 0.0
        %3732 = vmatprep.subr.mxu0 0.0
        %3733 = vmatpush1.msra.mxu0 0.0
        %3734 = vmatprep.subr.mxu0 0.0
        %3735 = vmatpush1.msra.mxu0 0.0
        %3736 = vmatprep.subr.mxu0 0.0
        %3737 = vmatpush1.msra.mxu0 0.0
        %3738 = vmatprep.subr.mxu0 0.0
        %3739 = vmatpush1.msra.mxu0 0.0
        %3740 = vmatprep.subr.mxu0 0.0
        %3741 = vmatpush1.msra.mxu0 0.0
        %3742 = vmatprep.subr.mxu0 0.0
        %3743 = vmatpush1.msra.mxu0 0.0
        %3744 = vmatprep.subr.mxu0 0.0
        %3745 = vmatpush1.msra.mxu0 0.0
        %3746 = vmatprep.subr.mxu0 0.0
        %3747 = vmatpush1.msra.mxu0 0.0
        %3748 = vmatprep.subr.mxu0 0.0
        %3749 = vmatpush1.msra.mxu0 0.0
        %3750 = vmatprep.subr.mxu0 0.0
        %3751 = vmatpush1.msra.mxu0 0.0
        %3752 = vmatprep.subr.mxu0 0.0
        %3753 = vmatpush1.msra.mxu0 0.0
        %3754 = vmatprep.subr.mxu0 0.0
        %3755 = vmatpush1.msra.mxu0 0.0
        %3756 = vmatprep.subr.mxu0 0.0
        %3757 = vmatpush1.msra.mxu0 0.0
        %3758 = vmatprep.subr.mxu0 0.0
        %3759 = vmatpush1.msra.mxu0 0.0
        %3760 = vmatprep.subr.mxu0 0.0
        %3761 = vmatpush1.msra.mxu0 0.0
        %3762 = vmatprep.subr.mxu0 0.0
        %3763 = vmatpush1.msra.mxu0 0.0
        %3764 = vmatprep.subr.mxu0 0.0
        %3765 = vmatpush1.msra.mxu0 0.0
        %3766 = vmatprep.subr.mxu0 0.0
        %3767 = vmatpush1.msra.mxu0 0.0
        %3768 = vmatprep.subr.mxu0 0.0
        %3769 = vmatpush1.msra.mxu0 0.0
        %3770 = vmatprep.subr.mxu0 0.0
        %3771 = vmatpush1.msra.mxu0 0.0
        %3772 = vmatprep.subr.mxu0 0.0
        %3773 = vmatpush1.msra.mxu0 0.0
        %3774 = vmatprep.subr.mxu0 0.0
        %3775 = vmatpush1.msra.mxu0 0.0
        %3776 = vmatprep.subr.mxu0 0.0
        %3777 = vmatpush1.msra.mxu0 0.0
        %3778 = vmatprep.mubr.f32.mxu0 0.0
        %3779 = vmatmul.mubr.f32.gmra.mrb[0].mxu0 %v3712
        %v3780 = vpop.f32.mrb[0].mxu0
        %v3781 = vadd.f32 0.0, %v3780
        %v3782 = vpop.f32.mrb[0].mxu0
        %3783 = vdwg.mxu0
        %v3785 = vsel %vm2074, %v3416, 0
        %3787 = vmatprep.subr.mxu0 0.0
        %3788 = vmatpush1.msra.mxu0 %v1492
        %3789 = vmatprep.subr.mxu0 0.0
        %3790 = vmatpush1.msra.mxu0 0.0
        %3791 = vmatprep.subr.mxu0 0.0
        %3792 = vmatpush1.msra.mxu0 0.0
        %3793 = vmatprep.subr.mxu0 0.0
        %3794 = vmatpush1.msra.mxu0 0.0
        %3795 = vmatprep.subr.mxu0 0.0
        %3796 = vmatpush1.msra.mxu0 0.0
        %3797 = vmatprep.subr.mxu0 0.0
        %3798 = vmatpush1.msra.mxu0 0.0
        %3799 = vmatprep.subr.mxu0 0.0
        %3800 = vmatpush1.msra.mxu0 0.0
        %3801 = vmatprep.subr.mxu0 0.0
        %3802 = vmatpush1.msra.mxu0 0.0
        %3803 = vmatprep.subr.mxu0 0.0
        %3804 = vmatpush1.msra.mxu0 0.0
        %3805 = vmatprep.subr.mxu0 0.0
        %3806 = vmatpush1.msra.mxu0 0.0
        %3807 = vmatprep.subr.mxu0 0.0
        %3808 = vmatpush1.msra.mxu0 0.0
        %3809 = vmatprep.subr.mxu0 0.0
        %3810 = vmatpush1.msra.mxu0 0.0
        %3811 = vmatprep.subr.mxu0 0.0
        %3812 = vmatpush1.msra.mxu0 0.0
        %3813 = vmatprep.subr.mxu0 0.0
        %3814 = vmatpush1.msra.mxu0 0.0
        %3815 = vmatprep.subr.mxu0 0.0
        %3816 = vmatpush1.msra.mxu0 0.0
        %3817 = vmatprep.subr.mxu0 0.0
        %3818 = vmatpush1.msra.mxu0 0.0
        %3819 = vmatprep.subr.mxu0 0.0
        %3820 = vmatpush1.msra.mxu0 0.0
        %3821 = vmatprep.subr.mxu0 0.0
        %3822 = vmatpush1.msra.mxu0 0.0
        %3823 = vmatprep.subr.mxu0 0.0
        %3824 = vmatpush1.msra.mxu0 0.0
        %3825 = vmatprep.subr.mxu0 0.0
        %3826 = vmatpush1.msra.mxu0 0.0
        %3827 = vmatprep.subr.mxu0 0.0
        %3828 = vmatpush1.msra.mxu0 0.0
        %3829 = vmatprep.subr.mxu0 0.0
        %3830 = vmatpush1.msra.mxu0 0.0
        %3831 = vmatprep.subr.mxu0 0.0
        %3832 = vmatpush1.msra.mxu0 0.0
        %3833 = vmatprep.subr.mxu0 0.0
        %3834 = vmatpush1.msra.mxu0 0.0
        %3835 = vmatprep.subr.mxu0 0.0
        %3836 = vmatpush1.msra.mxu0 0.0
        %3837 = vmatprep.subr.mxu0 0.0
        %3838 = vmatpush1.msra.mxu0 0.0
        %3839 = vmatprep.subr.mxu0 0.0
        %3840 = vmatpush1.msra.mxu0 0.0
        %3841 = vmatprep.subr.mxu0 0.0
        %3842 = vmatpush1.msra.mxu0 0.0
        %3843 = vmatprep.subr.mxu0 0.0
        %3844 = vmatpush1.msra.mxu0 0.0
        %3845 = vmatprep.subr.mxu0 0.0
        %3846 = vmatpush1.msra.mxu0 0.0
        %3847 = vmatprep.subr.mxu0 0.0
        %3848 = vmatpush1.msra.mxu0 0.0
        %3849 = vmatprep.subr.mxu0 0.0
        %3850 = vmatpush1.msra.mxu0 0.0
        %3851 = vmatprep.mubr.f32.mxu0 0.0
        %3852 = vmatmul.mubr.f32.gmra.mrb[0].mxu0 %v3785
        %v3853 = vpop.f32.mrb[0].mxu0
        %v3854 = vadd.f32 0.0, %v3853
        %v3855 = vpop.f32.mrb[0].mxu0
        %3856 = vdwg.mxu0
        %v3858 = vsel %vm2074, %v3417, 0
        %3860 = vmatprep.subr.mxu0 0.0
        %3861 = vmatpush1.msra.mxu0 %v1498
        %3862 = vmatprep.subr.mxu0 0.0
        %3863 = vmatpush1.msra.mxu0 0.0
        %3864 = vmatprep.subr.mxu0 0.0
        %3865 = vmatpush1.msra.mxu0 0.0
        %3866 = vmatprep.subr.mxu0 0.0
        %3867 = vmatpush1.msra.mxu0 0.0
        %3868 = vmatprep.subr.mxu0 0.0
        %3869 = vmatpush1.msra.mxu0 0.0
        %3870 = vmatprep.subr.mxu0 0.0
        %3871 = vmatpush1.msra.mxu0 0.0
        %3872 = vmatprep.subr.mxu0 0.0
        %3873 = vmatpush1.msra.mxu0 0.0
        %3874 = vmatprep.subr.mxu0 0.0
        %3875 = vmatpush1.msra.mxu0 0.0
        %3876 = vmatprep.subr.mxu0 0.0
        %3877 = vmatpush1.msra.mxu0 0.0
        %3878 = vmatprep.subr.mxu0 0.0
        %3879 = vmatpush1.msra.mxu0 0.0
        %3880 = vmatprep.subr.mxu0 0.0
        %3881 = vmatpush1.msra.mxu0 0.0
        %3882 = vmatprep.subr.mxu0 0.0
        %3883 = vmatpush1.msra.mxu0 0.0
        %3884 = vmatprep.subr.mxu0 0.0
        %3885 = vmatpush1.msra.mxu0 0.0
        %3886 = vmatprep.subr.mxu0 0.0
        %3887 = vmatpush1.msra.mxu0 0.0
        %3888 = vmatprep.subr.mxu0 0.0
        %3889 = vmatpush1.msra.mxu0 0.0
        %3890 = vmatprep.subr.mxu0 0.0
        %3891 = vmatpush1.msra.mxu0 0.0
        %3892 = vmatprep.subr.mxu0 0.0
        %3893 = vmatpush1.msra.mxu0 0.0
        %3894 = vmatprep.subr.mxu0 0.0
        %3895 = vmatpush1.msra.mxu0 0.0
        %3896 = vmatprep.subr.mxu0 0.0
        %3897 = vmatpush1.msra.mxu0 0.0
        %3898 = vmatprep.subr.mxu0 0.0
        %3899 = vmatpush1.msra.mxu0 0.0
        %3900 = vmatprep.subr.mxu0 0.0
        %3901 = vmatpush1.msra.mxu0 0.0
        %3902 = vmatprep.subr.mxu0 0.0
        %3903 = vmatpush1.msra.mxu0 0.0
        %3904 = vmatprep.subr.mxu0 0.0
        %3905 = vmatpush1.msra.mxu0 0.0
        %3906 = vmatprep.subr.mxu0 0.0
        %3907 = vmatpush1.msra.mxu0 0.0
        %3908 = vmatprep.subr.mxu0 0.0
        %3909 = vmatpush1.msra.mxu0 0.0
        %3910 = vmatprep.subr.mxu0 0.0
        %3911 = vmatpush1.msra.mxu0 0.0
        %3912 = vmatprep.subr.mxu0 0.0
        %3913 = vmatpush1.msra.mxu0 0.0
        %3914 = vmatprep.subr.mxu0 0.0
        %3915 = vmatpush1.msra.mxu0 0.0
        %3916 = vmatprep.subr.mxu0 0.0
        %3917 = vmatpush1.msra.mxu0 0.0
        %3918 = vmatprep.subr.mxu0 0.0
        %3919 = vmatpush1.msra.mxu0 0.0
        %3920 = vmatprep.subr.mxu0 0.0
        %3921 = vmatpush1.msra.mxu0 0.0
        %3922 = vmatprep.subr.mxu0 0.0
        %3923 = vmatpush1.msra.mxu0 0.0
        %3924 = vmatprep.mubr.f32.mxu0 0.0
        %3925 = vmatmul.mubr.f32.gmra.mrb[0].mxu0 %v3858
        %v3926 = vpop.f32.mrb[0].mxu0
        %v3927 = vadd.f32 0.0, %v3926
        %v3928 = vpop.f32.mrb[0].mxu0
        %3929 = vdwg.mxu0
        %v3931 = vsel %vm2074, %v3418, 0
        %3933 = vmatprep.subr.mxu0 0.0
        %3934 = vmatpush1.msra.mxu0 %v1504
        %3935 = vmatprep.subr.mxu0 0.0
        %3936 = vmatpush1.msra.mxu0 0.0
        %3937 = vmatprep.subr.mxu0 0.0
        %3938 = vmatpush1.msra.mxu0 0.0
        %3939 = vmatprep.subr.mxu0 0.0
        %3940 = vmatpush1.msra.mxu0 0.0
        %3941 = vmatprep.subr.mxu0 0.0
        %3942 = vmatpush1.msra.mxu0 0.0
        %3943 = vmatprep.subr.mxu0 0.0
        %3944 = vmatpush1.msra.mxu0 0.0
        %3945 = vmatprep.subr.mxu0 0.0
        %3946 = vmatpush1.msra.mxu0 0.0
        %3947 = vmatprep.subr.mxu0 0.0
        %3948 = vmatpush1.msra.mxu0 0.0
        %3949 = vmatprep.subr.mxu0 0.0
        %3950 = vmatpush1.msra.mxu0 0.0
        %3951 = vmatprep.subr.mxu0 0.0
        %3952 = vmatpush1.msra.mxu0 0.0
        %3953 = vmatprep.subr.mxu0 0.0
        %3954 = vmatpush1.msra.mxu0 0.0
        %3955 = vmatprep.subr.mxu0 0.0
        %3956 = vmatpush1.msra.mxu0 0.0
        %3957 = vmatprep.subr.mxu0 0.0
        %3958 = vmatpush1.msra.mxu0 0.0
        %3959 = vmatprep.subr.mxu0 0.0
        %3960 = vmatpush1.msra.mxu0 0.0
        %3961 = vmatprep.subr.mxu0 0.0
        %3962 = vmatpush1.msra.mxu0 0.0
        %3963 = vmatprep.subr.mxu0 0.0
        %3964 = vmatpush1.msra.mxu0 0.0
        %3965 = vmatprep.subr.mxu0 0.0
        %3966 = vmatpush1.msra.mxu0 0.0
        %3967 = vmatprep.subr.mxu0 0.0
        %3968 = vmatpush1.msra.mxu0 0.0
        %3969 = vmatprep.subr.mxu0 0.0
        %3970 = vmatpush1.msra.mxu0 0.0
        %3971 = vmatprep.subr.mxu0 0.0
        %3972 = vmatpush1.msra.mxu0 0.0
        %3973 = vmatprep.subr.mxu0 0.0
        %3974 = vmatpush1.msra.mxu0 0.0
        %3975 = vmatprep.subr.mxu0 0.0
        %3976 = vmatpush1.msra.mxu0 0.0
        %3977 = vmatprep.subr.mxu0 0.0
        %3978 = vmatpush1.msra.mxu0 0.0
        %3979 = vmatprep.subr.mxu0 0.0
        %3980 = vmatpush1.msra.mxu0 0.0
        %3981 = vmatprep.subr.mxu0 0.0
        %3982 = vmatpush1.msra.mxu0 0.0
        %3983 = vmatprep.subr.mxu0 0.0
        %3984 = vmatpush1.msra.mxu0 0.0
        %3985 = vmatprep.subr.mxu0 0.0
        %3986 = vmatpush1.msra.mxu0 0.0
        %3987 = vmatprep.subr.mxu0 0.0
        %3988 = vmatpush1.msra.mxu0 0.0
        %3989 = vmatprep.subr.mxu0 0.0
        %3990 = vmatpush1.msra.mxu0 0.0
        %3991 = vmatprep.subr.mxu0 0.0
        %3992 = vmatpush1.msra.mxu0 0.0
        %3993 = vmatprep.subr.mxu0 0.0
        %3994 = vmatpush1.msra.mxu0 0.0
        %3995 = vmatprep.subr.mxu0 0.0
        %3996 = vmatpush1.msra.mxu0 0.0
        %3997 = vmatprep.mubr.f32.mxu0 0.0
        %3998 = vmatmul.mubr.f32.gmra.mrb[0].mxu0 %v3931
        %v3999 = vpop.f32.mrb[0].mxu0
        %v4000 = vadd.f32 0.0, %v3999
        %v4001 = vpop.f32.mrb[0].mxu0
        %4002 = vdwg.mxu0
        %s4003 = scalar_lea.vmem %s7, 128
        %v4004 = vld [vmem:[%s4003] sm:$0xff]
        %v4005 = vld [vmem:[%s4003 + $0x8] sm:$0xff]
        %v4006 = vld [vmem:[%s4003 + $0x10] sm:$0xff]
        %v4007 = vld [vmem:[%s4003 + $0x18] sm:$0xff]
        %v4008 = vld [vmem:[%s4003 + $0x20] sm:$0xff]
        %v4009 = vld [vmem:[%s4003 + $0x28] sm:$0xff]
        %v4010 = vld [vmem:[%s4003 + $0x30] sm:$0xff]
        %v4011 = vld [vmem:[%s4003 + $0x38] sm:$0xff]
        %v4012 = vld [vmem:[%s4003 + $0x40] sm:$0xff]
        %v4013 = vld [vmem:[%s4003 + $0x48] sm:$0xff]
        %v4014 = vld [vmem:[%s4003 + $0x50] sm:$0xff]
        %v4015 = vld [vmem:[%s4003 + $0x58] sm:$0xff]
        %v4016 = vld [vmem:[%s4003 + $0x60] sm:$0xff]
        %v4017 = vld [vmem:[%s4003 + $0x68] sm:$0xff]
        %v4018 = vld [vmem:[%s4003 + $0x70] sm:$0xff]
        %v4019 = vld [vmem:[%s4003 + $0x78] sm:$0xff]
        %4020 = vmatprep.subr.mxu0 0.0
        %4021 = vmatpush1.msra.mxu0 %v4004
        %4022 = vmatprep.subr.mxu0 0.0
        %4023 = vmatpush1.msra.mxu0 %v4005
        %4024 = vmatprep.subr.mxu0 0.0
        %4025 = vmatpush1.msra.mxu0 %v4006
        %4026 = vmatprep.subr.mxu0 0.0
        %4027 = vmatpush1.msra.mxu0 %v4007
        %4028 = vmatprep.subr.mxu0 0.0
        %4029 = vmatpush1.msra.mxu0 %v4008
        %4030 = vmatprep.subr.mxu0 0.0
        %4031 = vmatpush1.msra.mxu0 %v4009
        %4032 = vmatprep.subr.mxu0 0.0
        %4033 = vmatpush1.msra.mxu0 %v4010
        %4034 = vmatprep.subr.mxu0 0.0
        %4035 = vmatpush1.msra.mxu0 %v4011
        %4036 = vmatprep.subr.mxu0 0.0
        %4037 = vmatpush1.msra.mxu0 %v4012
        %4038 = vmatprep.subr.mxu0 0.0
        %4039 = vmatpush1.msra.mxu0 %v4013
        %4040 = vmatprep.subr.mxu0 0.0
        %4041 = vmatpush1.msra.mxu0 %v4014
        %4042 = vmatprep.subr.mxu0 0.0
        %4043 = vmatpush1.msra.mxu0 %v4015
        %4044 = vmatprep.subr.mxu0 0.0
        %4045 = vmatpush1.msra.mxu0 %v4016
        %4046 = vmatprep.subr.mxu0 0.0
        %4047 = vmatpush1.msra.mxu0 %v4017
        %4048 = vmatprep.subr.mxu0 0.0
        %4049 = vmatpush1.msra.mxu0 %v4018
        %4050 = vmatprep.subr.mxu0 0.0
        %4051 = vmatpush1.msra.mxu0 %v4019
        %4052 = vmatprep.subr.mxu0 0.0
        %4053 = vmatpush1.msra.mxu0 0.0
        %4054 = vmatprep.subr.mxu0 0.0
        %4055 = vmatpush1.msra.mxu0 0.0
        %4056 = vmatprep.subr.mxu0 0.0
        %4057 = vmatpush1.msra.mxu0 0.0
        %4058 = vmatprep.subr.mxu0 0.0
        %4059 = vmatpush1.msra.mxu0 0.0
        %4060 = vmatprep.subr.mxu0 0.0
        %4061 = vmatpush1.msra.mxu0 0.0
        %4062 = vmatprep.subr.mxu0 0.0
        %4063 = vmatpush1.msra.mxu0 0.0
        %4064 = vmatprep.subr.mxu0 0.0
        %4065 = vmatpush1.msra.mxu0 0.0
        %4066 = vmatprep.subr.mxu0 0.0
        %4067 = vmatpush1.msra.mxu0 0.0
        %4068 = vmatprep.subr.mxu0 0.0
        %4069 = vmatpush1.msra.mxu0 0.0
        %4070 = vmatprep.subr.mxu0 0.0
        %4071 = vmatpush1.msra.mxu0 0.0
        %4072 = vmatprep.subr.mxu0 0.0
        %4073 = vmatpush1.msra.mxu0 0.0
        %4074 = vmatprep.subr.mxu0 0.0
        %4075 = vmatpush1.msra.mxu0 0.0
        %4076 = vmatprep.subr.mxu0 0.0
        %4077 = vmatpush1.msra.mxu0 0.0
        %4078 = vmatprep.subr.mxu0 0.0
        %4079 = vmatpush1.msra.mxu0 0.0
        %4080 = vmatprep.subr.mxu0 0.0
        %4081 = vmatpush1.msra.mxu0 0.0
        %4082 = vmatprep.subr.mxu0 0.0
        %4083 = vmatpush1.msra.mxu0 0.0
        %4084 = vmatprep.mubr.f32.mxu0 0.0
        %4085 = vmatmul.mubr.f32.gmra.mrb[0].mxu0 %v3489
        %v4086 = vpop.f32.mrb[0].mxu0
        %v4087 = vadd.f32 0.0, %v4086
        %v4088 = vpop.f32.mrb[0].mxu0
        %4089 = vmatprep.mubr.f32.mxu0 0.0
        %4090 = vmatmul.mubr.f32.gmra.mrb[0].mxu0 %v3562
        %v4091 = vpop.f32.mrb[0].mxu0
        %v4092 = vadd.f32 0.0, %v4091
        %v4093 = vpop.f32.mrb[0].mxu0
        %4094 = vmatprep.mubr.f32.mxu0 0.0
        %4095 = vmatmul.mubr.f32.gmra.mrb[0].mxu0 %v3635
        %v4096 = vpop.f32.mrb[0].mxu0
        %v4097 = vadd.f32 0.0, %v4096
        %v4098 = vpop.f32.mrb[0].mxu0
        %4099 = vmatprep.mubr.f32.mxu0 0.0
        %4100 = vmatmul.mubr.f32.gmra.mrb[0].mxu0 %v3708
        %v4101 = vpop.f32.mrb[0].mxu0
        %v4102 = vadd.f32 0.0, %v4101
        %v4103 = vpop.f32.mrb[0].mxu0
        %4104 = vmatprep.mubr.f32.mxu0 0.0
        %4105 = vmatmul.mubr.f32.gmra.mrb[0].mxu0 %v3781
        %v4106 = vpop.f32.mrb[0].mxu0
        %v4107 = vadd.f32 0.0, %v4106
        %v4108 = vpop.f32.mrb[0].mxu0
        %4109 = vmatprep.mubr.f32.mxu0 0.0
        %4110 = vmatmul.mubr.f32.gmra.mrb[0].mxu0 %v3854
        %v4111 = vpop.f32.mrb[0].mxu0
        %v4112 = vadd.f32 0.0, %v4111
        %v4113 = vpop.f32.mrb[0].mxu0
        %4114 = vmatprep.mubr.f32.mxu0 0.0
        %4115 = vmatmul.mubr.f32.gmra.mrb[0].mxu0 %v3927
        %v4116 = vpop.f32.mrb[0].mxu0
        %v4117 = vadd.f32 0.0, %v4116
        %v4118 = vpop.f32.mrb[0].mxu0
        %4119 = vmatprep.mubr.f32.mxu0 0.0
        %4120 = vmatmul.mubr.f32.gmra.mrb[0].mxu0 %v4000
        %v4121 = vpop.f32.mrb[0].mxu0
        %v4122 = vadd.f32 0.0, %v4121
        %v4123 = vpop.f32.mrb[0].mxu0
        %4124 = vdwg.mxu0
        %4125 = vmatprep.subr.mxu0 0.0
        %4126 = vmatpush1.msra.mxu0 %v2747
        %4127 = vmatprep.subr.mxu0 0.0
        %4128 = vmatpush1.msra.mxu0 %v2748
        %4129 = vmatprep.subr.mxu0 0.0
        %4130 = vmatpush1.msra.mxu0 %v2749
        %4131 = vmatprep.subr.mxu0 0.0
        %4132 = vmatpush1.msra.mxu0 %v2750
        %4133 = vmatprep.subr.mxu0 0.0
        %4134 = vmatpush1.msra.mxu0 %v2751
        %4135 = vmatprep.subr.mxu0 0.0
        %4136 = vmatpush1.msra.mxu0 %v2752
        %4137 = vmatprep.subr.mxu0 0.0
        %4138 = vmatpush1.msra.mxu0 %v2753
        %4139 = vmatprep.subr.mxu0 0.0
        %4140 = vmatpush1.msra.mxu0 %v2754
        %4141 = vmatprep.subr.mxu0 0.0
        %4142 = vmatpush1.msra.mxu0 %v2755
        %4143 = vmatprep.subr.mxu0 0.0
        %4144 = vmatpush1.msra.mxu0 %v2756
        %4145 = vmatprep.subr.mxu0 0.0
        %4146 = vmatpush1.msra.mxu0 %v2757
        %4147 = vmatprep.subr.mxu0 0.0
        %4148 = vmatpush1.msra.mxu0 %v2758
        %4149 = vmatprep.subr.mxu0 0.0
        %4150 = vmatpush1.msra.mxu0 %v2759
        %4151 = vmatprep.subr.mxu0 0.0
        %4152 = vmatpush1.msra.mxu0 %v2760
        %4153 = vmatprep.subr.mxu0 0.0
        %4154 = vmatpush1.msra.mxu0 %v2761
        %4155 = vmatprep.subr.mxu0 0.0
        %4156 = vmatpush1.msra.mxu0 %v2762
        %4157 = vmatprep.subr.mxu0 0.0
        %4158 = vmatpush1.msra.mxu0 0.0
        %4159 = vmatprep.subr.mxu0 0.0
        %4160 = vmatpush1.msra.mxu0 0.0
        %4161 = vmatprep.subr.mxu0 0.0
        %4162 = vmatpush1.msra.mxu0 0.0
        %4163 = vmatprep.subr.mxu0 0.0
        %4164 = vmatpush1.msra.mxu0 0.0
        %4165 = vmatprep.subr.mxu0 0.0
        %4166 = vmatpush1.msra.mxu0 0.0
        %4167 = vmatprep.subr.mxu0 0.0
        %4168 = vmatpush1.msra.mxu0 0.0
        %4169 = vmatprep.subr.mxu0 0.0
        %4170 = vmatpush1.msra.mxu0 0.0
        %4171 = vmatprep.subr.mxu0 0.0
        %4172 = vmatpush1.msra.mxu0 0.0
        %4173 = vmatprep.subr.mxu0 0.0
        %4174 = vmatpush1.msra.mxu0 0.0
        %4175 = vmatprep.subr.mxu0 0.0
        %4176 = vmatpush1.msra.mxu0 0.0
        %4177 = vmatprep.subr.mxu0 0.0
        %4178 = vmatpush1.msra.mxu0 0.0
        %4179 = vmatprep.subr.mxu0 0.0
        %4180 = vmatpush1.msra.mxu0 0.0
        %4181 = vmatprep.subr.mxu0 0.0
        %4182 = vmatpush1.msra.mxu0 0.0
        %4183 = vmatprep.subr.mxu0 0.0
        %4184 = vmatpush1.msra.mxu0 0.0
        %4185 = vmatprep.subr.mxu0 0.0
        %4186 = vmatpush1.msra.mxu0 0.0
        %4187 = vmatprep.subr.mxu0 0.0
        %4188 = vmatpush1.msra.mxu0 0.0
        %4189 = vmatprep.mubr.f32.mxu0 0.0
        %4190 = vmatmul.mubr.f32.gmra.mrb[0].mxu0 %v2233
        %v4191 = vpop.f32.mrb[0].mxu0
        %v4192 = vadd.f32 %v4087, %v4191
        %v4193 = vpop.f32.mrb[0].mxu0
        %4194 = vmatprep.mubr.f32.mxu0 0.0
        %4195 = vmatmul.mubr.f32.gmra.mrb[0].mxu0 %v2306
        %v4196 = vpop.f32.mrb[0].mxu0
        %v4197 = vadd.f32 %v4092, %v4196
        %v4198 = vpop.f32.mrb[0].mxu0
        %4199 = vmatprep.mubr.f32.mxu0 0.0
        %4200 = vmatmul.mubr.f32.gmra.mrb[0].mxu0 %v2379
        %v4201 = vpop.f32.mrb[0].mxu0
        %v4202 = vadd.f32 %v4097, %v4201
        %v4203 = vpop.f32.mrb[0].mxu0
        %4204 = vmatprep.mubr.f32.mxu0 0.0
        %4205 = vmatmul.mubr.f32.gmra.mrb[0].mxu0 %v2452
        %v4206 = vpop.f32.mrb[0].mxu0
        %v4207 = vadd.f32 %v4102, %v4206
        %v4208 = vpop.f32.mrb[0].mxu0
        %4209 = vmatprep.mubr.f32.mxu0 0.0
        %4210 = vmatmul.mubr.f32.gmra.mrb[0].mxu0 %v2525
        %v4211 = vpop.f32.mrb[0].mxu0
        %v4212 = vadd.f32 %v4107, %v4211
        %v4213 = vpop.f32.mrb[0].mxu0
        %4214 = vmatprep.mubr.f32.mxu0 0.0
        %4215 = vmatmul.mubr.f32.gmra.mrb[0].mxu0 %v2598
        %v4216 = vpop.f32.mrb[0].mxu0
        %v4217 = vadd.f32 %v4112, %v4216
        %v4218 = vpop.f32.mrb[0].mxu0
        %4219 = vmatprep.mubr.f32.mxu0 0.0
        %4220 = vmatmul.mubr.f32.gmra.mrb[0].mxu0 %v2671
        %v4221 = vpop.f32.mrb[0].mxu0
        %v4222 = vadd.f32 %v4117, %v4221
        %v4223 = vpop.f32.mrb[0].mxu0
        %4224 = vmatprep.mubr.f32.mxu0 0.0
        %4225 = vmatmul.mubr.f32.gmra.mrb[0].mxu0 %v2744
        %v4226 = vpop.f32.mrb[0].mxu0
        %v4227 = vadd.f32 %v4122, %v4226
        %v4228 = vpop.f32.mrb[0].mxu0
        %4229 = vdwg.mxu0
        %v4230 = vld [vmem:[#allocation11] sm:$0x1]
        %v4232 = vlaneseq
        %v4233 = vshrl.u32 %v4232, 7
        %v4234 = vsub.s32 0, %v4233
        %v4235 = vrot.slane %v4230, %v4234
        %v4237 = vadd.f32 %v4192, %v4235
        %v4238 = vadd.f32 %v4197, %v4235
        %v4239 = vadd.f32 %v4202, %v4235
        %v4240 = vadd.f32 %v4207, %v4235
        %v4241 = vadd.f32 %v4212, %v4235
        %v4242 = vadd.f32 %v4217, %v4235
        %v4243 = vadd.f32 %v4222, %v4235
        %v4244 = vadd.f32 %v4227, %v4235
        %v4245 = vadd.f32 %v877, %v4237
        %v4246 = vadd.f32 %v882, %v4238
        %v4247 = vadd.f32 %v887, %v4239
        %v4248 = vadd.f32 %v892, %v4240
        %v4249 = vadd.f32 %v897, %v4241
        %v4250 = vadd.f32 %v902, %v4242
        %v4251 = vadd.f32 %v907, %v4243
        %v4252 = vadd.f32 %v912, %v4244
        %v4253 = vld [vmem:[#allocation13] sm:$0x1]
        %v4254 = vld [vmem:[#allocation14] sm:$0x1]
        %v4255 = vsel %vm917, %v4245, 0.0
        %4256 = vadd.xlane.f32.xlu0 %v4255
        %v4257 = vpop.xlane.xlu0 %4256
        %v4258 = vsel %vm917, %v4246, 0.0
        %4259 = vadd.xlane.f32.xlu0 %v4258
        %v4260 = vpop.xlane.xlu0 %4259
        %v4261 = vsel %vm917, %v4247, 0.0
        %4262 = vadd.xlane.f32.xlu0 %v4261
        %v4263 = vpop.xlane.xlu0 %4262
        %v4264 = vsel %vm917, %v4248, 0.0
        %4265 = vadd.xlane.f32.xlu0 %v4264
        %v4266 = vpop.xlane.xlu0 %4265
        %v4267 = vsel %vm917, %v4249, 0.0
        %4268 = vadd.xlane.f32.xlu0 %v4267
        %v4269 = vpop.xlane.xlu0 %4268
        %v4270 = vsel %vm917, %v4250, 0.0
        %4271 = vadd.xlane.f32.xlu0 %v4270
        %v4272 = vpop.xlane.xlu0 %4271
        %v4273 = vsel %vm917, %v4251, 0.0
        %4274 = vadd.xlane.f32.xlu0 %v4273
        %v4275 = vpop.xlane.xlu0 %4274
        %v4276 = vsel %vm917, %v4252, 0.0
        %4277 = vadd.xlane.f32.xlu0 %v4276
        %v4278 = vpop.xlane.xlu0 %4277
        %v4279 = vmul.f32 %v4257, %v942
        %v4280 = vmul.f32 %v4260, %v942
        %v4281 = vmul.f32 %v4263, %v942
        %v4282 = vmul.f32 %v4266, %v942
        %v4283 = vmul.f32 %v4269, %v942
        %v4284 = vmul.f32 %v4272, %v942
        %v4285 = vmul.f32 %v4275, %v942
        %v4286 = vmul.f32 %v4278, %v942
        %v4287 = vsub.f32 %v4245, %v4279
        %v4288 = vsub.f32 %v4246, %v4280
        %v4289 = vsub.f32 %v4247, %v4281
        %v4290 = vsub.f32 %v4248, %v4282
        %v4291 = vsub.f32 %v4249, %v4283
        %v4292 = vsub.f32 %v4250, %v4284
        %v4293 = vsub.f32 %v4251, %v4285
        %v4294 = vsub.f32 %v4252, %v4286
        %v4295 = vmul.f32 %v4287, %v4287
        %v4296 = vmul.f32 %v4288, %v4288
        %v4297 = vmul.f32 %v4289, %v4289
        %v4298 = vmul.f32 %v4290, %v4290
        %v4299 = vmul.f32 %v4291, %v4291
        %v4300 = vmul.f32 %v4292, %v4292
        %v4301 = vmul.f32 %v4293, %v4293
        %v4302 = vmul.f32 %v4294, %v4294
        %v4303 = vsel %vm917, %v4295, 0.0
        %4304 = vadd.xlane.f32.xlu0 %v4303
        %v4305 = vpop.xlane.xlu0 %4304
        %v4306 = vsel %vm917, %v4296, 0.0
        %4307 = vadd.xlane.f32.xlu0 %v4306
        %v4308 = vpop.xlane.xlu0 %4307
        %v4309 = vsel %vm917, %v4297, 0.0
        %4310 = vadd.xlane.f32.xlu0 %v4309
        %v4311 = vpop.xlane.xlu0 %4310
        %v4312 = vsel %vm917, %v4298, 0.0
        %4313 = vadd.xlane.f32.xlu0 %v4312
        %v4314 = vpop.xlane.xlu0 %4313
        %v4315 = vsel %vm917, %v4299, 0.0
        %4316 = vadd.xlane.f32.xlu0 %v4315
        %v4317 = vpop.xlane.xlu0 %4316
        %v4318 = vsel %vm917, %v4300, 0.0
        %4319 = vadd.xlane.f32.xlu0 %v4318
        %v4320 = vpop.xlane.xlu0 %4319
        %v4321 = vsel %vm917, %v4301, 0.0
        %4322 = vadd.xlane.f32.xlu0 %v4321
        %v4323 = vpop.xlane.xlu0 %4322
        %v4324 = vsel %vm917, %v4302, 0.0
        %4325 = vadd.xlane.f32.xlu0 %v4324
        %v4326 = vpop.xlane.xlu0 %4325
        %v4327 = vmul.f32 %v4305, %v942
        %v4328 = vmul.f32 %v4308, %v942
        %v4329 = vmul.f32 %v4311, %v942
        %v4330 = vmul.f32 %v4314, %v942
        %v4331 = vmul.f32 %v4317, %v942
        %v4332 = vmul.f32 %v4320, %v942
        %v4333 = vmul.f32 %v4323, %v942
        %v4334 = vmul.f32 %v4326, %v942
        %v4335 = vadd.f32 %v4327, 1e-05
        %v4336 = vadd.f32 %v4328, 1e-05
        %v4337 = vadd.f32 %v4329, 1e-05
        %v4338 = vadd.f32 %v4330, 1e-05
        %v4339 = vadd.f32 %v4331, 1e-05
        %v4340 = vadd.f32 %v4332, 1e-05
        %v4341 = vadd.f32 %v4333, 1e-05
        %v4342 = vadd.f32 %v4334, 1e-05
        %v4343 = vrsqrt.pop %v4335
        %v4344 = vrsqrt.pop %v4336
        %v4345 = vrsqrt.pop %v4337
        %v4346 = vrsqrt.pop %v4338
        %v4347 = vrsqrt.pop %v4339
        %v4348 = vrsqrt.pop %v4340
        %v4349 = vrsqrt.pop %v4341
        %v4350 = vrsqrt.pop %v4342
        %v4351 = vmul.f32 %v4287, %v4343
        %v4352 = vmul.f32 %v4288, %v4344
        %v4353 = vmul.f32 %v4289, %v4345
        %v4354 = vmul.f32 %v4290, %v4346
        %v4355 = vmul.f32 %v4291, %v4347
        %v4356 = vmul.f32 %v4292, %v4348
        %v4357 = vmul.f32 %v4293, %v4349
        %v4358 = vmul.f32 %v4294, %v4350
        %v4360 = vlaneseq
        %v4361 = vshrl.u32 %v4360, 7
        %v4362 = vsub.s32 0, %v4361
        %v4363 = vrot.slane %v4253, %v4362
        %v4365 = vmul.f32 %v4351, %v4363
        %v4366 = vmul.f32 %v4352, %v4363
        %v4367 = vmul.f32 %v4353, %v4363
        %v4368 = vmul.f32 %v4354, %v4363
        %v4369 = vmul.f32 %v4355, %v4363
        %v4370 = vmul.f32 %v4356, %v4363
        %v4371 = vmul.f32 %v4357, %v4363
        %v4372 = vmul.f32 %v4358, %v4363
        %v4374 = vlaneseq
        %v4375 = vshrl.u32 %v4374, 7
        %v4376 = vsub.s32 0, %v4375
        %v4377 = vrot.slane %v4254, %v4376
        %v4379 = vadd.f32 %v4365, %v4377
        %v4380 = vadd.f32 %v4366, %v4377
        %v4381 = vadd.f32 %v4367, %v4377
        %v4382 = vadd.f32 %v4368, %v4377
        %v4383 = vadd.f32 %v4369, %v4377
        %v4384 = vadd.f32 %v4370, %v4377
        %v4385 = vadd.f32 %v4371, %v4377
        %v4386 = vadd.f32 %v4372, %v4377
        %v4387 = vld [vmem:[%s11] sm:$0xff]
        %v4388 = vld [vmem:[%s11 + $0x8] sm:$0xff]
        %v4389 = vld [vmem:[%s11 + $0x10] sm:$0xff]
        %v4390 = vld [vmem:[%s11 + $0x18] sm:$0xff]
        %v4391 = vld [vmem:[%s11 + $0x20] sm:$0xff]
        %v4392 = vld [vmem:[%s11 + $0x28] sm:$0xff]
        %v4393 = vld [vmem:[%s11 + $0x30] sm:$0xff]
        %v4394 = vld [vmem:[%s11 + $0x38] sm:$0xff]
        %v4395 = vld [vmem:[%s11 + $0x40] sm:$0xff]
        %v4396 = vld [vmem:[%s11 + $0x48] sm:$0xff]
        %v4397 = vld [vmem:[%s11 + $0x50] sm:$0xff]
        %v4398 = vld [vmem:[%s11 + $0x58] sm:$0xff]
        %v4399 = vld [vmem:[%s11 + $0x60] sm:$0xff]
        %v4400 = vld [vmem:[%s11 + $0x68] sm:$0xff]
        %v4401 = vld [vmem:[%s11 + $0x70] sm:$0xff]
        %v4402 = vld [vmem:[%s11 + $0x78] sm:$0xff]
        %v4403 = vld [vmem:[%s11 + $0x80] sm:$0xff]
        %v4404 = vld [vmem:[%s11 + $0x88] sm:$0xff]
        %v4405 = vld [vmem:[%s11 + $0x90] sm:$0xff]
        %v4406 = vld [vmem:[%s11 + $0x98] sm:$0xff]
        %v4407 = vld [vmem:[%s12] sm:$0x3]
        %v4409 = vlaneseq
        %v4410 = vshrl.u32 %v4409, 7
        %v4411 = vsub.s32 0, %v4410
        %v4412 = vrot.slane %v4407, %v4411
        %v4413 = vlaneseq
        %v4414 = vshrl.u32 %v4413, 7
        %v4415 = vsub.s32 1, %v4414
        %v4416 = vrot.slane %v4407, %v4415
        %v4420 = vsel %vm917, %v4379, 0
        %v4423 = vsel %vm917, %v4380, 0
        %v4426 = vsel %vm917, %v4381, 0
        %v4429 = vsel %vm917, %v4382, 0
        %v4432 = vsel %vm917, %v4383, 0
        %v4435 = vsel %vm917, %v4384, 0
        %v4438 = vsel %vm917, %v4385, 0
        %v4441 = vsel %vm917, %v4386, 0
        %4443 = vmatprep.subr.mxu0 %v4388
        %4444 = vmatpush1.msra.mxu0 %v4387
        %4445 = vmatprep.subr.mxu0 %v4390
        %4446 = vmatpush1.msra.mxu0 %v4389
        %4447 = vmatprep.subr.mxu0 %v4392
        %4448 = vmatpush1.msra.mxu0 %v4391
        %4449 = vmatprep.subr.mxu0 %v4394
        %4450 = vmatpush1.msra.mxu0 %v4393
        %4451 = vmatprep.subr.mxu0 %v4396
        %4452 = vmatpush1.msra.mxu0 %v4395
        %4453 = vmatprep.subr.mxu0 %v4398
        %4454 = vmatpush1.msra.mxu0 %v4397
        %4455 = vmatprep.subr.mxu0 %v4400
        %4456 = vmatpush1.msra.mxu0 %v4399
        %4457 = vmatprep.subr.mxu0 %v4402
        %4458 = vmatpush1.msra.mxu0 %v4401
        %4459 = vmatprep.subr.mxu0 %v4404
        %4460 = vmatpush1.msra.mxu0 %v4403
        %4461 = vmatprep.subr.mxu0 %v4406
        %4462 = vmatpush1.msra.mxu0 %v4405
        %4463 = vmatprep.subr.mxu0 0.0
        %4464 = vmatpush1.msra.mxu0 0.0
        %4465 = vmatprep.subr.mxu0 0.0
        %4466 = vmatpush1.msra.mxu0 0.0
        %4467 = vmatprep.subr.mxu0 0.0
        %4468 = vmatpush1.msra.mxu0 0.0
        %4469 = vmatprep.subr.mxu0 0.0
        %4470 = vmatpush1.msra.mxu0 0.0
        %4471 = vmatprep.subr.mxu0 0.0
        %4472 = vmatpush1.msra.mxu0 0.0
        %4473 = vmatprep.subr.mxu0 0.0
        %4474 = vmatpush1.msra.mxu0 0.0
        %4475 = vmatprep.subr.mxu0 0.0
        %4476 = vmatpush1.msra.mxu0 0.0
        %4477 = vmatprep.subr.mxu0 0.0
        %4478 = vmatpush1.msra.mxu0 0.0
        %4479 = vmatprep.subr.mxu0 0.0
        %4480 = vmatpush1.msra.mxu0 0.0
        %4481 = vmatprep.subr.mxu0 0.0
        %4482 = vmatpush1.msra.mxu0 0.0
        %4483 = vmatprep.subr.mxu0 0.0
        %4484 = vmatpush1.msra.mxu0 0.0
        %4485 = vmatprep.subr.mxu0 0.0
        %4486 = vmatpush1.msra.mxu0 0.0
        %4487 = vmatprep.subr.mxu0 0.0
        %4488 = vmatpush1.msra.mxu0 0.0
        %4489 = vmatprep.subr.mxu0 0.0
        %4490 = vmatpush1.msra.mxu0 0.0
        %4491 = vmatprep.subr.mxu0 0.0
        %4492 = vmatpush1.msra.mxu0 0.0
        %4493 = vmatprep.subr.mxu0 0.0
        %4494 = vmatpush1.msra.mxu0 0.0
        %4495 = vmatprep.subr.mxu0 0.0
        %4496 = vmatpush1.msra.mxu0 0.0
        %4497 = vmatprep.subr.mxu0 0.0
        %4498 = vmatpush1.msra.mxu0 0.0
        %4499 = vmatprep.subr.mxu0 0.0
        %4500 = vmatpush1.msra.mxu0 0.0
        %4501 = vmatprep.subr.mxu0 0.0
        %4502 = vmatpush1.msra.mxu0 0.0
        %4503 = vmatprep.subr.mxu0 0.0
        %4504 = vmatpush1.msra.mxu0 0.0
        %4505 = vmatprep.subr.mxu0 0.0
        %4506 = vmatpush1.msra.mxu0 0.0
        %4507 = vmatprep.mubr.f32.mxu0 0.0
        %4508 = vmatmul.mubr.f32.gmra.mrb[0].mxu0 %v4420
        %v4509 = vpop.f32.mrb[0].mxu0
        %v4510 = vadd.f32 %v4412, %v4509
        %v4511 = vpop.f32.mrb[0].mxu0
        %v4512 = vadd.f32 %v4416, %v4511
        %4513 = vmatprep.mubr.f32.mxu0 0.0
        %4514 = vmatmul.mubr.f32.gmra.mrb[0].mxu0 %v4423
        %v4515 = vpop.f32.mrb[0].mxu0
        %v4516 = vadd.f32 %v4412, %v4515
        %v4517 = vpop.f32.mrb[0].mxu0
        %v4518 = vadd.f32 %v4416, %v4517
        %4519 = vmatprep.mubr.f32.mxu0 0.0
        %4520 = vmatmul.mubr.f32.gmra.mrb[0].mxu0 %v4426
        %v4521 = vpop.f32.mrb[0].mxu0
        %v4522 = vadd.f32 %v4412, %v4521
        %v4523 = vpop.f32.mrb[0].mxu0
        %v4524 = vadd.f32 %v4416, %v4523
        %4525 = vmatprep.mubr.f32.mxu0 0.0
        %4526 = vmatmul.mubr.f32.gmra.mrb[0].mxu0 %v4429
        %v4527 = vpop.f32.mrb[0].mxu0
        %v4528 = vadd.f32 %v4412, %v4527
        %v4529 = vpop.f32.mrb[0].mxu0
        %v4530 = vadd.f32 %v4416, %v4529
        %4531 = vmatprep.mubr.f32.mxu0 0.0
        %4532 = vmatmul.mubr.f32.gmra.mrb[0].mxu0 %v4432
        %v4533 = vpop.f32.mrb[0].mxu0
        %v4534 = vadd.f32 %v4412, %v4533
        %v4535 = vpop.f32.mrb[0].mxu0
        %v4536 = vadd.f32 %v4416, %v4535
        %4537 = vmatprep.mubr.f32.mxu0 0.0
        %4538 = vmatmul.mubr.f32.gmra.mrb[0].mxu0 %v4435
        %v4539 = vpop.f32.mrb[0].mxu0
        %v4540 = vadd.f32 %v4412, %v4539
        %v4541 = vpop.f32.mrb[0].mxu0
        %v4542 = vadd.f32 %v4416, %v4541
        %4543 = vmatprep.mubr.f32.mxu0 0.0
        %4544 = vmatmul.mubr.f32.gmra.mrb[0].mxu0 %v4438
        %v4545 = vpop.f32.mrb[0].mxu0
        %v4546 = vadd.f32 %v4412, %v4545
        %v4547 = vpop.f32.mrb[0].mxu0
        %v4548 = vadd.f32 %v4416, %v4547
        %4549 = vmatprep.mubr.f32.mxu0 0.0
        %4550 = vmatmul.mubr.f32.gmra.mrb[0].mxu0 %v4441
        %v4551 = vpop.f32.mrb[0].mxu0
        %v4552 = vadd.f32 %v4412, %v4551
        %v4553 = vpop.f32.mrb[0].mxu0
        %v4554 = vadd.f32 %v4416, %v4553
        %4555 = vdwg.mxu0
        %v4556 = vmax.f32 %v4510, 0.0
        %v4557 = vmax.f32 %v4512, 0.0
        %v4558 = vmax.f32 %v4516, 0.0
        %v4559 = vmax.f32 %v4518, 0.0
        %v4560 = vmax.f32 %v4522, 0.0
        %v4561 = vmax.f32 %v4524, 0.0
        %v4562 = vmax.f32 %v4528, 0.0
        %v4563 = vmax.f32 %v4530, 0.0
        %v4564 = vmax.f32 %v4534, 0.0
        %v4565 = vmax.f32 %v4536, 0.0
        %v4566 = vmax.f32 %v4540, 0.0
        %v4567 = vmax.f32 %v4542, 0.0
        %v4568 = vmax.f32 %v4546, 0.0
        %v4569 = vmax.f32 %v4548, 0.0
        %v4570 = vmax.f32 %v4552, 0.0
        %v4571 = vmax.f32 %v4554, 0.0
        %v4572 = vld [vmem:[%s13] sm:$0xff]
        %v4573 = vld [vmem:[%s13 + $0x8] sm:$0xff]
        %v4574 = vld [vmem:[%s13 + $0x10] sm:$0xff]
        %v4575 = vld [vmem:[%s13 + $0x18] sm:$0xff]
        %v4576 = vld [vmem:[%s13 + $0x20] sm:$0xff]
        %v4577 = vld [vmem:[%s13 + $0x28] sm:$0xff]
        %v4578 = vld [vmem:[%s13 + $0x30] sm:$0xff]
        %v4579 = vld [vmem:[%s13 + $0x38] sm:$0xff]
        %v4580 = vld [vmem:[%s13 + $0x40] sm:$0xff]
        %v4581 = vld [vmem:[%s13 + $0x48] sm:$0xff]
        %v4582 = vld [vmem:[%s13 + $0x50] sm:$0xff]
        %v4583 = vld [vmem:[%s13 + $0x58] sm:$0xff]
        %v4584 = vld [vmem:[%s13 + $0x60] sm:$0xff]
        %v4585 = vld [vmem:[%s13 + $0x68] sm:$0xff]
        %v4586 = vld [vmem:[%s13 + $0x70] sm:$0xff]
        %v4587 = vld [vmem:[%s13 + $0x78] sm:$0xff]
        %v4588 = vld [vmem:[%s13 + $0x80] sm:$0xff]
        %v4589 = vld [vmem:[%s13 + $0x88] sm:$0xff]
        %v4590 = vld [vmem:[%s13 + $0x90] sm:$0xff]
        %v4591 = vld [vmem:[%s13 + $0x98] sm:$0xff]
        %v4592 = vld [vmem:[%s13 + $0xa0] sm:$0xff]
        %v4593 = vld [vmem:[%s13 + $0xa8] sm:$0xff]
        %v4594 = vld [vmem:[%s13 + $0xb0] sm:$0xff]
        %v4595 = vld [vmem:[%s13 + $0xb8] sm:$0xff]
        %v4596 = vld [vmem:[%s13 + $0xc0] sm:$0xff]
        %v4597 = vld [vmem:[%s13 + $0xc8] sm:$0xff]
        %v4598 = vld [vmem:[%s13 + $0xd0] sm:$0xff]
        %v4599 = vld [vmem:[%s13 + $0xd8] sm:$0xff]
        %v4600 = vld [vmem:[%s13 + $0xe0] sm:$0xff]
        %v4601 = vld [vmem:[%s13 + $0xe8] sm:$0xff]
        %v4602 = vld [vmem:[%s13 + $0xf0] sm:$0xff]
        %v4603 = vld [vmem:[%s13 + $0xf8] sm:$0xff]
        %v4604 = vld [vmem:[#allocation16] sm:$0x1]
        %v4606 = vlaneseq
        %v4607 = vshrl.u32 %v4606, 7
        %v4608 = vsub.s32 0, %v4607
        %v4609 = vrot.slane %v4604, %v4608
        %4611 = vmatprep.subr.mxu0 0.0
        %4612 = vmatpush1.msra.mxu0 %v4572
        %4613 = vmatprep.subr.mxu0 0.0
        %4614 = vmatpush1.msra.mxu0 %v4573
        %4615 = vmatprep.subr.mxu0 0.0
        %4616 = vmatpush1.msra.mxu0 %v4574
        %4617 = vmatprep.subr.mxu0 0.0
        %4618 = vmatpush1.msra.mxu0 %v4575
        %4619 = vmatprep.subr.mxu0 0.0
        %4620 = vmatpush1.msra.mxu0 %v4576
        %4621 = vmatprep.subr.mxu0 0.0
        %4622 = vmatpush1.msra.mxu0 %v4577
        %4623 = vmatprep.subr.mxu0 0.0
        %4624 = vmatpush1.msra.mxu0 %v4578
        %4625 = vmatprep.subr.mxu0 0.0
        %4626 = vmatpush1.msra.mxu0 %v4579
        %4627 = vmatprep.subr.mxu0 0.0
        %4628 = vmatpush1.msra.mxu0 %v4580
        %4629 = vmatprep.subr.mxu0 0.0
        %4630 = vmatpush1.msra.mxu0 %v4581
        %4631 = vmatprep.subr.mxu0 0.0
        %4632 = vmatpush1.msra.mxu0 %v4582
        %4633 = vmatprep.subr.mxu0 0.0
        %4634 = vmatpush1.msra.mxu0 %v4583
        %4635 = vmatprep.subr.mxu0 0.0
        %4636 = vmatpush1.msra.mxu0 %v4584
        %4637 = vmatprep.subr.mxu0 0.0
        %4638 = vmatpush1.msra.mxu0 %v4585
        %4639 = vmatprep.subr.mxu0 0.0
        %4640 = vmatpush1.msra.mxu0 %v4586
        %4641 = vmatprep.subr.mxu0 0.0
        %4642 = vmatpush1.msra.mxu0 %v4587
        %4643 = vmatprep.subr.mxu0 0.0
        %4644 = vmatpush1.msra.mxu0 %v4588
        %4645 = vmatprep.subr.mxu0 0.0
        %4646 = vmatpush1.msra.mxu0 %v4589
        %4647 = vmatprep.subr.mxu0 0.0
        %4648 = vmatpush1.msra.mxu0 %v4590
        %4649 = vmatprep.subr.mxu0 0.0
        %4650 = vmatpush1.msra.mxu0 %v4591
        %4651 = vmatprep.subr.mxu0 0.0
        %4652 = vmatpush1.msra.mxu0 %v4592
        %4653 = vmatprep.subr.mxu0 0.0
        %4654 = vmatpush1.msra.mxu0 %v4593
        %4655 = vmatprep.subr.mxu0 0.0
        %4656 = vmatpush1.msra.mxu0 %v4594
        %4657 = vmatprep.subr.mxu0 0.0
        %4658 = vmatpush1.msra.mxu0 %v4595
        %4659 = vmatprep.subr.mxu0 0.0
        %4660 = vmatpush1.msra.mxu0 %v4596
        %4661 = vmatprep.subr.mxu0 0.0
        %4662 = vmatpush1.msra.mxu0 %v4597
        %4663 = vmatprep.subr.mxu0 0.0
        %4664 = vmatpush1.msra.mxu0 %v4598
        %4665 = vmatprep.subr.mxu0 0.0
        %4666 = vmatpush1.msra.mxu0 %v4599
        %4667 = vmatprep.subr.mxu0 0.0
        %4668 = vmatpush1.msra.mxu0 %v4600
        %4669 = vmatprep.subr.mxu0 0.0
        %4670 = vmatpush1.msra.mxu0 %v4601
        %4671 = vmatprep.subr.mxu0 0.0
        %4672 = vmatpush1.msra.mxu0 %v4602
        %4673 = vmatprep.subr.mxu0 0.0
        %4674 = vmatpush1.msra.mxu0 %v4603
        %4675 = vmatprep.mubr.f32.mxu0 %v4557
        %4676 = vmatmul.mubr.f32.gmra.mrb[0].mxu0 %v4556
        %v4677 = vpop.f32.mrb[0].mxu0
        %v4678 = vadd.f32 %v4609, %v4677
        %v4679 = vpop.f32.mrb[0].mxu0
        %4680 = vmatprep.mubr.f32.mxu0 %v4559
        %4681 = vmatmul.mubr.f32.gmra.mrb[0].mxu0 %v4558
        %v4682 = vpop.f32.mrb[0].mxu0
        %v4683 = vadd.f32 %v4609, %v4682
        %v4684 = vpop.f32.mrb[0].mxu0
        %4685 = vmatprep.mubr.f32.mxu0 %v4561
        %4686 = vmatmul.mubr.f32.gmra.mrb[0].mxu0 %v4560
        %v4687 = vpop.f32.mrb[0].mxu0
        %v4688 = vadd.f32 %v4609, %v4687
        %v4689 = vpop.f32.mrb[0].mxu0
        %4690 = vmatprep.mubr.f32.mxu0 %v4563
        %4691 = vmatmul.mubr.f32.gmra.mrb[0].mxu0 %v4562
        %v4692 = vpop.f32.mrb[0].mxu0
        %v4693 = vadd.f32 %v4609, %v4692
        %v4694 = vpop.f32.mrb[0].mxu0
        %4695 = vmatprep.mubr.f32.mxu0 %v4565
        %4696 = vmatmul.mubr.f32.gmra.mrb[0].mxu0 %v4564
        %v4697 = vpop.f32.mrb[0].mxu0
        %v4698 = vadd.f32 %v4609, %v4697
        %v4699 = vpop.f32.mrb[0].mxu0
        %4700 = vmatprep.mubr.f32.mxu0 %v4567
        %4701 = vmatmul.mubr.f32.gmra.mrb[0].mxu0 %v4566
        %v4702 = vpop.f32.mrb[0].mxu0
        %v4703 = vadd.f32 %v4609, %v4702
        %v4704 = vpop.f32.mrb[0].mxu0
        %4705 = vmatprep.mubr.f32.mxu0 %v4569
        %4706 = vmatmul.mubr.f32.gmra.mrb[0].mxu0 %v4568
        %v4707 = vpop.f32.mrb[0].mxu0
        %v4708 = vadd.f32 %v4609, %v4707
        %v4709 = vpop.f32.mrb[0].mxu0
        %4710 = vmatprep.mubr.f32.mxu0 %v4571
        %4711 = vmatmul.mubr.f32.gmra.mrb[0].mxu0 %v4570
        %v4712 = vpop.f32.mrb[0].mxu0
        %v4713 = vadd.f32 %v4609, %v4712
        %v4714 = vpop.f32.mrb[0].mxu0
        %4715 = vdwg.mxu0
        %v4716 = vadd.f32 %v4245, %v4678
        %v4717 = vadd.f32 %v4246, %v4683
        %v4718 = vadd.f32 %v4247, %v4688
        %v4719 = vadd.f32 %v4248, %v4693
        %v4720 = vadd.f32 %v4249, %v4698
        %v4721 = vadd.f32 %v4250, %v4703
        %v4722 = vadd.f32 %v4251, %v4708
        %v4723 = vadd.f32 %v4252, %v4713
        %v4724 = vsel %vm917, %v4716, 0.0
        %v4725 = vrot.slane %v4724, 4
        %v4726 = vadd.f32 %v4724, %v4725
        %v4727 = vrot.slane %v4726, 2
        %v4728 = vadd.f32 %v4726, %v4727
        %v4729 = vrot.slane %v4728, 1
        %v4730 = vadd.f32 %v4728, %v4729
        %v4731 = vsel %vm917, %v4717, 0.0
        %v4732 = vrot.slane %v4731, 4
        %v4733 = vadd.f32 %v4731, %v4732
        %v4734 = vrot.slane %v4733, 2
        %v4735 = vadd.f32 %v4733, %v4734
        %v4736 = vrot.slane %v4735, 1
        %v4737 = vadd.f32 %v4735, %v4736
        %v4738 = vsel %vm917, %v4718, 0.0
        %v4739 = vrot.slane %v4738, 4
        %v4740 = vadd.f32 %v4738, %v4739
        %v4741 = vrot.slane %v4740, 2
        %v4742 = vadd.f32 %v4740, %v4741
        %v4743 = vrot.slane %v4742, 1
        %v4744 = vadd.f32 %v4742, %v4743
        %v4745 = vsel %vm917, %v4719, 0.0
        %v4746 = vrot.slane %v4745, 4
        %v4747 = vadd.f32 %v4745, %v4746
        %v4748 = vrot.slane %v4747, 2
        %v4749 = vadd.f32 %v4747, %v4748
        %v4750 = vrot.slane %v4749, 1
        %v4751 = vadd.f32 %v4749, %v4750
        %v4752 = vsel %vm917, %v4720, 0.0
        %v4753 = vrot.slane %v4752, 4
        %v4754 = vadd.f32 %v4752, %v4753
        %v4755 = vrot.slane %v4754, 2
        %v4756 = vadd.f32 %v4754, %v4755
        %v4757 = vrot.slane %v4756, 1
        %v4758 = vadd.f32 %v4756, %v4757
        %v4759 = vsel %vm917, %v4721, 0.0
        %v4760 = vrot.slane %v4759, 4
        %v4761 = vadd.f32 %v4759, %v4760
        %v4762 = vrot.slane %v4761, 2
        %v4763 = vadd.f32 %v4761, %v4762
        %v4764 = vrot.slane %v4763, 1
        %v4765 = vadd.f32 %v4763, %v4764
        %v4766 = vsel %vm917, %v4722, 0.0
        %v4767 = vrot.slane %v4766, 4
        %v4768 = vadd.f32 %v4766, %v4767
        %v4769 = vrot.slane %v4768, 2
        %v4770 = vadd.f32 %v4768, %v4769
        %v4771 = vrot.slane %v4770, 1
        %v4772 = vadd.f32 %v4770, %v4771
        %v4773 = vsel %vm917, %v4723, 0.0
        %v4774 = vrot.slane %v4773, 4
        %v4775 = vadd.f32 %v4773, %v4774
        %v4776 = vrot.slane %v4775, 2
        %v4777 = vadd.f32 %v4775, %v4776
        %v4778 = vrot.slane %v4777, 1
        %v4779 = vadd.f32 %v4777, %v4778
        %v4780 = vmul.f32 %v4730, 0.125
        %v4781 = vmul.f32 %v4737, 0.125
        %v4782 = vmul.f32 %v4744, 0.125
        %v4783 = vmul.f32 %v4751, 0.125
        %v4784 = vmul.f32 %v4758, 0.125
        %v4785 = vmul.f32 %v4765, 0.125
        %v4786 = vmul.f32 %v4772, 0.125
        %v4787 = vmul.f32 %v4779, 0.125
        %v4788 = vld [vmem:[%s15] sm:$0xff]
        %v4789 = vld [vmem:[%s15 + $0x8] sm:$0xff]
        %v4790 = vld [vmem:[%s15 + $0x10] sm:$0xff]
        %v4791 = vld [vmem:[%s15 + $0x18] sm:$0xff]
        %v4792 = vld [vmem:[%s15 + $0x20] sm:$0xff]
        %v4793 = vld [vmem:[%s15 + $0x28] sm:$0xff]
        %v4794 = vld [vmem:[%s15 + $0x30] sm:$0xff]
        %v4795 = vld [vmem:[%s15 + $0x38] sm:$0xff]
        %v4796 = vld [vmem:[%s15 + $0x40] sm:$0xff]
        %v4797 = vld [vmem:[%s15 + $0x48] sm:$0xff]
        %v4798 = vld [vmem:[#allocation17] sm:$0x1]
        %v4800 = vlaneseq
        %v4801 = vshrl.u32 %v4800, 7
        %v4802 = vsub.s32 0, %v4801
        %v4803 = vrot.slane %v4798, %v4802
        %vm4813 = vcmask 1041409
        %v4814 = vsel %vm4813, %v4781, %v4780
        %vm4815 = vcmask 1042434
        %v4816 = vsel %vm4815, %v4782, %v4814
        %vm4817 = vcmask 1043459
        %v4818 = vsel %vm4817, %v4783, %v4816
        %vm4819 = vcmask 1044484
        %v4820 = vsel %vm4819, %v4784, %v4818
        %vm4821 = vcmask 1045509
        %v4822 = vsel %vm4821, %v4785, %v4820
        %vm4823 = vcmask 1046534
        %v4824 = vsel %vm4823, %v4786, %v4822
        %vm4825 = vcmask 1047559
        %v4826 = vsel %vm4825, %v4787, %v4824
        %v4827 = vsel %vm917, %v4826, 0
        %4829 = vmatprep.subr.mxu0 0.0
        %4830 = vmatpush1.msra.mxu0 %v4788
        %4831 = vmatprep.subr.mxu0 0.0
        %4832 = vmatpush1.msra.mxu0 %v4789
        %4833 = vmatprep.subr.mxu0 0.0
        %4834 = vmatpush1.msra.mxu0 %v4790
        %4835 = vmatprep.subr.mxu0 0.0
        %4836 = vmatpush1.msra.mxu0 %v4791
        %4837 = vmatprep.subr.mxu0 0.0
        %4838 = vmatpush1.msra.mxu0 %v4792
        %4839 = vmatprep.subr.mxu0 0.0
        %4840 = vmatpush1.msra.mxu0 %v4793
        %4841 = vmatprep.subr.mxu0 0.0
        %4842 = vmatpush1.msra.mxu0 %v4794
        %4843 = vmatprep.subr.mxu0 0.0
        %4844 = vmatpush1.msra.mxu0 %v4795
        %4845 = vmatprep.subr.mxu0 0.0
        %4846 = vmatpush1.msra.mxu0 %v4796
        %4847 = vmatprep.subr.mxu0 0.0
        %4848 = vmatpush1.msra.mxu0 %v4797
        %4849 = vmatprep.subr.mxu0 0.0
        %4850 = vmatpush1.msra.mxu0 0.0
        %4851 = vmatprep.subr.mxu0 0.0
        %4852 = vmatpush1.msra.mxu0 0.0
        %4853 = vmatprep.subr.mxu0 0.0
        %4854 = vmatpush1.msra.mxu0 0.0
        %4855 = vmatprep.subr.mxu0 0.0
        %4856 = vmatpush1.msra.mxu0 0.0
        %4857 = vmatprep.subr.mxu0 0.0
        %4858 = vmatpush1.msra.mxu0 0.0
        %4859 = vmatprep.subr.mxu0 0.0
        %4860 = vmatpush1.msra.mxu0 0.0
        %4861 = vmatprep.subr.mxu0 0.0
        %4862 = vmatpush1.msra.mxu0 0.0
        %4863 = vmatprep.subr.mxu0 0.0
        %4864 = vmatpush1.msra.mxu0 0.0
        %4865 = vmatprep.subr.mxu0 0.0
        %4866 = vmatpush1.msra.mxu0 0.0
        %4867 = vmatprep.subr.mxu0 0.0
        %4868 = vmatpush1.msra.mxu0 0.0
        %4869 = vmatprep.subr.mxu0 0.0
        %4870 = vmatpush1.msra.mxu0 0.0
        %4871 = vmatprep.subr.mxu0 0.0
        %4872 = vmatpush1.msra.mxu0 0.0
        %4873 = vmatprep.subr.mxu0 0.0
        %4874 = vmatpush1.msra.mxu0 0.0
        %4875 = vmatprep.subr.mxu0 0.0
        %4876 = vmatpush1.msra.mxu0 0.0
        %4877 = vmatprep.subr.mxu0 0.0
        %4878 = vmatpush1.msra.mxu0 0.0
        %4879 = vmatprep.subr.mxu0 0.0
        %4880 = vmatpush1.msra.mxu0 0.0
        %4881 = vmatprep.subr.mxu0 0.0
        %4882 = vmatpush1.msra.mxu0 0.0
        %4883 = vmatprep.subr.mxu0 0.0
        %4884 = vmatpush1.msra.mxu0 0.0
        %4885 = vmatprep.subr.mxu0 0.0
        %4886 = vmatpush1.msra.mxu0 0.0
        %4887 = vmatprep.subr.mxu0 0.0
        %4888 = vmatpush1.msra.mxu0 0.0
        %4889 = vmatprep.subr.mxu0 0.0
        %4890 = vmatpush1.msra.mxu0 0.0
        %4891 = vmatprep.subr.mxu0 0.0
        %4892 = vmatpush1.msra.mxu0 0.0
        %4893 = vmatprep.mubr.f32.mxu0 0.0
        %4894 = vmatmul.mubr.f32.gmra.mrb[0].mxu0 %v4827
        %v4895 = vpop.f32.mrb[0].mxu0
        %v4896 = vadd.f32 %v4803, %v4895
        %v4897 = vpop.f32.mrb[0].mxu0
        %4898 = vdwg.mxu0
        %v4899 = vmax.f32 %v4896, 0.0
        %v4900 = vpack.c.bf16 %v4899, %v4899
        %v4901 = vld [vmem:[#allocation19] sm:$0xff]
        %v4902 = vld [vmem:[#allocation19 + $0x8] sm:$0xff]
        %v4903 = vld [vmem:[#allocation19 + $0x10] sm:$0xff]
        %v4904 = vld [vmem:[#allocation19 + $0x18] sm:$0xff]
        %v4905 = vld [vmem:[#allocation19 + $0x20] sm:$0xff]
        %v4906 = vld [vmem:[#allocation19 + $0x28] sm:$0xff]
        %v4907 = vld [vmem:[#allocation19 + $0x30] sm:$0xff]
        %v4908 = vld [vmem:[#allocation19 + $0x38] sm:$0xff]
        %v4909 = vld [vmem:[#allocation19 + $0x40] sm:$0xff]
        %v4910 = vld [vmem:[#allocation19 + $0x48] sm:$0xff]
        %v4911 = vld [vmem:[#allocation19 + $0x50] sm:$0xff]
        %v4912 = vld [vmem:[#allocation19 + $0x58] sm:$0xff]
        %v4913 = vld [vmem:[#allocation19 + $0x60] sm:$0xff]
        %v4914 = vld [vmem:[#allocation19 + $0x68] sm:$0xff]
        %v4915 = vld [vmem:[#allocation19 + $0x70] sm:$0xff]
        %v4916 = vld [vmem:[#allocation19 + $0x78] sm:$0xff]
        %v4917 = vld [vmem:[#allocation19 + $0x80] sm:$0xff]
        %v4918 = vld [vmem:[#allocation19 + $0x88] sm:$0xff]
        %v4919 = vld [vmem:[#allocation19 + $0x90] sm:$0xff]
        %v4920 = vld [vmem:[#allocation19 + $0x98] sm:$0xff]
        %v4921 = vld [vmem:[#allocation19 + $0xa0] sm:$0xff]
        %v4922 = vld [vmem:[#allocation19 + $0xa8] sm:$0xff]
        %v4923 = vld [vmem:[#allocation19 + $0xb0] sm:$0xff]
        %v4924 = vld [vmem:[#allocation19 + $0xb8] sm:$0xff]
        %v4925 = vld [vmem:[#allocation19 + $0xc0] sm:$0xff]
        %v4926 = vld [vmem:[#allocation19 + $0xc8] sm:$0xff]
        %v4927 = vld [vmem:[#allocation19 + $0xd0] sm:$0xff]
        %v4928 = vld [vmem:[#allocation19 + $0xd8] sm:$0xff]
        %v4929 = vld [vmem:[#allocation19 + $0xe0] sm:$0xff]
        %v4930 = vld [vmem:[#allocation19 + $0xe8] sm:$0xff]
        %v4931 = vld [vmem:[#allocation19 + $0xf0] sm:$0xff]
        %v4932 = vld [vmem:[#allocation19 + $0xf8] sm:$0xff]
        %v4933 = vld [vmem:[#allocation19 + $0x100] sm:$0xff]
        %v4934 = vld [vmem:[#allocation19 + $0x108] sm:$0xff]
        %v4935 = vld [vmem:[#allocation19 + $0x110] sm:$0xff]
        %v4936 = vld [vmem:[#allocation19 + $0x118] sm:$0xff]
        %v4937 = vld [vmem:[#allocation19 + $0x120] sm:$0xff]
        %v4938 = vld [vmem:[#allocation19 + $0x128] sm:$0xff]
        %v4939 = vld [vmem:[#allocation19 + $0x130] sm:$0xff]
        %v4940 = vld [vmem:[#allocation19 + $0x138] sm:$0xff]
        %v4941 = vld [vmem:[#allocation19 + $0x140] sm:$0xff]
        %v4942 = vld [vmem:[#allocation19 + $0x148] sm:$0xff]
        %v4943 = vld [vmem:[#allocation19 + $0x150] sm:$0xff]
        %v4944 = vld [vmem:[#allocation19 + $0x158] sm:$0xff]
        %v4945 = vld [vmem:[#allocation19 + $0x160] sm:$0xff]
        %v4946 = vld [vmem:[#allocation19 + $0x168] sm:$0xff]
        %v4947 = vld [vmem:[#allocation19 + $0x170] sm:$0xff]
        %v4948 = vld [vmem:[#allocation19 + $0x178] sm:$0xff]
        %v4949 = vld [vmem:[#allocation19 + $0x180] sm:$0xff]
        %v4950 = vld [vmem:[#allocation19 + $0x188] sm:$0xff]
        %v4951 = vld [vmem:[#allocation19 + $0x190] sm:$0xff]
        %v4952 = vld [vmem:[#allocation19 + $0x198] sm:$0xff]
        %v4953 = vld [vmem:[#allocation19 + $0x1a0] sm:$0xff]
        %v4954 = vld [vmem:[#allocation19 + $0x1a8] sm:$0xff]
        %v4955 = vld [vmem:[#allocation19 + $0x1b0] sm:$0xff]
        %v4956 = vld [vmem:[#allocation19 + $0x1b8] sm:$0xff]
        %v4957 = vld [vmem:[#allocation19 + $0x1c0] sm:$0xff]
        %v4958 = vld [vmem:[#allocation19 + $0x1c8] sm:$0xff]
        %v4959 = vld [vmem:[#allocation19 + $0x1d0] sm:$0xff]
        %v4960 = vld [vmem:[#allocation19 + $0x1d8] sm:$0xff]
        %v4961 = vld [vmem:[#allocation19 + $0x1e0] sm:$0xff]
        %v4962 = vld [vmem:[#allocation19 + $0x1e8] sm:$0xff]
        %v4963 = vld [vmem:[#allocation19 + $0x1f0] sm:$0xff]
        %v4964 = vld [vmem:[#allocation19 + $0x1f8] sm:$0xff]
        %v4965 = vld [vmem:[#allocation19 + $0x200] sm:$0xff]
        %v4966 = vld [vmem:[#allocation19 + $0x208] sm:$0xff]
        %v4967 = vld [vmem:[#allocation19 + $0x210] sm:$0xff]
        %v4968 = vld [vmem:[#allocation19 + $0x218] sm:$0xff]
        %v4969 = vld [vmem:[#allocation19 + $0x220] sm:$0xff]
        %v4970 = vld [vmem:[#allocation19 + $0x228] sm:$0xff]
        %v4971 = vld [vmem:[#allocation19 + $0x230] sm:$0xff]
        %v4972 = vld [vmem:[#allocation19 + $0x238] sm:$0xff]
        %v4973 = vld [vmem:[#allocation19 + $0x240] sm:$0xff]
        %v4974 = vld [vmem:[#allocation19 + $0x248] sm:$0xff]
        %v4975 = vld [vmem:[#allocation19 + $0x250] sm:$0xff]
        %v4976 = vld [vmem:[#allocation19 + $0x258] sm:$0xff]
        %v4977 = vld [vmem:[#allocation19 + $0x260] sm:$0xff]
        %v4978 = vld [vmem:[#allocation19 + $0x268] sm:$0xff]
        %v4979 = vld [vmem:[#allocation19 + $0x270] sm:$0xff]
        %v4980 = vld [vmem:[#allocation19 + $0x278] sm:$0xff]
        %v4981 = vld [vmem:[#allocation19 + $0x280] sm:$0xff]
        %v4982 = vld [vmem:[#allocation19 + $0x288] sm:$0xff]
        %v4983 = vld [vmem:[#allocation19 + $0x290] sm:$0xff]
        %v4984 = vld [vmem:[#allocation19 + $0x298] sm:$0xff]
        %v4985 = vld [vmem:[#allocation19 + $0x2a0] sm:$0xff]
        %v4986 = vld [vmem:[#allocation19 + $0x2a8] sm:$0xff]
        %v4987 = vld [vmem:[#allocation19 + $0x2b0] sm:$0xff]
        %v4988 = vld [vmem:[#allocation19 + $0x2b8] sm:$0xff]
        %v4989 = vld [vmem:[#allocation19 + $0x2c0] sm:$0xff]
        %v4990 = vld [vmem:[#allocation19 + $0x2c8] sm:$0xff]
        %v4991 = vld [vmem:[#allocation19 + $0x2d0] sm:$0xff]
        %v4992 = vld [vmem:[#allocation19 + $0x2d8] sm:$0xff]
        %v4993 = vld [vmem:[#allocation19 + $0x2e0] sm:$0xff]
        %v4994 = vld [vmem:[#allocation19 + $0x2e8] sm:$0xff]
        %v4995 = vld [vmem:[#allocation19 + $0x2f0] sm:$0xff]
        %v4996 = vld [vmem:[#allocation19 + $0x2f8] sm:$0xff]
        %v4997 = vld [vmem:[#allocation19 + $0x300] sm:$0xff]
        %v4998 = vld [vmem:[#allocation19 + $0x308] sm:$0xff]
        %v4999 = vld [vmem:[#allocation19 + $0x310] sm:$0xff]
        %v5000 = vld [vmem:[#allocation19 + $0x318] sm:$0xff]
        %v5001 = vld [vmem:[#allocation19 + $0x320] sm:$0xff]
        %v5002 = vld [vmem:[#allocation19 + $0x328] sm:$0xff]
        %v5003 = vld [vmem:[#allocation19 + $0x330] sm:$0xff]
        %v5004 = vld [vmem:[#allocation19 + $0x338] sm:$0xff]
        %v5005 = vld [vmem:[#allocation19 + $0x340] sm:$0xff]
        %v5006 = vld [vmem:[#allocation19 + $0x348] sm:$0xff]
        %v5007 = vld [vmem:[#allocation19 + $0x350] sm:$0xff]
        %v5008 = vld [vmem:[#allocation19 + $0x358] sm:$0xff]
        %v5009 = vld [vmem:[#allocation19 + $0x360] sm:$0xff]
        %v5010 = vld [vmem:[#allocation19 + $0x368] sm:$0xff]
        %v5011 = vld [vmem:[#allocation19 + $0x370] sm:$0xff]
        %v5012 = vld [vmem:[#allocation19 + $0x378] sm:$0xff]
        %v5013 = vld [vmem:[#allocation19 + $0x380] sm:$0xff]
        %v5014 = vld [vmem:[#allocation19 + $0x388] sm:$0xff]
        %v5015 = vld [vmem:[#allocation19 + $0x390] sm:$0xff]
        %v5016 = vld [vmem:[#allocation19 + $0x398] sm:$0xff]
        %v5017 = vld [vmem:[#allocation19 + $0x3a0] sm:$0xff]
        %v5018 = vld [vmem:[#allocation19 + $0x3a8] sm:$0xff]
        %v5019 = vld [vmem:[#allocation19 + $0x3b0] sm:$0xff]
        %v5020 = vld [vmem:[#allocation19 + $0x3b8] sm:$0xff]
        %v5021 = vld [vmem:[#allocation19 + $0x3c0] sm:$0xff]
        %v5022 = vld [vmem:[#allocation19 + $0x3c8] sm:$0xff]
        %v5023 = vld [vmem:[#allocation19 + $0x3d0] sm:$0xff]
        %v5024 = vld [vmem:[#allocation19 + $0x3d8] sm:$0xff]
        %v5025 = vld [vmem:[#allocation19 + $0x3e0] sm:$0xff]
        %v5026 = vld [vmem:[#allocation19 + $0x3e8] sm:$0xff]
        %v5027 = vld [vmem:[#allocation19 + $0x3f0] sm:$0xff]
        %v5028 = vld [vmem:[#allocation19 + $0x3f8] sm:$0xff]
        %v5029 = vld [vmem:[#allocation19 + $0x400] sm:$0xff]
        %v5030 = vld [vmem:[#allocation19 + $0x408] sm:$0xff]
        %v5031 = vld [vmem:[#allocation19 + $0x410] sm:$0xff]
        %v5032 = vld [vmem:[#allocation19 + $0x418] sm:$0xff]
        %v5033 = vld [vmem:[#allocation19 + $0x420] sm:$0xff]
        %v5034 = vld [vmem:[#allocation19 + $0x428] sm:$0xff]
        %v5035 = vld [vmem:[#allocation19 + $0x430] sm:$0xff]
        %v5036 = vld [vmem:[#allocation19 + $0x438] sm:$0xff]
        %v5037 = vld [vmem:[#allocation19 + $0x440] sm:$0xff]
        %v5038 = vld [vmem:[#allocation19 + $0x448] sm:$0xff]
        %v5039 = vld [vmem:[#allocation19 + $0x450] sm:$0xff]
        %v5040 = vld [vmem:[#allocation19 + $0x458] sm:$0xff]
        %v5041 = vld [vmem:[#allocation19 + $0x460] sm:$0xff]
        %v5042 = vld [vmem:[#allocation19 + $0x468] sm:$0xff]
        %v5043 = vld [vmem:[#allocation19 + $0x470] sm:$0xff]
        %v5044 = vld [vmem:[#allocation19 + $0x478] sm:$0xff]
        %v5045 = vld [vmem:[#allocation19 + $0x480] sm:$0xff]
        %v5046 = vld [vmem:[#allocation19 + $0x488] sm:$0xff]
        %v5047 = vld [vmem:[#allocation19 + $0x490] sm:$0xff]
        %v5048 = vld [vmem:[#allocation19 + $0x498] sm:$0xff]
        %v5049 = vld [vmem:[#allocation19 + $0x4a0] sm:$0xff]
        %v5050 = vld [vmem:[#allocation19 + $0x4a8] sm:$0xff]
        %v5051 = vld [vmem:[#allocation19 + $0x4b0] sm:$0xff]
        %v5052 = vld [vmem:[#allocation19 + $0x4b8] sm:$0xff]
        %v5053 = vld [vmem:[#allocation19 + $0x4c0] sm:$0xff]
        %v5054 = vld [vmem:[#allocation19 + $0x4c8] sm:$0xff]
        %v5055 = vld [vmem:[#allocation19 + $0x4d0] sm:$0xff]
        %v5056 = vld [vmem:[#allocation19 + $0x4d8] sm:$0xff]
        %v5057 = vld [vmem:[#allocation19 + $0x4e0] sm:$0xff]
        %v5058 = vld [vmem:[#allocation19 + $0x4e8] sm:$0xff]
        %v5059 = vld [vmem:[#allocation19 + $0x4f0] sm:$0xff]
        %v5060 = vld [vmem:[#allocation19 + $0x4f8] sm:$0xff]
        %v5061 = vld [vmem:[#allocation19 + $0x500] sm:$0xff]
        %v5062 = vld [vmem:[#allocation19 + $0x508] sm:$0xff]
        %v5063 = vld [vmem:[#allocation19 + $0x510] sm:$0xff]
        %v5064 = vld [vmem:[#allocation19 + $0x518] sm:$0xff]
        %v5065 = vld [vmem:[#allocation19 + $0x520] sm:$0xff]
        %v5066 = vld [vmem:[#allocation19 + $0x528] sm:$0xff]
        %v5067 = vld [vmem:[#allocation19 + $0x530] sm:$0xff]
        %v5068 = vld [vmem:[#allocation19 + $0x538] sm:$0xff]
        %v5069 = vld [vmem:[#allocation19 + $0x540] sm:$0xff]
        %v5070 = vld [vmem:[#allocation19 + $0x548] sm:$0xff]
        %v5071 = vld [vmem:[#allocation19 + $0x550] sm:$0xff]
        %v5072 = vld [vmem:[#allocation19 + $0x558] sm:$0xff]
        %v5073 = vld [vmem:[#allocation19 + $0x560] sm:$0xff]
        %v5074 = vld [vmem:[#allocation19 + $0x568] sm:$0xff]
        %v5075 = vld [vmem:[#allocation19 + $0x570] sm:$0xff]
        %v5076 = vld [vmem:[#allocation19 + $0x578] sm:$0xff]
        %v5077 = vld [vmem:[#allocation19 + $0x580] sm:$0xff]
        %v5078 = vld [vmem:[#allocation19 + $0x588] sm:$0xff]
        %v5079 = vld [vmem:[#allocation19 + $0x590] sm:$0xff]
        %v5080 = vld [vmem:[#allocation19 + $0x598] sm:$0xff]
        %v5081 = vld [vmem:[#allocation19 + $0x5a0] sm:$0xff]
        %v5082 = vld [vmem:[#allocation19 + $0x5a8] sm:$0xff]
        %v5083 = vld [vmem:[#allocation19 + $0x5b0] sm:$0xff]
        %v5084 = vld [vmem:[#allocation19 + $0x5b8] sm:$0xff]
        %v5085 = vld [vmem:[#allocation19 + $0x5c0] sm:$0xff]
        %v5086 = vld [vmem:[#allocation19 + $0x5c8] sm:$0xff]
        %v5087 = vld [vmem:[#allocation19 + $0x5d0] sm:$0xff]
        %v5088 = vld [vmem:[#allocation19 + $0x5d8] sm:$0xff]
        %v5089 = vld [vmem:[#allocation19 + $0x5e0] sm:$0xff]
        %v5090 = vld [vmem:[#allocation19 + $0x5e8] sm:$0xff]
        %v5091 = vld [vmem:[#allocation19 + $0x5f0] sm:$0xff]
        %v5092 = vld [vmem:[#allocation19 + $0x5f8] sm:$0xff]
        %v5093 = vld [vmem:[#allocation19 + $0x600] sm:$0xff]
        %v5094 = vld [vmem:[#allocation19 + $0x608] sm:$0xff]
        %v5095 = vld [vmem:[#allocation19 + $0x610] sm:$0xff]
        %v5096 = vld [vmem:[#allocation19 + $0x618] sm:$0xff]
        %v5097 = vld [vmem:[#allocation19 + $0x620] sm:$0xff]
        %v5098 = vld [vmem:[#allocation19 + $0x628] sm:$0xff]
        %v5099 = vld [vmem:[#allocation19 + $0x630] sm:$0xff]
        %v5100 = vld [vmem:[#allocation19 + $0x638] sm:$0xff]
        %v5101 = vld [vmem:[#allocation19 + $0x640] sm:$0xff]
        %v5102 = vld [vmem:[#allocation19 + $0x648] sm:$0xff]
        %v5103 = vld [vmem:[#allocation19 + $0x650] sm:$0xff]
        %v5104 = vld [vmem:[#allocation19 + $0x658] sm:$0xff]
        %v5105 = vld [vmem:[#allocation19 + $0x660] sm:$0xff]
        %v5106 = vld [vmem:[#allocation19 + $0x668] sm:$0xff]
        %v5107 = vld [vmem:[#allocation19 + $0x670] sm:$0xff]
        %v5108 = vld [vmem:[#allocation19 + $0x678] sm:$0xff]
        %v5109 = vld [vmem:[#allocation19 + $0x680] sm:$0xff]
        %v5110 = vld [vmem:[#allocation19 + $0x688] sm:$0xff]
        %v5111 = vld [vmem:[#allocation19 + $0x690] sm:$0xff]
        %v5112 = vld [vmem:[#allocation19 + $0x698] sm:$0xff]
        %v5113 = vld [vmem:[#allocation19 + $0x6a0] sm:$0xff]
        %v5114 = vld [vmem:[#allocation19 + $0x6a8] sm:$0xff]
        %v5115 = vld [vmem:[#allocation19 + $0x6b0] sm:$0xff]
        %v5116 = vld [vmem:[#allocation19 + $0x6b8] sm:$0xff]
        %v5117 = vld [vmem:[#allocation19 + $0x6c0] sm:$0xff]
        %v5118 = vld [vmem:[#allocation19 + $0x6c8] sm:$0xff]
        %v5119 = vld [vmem:[#allocation19 + $0x6d0] sm:$0xff]
        %v5120 = vld [vmem:[#allocation19 + $0x6d8] sm:$0xff]
        %v5121 = vld [vmem:[#allocation19 + $0x6e0] sm:$0xff]
        %v5122 = vld [vmem:[#allocation19 + $0x6e8] sm:$0xff]
        %v5123 = vld [vmem:[#allocation19 + $0x6f0] sm:$0xff]
        %v5124 = vld [vmem:[#allocation19 + $0x6f8] sm:$0xff]
        %v5125 = vld [vmem:[#allocation19 + $0x700] sm:$0xff]
        %v5126 = vld [vmem:[#allocation19 + $0x708] sm:$0xff]
        %v5127 = vld [vmem:[#allocation19 + $0x710] sm:$0xff]
        %v5128 = vld [vmem:[#allocation19 + $0x718] sm:$0xff]
        %v5129 = vld [vmem:[#allocation19 + $0x720] sm:$0xff]
        %v5130 = vld [vmem:[#allocation19 + $0x728] sm:$0xff]
        %v5131 = vld [vmem:[#allocation19 + $0x730] sm:$0xff]
        %v5132 = vld [vmem:[#allocation19 + $0x738] sm:$0xff]
        %v5133 = vld [vmem:[#allocation19 + $0x740] sm:$0xff]
        %v5134 = vld [vmem:[#allocation19 + $0x748] sm:$0xff]
        %v5135 = vld [vmem:[#allocation19 + $0x750] sm:$0xff]
        %v5136 = vld [vmem:[#allocation19 + $0x758] sm:$0xff]
        %v5137 = vld [vmem:[#allocation19 + $0x760] sm:$0xff]
        %v5138 = vld [vmem:[#allocation19 + $0x768] sm:$0xff]
        %v5139 = vld [vmem:[#allocation19 + $0x770] sm:$0xff]
        %v5140 = vld [vmem:[#allocation19 + $0x778] sm:$0xff]
        %v5141 = vld [vmem:[#allocation20] sm:$0xff]
        %v5142 = vld [vmem:[#allocation20 + $0x8] sm:$0xff]
        %v5143 = vld [vmem:[#allocation20 + $0x10] sm:$0xff]
        %v5144 = vld [vmem:[#allocation20 + $0x18] sm:$0xff]
        %v5145 = vld [vmem:[#allocation20 + $0x20] sm:$0xff]
        %v5146 = vld [vmem:[#allocation20 + $0x28] sm:$0xff]
        %v5153 = vlaneseq
        %v5154 = vshrl.u32 %v5153, 7
        %v5155 = vsub.s32 0, %v5154
        %v5156 = vrot.slane %v5141, %v5155
        %v5157 = vlaneseq
        %v5158 = vshrl.u32 %v5157, 7
        %v5159 = vsub.s32 1, %v5158
        %v5160 = vrot.slane %v5141, %v5159
        %v5161 = vlaneseq
        %v5162 = vshrl.u32 %v5161, 7
        %v5163 = vsub.s32 2, %v5162
        %v5164 = vrot.slane %v5141, %v5163
        %v5165 = vlaneseq
        %v5166 = vshrl.u32 %v5165, 7
        %v5167 = vsub.s32 3, %v5166
        %v5168 = vrot.slane %v5141, %v5167
        %v5169 = vlaneseq
        %v5170 = vshrl.u32 %v5169, 7
        %v5171 = vsub.s32 4, %v5170
        %v5172 = vrot.slane %v5141, %v5171
        %v5173 = vlaneseq
        %v5174 = vshrl.u32 %v5173, 7
        %v5175 = vsub.s32 5, %v5174
        %v5176 = vrot.slane %v5141, %v5175
        %v5177 = vlaneseq
        %v5178 = vshrl.u32 %v5177, 7
        %v5179 = vsub.s32 6, %v5178
        %v5180 = vrot.slane %v5141, %v5179
        %v5181 = vlaneseq
        %v5182 = vshrl.u32 %v5181, 7
        %v5183 = vsub.s32 7, %v5182
        %v5184 = vrot.slane %v5141, %v5183
        %v5185 = vlaneseq
        %v5186 = vshrl.u32 %v5185, 7
        %v5187 = vsub.s32 0, %v5186
        %v5188 = vrot.slane %v5142, %v5187
        %v5189 = vlaneseq
        %v5190 = vshrl.u32 %v5189, 7
        %v5191 = vsub.s32 1, %v5190
        %v5192 = vrot.slane %v5142, %v5191
        %v5193 = vlaneseq
        %v5194 = vshrl.u32 %v5193, 7
        %v5195 = vsub.s32 2, %v5194
        %v5196 = vrot.slane %v5142, %v5195
        %v5197 = vlaneseq
        %v5198 = vshrl.u32 %v5197, 7
        %v5199 = vsub.s32 3, %v5198
        %v5200 = vrot.slane %v5142, %v5199
        %v5201 = vlaneseq
        %v5202 = vshrl.u32 %v5201, 7
        %v5203 = vsub.s32 4, %v5202
        %v5204 = vrot.slane %v5142, %v5203
        %v5205 = vlaneseq
        %v5206 = vshrl.u32 %v5205, 7
        %v5207 = vsub.s32 5, %v5206
        %v5208 = vrot.slane %v5142, %v5207
        %v5209 = vlaneseq
        %v5210 = vshrl.u32 %v5209, 7
        %v5211 = vsub.s32 6, %v5210
        %v5212 = vrot.slane %v5142, %v5211
        %v5213 = vlaneseq
        %v5214 = vshrl.u32 %v5213, 7
        %v5215 = vsub.s32 7, %v5214
        %v5216 = vrot.slane %v5142, %v5215
        %v5217 = vlaneseq
        %v5218 = vshrl.u32 %v5217, 7
        %v5219 = vsub.s32 0, %v5218
        %v5220 = vrot.slane %v5143, %v5219
        %v5221 = vlaneseq
        %v5222 = vshrl.u32 %v5221, 7
        %v5223 = vsub.s32 1, %v5222
        %v5224 = vrot.slane %v5143, %v5223
        %v5225 = vlaneseq
        %v5226 = vshrl.u32 %v5225, 7
        %v5227 = vsub.s32 2, %v5226
        %v5228 = vrot.slane %v5143, %v5227
        %v5229 = vlaneseq
        %v5230 = vshrl.u32 %v5229, 7
        %v5231 = vsub.s32 3, %v5230
        %v5232 = vrot.slane %v5143, %v5231
        %v5233 = vlaneseq
        %v5234 = vshrl.u32 %v5233, 7
        %v5235 = vsub.s32 4, %v5234
        %v5236 = vrot.slane %v5143, %v5235
        %v5237 = vlaneseq
        %v5238 = vshrl.u32 %v5237, 7
        %v5239 = vsub.s32 5, %v5238
        %v5240 = vrot.slane %v5143, %v5239
        %v5241 = vlaneseq
        %v5242 = vshrl.u32 %v5241, 7
        %v5243 = vsub.s32 6, %v5242
        %v5244 = vrot.slane %v5143, %v5243
        %v5245 = vlaneseq
        %v5246 = vshrl.u32 %v5245, 7
        %v5247 = vsub.s32 7, %v5246
        %v5248 = vrot.slane %v5143, %v5247
        %v5249 = vlaneseq
        %v5250 = vshrl.u32 %v5249, 7
        %v5251 = vsub.s32 0, %v5250
        %v5252 = vrot.slane %v5144, %v5251
        %v5253 = vlaneseq
        %v5254 = vshrl.u32 %v5253, 7
        %v5255 = vsub.s32 1, %v5254
        %v5256 = vrot.slane %v5144, %v5255
        %v5257 = vlaneseq
        %v5258 = vshrl.u32 %v5257, 7
        %v5259 = vsub.s32 2, %v5258
        %v5260 = vrot.slane %v5144, %v5259
        %v5261 = vlaneseq
        %v5262 = vshrl.u32 %v5261, 7
        %v5263 = vsub.s32 3, %v5262
        %v5264 = vrot.slane %v5144, %v5263
        %v5265 = vlaneseq
        %v5266 = vshrl.u32 %v5265, 7
        %v5267 = vsub.s32 4, %v5266
        %v5268 = vrot.slane %v5144, %v5267
        %v5269 = vlaneseq
        %v5270 = vshrl.u32 %v5269, 7
        %v5271 = vsub.s32 5, %v5270
        %v5272 = vrot.slane %v5144, %v5271
        %v5273 = vlaneseq
        %v5274 = vshrl.u32 %v5273, 7
        %v5275 = vsub.s32 6, %v5274
        %v5276 = vrot.slane %v5144, %v5275
        %v5277 = vlaneseq
        %v5278 = vshrl.u32 %v5277, 7
        %v5279 = vsub.s32 7, %v5278
        %v5280 = vrot.slane %v5144, %v5279
        %v5281 = vlaneseq
        %v5282 = vshrl.u32 %v5281, 7
        %v5283 = vsub.s32 0, %v5282
        %v5284 = vrot.slane %v5145, %v5283
        %v5285 = vlaneseq
        %v5286 = vshrl.u32 %v5285, 7
        %v5287 = vsub.s32 1, %v5286
        %v5288 = vrot.slane %v5145, %v5287
        %v5289 = vlaneseq
        %v5290 = vshrl.u32 %v5289, 7
        %v5291 = vsub.s32 2, %v5290
        %v5292 = vrot.slane %v5145, %v5291
        %v5293 = vlaneseq
        %v5294 = vshrl.u32 %v5293, 7
        %v5295 = vsub.s32 3, %v5294
        %v5296 = vrot.slane %v5145, %v5295
        %v5297 = vlaneseq
        %v5298 = vshrl.u32 %v5297, 7
        %v5299 = vsub.s32 4, %v5298
        %v5300 = vrot.slane %v5145, %v5299
        %v5301 = vlaneseq
        %v5302 = vshrl.u32 %v5301, 7
        %v5303 = vsub.s32 5, %v5302
        %v5304 = vrot.slane %v5145, %v5303
        %v5305 = vlaneseq
        %v5306 = vshrl.u32 %v5305, 7
        %v5307 = vsub.s32 6, %v5306
        %v5308 = vrot.slane %v5145, %v5307
        %v5309 = vlaneseq
        %v5310 = vshrl.u32 %v5309, 7
        %v5311 = vsub.s32 7, %v5310
        %v5312 = vrot.slane %v5145, %v5311
        %v5313 = vlaneseq
        %v5314 = vshrl.u32 %v5313, 7
        %v5315 = vsub.s32 0, %v5314
        %v5316 = vrot.slane %v5146, %v5315
        %v5317 = vlaneseq
        %v5318 = vshrl.u32 %v5317, 7
        %v5319 = vsub.s32 1, %v5318
        %v5320 = vrot.slane %v5146, %v5319
        %v5321 = vlaneseq
        %v5322 = vshrl.u32 %v5321, 7
        %v5323 = vsub.s32 2, %v5322
        %v5324 = vrot.slane %v5146, %v5323
        %v5325 = vlaneseq
        %v5326 = vshrl.u32 %v5325, 7
        %v5327 = vsub.s32 3, %v5326
        %v5328 = vrot.slane %v5146, %v5327
        %v5329 = vlaneseq
        %v5330 = vshrl.u32 %v5329, 7
        %v5331 = vsub.s32 4, %v5330
        %v5332 = vrot.slane %v5146, %v5331
        %v5333 = vlaneseq
        %v5334 = vshrl.u32 %v5333, 7
        %v5335 = vsub.s32 5, %v5334
        %v5336 = vrot.slane %v5146, %v5335
        %v5337 = vlaneseq
        %v5338 = vshrl.u32 %v5337, 7
        %v5339 = vsub.s32 6, %v5338
        %v5340 = vrot.slane %v5146, %v5339
        %v5341 = vlaneseq
        %v5342 = vshrl.u32 %v5341, 7
        %v5343 = vsub.s32 7, %v5342
        %v5344 = vrot.slane %v5146, %v5343
        %v5633 = vunpack.c.l.b16 %v4901
        %v5634 = vunpack.c.h.b16 %v4901
        %v5635 = vunpack.c.l.b16 %v4902
        %v5636 = vunpack.c.h.b16 %v4902
        %v5637 = vunpack.c.l.b16 %v4903
        %v5638 = vunpack.c.h.b16 %v4903
        %v5639 = vunpack.c.l.b16 %v4904
        %v5640 = vunpack.c.h.b16 %v4904
        %v5641 = vunpack.c.l.b16 %v4905
        %v5642 = vunpack.c.h.b16 %v4905
        %v5643 = vunpack.c.l.b16 %v4906
        %v5644 = vunpack.c.h.b16 %v4906
        %v5645 = vunpack.c.l.b16 %v4907
        %v5646 = vunpack.c.h.b16 %v4907
        %v5647 = vunpack.c.l.b16 %v4908
        %v5648 = vunpack.c.h.b16 %v4908
        %v5649 = vunpack.c.l.b16 %v4909
        %v5650 = vunpack.c.h.b16 %v4909
        %v5651 = vunpack.c.l.b16 %v4910
        %v5652 = vunpack.c.h.b16 %v4910
        %v5653 = vunpack.c.l.b16 %v4911
        %v5654 = vunpack.c.h.b16 %v4911
        %v5655 = vunpack.c.l.b16 %v4912
        %v5656 = vunpack.c.h.b16 %v4912
        %v5657 = vunpack.c.l.b16 %v4913
        %v5658 = vunpack.c.h.b16 %v4913
        %v5659 = vunpack.c.l.b16 %v4914
        %v5660 = vunpack.c.h.b16 %v4914
        %v5661 = vunpack.c.l.b16 %v4915
        %v5662 = vunpack.c.h.b16 %v4915
        %v5663 = vunpack.c.l.b16 %v4916
        %v5664 = vunpack.c.h.b16 %v4916
        %v5665 = vunpack.c.l.b16 %v4917
        %v5666 = vunpack.c.h.b16 %v4917
        %v5667 = vunpack.c.l.b16 %v4918
        %v5668 = vunpack.c.h.b16 %v4918
        %v5669 = vunpack.c.l.b16 %v4919
        %v5670 = vunpack.c.h.b16 %v4919
        %v5671 = vunpack.c.l.b16 %v4920
        %v5672 = vunpack.c.h.b16 %v4920
        %v5673 = vunpack.c.l.b16 %v4921
        %v5674 = vunpack.c.h.b16 %v4921
        %v5675 = vunpack.c.l.b16 %v4922
        %v5676 = vunpack.c.h.b16 %v4922
        %v5677 = vunpack.c.l.b16 %v4923
        %v5678 = vunpack.c.h.b16 %v4923
        %v5679 = vunpack.c.l.b16 %v4924
        %v5680 = vunpack.c.h.b16 %v4924
        %v5681 = vunpack.c.l.b16 %v4925
        %v5682 = vunpack.c.h.b16 %v4925
        %v5683 = vunpack.c.l.b16 %v4926
        %v5684 = vunpack.c.h.b16 %v4926
        %v5685 = vunpack.c.l.b16 %v4927
        %v5686 = vunpack.c.h.b16 %v4927
        %v5687 = vunpack.c.l.b16 %v4928
        %v5688 = vunpack.c.h.b16 %v4928
        %v5689 = vunpack.c.l.b16 %v4929
        %v5690 = vunpack.c.h.b16 %v4929
        %v5691 = vunpack.c.l.b16 %v4930
        %v5692 = vunpack.c.h.b16 %v4930
        %v5693 = vunpack.c.l.b16 %v4931
        %v5694 = vunpack.c.h.b16 %v4931
        %v5695 = vunpack.c.l.b16 %v4932
        %v5696 = vunpack.c.h.b16 %v4932
        %v5697 = vunpack.c.l.b16 %v4933
        %v5698 = vunpack.c.h.b16 %v4933
        %v5699 = vunpack.c.l.b16 %v4934
        %v5700 = vunpack.c.h.b16 %v4934
        %v5701 = vunpack.c.l.b16 %v4935
        %v5702 = vunpack.c.h.b16 %v4935
        %v5703 = vunpack.c.l.b16 %v4936
        %v5704 = vunpack.c.h.b16 %v4936
        %v5705 = vunpack.c.l.b16 %v4937
        %v5706 = vunpack.c.h.b16 %v4937
        %v5707 = vunpack.c.l.b16 %v4938
        %v5708 = vunpack.c.h.b16 %v4938
        %v5709 = vunpack.c.l.b16 %v4939
        %v5710 = vunpack.c.h.b16 %v4939
        %v5711 = vunpack.c.l.b16 %v4940
        %v5712 = vunpack.c.h.b16 %v4940
        %v5713 = vunpack.c.l.b16 %v4941
        %v5714 = vunpack.c.h.b16 %v4941
        %v5715 = vunpack.c.l.b16 %v4942
        %v5716 = vunpack.c.h.b16 %v4942
        %v5717 = vunpack.c.l.b16 %v4943
        %v5718 = vunpack.c.h.b16 %v4943
        %v5719 = vunpack.c.l.b16 %v4944
        %v5720 = vunpack.c.h.b16 %v4944
        %v5721 = vunpack.c.l.b16 %v4945
        %v5722 = vunpack.c.h.b16 %v4945
        %v5723 = vunpack.c.l.b16 %v4946
        %v5724 = vunpack.c.h.b16 %v4946
        %v5725 = vunpack.c.l.b16 %v4947
        %v5726 = vunpack.c.h.b16 %v4947
        %v5727 = vunpack.c.l.b16 %v4948
        %v5728 = vunpack.c.h.b16 %v4948
        %v5729 = vunpack.c.l.b16 %v4949
        %v5730 = vunpack.c.h.b16 %v4949
        %v5731 = vunpack.c.l.b16 %v4950
        %v5732 = vunpack.c.h.b16 %v4950
        %v5733 = vunpack.c.l.b16 %v4951
        %v5734 = vunpack.c.h.b16 %v4951
        %v5735 = vunpack.c.l.b16 %v4952
        %v5736 = vunpack.c.h.b16 %v4952
        %v5737 = vunpack.c.l.b16 %v4953
        %v5738 = vunpack.c.h.b16 %v4953
        %v5739 = vunpack.c.l.b16 %v4954
        %v5740 = vunpack.c.h.b16 %v4954
        %v5741 = vunpack.c.l.b16 %v4955
        %v5742 = vunpack.c.h.b16 %v4955
        %v5743 = vunpack.c.l.b16 %v4956
        %v5744 = vunpack.c.h.b16 %v4956
        %v5745 = vunpack.c.l.b16 %v4957
        %v5746 = vunpack.c.h.b16 %v4957
        %v5747 = vunpack.c.l.b16 %v4958
        %v5748 = vunpack.c.h.b16 %v4958
        %v5749 = vunpack.c.l.b16 %v4959
        %v5750 = vunpack.c.h.b16 %v4959
        %v5751 = vunpack.c.l.b16 %v4960
        %v5752 = vunpack.c.h.b16 %v4960
        %v5753 = vunpack.c.l.b16 %v4961
        %v5754 = vunpack.c.h.b16 %v4961
        %v5755 = vunpack.c.l.b16 %v4962
        %v5756 = vunpack.c.h.b16 %v4962
        %v5757 = vunpack.c.l.b16 %v4963
        %v5758 = vunpack.c.h.b16 %v4963
        %v5759 = vunpack.c.l.b16 %v4964
        %v5760 = vunpack.c.h.b16 %v4964
        %v5761 = vunpack.c.l.b16 %v4965
        %v5762 = vunpack.c.h.b16 %v4965
        %v5763 = vunpack.c.l.b16 %v4966
        %v5764 = vunpack.c.h.b16 %v4966
        %v5765 = vunpack.c.l.b16 %v4967
        %v5766 = vunpack.c.h.b16 %v4967
        %v5767 = vunpack.c.l.b16 %v4968
        %v5768 = vunpack.c.h.b16 %v4968
        %v5769 = vunpack.c.l.b16 %v4969
        %v5770 = vunpack.c.h.b16 %v4969
        %v5771 = vunpack.c.l.b16 %v4970
        %v5772 = vunpack.c.h.b16 %v4970
        %v5773 = vunpack.c.l.b16 %v4971
        %v5774 = vunpack.c.h.b16 %v4971
        %v5775 = vunpack.c.l.b16 %v4972
        %v5776 = vunpack.c.h.b16 %v4972
        %v5777 = vunpack.c.l.b16 %v4973
        %v5778 = vunpack.c.h.b16 %v4973
        %v5779 = vunpack.c.l.b16 %v4974
        %v5780 = vunpack.c.h.b16 %v4974
        %v5781 = vunpack.c.l.b16 %v4975
        %v5782 = vunpack.c.h.b16 %v4975
        %v5783 = vunpack.c.l.b16 %v4976
        %v5784 = vunpack.c.h.b16 %v4976
        %v5785 = vunpack.c.l.b16 %v4977
        %v5786 = vunpack.c.h.b16 %v4977
        %v5787 = vunpack.c.l.b16 %v4978
        %v5788 = vunpack.c.h.b16 %v4978
        %v5789 = vunpack.c.l.b16 %v4979
        %v5790 = vunpack.c.h.b16 %v4979
        %v5791 = vunpack.c.l.b16 %v4980
        %v5792 = vunpack.c.h.b16 %v4980
        %v5793 = vunpack.c.l.b16 %v4981
        %v5794 = vunpack.c.h.b16 %v4981
        %v5795 = vunpack.c.l.b16 %v4982
        %v5796 = vunpack.c.h.b16 %v4982
        %v5797 = vunpack.c.l.b16 %v4983
        %v5798 = vunpack.c.h.b16 %v4983
        %v5799 = vunpack.c.l.b16 %v4984
        %v5800 = vunpack.c.h.b16 %v4984
        %v5801 = vunpack.c.l.b16 %v4985
        %v5802 = vunpack.c.h.b16 %v4985
        %v5803 = vunpack.c.l.b16 %v4986
        %v5804 = vunpack.c.h.b16 %v4986
        %v5805 = vunpack.c.l.b16 %v4987
        %v5806 = vunpack.c.h.b16 %v4987
        %v5807 = vunpack.c.l.b16 %v4988
        %v5808 = vunpack.c.h.b16 %v4988
        %v5809 = vunpack.c.l.b16 %v4989
        %v5810 = vunpack.c.h.b16 %v4989
        %v5811 = vunpack.c.l.b16 %v4990
        %v5812 = vunpack.c.h.b16 %v4990
        %v5813 = vunpack.c.l.b16 %v4991
        %v5814 = vunpack.c.h.b16 %v4991
        %v5815 = vunpack.c.l.b16 %v4992
        %v5816 = vunpack.c.h.b16 %v4992
        %v5817 = vunpack.c.l.b16 %v4993
        %v5818 = vunpack.c.h.b16 %v4993
        %v5819 = vunpack.c.l.b16 %v4994
        %v5820 = vunpack.c.h.b16 %v4994
        %v5821 = vunpack.c.l.b16 %v4995
        %v5822 = vunpack.c.h.b16 %v4995
        %v5823 = vunpack.c.l.b16 %v4996
        %v5824 = vunpack.c.h.b16 %v4996
        %v5825 = vunpack.c.l.b16 %v4997
        %v5826 = vunpack.c.h.b16 %v4997
        %v5827 = vunpack.c.l.b16 %v4998
        %v5828 = vunpack.c.h.b16 %v4998
        %v5829 = vunpack.c.l.b16 %v4999
        %v5830 = vunpack.c.h.b16 %v4999
        %v5831 = vunpack.c.l.b16 %v5000
        %v5832 = vunpack.c.h.b16 %v5000
        %v5833 = vunpack.c.l.b16 %v5001
        %v5834 = vunpack.c.h.b16 %v5001
        %v5835 = vunpack.c.l.b16 %v5002
        %v5836 = vunpack.c.h.b16 %v5002
        %v5837 = vunpack.c.l.b16 %v5003
        %v5838 = vunpack.c.h.b16 %v5003
        %v5839 = vunpack.c.l.b16 %v5004
        %v5840 = vunpack.c.h.b16 %v5004
        %v5841 = vunpack.c.l.b16 %v5005
        %v5842 = vunpack.c.h.b16 %v5005
        %v5843 = vunpack.c.l.b16 %v5006
        %v5844 = vunpack.c.h.b16 %v5006
        %v5845 = vunpack.c.l.b16 %v5007
        %v5846 = vunpack.c.h.b16 %v5007
        %v5847 = vunpack.c.l.b16 %v5008
        %v5848 = vunpack.c.h.b16 %v5008
        %v5849 = vunpack.c.l.b16 %v5009
        %v5850 = vunpack.c.h.b16 %v5009
        %v5851 = vunpack.c.l.b16 %v5010
        %v5852 = vunpack.c.h.b16 %v5010
        %v5853 = vunpack.c.l.b16 %v5011
        %v5854 = vunpack.c.h.b16 %v5011
        %v5855 = vunpack.c.l.b16 %v5012
        %v5856 = vunpack.c.h.b16 %v5012
        %v5857 = vunpack.c.l.b16 %v5013
        %v5858 = vunpack.c.h.b16 %v5013
        %v5859 = vunpack.c.l.b16 %v5014
        %v5860 = vunpack.c.h.b16 %v5014
        %v5861 = vunpack.c.l.b16 %v5015
        %v5862 = vunpack.c.h.b16 %v5015
        %v5863 = vunpack.c.l.b16 %v5016
        %v5864 = vunpack.c.h.b16 %v5016
        %v5865 = vunpack.c.l.b16 %v5017
        %v5866 = vunpack.c.h.b16 %v5017
        %v5867 = vunpack.c.l.b16 %v5018
        %v5868 = vunpack.c.h.b16 %v5018
        %v5869 = vunpack.c.l.b16 %v5019
        %v5870 = vunpack.c.h.b16 %v5019
        %v5871 = vunpack.c.l.b16 %v5020
        %v5872 = vunpack.c.h.b16 %v5020
        %v5873 = vunpack.c.l.b16 %v5021
        %v5874 = vunpack.c.h.b16 %v5021
        %v5875 = vunpack.c.l.b16 %v5022
        %v5876 = vunpack.c.h.b16 %v5022
        %v5877 = vunpack.c.l.b16 %v5023
        %v5878 = vunpack.c.h.b16 %v5023
        %v5879 = vunpack.c.l.b16 %v5024
        %v5880 = vunpack.c.h.b16 %v5024
        %v5881 = vunpack.c.l.b16 %v5025
        %v5882 = vunpack.c.h.b16 %v5025
        %v5883 = vunpack.c.l.b16 %v5026
        %v5884 = vunpack.c.h.b16 %v5026
        %v5885 = vunpack.c.l.b16 %v5027
        %v5886 = vunpack.c.h.b16 %v5027
        %v5887 = vunpack.c.l.b16 %v5028
        %v5888 = vunpack.c.h.b16 %v5028
        %v5889 = vunpack.c.l.b16 %v5029
        %v5890 = vunpack.c.h.b16 %v5029
        %v5891 = vunpack.c.l.b16 %v5030
        %v5892 = vunpack.c.h.b16 %v5030
        %v5893 = vunpack.c.l.b16 %v5031
        %v5894 = vunpack.c.h.b16 %v5031
        %v5895 = vunpack.c.l.b16 %v5032
        %v5896 = vunpack.c.h.b16 %v5032
        %v5897 = vunpack.c.l.b16 %v5033
        %v5898 = vunpack.c.h.b16 %v5033
        %v5899 = vunpack.c.l.b16 %v5034
        %v5900 = vunpack.c.h.b16 %v5034
        %v5901 = vunpack.c.l.b16 %v5035
        %v5902 = vunpack.c.h.b16 %v5035
        %v5903 = vunpack.c.l.b16 %v5036
        %v5904 = vunpack.c.h.b16 %v5036
        %v5905 = vunpack.c.l.b16 %v5037
        %v5906 = vunpack.c.h.b16 %v5037
        %v5907 = vunpack.c.l.b16 %v5038
        %v5908 = vunpack.c.h.b16 %v5038
        %v5909 = vunpack.c.l.b16 %v5039
        %v5910 = vunpack.c.h.b16 %v5039
        %v5911 = vunpack.c.l.b16 %v5040
        %v5912 = vunpack.c.h.b16 %v5040
        %v5913 = vunpack.c.l.b16 %v5041
        %v5914 = vunpack.c.h.b16 %v5041
        %v5915 = vunpack.c.l.b16 %v5042
        %v5916 = vunpack.c.h.b16 %v5042
        %v5917 = vunpack.c.l.b16 %v5043
        %v5918 = vunpack.c.h.b16 %v5043
        %v5919 = vunpack.c.l.b16 %v5044
        %v5920 = vunpack.c.h.b16 %v5044
        %v5921 = vunpack.c.l.b16 %v5045
        %v5922 = vunpack.c.h.b16 %v5045
        %v5923 = vunpack.c.l.b16 %v5046
        %v5924 = vunpack.c.h.b16 %v5046
        %v5925 = vunpack.c.l.b16 %v5047
        %v5926 = vunpack.c.h.b16 %v5047
        %v5927 = vunpack.c.l.b16 %v5048
        %v5928 = vunpack.c.h.b16 %v5048
        %v5929 = vunpack.c.l.b16 %v5049
        %v5930 = vunpack.c.h.b16 %v5049
        %v5931 = vunpack.c.l.b16 %v5050
        %v5932 = vunpack.c.h.b16 %v5050
        %v5933 = vunpack.c.l.b16 %v5051
        %v5934 = vunpack.c.h.b16 %v5051
        %v5935 = vunpack.c.l.b16 %v5052
        %v5936 = vunpack.c.h.b16 %v5052
        %v5937 = vunpack.c.l.b16 %v5053
        %v5938 = vunpack.c.h.b16 %v5053
        %v5939 = vunpack.c.l.b16 %v5054
        %v5940 = vunpack.c.h.b16 %v5054
        %v5941 = vunpack.c.l.b16 %v5055
        %v5942 = vunpack.c.h.b16 %v5055
        %v5943 = vunpack.c.l.b16 %v5056
        %v5944 = vunpack.c.h.b16 %v5056
        %v5945 = vunpack.c.l.b16 %v5057
        %v5946 = vunpack.c.h.b16 %v5057
        %v5947 = vunpack.c.l.b16 %v5058
        %v5948 = vunpack.c.h.b16 %v5058
        %v5949 = vunpack.c.l.b16 %v5059
        %v5950 = vunpack.c.h.b16 %v5059
        %v5951 = vunpack.c.l.b16 %v5060
        %v5952 = vunpack.c.h.b16 %v5060
        %v5953 = vunpack.c.l.b16 %v5061
        %v5954 = vunpack.c.h.b16 %v5061
        %v5955 = vunpack.c.l.b16 %v5062
        %v5956 = vunpack.c.h.b16 %v5062
        %v5957 = vunpack.c.l.b16 %v5063
        %v5958 = vunpack.c.h.b16 %v5063
        %v5959 = vunpack.c.l.b16 %v5064
        %v5960 = vunpack.c.h.b16 %v5064
        %v5961 = vunpack.c.l.b16 %v5065
        %v5962 = vunpack.c.h.b16 %v5065
        %v5963 = vunpack.c.l.b16 %v5066
        %v5964 = vunpack.c.h.b16 %v5066
        %v5965 = vunpack.c.l.b16 %v5067
        %v5966 = vunpack.c.h.b16 %v5067
        %v5967 = vunpack.c.l.b16 %v5068
        %v5968 = vunpack.c.h.b16 %v5068
        %v5969 = vunpack.c.l.b16 %v5069
        %v5970 = vunpack.c.h.b16 %v5069
        %v5971 = vunpack.c.l.b16 %v5070
        %v5972 = vunpack.c.h.b16 %v5070
        %v5973 = vunpack.c.l.b16 %v5071
        %v5974 = vunpack.c.h.b16 %v5071
        %v5975 = vunpack.c.l.b16 %v5072
        %v5976 = vunpack.c.h.b16 %v5072
        %v5977 = vunpack.c.l.b16 %v5073
        %v5978 = vunpack.c.h.b16 %v5073
        %v5979 = vunpack.c.l.b16 %v5074
        %v5980 = vunpack.c.h.b16 %v5074
        %v5981 = vunpack.c.l.b16 %v5075
        %v5982 = vunpack.c.h.b16 %v5075
        %v5983 = vunpack.c.l.b16 %v5076
        %v5984 = vunpack.c.h.b16 %v5076
        %v5985 = vunpack.c.l.b16 %v5077
        %v5986 = vunpack.c.h.b16 %v5077
        %v5987 = vunpack.c.l.b16 %v5078
        %v5988 = vunpack.c.h.b16 %v5078
        %v5989 = vunpack.c.l.b16 %v5079
        %v5990 = vunpack.c.h.b16 %v5079
        %v5991 = vunpack.c.l.b16 %v5080
        %v5992 = vunpack.c.h.b16 %v5080
        %v5993 = vunpack.c.l.b16 %v5081
        %v5994 = vunpack.c.h.b16 %v5081
        %v5995 = vunpack.c.l.b16 %v5082
        %v5996 = vunpack.c.h.b16 %v5082
        %v5997 = vunpack.c.l.b16 %v5083
        %v5998 = vunpack.c.h.b16 %v5083
        %v5999 = vunpack.c.l.b16 %v5084
        %v6000 = vunpack.c.h.b16 %v5084
        %v6001 = vunpack.c.l.b16 %v5085
        %v6002 = vunpack.c.h.b16 %v5085
        %v6003 = vunpack.c.l.b16 %v5086
        %v6004 = vunpack.c.h.b16 %v5086
        %v6005 = vunpack.c.l.b16 %v5087
        %v6006 = vunpack.c.h.b16 %v5087
        %v6007 = vunpack.c.l.b16 %v5088
        %v6008 = vunpack.c.h.b16 %v5088
        %v6009 = vunpack.c.l.b16 %v5089
        %v6010 = vunpack.c.h.b16 %v5089
        %v6011 = vunpack.c.l.b16 %v5090
        %v6012 = vunpack.c.h.b16 %v5090
        %v6013 = vunpack.c.l.b16 %v5091
        %v6014 = vunpack.c.h.b16 %v5091
        %v6015 = vunpack.c.l.b16 %v5092
        %v6016 = vunpack.c.h.b16 %v5092
        %v6017 = vunpack.c.l.b16 %v5093
        %v6018 = vunpack.c.h.b16 %v5093
        %v6019 = vunpack.c.l.b16 %v5094
        %v6020 = vunpack.c.h.b16 %v5094
        %v6021 = vunpack.c.l.b16 %v5095
        %v6022 = vunpack.c.h.b16 %v5095
        %v6023 = vunpack.c.l.b16 %v5096
        %v6024 = vunpack.c.h.b16 %v5096
        %v6025 = vunpack.c.l.b16 %v5097
        %v6026 = vunpack.c.h.b16 %v5097
        %v6027 = vunpack.c.l.b16 %v5098
        %v6028 = vunpack.c.h.b16 %v5098
        %v6029 = vunpack.c.l.b16 %v5099
        %v6030 = vunpack.c.h.b16 %v5099
        %v6031 = vunpack.c.l.b16 %v5100
        %v6032 = vunpack.c.h.b16 %v5100
        %v6033 = vunpack.c.l.b16 %v5101
        %v6034 = vunpack.c.h.b16 %v5101
        %v6035 = vunpack.c.l.b16 %v5102
        %v6036 = vunpack.c.h.b16 %v5102
        %v6037 = vunpack.c.l.b16 %v5103
        %v6038 = vunpack.c.h.b16 %v5103
        %v6039 = vunpack.c.l.b16 %v5104
        %v6040 = vunpack.c.h.b16 %v5104
        %v6041 = vunpack.c.l.b16 %v5105
        %v6042 = vunpack.c.h.b16 %v5105
        %v6043 = vunpack.c.l.b16 %v5106
        %v6044 = vunpack.c.h.b16 %v5106
        %v6045 = vunpack.c.l.b16 %v5107
        %v6046 = vunpack.c.h.b16 %v5107
        %v6047 = vunpack.c.l.b16 %v5108
        %v6048 = vunpack.c.h.b16 %v5108
        %v6049 = vunpack.c.l.b16 %v5109
        %v6050 = vunpack.c.h.b16 %v5109
        %v6051 = vunpack.c.l.b16 %v5110
        %v6052 = vunpack.c.h.b16 %v5110
        %v6053 = vunpack.c.l.b16 %v5111
        %v6054 = vunpack.c.h.b16 %v5111
        %v6055 = vunpack.c.l.b16 %v5112
        %v6056 = vunpack.c.h.b16 %v5112
        %v6057 = vunpack.c.l.b16 %v5113
        %v6058 = vunpack.c.h.b16 %v5113
        %v6059 = vunpack.c.l.b16 %v5114
        %v6060 = vunpack.c.h.b16 %v5114
        %v6061 = vunpack.c.l.b16 %v5115
        %v6062 = vunpack.c.h.b16 %v5115
        %v6063 = vunpack.c.l.b16 %v5116
        %v6064 = vunpack.c.h.b16 %v5116
        %v6065 = vunpack.c.l.b16 %v5117
        %v6066 = vunpack.c.h.b16 %v5117
        %v6067 = vunpack.c.l.b16 %v5118
        %v6068 = vunpack.c.h.b16 %v5118
        %v6069 = vunpack.c.l.b16 %v5119
        %v6070 = vunpack.c.h.b16 %v5119
        %v6071 = vunpack.c.l.b16 %v5120
        %v6072 = vunpack.c.h.b16 %v5120
        %v6073 = vunpack.c.l.b16 %v5121
        %v6074 = vunpack.c.h.b16 %v5121
        %v6075 = vunpack.c.l.b16 %v5122
        %v6076 = vunpack.c.h.b16 %v5122
        %v6077 = vunpack.c.l.b16 %v5123
        %v6078 = vunpack.c.h.b16 %v5123
        %v6079 = vunpack.c.l.b16 %v5124
        %v6080 = vunpack.c.h.b16 %v5124
        %v6081 = vunpack.c.l.b16 %v5125
        %v6082 = vunpack.c.h.b16 %v5125
        %v6083 = vunpack.c.l.b16 %v5126
        %v6084 = vunpack.c.h.b16 %v5126
        %v6085 = vunpack.c.l.b16 %v5127
        %v6086 = vunpack.c.h.b16 %v5127
        %v6087 = vunpack.c.l.b16 %v5128
        %v6088 = vunpack.c.h.b16 %v5128
        %v6089 = vunpack.c.l.b16 %v5129
        %v6090 = vunpack.c.h.b16 %v5129
        %v6091 = vunpack.c.l.b16 %v5130
        %v6092 = vunpack.c.h.b16 %v5130
        %v6093 = vunpack.c.l.b16 %v5131
        %v6094 = vunpack.c.h.b16 %v5131
        %v6095 = vunpack.c.l.b16 %v5132
        %v6096 = vunpack.c.h.b16 %v5132
        %v6097 = vunpack.c.l.b16 %v5133
        %v6098 = vunpack.c.h.b16 %v5133
        %v6099 = vunpack.c.l.b16 %v5134
        %v6100 = vunpack.c.h.b16 %v5134
        %v6101 = vunpack.c.l.b16 %v5135
        %v6102 = vunpack.c.h.b16 %v5135
        %v6103 = vunpack.c.l.b16 %v5136
        %v6104 = vunpack.c.h.b16 %v5136
        %v6105 = vunpack.c.l.b16 %v5137
        %v6106 = vunpack.c.h.b16 %v5137
        %v6107 = vunpack.c.l.b16 %v5138
        %v6108 = vunpack.c.h.b16 %v5138
        %v6109 = vunpack.c.l.b16 %v5139
        %v6110 = vunpack.c.h.b16 %v5139
        %v6111 = vunpack.c.l.b16 %v5140
        %v6112 = vunpack.c.h.b16 %v5140
        %v6113 = vpack.c.b16 %v5681, %v5633
        %v6114 = vpack.c.b16 %v5682, %v5634
        %v6115 = vpack.c.b16 %v5683, %v5635
        %v6116 = vpack.c.b16 %v5684, %v5636
        %v6117 = vpack.c.b16 %v5685, %v5637
        %v6118 = vpack.c.b16 %v5686, %v5638
        %v6119 = vpack.c.b16 %v5687, %v5639
        %v6120 = vpack.c.b16 %v5688, %v5640
        %v6121 = vpack.c.b16 %v5689, %v5641
        %v6122 = vpack.c.b16 %v5690, %v5642
        %v6123 = vpack.c.b16 %v5691, %v5643
        %v6124 = vpack.c.b16 %v5692, %v5644
        %v6125 = vpack.c.b16 %v5693, %v5645
        %v6126 = vpack.c.b16 %v5694, %v5646
        %v6127 = vpack.c.b16 %v5695, %v5647
        %v6128 = vpack.c.b16 %v5696, %v5648
        %v6129 = vpack.c.b16 %v5697, %v5649
        %v6130 = vpack.c.b16 %v5698, %v5650
        %v6131 = vpack.c.b16 %v5699, %v5651
        %v6132 = vpack.c.b16 %v5700, %v5652
        %v6133 = vpack.c.b16 %v5701, %v5653
        %v6134 = vpack.c.b16 %v5702, %v5654
        %v6135 = vpack.c.b16 %v5703, %v5655
        %v6136 = vpack.c.b16 %v5704, %v5656
        %v6137 = vpack.c.b16 %v5705, %v5657
        %v6138 = vpack.c.b16 %v5706, %v5658
        %v6139 = vpack.c.b16 %v5707, %v5659
        %v6140 = vpack.c.b16 %v5708, %v5660
        %v6141 = vpack.c.b16 %v5709, %v5661
        %v6142 = vpack.c.b16 %v5710, %v5662
        %v6143 = vpack.c.b16 %v5711, %v5663
        %v6144 = vpack.c.b16 %v5712, %v5664
        %v6145 = vpack.c.b16 %v5713, %v5665
        %v6146 = vpack.c.b16 %v5714, %v5666
        %v6147 = vpack.c.b16 %v5715, %v5667
        %v6148 = vpack.c.b16 %v5716, %v5668
        %v6149 = vpack.c.b16 %v5717, %v5669
        %v6150 = vpack.c.b16 %v5718, %v5670
        %v6151 = vpack.c.b16 %v5719, %v5671
        %v6152 = vpack.c.b16 %v5720, %v5672
        %v6153 = vpack.c.b16 %v5721, %v5673
        %v6154 = vpack.c.b16 %v5722, %v5674
        %v6155 = vpack.c.b16 %v5723, %v5675
        %v6156 = vpack.c.b16 %v5724, %v5676
        %v6157 = vpack.c.b16 %v5725, %v5677
        %v6158 = vpack.c.b16 %v5726, %v5678
        %v6159 = vpack.c.b16 %v5727, %v5679
        %v6160 = vpack.c.b16 %v5728, %v5680
        %v6161 = vpack.c.b16 %v5777, %v5729
        %v6162 = vpack.c.b16 %v5778, %v5730
        %v6163 = vpack.c.b16 %v5779, %v5731
        %v6164 = vpack.c.b16 %v5780, %v5732
        %v6165 = vpack.c.b16 %v5781, %v5733
        %v6166 = vpack.c.b16 %v5782, %v5734
        %v6167 = vpack.c.b16 %v5783, %v5735
        %v6168 = vpack.c.b16 %v5784, %v5736
        %v6169 = vpack.c.b16 %v5785, %v5737
        %v6170 = vpack.c.b16 %v5786, %v5738
        %v6171 = vpack.c.b16 %v5787, %v5739
        %v6172 = vpack.c.b16 %v5788, %v5740
        %v6173 = vpack.c.b16 %v5789, %v5741
        %v6174 = vpack.c.b16 %v5790, %v5742
        %v6175 = vpack.c.b16 %v5791, %v5743
        %v6176 = vpack.c.b16 %v5792, %v5744
        %v6177 = vpack.c.b16 %v5793, %v5745
        %v6178 = vpack.c.b16 %v5794, %v5746
        %v6179 = vpack.c.b16 %v5795, %v5747
        %v6180 = vpack.c.b16 %v5796, %v5748
        %v6181 = vpack.c.b16 %v5797, %v5749
        %v6182 = vpack.c.b16 %v5798, %v5750
        %v6183 = vpack.c.b16 %v5799, %v5751
        %v6184 = vpack.c.b16 %v5800, %v5752
        %v6185 = vpack.c.b16 %v5801, %v5753
        %v6186 = vpack.c.b16 %v5802, %v5754
        %v6187 = vpack.c.b16 %v5803, %v5755
        %v6188 = vpack.c.b16 %v5804, %v5756
        %v6189 = vpack.c.b16 %v5805, %v5757
        %v6190 = vpack.c.b16 %v5806, %v5758
        %v6191 = vpack.c.b16 %v5807, %v5759
        %v6192 = vpack.c.b16 %v5808, %v5760
        %v6193 = vpack.c.b16 %v5809, %v5761
        %v6194 = vpack.c.b16 %v5810, %v5762
        %v6195 = vpack.c.b16 %v5811, %v5763
        %v6196 = vpack.c.b16 %v5812, %v5764
        %v6197 = vpack.c.b16 %v5813, %v5765
        %v6198 = vpack.c.b16 %v5814, %v5766
        %v6199 = vpack.c.b16 %v5815, %v5767
        %v6200 = vpack.c.b16 %v5816, %v5768
        %v6201 = vpack.c.b16 %v5817, %v5769
        %v6202 = vpack.c.b16 %v5818, %v5770
        %v6203 = vpack.c.b16 %v5819, %v5771
        %v6204 = vpack.c.b16 %v5820, %v5772
        %v6205 = vpack.c.b16 %v5821, %v5773
        %v6206 = vpack.c.b16 %v5822, %v5774
        %v6207 = vpack.c.b16 %v5823, %v5775
        %v6208 = vpack.c.b16 %v5824, %v5776
        %v6209 = vpack.c.b16 %v5873, %v5825
        %v6210 = vpack.c.b16 %v5874, %v5826
        %v6211 = vpack.c.b16 %v5875, %v5827
        %v6212 = vpack.c.b16 %v5876, %v5828
        %v6213 = vpack.c.b16 %v5877, %v5829
        %v6214 = vpack.c.b16 %v5878, %v5830
        %v6215 = vpack.c.b16 %v5879, %v5831
        %v6216 = vpack.c.b16 %v5880, %v5832
        %v6217 = vpack.c.b16 %v5881, %v5833
        %v6218 = vpack.c.b16 %v5882, %v5834
        %v6219 = vpack.c.b16 %v5883, %v5835
        %v6220 = vpack.c.b16 %v5884, %v5836
        %v6221 = vpack.c.b16 %v5885, %v5837
        %v6222 = vpack.c.b16 %v5886, %v5838
        %v6223 = vpack.c.b16 %v5887, %v5839
        %v6224 = vpack.c.b16 %v5888, %v5840
        %v6225 = vpack.c.b16 %v5889, %v5841
        %v6226 = vpack.c.b16 %v5890, %v5842
        %v6227 = vpack.c.b16 %v5891, %v5843
        %v6228 = vpack.c.b16 %v5892, %v5844
        %v6229 = vpack.c.b16 %v5893, %v5845
        %v6230 = vpack.c.b16 %v5894, %v5846
        %v6231 = vpack.c.b16 %v5895, %v5847
        %v6232 = vpack.c.b16 %v5896, %v5848
        %v6233 = vpack.c.b16 %v5897, %v5849
        %v6234 = vpack.c.b16 %v5898, %v5850
        %v6235 = vpack.c.b16 %v5899, %v5851
        %v6236 = vpack.c.b16 %v5900, %v5852
        %v6237 = vpack.c.b16 %v5901, %v5853
        %v6238 = vpack.c.b16 %v5902, %v5854
        %v6239 = vpack.c.b16 %v5903, %v5855
        %v6240 = vpack.c.b16 %v5904, %v5856
        %v6241 = vpack.c.b16 %v5905, %v5857
        %v6242 = vpack.c.b16 %v5906, %v5858
        %v6243 = vpack.c.b16 %v5907, %v5859
        %v6244 = vpack.c.b16 %v5908, %v5860
        %v6245 = vpack.c.b16 %v5909, %v5861
        %v6246 = vpack.c.b16 %v5910, %v5862
        %v6247 = vpack.c.b16 %v5911, %v5863
        %v6248 = vpack.c.b16 %v5912, %v5864
        %v6249 = vpack.c.b16 %v5913, %v5865
        %v6250 = vpack.c.b16 %v5914, %v5866
        %v6251 = vpack.c.b16 %v5915, %v5867
        %v6252 = vpack.c.b16 %v5916, %v5868
        %v6253 = vpack.c.b16 %v5917, %v5869
        %v6254 = vpack.c.b16 %v5918, %v5870
        %v6255 = vpack.c.b16 %v5919, %v5871
        %v6256 = vpack.c.b16 %v5920, %v5872
        %v6257 = vpack.c.b16 %v5969, %v5921
        %v6258 = vpack.c.b16 %v5970, %v5922
        %v6259 = vpack.c.b16 %v5971, %v5923
        %v6260 = vpack.c.b16 %v5972, %v5924
        %v6261 = vpack.c.b16 %v5973, %v5925
        %v6262 = vpack.c.b16 %v5974, %v5926
        %v6263 = vpack.c.b16 %v5975, %v5927
        %v6264 = vpack.c.b16 %v5976, %v5928
        %v6265 = vpack.c.b16 %v5977, %v5929
        %v6266 = vpack.c.b16 %v5978, %v5930
        %v6267 = vpack.c.b16 %v5979, %v5931
        %v6268 = vpack.c.b16 %v5980, %v5932
        %v6269 = vpack.c.b16 %v5981, %v5933
        %v6270 = vpack.c.b16 %v5982, %v5934
        %v6271 = vpack.c.b16 %v5983, %v5935
        %v6272 = vpack.c.b16 %v5984, %v5936
        %v6273 = vpack.c.b16 %v5985, %v5937
        %v6274 = vpack.c.b16 %v5986, %v5938
        %v6275 = vpack.c.b16 %v5987, %v5939
        %v6276 = vpack.c.b16 %v5988, %v5940
        %v6277 = vpack.c.b16 %v5989, %v5941
        %v6278 = vpack.c.b16 %v5990, %v5942
        %v6279 = vpack.c.b16 %v5991, %v5943
        %v6280 = vpack.c.b16 %v5992, %v5944
        %v6281 = vpack.c.b16 %v5993, %v5945
        %v6282 = vpack.c.b16 %v5994, %v5946
        %v6283 = vpack.c.b16 %v5995, %v5947
        %v6284 = vpack.c.b16 %v5996, %v5948
        %v6285 = vpack.c.b16 %v5997, %v5949
        %v6286 = vpack.c.b16 %v5998, %v5950
        %v6287 = vpack.c.b16 %v5999, %v5951
        %v6288 = vpack.c.b16 %v6000, %v5952
        %v6289 = vpack.c.b16 %v6001, %v5953
        %v6290 = vpack.c.b16 %v6002, %v5954
        %v6291 = vpack.c.b16 %v6003, %v5955
        %v6292 = vpack.c.b16 %v6004, %v5956
        %v6293 = vpack.c.b16 %v6005, %v5957
        %v6294 = vpack.c.b16 %v6006, %v5958
        %v6295 = vpack.c.b16 %v6007, %v5959
        %v6296 = vpack.c.b16 %v6008, %v5960
        %v6297 = vpack.c.b16 %v6009, %v5961
        %v6298 = vpack.c.b16 %v6010, %v5962
        %v6299 = vpack.c.b16 %v6011, %v5963
        %v6300 = vpack.c.b16 %v6012, %v5964
        %v6301 = vpack.c.b16 %v6013, %v5965
        %v6302 = vpack.c.b16 %v6014, %v5966
        %v6303 = vpack.c.b16 %v6015, %v5967
        %v6304 = vpack.c.b16 %v6016, %v5968
        %v6305 = vpack.c.b16 %v6065, %v6017
        %v6306 = vpack.c.b16 %v6066, %v6018
        %v6307 = vpack.c.b16 %v6067, %v6019
        %v6308 = vpack.c.b16 %v6068, %v6020
        %v6309 = vpack.c.b16 %v6069, %v6021
        %v6310 = vpack.c.b16 %v6070, %v6022
        %v6311 = vpack.c.b16 %v6071, %v6023
        %v6312 = vpack.c.b16 %v6072, %v6024
        %v6313 = vpack.c.b16 %v6073, %v6025
        %v6314 = vpack.c.b16 %v6074, %v6026
        %v6315 = vpack.c.b16 %v6075, %v6027
        %v6316 = vpack.c.b16 %v6076, %v6028
        %v6317 = vpack.c.b16 %v6077, %v6029
        %v6318 = vpack.c.b16 %v6078, %v6030
        %v6319 = vpack.c.b16 %v6079, %v6031
        %v6320 = vpack.c.b16 %v6080, %v6032
        %v6321 = vpack.c.b16 %v6081, %v6033
        %v6322 = vpack.c.b16 %v6082, %v6034
        %v6323 = vpack.c.b16 %v6083, %v6035
        %v6324 = vpack.c.b16 %v6084, %v6036
        %v6325 = vpack.c.b16 %v6085, %v6037
        %v6326 = vpack.c.b16 %v6086, %v6038
        %v6327 = vpack.c.b16 %v6087, %v6039
        %v6328 = vpack.c.b16 %v6088, %v6040
        %v6329 = vpack.c.b16 %v6089, %v6041
        %v6330 = vpack.c.b16 %v6090, %v6042
        %v6331 = vpack.c.b16 %v6091, %v6043
        %v6332 = vpack.c.b16 %v6092, %v6044
        %v6333 = vpack.c.b16 %v6093, %v6045
        %v6334 = vpack.c.b16 %v6094, %v6046
        %v6335 = vpack.c.b16 %v6095, %v6047
        %v6336 = vpack.c.b16 %v6096, %v6048
        %v6337 = vpack.c.b16 %v6097, %v6049
        %v6338 = vpack.c.b16 %v6098, %v6050
        %v6339 = vpack.c.b16 %v6099, %v6051
        %v6340 = vpack.c.b16 %v6100, %v6052
        %v6341 = vpack.c.b16 %v6101, %v6053
        %v6342 = vpack.c.b16 %v6102, %v6054
        %v6343 = vpack.c.b16 %v6103, %v6055
        %v6344 = vpack.c.b16 %v6104, %v6056
        %v6345 = vpack.c.b16 %v6105, %v6057
        %v6346 = vpack.c.b16 %v6106, %v6058
        %v6347 = vpack.c.b16 %v6107, %v6059
        %v6348 = vpack.c.b16 %v6108, %v6060
        %v6349 = vpack.c.b16 %v6109, %v6061
        %v6350 = vpack.c.b16 %v6110, %v6062
        %v6351 = vpack.c.b16 %v6111, %v6063
        %v6352 = vpack.c.b16 %v6112, %v6064
        %v6594 = vsel %vm917, %v4900, 0
        %6596 = vmatprep.subr.bf16.mxu0 %v6114
        %6597 = vmatpush1.bf16.msra.mxu0 %v6113
        %6598 = vmatprep.subr.bf16.mxu0 %v6162
        %6599 = vmatpush1.bf16.msra.mxu0 %v6161
        %6600 = vmatprep.subr.bf16.mxu0 %v6210
        %6601 = vmatpush1.bf16.msra.mxu0 %v6209
        %6602 = vmatprep.subr.bf16.mxu0 %v6258
        %6603 = vmatpush1.bf16.msra.mxu0 %v6257
        %6604 = vmatprep.subr.bf16.mxu0 %v6306
        %6605 = vmatpush1.bf16.msra.mxu0 %v6305
        %6606 = vmatprep.subr.bf16.mxu0 0
        %6607 = vmatpush1.bf16.msra.mxu0 0
        %6608 = vmatprep.subr.bf16.mxu0 0
        %6609 = vmatpush1.bf16.msra.mxu0 0
        %6610 = vmatprep.subr.bf16.mxu0 0
        %6611 = vmatpush1.bf16.msra.mxu0 0
        %6612 = vmatprep.subr.bf16.mxu0 0
        %6613 = vmatpush1.bf16.msra.mxu0 0
        %6614 = vmatprep.subr.bf16.mxu0 0
        %6615 = vmatpush1.bf16.msra.mxu0 0
        %6616 = vmatprep.subr.bf16.mxu0 0
        %6617 = vmatpush1.bf16.msra.mxu0 0
        %6618 = vmatprep.subr.bf16.mxu0 0
        %6619 = vmatpush1.bf16.msra.mxu0 0
        %6620 = vmatprep.subr.bf16.mxu0 0
        %6621 = vmatpush1.bf16.msra.mxu0 0
        %6622 = vmatprep.subr.bf16.mxu0 0
        %6623 = vmatpush1.bf16.msra.mxu0 0
        %6624 = vmatprep.subr.bf16.mxu0 0
        %6625 = vmatpush1.bf16.msra.mxu0 0
        %6626 = vmatprep.subr.bf16.mxu0 0
        %6627 = vmatpush1.bf16.msra.mxu0 0
        %6628 = vmatprep.mubr.bf16.mxu0 0
        %6629 = vmatmul.mubr.bf16.gmra.mrb[0].mxu0 %v6594
        %v6630 = vpop.f32.mrb[0].mxu0
        %v6631 = vadd.f32 %v5156, %v6630
        %v6632 = vpop.f32.mrb[0].mxu0
        %v6633 = vadd.f32 %v5160, %v6632
        %v6634 = vpop.f32.mrb[0].mxu0
        %v6635 = vpop.f32.mrb[0].mxu0
        %6636 = vdwg.mxu0
        %6637 = vmatprep.subr.bf16.mxu0 %v6116
        %6638 = vmatpush1.bf16.msra.mxu0 %v6115
        %6639 = vmatprep.subr.bf16.mxu0 %v6164
        %6640 = vmatpush1.bf16.msra.mxu0 %v6163
        %6641 = vmatprep.subr.bf16.mxu0 %v6212
        %6642 = vmatpush1.bf16.msra.mxu0 %v6211
        %6643 = vmatprep.subr.bf16.mxu0 %v6260
        %6644 = vmatpush1.bf16.msra.mxu0 %v6259
        %6645 = vmatprep.subr.bf16.mxu0 %v6308
        %6646 = vmatpush1.bf16.msra.mxu0 %v6307
        %6647 = vmatprep.subr.bf16.mxu0 0
        %6648 = vmatpush1.bf16.msra.mxu0 0
        %6649 = vmatprep.subr.bf16.mxu0 0
        %6650 = vmatpush1.bf16.msra.mxu0 0
        %6651 = vmatprep.subr.bf16.mxu0 0
        %6652 = vmatpush1.bf16.msra.mxu0 0
        %6653 = vmatprep.subr.bf16.mxu0 0
        %6654 = vmatpush1.bf16.msra.mxu0 0
        %6655 = vmatprep.subr.bf16.mxu0 0
        %6656 = vmatpush1.bf16.msra.mxu0 0
        %6657 = vmatprep.subr.bf16.mxu0 0
        %6658 = vmatpush1.bf16.msra.mxu0 0
        %6659 = vmatprep.subr.bf16.mxu0 0
        %6660 = vmatpush1.bf16.msra.mxu0 0
        %6661 = vmatprep.subr.bf16.mxu0 0
        %6662 = vmatpush1.bf16.msra.mxu0 0
        %6663 = vmatprep.subr.bf16.mxu0 0
        %6664 = vmatpush1.bf16.msra.mxu0 0
        %6665 = vmatprep.subr.bf16.mxu0 0
        %6666 = vmatpush1.bf16.msra.mxu0 0
        %6667 = vmatprep.subr.bf16.mxu0 0
        %6668 = vmatpush1.bf16.msra.mxu0 0
        %6669 = vmatprep.mubr.bf16.mxu0 0
        %6670 = vmatmul.mubr.bf16.gmra.mrb[0].mxu0 %v6594
        %v6671 = vpop.f32.mrb[0].mxu0
        %v6672 = vadd.f32 %v5164, %v6671
        %v6673 = vpop.f32.mrb[0].mxu0
        %v6674 = vadd.f32 %v5168, %v6673
        %v6675 = vpop.f32.mrb[0].mxu0
        %v6676 = vpop.f32.mrb[0].mxu0
        %6677 = vdwg.mxu0
        %6678 = vmatprep.subr.bf16.mxu0 %v6118
        %6679 = vmatpush1.bf16.msra.mxu0 %v6117
        %6680 = vmatprep.subr.bf16.mxu0 %v6166
        %6681 = vmatpush1.bf16.msra.mxu0 %v6165
        %6682 = vmatprep.subr.bf16.mxu0 %v6214
        %6683 = vmatpush1.bf16.msra.mxu0 %v6213
        %6684 = vmatprep.subr.bf16.mxu0 %v6262
        %6685 = vmatpush1.bf16.msra.mxu0 %v6261
        %6686 = vmatprep.subr.bf16.mxu0 %v6310
        %6687 = vmatpush1.bf16.msra.mxu0 %v6309
        %6688 = vmatprep.subr.bf16.mxu0 0
        %6689 = vmatpush1.bf16.msra.mxu0 0
        %6690 = vmatprep.subr.bf16.mxu0 0
        %6691 = vmatpush1.bf16.msra.mxu0 0
        %6692 = vmatprep.subr.bf16.mxu0 0
        %6693 = vmatpush1.bf16.msra.mxu0 0
        %6694 = vmatprep.subr.bf16.mxu0 0
        %6695 = vmatpush1.bf16.msra.mxu0 0
        %6696 = vmatprep.subr.bf16.mxu0 0
        %6697 = vmatpush1.bf16.msra.mxu0 0
        %6698 = vmatprep.subr.bf16.mxu0 0
        %6699 = vmatpush1.bf16.msra.mxu0 0
        %6700 = vmatprep.subr.bf16.mxu0 0
        %6701 = vmatpush1.bf16.msra.mxu0 0
        %6702 = vmatprep.subr.bf16.mxu0 0
        %6703 = vmatpush1.bf16.msra.mxu0 0
        %6704 = vmatprep.subr.bf16.mxu0 0
        %6705 = vmatpush1.bf16.msra.mxu0 0
        %6706 = vmatprep.subr.bf16.mxu0 0
        %6707 = vmatpush1.bf16.msra.mxu0 0
        %6708 = vmatprep.subr.bf16.mxu0 0
        %6709 = vmatpush1.bf16.msra.mxu0 0
        %6710 = vmatprep.mubr.bf16.mxu0 0
        %6711 = vmatmul.mubr.bf16.gmra.mrb[0].mxu0 %v6594
        %v6712 = vpop.f32.mrb[0].mxu0
        %v6713 = vadd.f32 %v5172, %v6712
        %v6714 = vpop.f32.mrb[0].mxu0
        %v6715 = vadd.f32 %v5176, %v6714
        %v6716 = vpop.f32.mrb[0].mxu0
        %v6717 = vpop.f32.mrb[0].mxu0
        %6718 = vdwg.mxu0
        %6719 = vmatprep.subr.bf16.mxu0 %v6120
        %6720 = vmatpush1.bf16.msra.mxu0 %v6119
        %6721 = vmatprep.subr.bf16.mxu0 %v6168
        %6722 = vmatpush1.bf16.msra.mxu0 %v6167
        %6723 = vmatprep.subr.bf16.mxu0 %v6216
        %6724 = vmatpush1.bf16.msra.mxu0 %v6215
        %6725 = vmatprep.subr.bf16.mxu0 %v6264
        %6726 = vmatpush1.bf16.msra.mxu0 %v6263
        %6727 = vmatprep.subr.bf16.mxu0 %v6312
        %6728 = vmatpush1.bf16.msra.mxu0 %v6311
        %6729 = vmatprep.subr.bf16.mxu0 0
        %6730 = vmatpush1.bf16.msra.mxu0 0
        %6731 = vmatprep.subr.bf16.mxu0 0
        %6732 = vmatpush1.bf16.msra.mxu0 0
        %6733 = vmatprep.subr.bf16.mxu0 0
        %6734 = vmatpush1.bf16.msra.mxu0 0
        %6735 = vmatprep.subr.bf16.mxu0 0
        %6736 = vmatpush1.bf16.msra.mxu0 0
        %6737 = vmatprep.subr.bf16.mxu0 0
        %6738 = vmatpush1.bf16.msra.mxu0 0
        %6739 = vmatprep.subr.bf16.mxu0 0
        %6740 = vmatpush1.bf16.msra.mxu0 0
        %6741 = vmatprep.subr.bf16.mxu0 0
        %6742 = vmatpush1.bf16.msra.mxu0 0
        %6743 = vmatprep.subr.bf16.mxu0 0
        %6744 = vmatpush1.bf16.msra.mxu0 0
        %6745 = vmatprep.subr.bf16.mxu0 0
        %6746 = vmatpush1.bf16.msra.mxu0 0
        %6747 = vmatprep.subr.bf16.mxu0 0
        %6748 = vmatpush1.bf16.msra.mxu0 0
        %6749 = vmatprep.subr.bf16.mxu0 0
        %6750 = vmatpush1.bf16.msra.mxu0 0
        %6751 = vmatprep.mubr.bf16.mxu0 0
        %6752 = vmatmul.mubr.bf16.gmra.mrb[0].mxu0 %v6594
        %v6753 = vpop.f32.mrb[0].mxu0
        %v6754 = vadd.f32 %v5180, %v6753
        %v6755 = vpop.f32.mrb[0].mxu0
        %v6756 = vadd.f32 %v5184, %v6755
        %v6757 = vpop.f32.mrb[0].mxu0
        %v6758 = vpop.f32.mrb[0].mxu0
        %6759 = vdwg.mxu0
        %6760 = vmatprep.subr.bf16.mxu0 %v6122
        %6761 = vmatpush1.bf16.msra.mxu0 %v6121
        %6762 = vmatprep.subr.bf16.mxu0 %v6170
        %6763 = vmatpush1.bf16.msra.mxu0 %v6169
        %6764 = vmatprep.subr.bf16.mxu0 %v6218
        %6765 = vmatpush1.bf16.msra.mxu0 %v6217
        %6766 = vmatprep.subr.bf16.mxu0 %v6266
        %6767 = vmatpush1.bf16.msra.mxu0 %v6265
        %6768 = vmatprep.subr.bf16.mxu0 %v6314
        %6769 = vmatpush1.bf16.msra.mxu0 %v6313
        %6770 = vmatprep.subr.bf16.mxu0 0
        %6771 = vmatpush1.bf16.msra.mxu0 0
        %6772 = vmatprep.subr.bf16.mxu0 0
        %6773 = vmatpush1.bf16.msra.mxu0 0
        %6774 = vmatprep.subr.bf16.mxu0 0
        %6775 = vmatpush1.bf16.msra.mxu0 0
        %6776 = vmatprep.subr.bf16.mxu0 0
        %6777 = vmatpush1.bf16.msra.mxu0 0
        %6778 = vmatprep.subr.bf16.mxu0 0
        %6779 = vmatpush1.bf16.msra.mxu0 0
        %6780 = vmatprep.subr.bf16.mxu0 0
        %6781 = vmatpush1.bf16.msra.mxu0 0
        %6782 = vmatprep.subr.bf16.mxu0 0
        %6783 = vmatpush1.bf16.msra.mxu0 0
        %6784 = vmatprep.subr.bf16.mxu0 0
        %6785 = vmatpush1.bf16.msra.mxu0 0
        %6786 = vmatprep.subr.bf16.mxu0 0
        %6787 = vmatpush1.bf16.msra.mxu0 0
        %6788 = vmatprep.subr.bf16.mxu0 0
        %6789 = vmatpush1.bf16.msra.mxu0 0
        %6790 = vmatprep.subr.bf16.mxu0 0
        %6791 = vmatpush1.bf16.msra.mxu0 0
        %6792 = vmatprep.mubr.bf16.mxu0 0
        %6793 = vmatmul.mubr.bf16.gmra.mrb[0].mxu0 %v6594
        %v6794 = vpop.f32.mrb[0].mxu0
        %v6795 = vadd.f32 %v5188, %v6794
        %v6796 = vpop.f32.mrb[0].mxu0
        %v6797 = vadd.f32 %v5192, %v6796
        %v6798 = vpop.f32.mrb[0].mxu0
        %v6799 = vpop.f32.mrb[0].mxu0
        %6800 = vdwg.mxu0
        %6801 = vmatprep.subr.bf16.mxu0 %v6124
        %6802 = vmatpush1.bf16.msra.mxu0 %v6123
        %6803 = vmatprep.subr.bf16.mxu0 %v6172
        %6804 = vmatpush1.bf16.msra.mxu0 %v6171
        %6805 = vmatprep.subr.bf16.mxu0 %v6220
        %6806 = vmatpush1.bf16.msra.mxu0 %v6219
        %6807 = vmatprep.subr.bf16.mxu0 %v6268
        %6808 = vmatpush1.bf16.msra.mxu0 %v6267
        %6809 = vmatprep.subr.bf16.mxu0 %v6316
        %6810 = vmatpush1.bf16.msra.mxu0 %v6315
        %6811 = vmatprep.subr.bf16.mxu0 0
        %6812 = vmatpush1.bf16.msra.mxu0 0
        %6813 = vmatprep.subr.bf16.mxu0 0
        %6814 = vmatpush1.bf16.msra.mxu0 0
        %6815 = vmatprep.subr.bf16.mxu0 0
        %6816 = vmatpush1.bf16.msra.mxu0 0
        %6817 = vmatprep.subr.bf16.mxu0 0
        %6818 = vmatpush1.bf16.msra.mxu0 0
        %6819 = vmatprep.subr.bf16.mxu0 0
        %6820 = vmatpush1.bf16.msra.mxu0 0
        %6821 = vmatprep.subr.bf16.mxu0 0
        %6822 = vmatpush1.bf16.msra.mxu0 0
        %6823 = vmatprep.subr.bf16.mxu0 0
        %6824 = vmatpush1.bf16.msra.mxu0 0
        %6825 = vmatprep.subr.bf16.mxu0 0
        %6826 = vmatpush1.bf16.msra.mxu0 0
        %6827 = vmatprep.subr.bf16.mxu0 0
        %6828 = vmatpush1.bf16.msra.mxu0 0
        %6829 = vmatprep.subr.bf16.mxu0 0
        %6830 = vmatpush1.bf16.msra.mxu0 0
        %6831 = vmatprep.subr.bf16.mxu0 0
        %6832 = vmatpush1.bf16.msra.mxu0 0
        %6833 = vmatprep.mubr.bf16.mxu0 0
        %6834 = vmatmul.mubr.bf16.gmra.mrb[0].mxu0 %v6594
        %v6835 = vpop.f32.mrb[0].mxu0
        %v6836 = vadd.f32 %v5196, %v6835
        %v6837 = vpop.f32.mrb[0].mxu0
        %v6838 = vadd.f32 %v5200, %v6837
        %v6839 = vpop.f32.mrb[0].mxu0
        %v6840 = vpop.f32.mrb[0].mxu0
        %6841 = vdwg.mxu0
        %6842 = vmatprep.subr.bf16.mxu0 %v6126
        %6843 = vmatpush1.bf16.msra.mxu0 %v6125
        %6844 = vmatprep.subr.bf16.mxu0 %v6174
        %6845 = vmatpush1.bf16.msra.mxu0 %v6173
        %6846 = vmatprep.subr.bf16.mxu0 %v6222
        %6847 = vmatpush1.bf16.msra.mxu0 %v6221
        %6848 = vmatprep.subr.bf16.mxu0 %v6270
        %6849 = vmatpush1.bf16.msra.mxu0 %v6269
        %6850 = vmatprep.subr.bf16.mxu0 %v6318
        %6851 = vmatpush1.bf16.msra.mxu0 %v6317
        %6852 = vmatprep.subr.bf16.mxu0 0
        %6853 = vmatpush1.bf16.msra.mxu0 0
        %6854 = vmatprep.subr.bf16.mxu0 0
        %6855 = vmatpush1.bf16.msra.mxu0 0
        %6856 = vmatprep.subr.bf16.mxu0 0
        %6857 = vmatpush1.bf16.msra.mxu0 0
        %6858 = vmatprep.subr.bf16.mxu0 0
        %6859 = vmatpush1.bf16.msra.mxu0 0
        %6860 = vmatprep.subr.bf16.mxu0 0
        %6861 = vmatpush1.bf16.msra.mxu0 0
        %6862 = vmatprep.subr.bf16.mxu0 0
        %6863 = vmatpush1.bf16.msra.mxu0 0
        %6864 = vmatprep.subr.bf16.mxu0 0
        %6865 = vmatpush1.bf16.msra.mxu0 0
        %6866 = vmatprep.subr.bf16.mxu0 0
        %6867 = vmatpush1.bf16.msra.mxu0 0
        %6868 = vmatprep.subr.bf16.mxu0 0
        %6869 = vmatpush1.bf16.msra.mxu0 0
        %6870 = vmatprep.subr.bf16.mxu0 0
        %6871 = vmatpush1.bf16.msra.mxu0 0
        %6872 = vmatprep.subr.bf16.mxu0 0
        %6873 = vmatpush1.bf16.msra.mxu0 0
        %6874 = vmatprep.mubr.bf16.mxu0 0
        %6875 = vmatmul.mubr.bf16.gmra.mrb[0].mxu0 %v6594
        %v6876 = vpop.f32.mrb[0].mxu0
        %v6877 = vadd.f32 %v5204, %v6876
        %v6878 = vpop.f32.mrb[0].mxu0
        %v6879 = vadd.f32 %v5208, %v6878
        %v6880 = vpop.f32.mrb[0].mxu0
        %v6881 = vpop.f32.mrb[0].mxu0
        %6882 = vdwg.mxu0
        %6883 = vmatprep.subr.bf16.mxu0 %v6128
        %6884 = vmatpush1.bf16.msra.mxu0 %v6127
        %6885 = vmatprep.subr.bf16.mxu0 %v6176
        %6886 = vmatpush1.bf16.msra.mxu0 %v6175
        %6887 = vmatprep.subr.bf16.mxu0 %v6224
        %6888 = vmatpush1.bf16.msra.mxu0 %v6223
        %6889 = vmatprep.subr.bf16.mxu0 %v6272
        %6890 = vmatpush1.bf16.msra.mxu0 %v6271
        %6891 = vmatprep.subr.bf16.mxu0 %v6320
        %6892 = vmatpush1.bf16.msra.mxu0 %v6319
        %6893 = vmatprep.subr.bf16.mxu0 0
        %6894 = vmatpush1.bf16.msra.mxu0 0
        %6895 = vmatprep.subr.bf16.mxu0 0
        %6896 = vmatpush1.bf16.msra.mxu0 0
        %6897 = vmatprep.subr.bf16.mxu0 0
        %6898 = vmatpush1.bf16.msra.mxu0 0
        %6899 = vmatprep.subr.bf16.mxu0 0
        %6900 = vmatpush1.bf16.msra.mxu0 0
        %6901 = vmatprep.subr.bf16.mxu0 0
        %6902 = vmatpush1.bf16.msra.mxu0 0
        %6903 = vmatprep.subr.bf16.mxu0 0
        %6904 = vmatpush1.bf16.msra.mxu0 0
        %6905 = vmatprep.subr.bf16.mxu0 0
        %6906 = vmatpush1.bf16.msra.mxu0 0
        %6907 = vmatprep.subr.bf16.mxu0 0
        %6908 = vmatpush1.bf16.msra.mxu0 0
        %6909 = vmatprep.subr.bf16.mxu0 0
        %6910 = vmatpush1.bf16.msra.mxu0 0
        %6911 = vmatprep.subr.bf16.mxu0 0
        %6912 = vmatpush1.bf16.msra.mxu0 0
        %6913 = vmatprep.subr.bf16.mxu0 0
        %6914 = vmatpush1.bf16.msra.mxu0 0
        %6915 = vmatprep.mubr.bf16.mxu0 0
        %6916 = vmatmul.mubr.bf16.gmra.mrb[0].mxu0 %v6594
        %v6917 = vpop.f32.mrb[0].mxu0
        %v6918 = vadd.f32 %v5212, %v6917
        %v6919 = vpop.f32.mrb[0].mxu0
        %v6920 = vadd.f32 %v5216, %v6919
        %v6921 = vpop.f32.mrb[0].mxu0
        %v6922 = vpop.f32.mrb[0].mxu0
        %6923 = vdwg.mxu0
        %6924 = vmatprep.subr.bf16.mxu0 %v6130
        %6925 = vmatpush1.bf16.msra.mxu0 %v6129
        %6926 = vmatprep.subr.bf16.mxu0 %v6178
        %6927 = vmatpush1.bf16.msra.mxu0 %v6177
        %6928 = vmatprep.subr.bf16.mxu0 %v6226
        %6929 = vmatpush1.bf16.msra.mxu0 %v6225
        %6930 = vmatprep.subr.bf16.mxu0 %v6274
        %6931 = vmatpush1.bf16.msra.mxu0 %v6273
        %6932 = vmatprep.subr.bf16.mxu0 %v6322
        %6933 = vmatpush1.bf16.msra.mxu0 %v6321
        %6934 = vmatprep.subr.bf16.mxu0 0
        %6935 = vmatpush1.bf16.msra.mxu0 0
        %6936 = vmatprep.subr.bf16.mxu0 0
        %6937 = vmatpush1.bf16.msra.mxu0 0
        %6938 = vmatprep.subr.bf16.mxu0 0
        %6939 = vmatpush1.bf16.msra.mxu0 0
        %6940 = vmatprep.subr.bf16.mxu0 0
        %6941 = vmatpush1.bf16.msra.mxu0 0
        %6942 = vmatprep.subr.bf16.mxu0 0
        %6943 = vmatpush1.bf16.msra.mxu0 0
        %6944 = vmatprep.subr.bf16.mxu0 0
        %6945 = vmatpush1.bf16.msra.mxu0 0
        %6946 = vmatprep.subr.bf16.mxu0 0
        %6947 = vmatpush1.bf16.msra.mxu0 0
        %6948 = vmatprep.subr.bf16.mxu0 0
        %6949 = vmatpush1.bf16.msra.mxu0 0
        %6950 = vmatprep.subr.bf16.mxu0 0
        %6951 = vmatpush1.bf16.msra.mxu0 0
        %6952 = vmatprep.subr.bf16.mxu0 0
        %6953 = vmatpush1.bf16.msra.mxu0 0
        %6954 = vmatprep.subr.bf16.mxu0 0
        %6955 = vmatpush1.bf16.msra.mxu0 0
        %6956 = vmatprep.mubr.bf16.mxu0 0
        %6957 = vmatmul.mubr.bf16.gmra.mrb[0].mxu0 %v6594
        %v6958 = vpop.f32.mrb[0].mxu0
        %v6959 = vadd.f32 %v5220, %v6958
        %v6960 = vpop.f32.mrb[0].mxu0
        %v6961 = vadd.f32 %v5224, %v6960
        %v6962 = vpop.f32.mrb[0].mxu0
        %v6963 = vpop.f32.mrb[0].mxu0
        %6964 = vdwg.mxu0
        %6965 = vmatprep.subr.bf16.mxu0 %v6132
        %6966 = vmatpush1.bf16.msra.mxu0 %v6131
        %6967 = vmatprep.subr.bf16.mxu0 %v6180
        %6968 = vmatpush1.bf16.msra.mxu0 %v6179
        %6969 = vmatprep.subr.bf16.mxu0 %v6228
        %6970 = vmatpush1.bf16.msra.mxu0 %v6227
        %6971 = vmatprep.subr.bf16.mxu0 %v6276
        %6972 = vmatpush1.bf16.msra.mxu0 %v6275
        %6973 = vmatprep.subr.bf16.mxu0 %v6324
        %6974 = vmatpush1.bf16.msra.mxu0 %v6323
        %6975 = vmatprep.subr.bf16.mxu0 0
        %6976 = vmatpush1.bf16.msra.mxu0 0
        %6977 = vmatprep.subr.bf16.mxu0 0
        %6978 = vmatpush1.bf16.msra.mxu0 0
        %6979 = vmatprep.subr.bf16.mxu0 0
        %6980 = vmatpush1.bf16.msra.mxu0 0
        %6981 = vmatprep.subr.bf16.mxu0 0
        %6982 = vmatpush1.bf16.msra.mxu0 0
        %6983 = vmatprep.subr.bf16.mxu0 0
        %6984 = vmatpush1.bf16.msra.mxu0 0
        %6985 = vmatprep.subr.bf16.mxu0 0
        %6986 = vmatpush1.bf16.msra.mxu0 0
        %6987 = vmatprep.subr.bf16.mxu0 0
        %6988 = vmatpush1.bf16.msra.mxu0 0
        %6989 = vmatprep.subr.bf16.mxu0 0
        %6990 = vmatpush1.bf16.msra.mxu0 0
        %6991 = vmatprep.subr.bf16.mxu0 0
        %6992 = vmatpush1.bf16.msra.mxu0 0
        %6993 = vmatprep.subr.bf16.mxu0 0
        %6994 = vmatpush1.bf16.msra.mxu0 0
        %6995 = vmatprep.subr.bf16.mxu0 0
        %6996 = vmatpush1.bf16.msra.mxu0 0
        %6997 = vmatprep.mubr.bf16.mxu0 0
        %6998 = vmatmul.mubr.bf16.gmra.mrb[0].mxu0 %v6594
        %v6999 = vpop.f32.mrb[0].mxu0
        %v7000 = vadd.f32 %v5228, %v6999
        %v7001 = vpop.f32.mrb[0].mxu0
        %v7002 = vadd.f32 %v5232, %v7001
        %v7003 = vpop.f32.mrb[0].mxu0
        %v7004 = vpop.f32.mrb[0].mxu0
        %7005 = vdwg.mxu0
        %7006 = vmatprep.subr.bf16.mxu0 %v6134
        %7007 = vmatpush1.bf16.msra.mxu0 %v6133
        %7008 = vmatprep.subr.bf16.mxu0 %v6182
        %7009 = vmatpush1.bf16.msra.mxu0 %v6181
        %7010 = vmatprep.subr.bf16.mxu0 %v6230
        %7011 = vmatpush1.bf16.msra.mxu0 %v6229
        %7012 = vmatprep.subr.bf16.mxu0 %v6278
        %7013 = vmatpush1.bf16.msra.mxu0 %v6277
        %7014 = vmatprep.subr.bf16.mxu0 %v6326
        %7015 = vmatpush1.bf16.msra.mxu0 %v6325
        %7016 = vmatprep.subr.bf16.mxu0 0
        %7017 = vmatpush1.bf16.msra.mxu0 0
        %7018 = vmatprep.subr.bf16.mxu0 0
        %7019 = vmatpush1.bf16.msra.mxu0 0
        %7020 = vmatprep.subr.bf16.mxu0 0
        %7021 = vmatpush1.bf16.msra.mxu0 0
        %7022 = vmatprep.subr.bf16.mxu0 0
        %7023 = vmatpush1.bf16.msra.mxu0 0
        %7024 = vmatprep.subr.bf16.mxu0 0
        %7025 = vmatpush1.bf16.msra.mxu0 0
        %7026 = vmatprep.subr.bf16.mxu0 0
        %7027 = vmatpush1.bf16.msra.mxu0 0
        %7028 = vmatprep.subr.bf16.mxu0 0
        %7029 = vmatpush1.bf16.msra.mxu0 0
        %7030 = vmatprep.subr.bf16.mxu0 0
        %7031 = vmatpush1.bf16.msra.mxu0 0
        %7032 = vmatprep.subr.bf16.mxu0 0
        %7033 = vmatpush1.bf16.msra.mxu0 0
        %7034 = vmatprep.subr.bf16.mxu0 0
        %7035 = vmatpush1.bf16.msra.mxu0 0
        %7036 = vmatprep.subr.bf16.mxu0 0
        %7037 = vmatpush1.bf16.msra.mxu0 0
        %7038 = vmatprep.mubr.bf16.mxu0 0
        %7039 = vmatmul.mubr.bf16.gmra.mrb[0].mxu0 %v6594
        %v7040 = vpop.f32.mrb[0].mxu0
        %v7041 = vadd.f32 %v5236, %v7040
        %v7042 = vpop.f32.mrb[0].mxu0
        %v7043 = vadd.f32 %v5240, %v7042
        %v7044 = vpop.f32.mrb[0].mxu0
        %v7045 = vpop.f32.mrb[0].mxu0
        %7046 = vdwg.mxu0
        %7047 = vmatprep.subr.bf16.mxu0 %v6136
        %7048 = vmatpush1.bf16.msra.mxu0 %v6135
        %7049 = vmatprep.subr.bf16.mxu0 %v6184
        %7050 = vmatpush1.bf16.msra.mxu0 %v6183
        %7051 = vmatprep.subr.bf16.mxu0 %v6232
        %7052 = vmatpush1.bf16.msra.mxu0 %v6231
        %7053 = vmatprep.subr.bf16.mxu0 %v6280
        %7054 = vmatpush1.bf16.msra.mxu0 %v6279
        %7055 = vmatprep.subr.bf16.mxu0 %v6328
        %7056 = vmatpush1.bf16.msra.mxu0 %v6327
        %7057 = vmatprep.subr.bf16.mxu0 0
        %7058 = vmatpush1.bf16.msra.mxu0 0
        %7059 = vmatprep.subr.bf16.mxu0 0
        %7060 = vmatpush1.bf16.msra.mxu0 0
        %7061 = vmatprep.subr.bf16.mxu0 0
        %7062 = vmatpush1.bf16.msra.mxu0 0
        %7063 = vmatprep.subr.bf16.mxu0 0
        %7064 = vmatpush1.bf16.msra.mxu0 0
        %7065 = vmatprep.subr.bf16.mxu0 0
        %7066 = vmatpush1.bf16.msra.mxu0 0
        %7067 = vmatprep.subr.bf16.mxu0 0
        %7068 = vmatpush1.bf16.msra.mxu0 0
        %7069 = vmatprep.subr.bf16.mxu0 0
        %7070 = vmatpush1.bf16.msra.mxu0 0
        %7071 = vmatprep.subr.bf16.mxu0 0
        %7072 = vmatpush1.bf16.msra.mxu0 0
        %7073 = vmatprep.subr.bf16.mxu0 0
        %7074 = vmatpush1.bf16.msra.mxu0 0
        %7075 = vmatprep.subr.bf16.mxu0 0
        %7076 = vmatpush1.bf16.msra.mxu0 0
        %7077 = vmatprep.subr.bf16.mxu0 0
        %7078 = vmatpush1.bf16.msra.mxu0 0
        %7079 = vmatprep.mubr.bf16.mxu0 0
        %7080 = vmatmul.mubr.bf16.gmra.mrb[0].mxu0 %v6594
        %v7081 = vpop.f32.mrb[0].mxu0
        %v7082 = vadd.f32 %v5244, %v7081
        %v7083 = vpop.f32.mrb[0].mxu0
        %v7084 = vadd.f32 %v5248, %v7083
        %v7085 = vpop.f32.mrb[0].mxu0
        %v7086 = vpop.f32.mrb[0].mxu0
        %7087 = vdwg.mxu0
        %7088 = vmatprep.subr.bf16.mxu0 %v6138
        %7089 = vmatpush1.bf16.msra.mxu0 %v6137
        %7090 = vmatprep.subr.bf16.mxu0 %v6186
        %7091 = vmatpush1.bf16.msra.mxu0 %v6185
        %7092 = vmatprep.subr.bf16.mxu0 %v6234
        %7093 = vmatpush1.bf16.msra.mxu0 %v6233
        %7094 = vmatprep.subr.bf16.mxu0 %v6282
        %7095 = vmatpush1.bf16.msra.mxu0 %v6281
        %7096 = vmatprep.subr.bf16.mxu0 %v6330
        %7097 = vmatpush1.bf16.msra.mxu0 %v6329
        %7098 = vmatprep.subr.bf16.mxu0 0
        %7099 = vmatpush1.bf16.msra.mxu0 0
        %7100 = vmatprep.subr.bf16.mxu0 0
        %7101 = vmatpush1.bf16.msra.mxu0 0
        %7102 = vmatprep.subr.bf16.mxu0 0
        %7103 = vmatpush1.bf16.msra.mxu0 0
        %7104 = vmatprep.subr.bf16.mxu0 0
        %7105 = vmatpush1.bf16.msra.mxu0 0
        %7106 = vmatprep.subr.bf16.mxu0 0
        %7107 = vmatpush1.bf16.msra.mxu0 0
        %7108 = vmatprep.subr.bf16.mxu0 0
        %7109 = vmatpush1.bf16.msra.mxu0 0
        %7110 = vmatprep.subr.bf16.mxu0 0
        %7111 = vmatpush1.bf16.msra.mxu0 0
        %7112 = vmatprep.subr.bf16.mxu0 0
        %7113 = vmatpush1.bf16.msra.mxu0 0
        %7114 = vmatprep.subr.bf16.mxu0 0
        %7115 = vmatpush1.bf16.msra.mxu0 0
        %7116 = vmatprep.subr.bf16.mxu0 0
        %7117 = vmatpush1.bf16.msra.mxu0 0
        %7118 = vmatprep.subr.bf16.mxu0 0
        %7119 = vmatpush1.bf16.msra.mxu0 0
        %7120 = vmatprep.mubr.bf16.mxu0 0
        %7121 = vmatmul.mubr.bf16.gmra.mrb[0].mxu0 %v6594
        %v7122 = vpop.f32.mrb[0].mxu0
        %v7123 = vadd.f32 %v5252, %v7122
        %v7124 = vpop.f32.mrb[0].mxu0
        %v7125 = vadd.f32 %v5256, %v7124
        %v7126 = vpop.f32.mrb[0].mxu0
        %v7127 = vpop.f32.mrb[0].mxu0
        %7128 = vdwg.mxu0
        %7129 = vmatprep.subr.bf16.mxu0 %v6140
        %7130 = vmatpush1.bf16.msra.mxu0 %v6139
        %7131 = vmatprep.subr.bf16.mxu0 %v6188
        %7132 = vmatpush1.bf16.msra.mxu0 %v6187
        %7133 = vmatprep.subr.bf16.mxu0 %v6236
        %7134 = vmatpush1.bf16.msra.mxu0 %v6235
        %7135 = vmatprep.subr.bf16.mxu0 %v6284
        %7136 = vmatpush1.bf16.msra.mxu0 %v6283
        %7137 = vmatprep.subr.bf16.mxu0 %v6332
        %7138 = vmatpush1.bf16.msra.mxu0 %v6331
        %7139 = vmatprep.subr.bf16.mxu0 0
        %7140 = vmatpush1.bf16.msra.mxu0 0
        %7141 = vmatprep.subr.bf16.mxu0 0
        %7142 = vmatpush1.bf16.msra.mxu0 0
        %7143 = vmatprep.subr.bf16.mxu0 0
        %7144 = vmatpush1.bf16.msra.mxu0 0
        %7145 = vmatprep.subr.bf16.mxu0 0
        %7146 = vmatpush1.bf16.msra.mxu0 0
        %7147 = vmatprep.subr.bf16.mxu0 0
        %7148 = vmatpush1.bf16.msra.mxu0 0
        %7149 = vmatprep.subr.bf16.mxu0 0
        %7150 = vmatpush1.bf16.msra.mxu0 0
        %7151 = vmatprep.subr.bf16.mxu0 0
        %7152 = vmatpush1.bf16.msra.mxu0 0
        %7153 = vmatprep.subr.bf16.mxu0 0
        %7154 = vmatpush1.bf16.msra.mxu0 0
        %7155 = vmatprep.subr.bf16.mxu0 0
        %7156 = vmatpush1.bf16.msra.mxu0 0
        %7157 = vmatprep.subr.bf16.mxu0 0
        %7158 = vmatpush1.bf16.msra.mxu0 0
        %7159 = vmatprep.subr.bf16.mxu0 0
        %7160 = vmatpush1.bf16.msra.mxu0 0
        %7161 = vmatprep.mubr.bf16.mxu0 0
        %7162 = vmatmul.mubr.bf16.gmra.mrb[0].mxu0 %v6594
        %v7163 = vpop.f32.mrb[0].mxu0
        %v7164 = vadd.f32 %v5260, %v7163
        %v7165 = vpop.f32.mrb[0].mxu0
        %v7166 = vadd.f32 %v5264, %v7165
        %v7167 = vpop.f32.mrb[0].mxu0
        %v7168 = vpop.f32.mrb[0].mxu0
        %7169 = vdwg.mxu0
        %7170 = vmatprep.subr.bf16.mxu0 %v6142
        %7171 = vmatpush1.bf16.msra.mxu0 %v6141
        %7172 = vmatprep.subr.bf16.mxu0 %v6190
        %7173 = vmatpush1.bf16.msra.mxu0 %v6189
        %7174 = vmatprep.subr.bf16.mxu0 %v6238
        %7175 = vmatpush1.bf16.msra.mxu0 %v6237
        %7176 = vmatprep.subr.bf16.mxu0 %v6286
        %7177 = vmatpush1.bf16.msra.mxu0 %v6285
        %7178 = vmatprep.subr.bf16.mxu0 %v6334
        %7179 = vmatpush1.bf16.msra.mxu0 %v6333
        %7180 = vmatprep.subr.bf16.mxu0 0
        %7181 = vmatpush1.bf16.msra.mxu0 0
        %7182 = vmatprep.subr.bf16.mxu0 0
        %7183 = vmatpush1.bf16.msra.mxu0 0
        %7184 = vmatprep.subr.bf16.mxu0 0
        %7185 = vmatpush1.bf16.msra.mxu0 0
        %7186 = vmatprep.subr.bf16.mxu0 0
        %7187 = vmatpush1.bf16.msra.mxu0 0
        %7188 = vmatprep.subr.bf16.mxu0 0
        %7189 = vmatpush1.bf16.msra.mxu0 0
        %7190 = vmatprep.subr.bf16.mxu0 0
        %7191 = vmatpush1.bf16.msra.mxu0 0
        %7192 = vmatprep.subr.bf16.mxu0 0
        %7193 = vmatpush1.bf16.msra.mxu0 0
        %7194 = vmatprep.subr.bf16.mxu0 0
        %7195 = vmatpush1.bf16.msra.mxu0 0
        %7196 = vmatprep.subr.bf16.mxu0 0
        %7197 = vmatpush1.bf16.msra.mxu0 0
        %7198 = vmatprep.subr.bf16.mxu0 0
        %7199 = vmatpush1.bf16.msra.mxu0 0
        %7200 = vmatprep.subr.bf16.mxu0 0
        %7201 = vmatpush1.bf16.msra.mxu0 0
        %7202 = vmatprep.mubr.bf16.mxu0 0
        %7203 = vmatmul.mubr.bf16.gmra.mrb[0].mxu0 %v6594
        %v7204 = vpop.f32.mrb[0].mxu0
        %v7205 = vadd.f32 %v5268, %v7204
        %v7206 = vpop.f32.mrb[0].mxu0
        %v7207 = vadd.f32 %v5272, %v7206
        %v7208 = vpop.f32.mrb[0].mxu0
        %v7209 = vpop.f32.mrb[0].mxu0
        %7210 = vdwg.mxu0
        %7211 = vmatprep.subr.bf16.mxu0 %v6144
        %7212 = vmatpush1.bf16.msra.mxu0 %v6143
        %7213 = vmatprep.subr.bf16.mxu0 %v6192
        %7214 = vmatpush1.bf16.msra.mxu0 %v6191
        %7215 = vmatprep.subr.bf16.mxu0 %v6240
        %7216 = vmatpush1.bf16.msra.mxu0 %v6239
        %7217 = vmatprep.subr.bf16.mxu0 %v6288
        %7218 = vmatpush1.bf16.msra.mxu0 %v6287
        %7219 = vmatprep.subr.bf16.mxu0 %v6336
        %7220 = vmatpush1.bf16.msra.mxu0 %v6335
        %7221 = vmatprep.subr.bf16.mxu0 0
        %7222 = vmatpush1.bf16.msra.mxu0 0
        %7223 = vmatprep.subr.bf16.mxu0 0
        %7224 = vmatpush1.bf16.msra.mxu0 0
        %7225 = vmatprep.subr.bf16.mxu0 0
        %7226 = vmatpush1.bf16.msra.mxu0 0
        %7227 = vmatprep.subr.bf16.mxu0 0
        %7228 = vmatpush1.bf16.msra.mxu0 0
        %7229 = vmatprep.subr.bf16.mxu0 0
        %7230 = vmatpush1.bf16.msra.mxu0 0
        %7231 = vmatprep.subr.bf16.mxu0 0
        %7232 = vmatpush1.bf16.msra.mxu0 0
        %7233 = vmatprep.subr.bf16.mxu0 0
        %7234 = vmatpush1.bf16.msra.mxu0 0
        %7235 = vmatprep.subr.bf16.mxu0 0
        %7236 = vmatpush1.bf16.msra.mxu0 0
        %7237 = vmatprep.subr.bf16.mxu0 0
        %7238 = vmatpush1.bf16.msra.mxu0 0
        %7239 = vmatprep.subr.bf16.mxu0 0
        %7240 = vmatpush1.bf16.msra.mxu0 0
        %7241 = vmatprep.subr.bf16.mxu0 0
        %7242 = vmatpush1.bf16.msra.mxu0 0
        %7243 = vmatprep.mubr.bf16.mxu0 0
        %7244 = vmatmul.mubr.bf16.gmra.mrb[0].mxu0 %v6594
        %v7245 = vpop.f32.mrb[0].mxu0
        %v7246 = vadd.f32 %v5276, %v7245
        %v7247 = vpop.f32.mrb[0].mxu0
        %v7248 = vadd.f32 %v5280, %v7247
        %v7249 = vpop.f32.mrb[0].mxu0
        %v7250 = vpop.f32.mrb[0].mxu0
        %7251 = vdwg.mxu0
        %7252 = vmatprep.subr.bf16.mxu0 %v6146
        %7253 = vmatpush1.bf16.msra.mxu0 %v6145
        %7254 = vmatprep.subr.bf16.mxu0 %v6194
        %7255 = vmatpush1.bf16.msra.mxu0 %v6193
        %7256 = vmatprep.subr.bf16.mxu0 %v6242
        %7257 = vmatpush1.bf16.msra.mxu0 %v6241
        %7258 = vmatprep.subr.bf16.mxu0 %v6290
        %7259 = vmatpush1.bf16.msra.mxu0 %v6289
        %7260 = vmatprep.subr.bf16.mxu0 %v6338
        %7261 = vmatpush1.bf16.msra.mxu0 %v6337
        %7262 = vmatprep.subr.bf16.mxu0 0
        %7263 = vmatpush1.bf16.msra.mxu0 0
        %7264 = vmatprep.subr.bf16.mxu0 0
        %7265 = vmatpush1.bf16.msra.mxu0 0
        %7266 = vmatprep.subr.bf16.mxu0 0
        %7267 = vmatpush1.bf16.msra.mxu0 0
        %7268 = vmatprep.subr.bf16.mxu0 0
        %7269 = vmatpush1.bf16.msra.mxu0 0
        %7270 = vmatprep.subr.bf16.mxu0 0
        %7271 = vmatpush1.bf16.msra.mxu0 0
        %7272 = vmatprep.subr.bf16.mxu0 0
        %7273 = vmatpush1.bf16.msra.mxu0 0
        %7274 = vmatprep.subr.bf16.mxu0 0
        %7275 = vmatpush1.bf16.msra.mxu0 0
        %7276 = vmatprep.subr.bf16.mxu0 0
        %7277 = vmatpush1.bf16.msra.mxu0 0
        %7278 = vmatprep.subr.bf16.mxu0 0
        %7279 = vmatpush1.bf16.msra.mxu0 0
        %7280 = vmatprep.subr.bf16.mxu0 0
        %7281 = vmatpush1.bf16.msra.mxu0 0
        %7282 = vmatprep.subr.bf16.mxu0 0
        %7283 = vmatpush1.bf16.msra.mxu0 0
        %7284 = vmatprep.mubr.bf16.mxu0 0
        %7285 = vmatmul.mubr.bf16.gmra.mrb[0].mxu0 %v6594
        %v7286 = vpop.f32.mrb[0].mxu0
        %v7287 = vadd.f32 %v5284, %v7286
        %v7288 = vpop.f32.mrb[0].mxu0
        %v7289 = vadd.f32 %v5288, %v7288
        %v7290 = vpop.f32.mrb[0].mxu0
        %v7291 = vpop.f32.mrb[0].mxu0
        %7292 = vdwg.mxu0
        %7293 = vmatprep.subr.bf16.mxu0 %v6148
        %7294 = vmatpush1.bf16.msra.mxu0 %v6147
        %7295 = vmatprep.subr.bf16.mxu0 %v6196
        %7296 = vmatpush1.bf16.msra.mxu0 %v6195
        %7297 = vmatprep.subr.bf16.mxu0 %v6244
        %7298 = vmatpush1.bf16.msra.mxu0 %v6243
        %7299 = vmatprep.subr.bf16.mxu0 %v6292
        %7300 = vmatpush1.bf16.msra.mxu0 %v6291
        %7301 = vmatprep.subr.bf16.mxu0 %v6340
        %7302 = vmatpush1.bf16.msra.mxu0 %v6339
        %7303 = vmatprep.subr.bf16.mxu0 0
        %7304 = vmatpush1.bf16.msra.mxu0 0
        %7305 = vmatprep.subr.bf16.mxu0 0
        %7306 = vmatpush1.bf16.msra.mxu0 0
        %7307 = vmatprep.subr.bf16.mxu0 0
        %7308 = vmatpush1.bf16.msra.mxu0 0
        %7309 = vmatprep.subr.bf16.mxu0 0
        %7310 = vmatpush1.bf16.msra.mxu0 0
        %7311 = vmatprep.subr.bf16.mxu0 0
        %7312 = vmatpush1.bf16.msra.mxu0 0
        %7313 = vmatprep.subr.bf16.mxu0 0
        %7314 = vmatpush1.bf16.msra.mxu0 0
        %7315 = vmatprep.subr.bf16.mxu0 0
        %7316 = vmatpush1.bf16.msra.mxu0 0
        %7317 = vmatprep.subr.bf16.mxu0 0
        %7318 = vmatpush1.bf16.msra.mxu0 0
        %7319 = vmatprep.subr.bf16.mxu0 0
        %7320 = vmatpush1.bf16.msra.mxu0 0
        %7321 = vmatprep.subr.bf16.mxu0 0
        %7322 = vmatpush1.bf16.msra.mxu0 0
        %7323 = vmatprep.subr.bf16.mxu0 0
        %7324 = vmatpush1.bf16.msra.mxu0 0
        %7325 = vmatprep.mubr.bf16.mxu0 0
        %7326 = vmatmul.mubr.bf16.gmra.mrb[0].mxu0 %v6594
        %v7327 = vpop.f32.mrb[0].mxu0
        %v7328 = vadd.f32 %v5292, %v7327
        %v7329 = vpop.f32.mrb[0].mxu0
        %v7330 = vadd.f32 %v5296, %v7329
        %v7331 = vpop.f32.mrb[0].mxu0
        %v7332 = vpop.f32.mrb[0].mxu0
        %7333 = vdwg.mxu0
        %7334 = vmatprep.subr.bf16.mxu0 %v6150
        %7335 = vmatpush1.bf16.msra.mxu0 %v6149
        %7336 = vmatprep.subr.bf16.mxu0 %v6198
        %7337 = vmatpush1.bf16.msra.mxu0 %v6197
        %7338 = vmatprep.subr.bf16.mxu0 %v6246
        %7339 = vmatpush1.bf16.msra.mxu0 %v6245
        %7340 = vmatprep.subr.bf16.mxu0 %v6294
        %7341 = vmatpush1.bf16.msra.mxu0 %v6293
        %7342 = vmatprep.subr.bf16.mxu0 %v6342
        %7343 = vmatpush1.bf16.msra.mxu0 %v6341
        %7344 = vmatprep.subr.bf16.mxu0 0
        %7345 = vmatpush1.bf16.msra.mxu0 0
        %7346 = vmatprep.subr.bf16.mxu0 0
        %7347 = vmatpush1.bf16.msra.mxu0 0
        %7348 = vmatprep.subr.bf16.mxu0 0
        %7349 = vmatpush1.bf16.msra.mxu0 0
        %7350 = vmatprep.subr.bf16.mxu0 0
        %7351 = vmatpush1.bf16.msra.mxu0 0
        %7352 = vmatprep.subr.bf16.mxu0 0
        %7353 = vmatpush1.bf16.msra.mxu0 0
        %7354 = vmatprep.subr.bf16.mxu0 0
        %7355 = vmatpush1.bf16.msra.mxu0 0
        %7356 = vmatprep.subr.bf16.mxu0 0
        %7357 = vmatpush1.bf16.msra.mxu0 0
        %7358 = vmatprep.subr.bf16.mxu0 0
        %7359 = vmatpush1.bf16.msra.mxu0 0
        %7360 = vmatprep.subr.bf16.mxu0 0
        %7361 = vmatpush1.bf16.msra.mxu0 0
        %7362 = vmatprep.subr.bf16.mxu0 0
        %7363 = vmatpush1.bf16.msra.mxu0 0
        %7364 = vmatprep.subr.bf16.mxu0 0
        %7365 = vmatpush1.bf16.msra.mxu0 0
        %7366 = vmatprep.mubr.bf16.mxu0 0
        %7367 = vmatmul.mubr.bf16.gmra.mrb[0].mxu0 %v6594
        %v7368 = vpop.f32.mrb[0].mxu0
        %v7369 = vadd.f32 %v5300, %v7368
        %v7370 = vpop.f32.mrb[0].mxu0
        %v7371 = vadd.f32 %v5304, %v7370
        %v7372 = vpop.f32.mrb[0].mxu0
        %v7373 = vpop.f32.mrb[0].mxu0
        %7374 = vdwg.mxu0
        %7375 = vmatprep.subr.bf16.mxu0 %v6152
        %7376 = vmatpush1.bf16.msra.mxu0 %v6151
        %7377 = vmatprep.subr.bf16.mxu0 %v6200
        %7378 = vmatpush1.bf16.msra.mxu0 %v6199
        %7379 = vmatprep.subr.bf16.mxu0 %v6248
        %7380 = vmatpush1.bf16.msra.mxu0 %v6247
        %7381 = vmatprep.subr.bf16.mxu0 %v6296
        %7382 = vmatpush1.bf16.msra.mxu0 %v6295
        %7383 = vmatprep.subr.bf16.mxu0 %v6344
        %7384 = vmatpush1.bf16.msra.mxu0 %v6343
        %7385 = vmatprep.subr.bf16.mxu0 0
        %7386 = vmatpush1.bf16.msra.mxu0 0
        %7387 = vmatprep.subr.bf16.mxu0 0
        %7388 = vmatpush1.bf16.msra.mxu0 0
        %7389 = vmatprep.subr.bf16.mxu0 0
        %7390 = vmatpush1.bf16.msra.mxu0 0
        %7391 = vmatprep.subr.bf16.mxu0 0
        %7392 = vmatpush1.bf16.msra.mxu0 0
        %7393 = vmatprep.subr.bf16.mxu0 0
        %7394 = vmatpush1.bf16.msra.mxu0 0
        %7395 = vmatprep.subr.bf16.mxu0 0
        %7396 = vmatpush1.bf16.msra.mxu0 0
        %7397 = vmatprep.subr.bf16.mxu0 0
        %7398 = vmatpush1.bf16.msra.mxu0 0
        %7399 = vmatprep.subr.bf16.mxu0 0
        %7400 = vmatpush1.bf16.msra.mxu0 0
        %7401 = vmatprep.subr.bf16.mxu0 0
        %7402 = vmatpush1.bf16.msra.mxu0 0
        %7403 = vmatprep.subr.bf16.mxu0 0
        %7404 = vmatpush1.bf16.msra.mxu0 0
        %7405 = vmatprep.subr.bf16.mxu0 0
        %7406 = vmatpush1.bf16.msra.mxu0 0
        %7407 = vmatprep.mubr.bf16.mxu0 0
        %7408 = vmatmul.mubr.bf16.gmra.mrb[0].mxu0 %v6594
        %v7409 = vpop.f32.mrb[0].mxu0
        %v7410 = vadd.f32 %v5308, %v7409
        %v7411 = vpop.f32.mrb[0].mxu0
        %v7412 = vadd.f32 %v5312, %v7411
        %v7413 = vpop.f32.mrb[0].mxu0
        %v7414 = vpop.f32.mrb[0].mxu0
        %7415 = vdwg.mxu0
        %7416 = vmatprep.subr.bf16.mxu0 %v6154
        %7417 = vmatpush1.bf16.msra.mxu0 %v6153
        %7418 = vmatprep.subr.bf16.mxu0 %v6202
        %7419 = vmatpush1.bf16.msra.mxu0 %v6201
        %7420 = vmatprep.subr.bf16.mxu0 %v6250
        %7421 = vmatpush1.bf16.msra.mxu0 %v6249
        %7422 = vmatprep.subr.bf16.mxu0 %v6298
        %7423 = vmatpush1.bf16.msra.mxu0 %v6297
        %7424 = vmatprep.subr.bf16.mxu0 %v6346
        %7425 = vmatpush1.bf16.msra.mxu0 %v6345
        %7426 = vmatprep.subr.bf16.mxu0 0
        %7427 = vmatpush1.bf16.msra.mxu0 0
        %7428 = vmatprep.subr.bf16.mxu0 0
        %7429 = vmatpush1.bf16.msra.mxu0 0
        %7430 = vmatprep.subr.bf16.mxu0 0
        %7431 = vmatpush1.bf16.msra.mxu0 0
        %7432 = vmatprep.subr.bf16.mxu0 0
        %7433 = vmatpush1.bf16.msra.mxu0 0
        %7434 = vmatprep.subr.bf16.mxu0 0
        %7435 = vmatpush1.bf16.msra.mxu0 0
        %7436 = vmatprep.subr.bf16.mxu0 0
        %7437 = vmatpush1.bf16.msra.mxu0 0
        %7438 = vmatprep.subr.bf16.mxu0 0
        %7439 = vmatpush1.bf16.msra.mxu0 0
        %7440 = vmatprep.subr.bf16.mxu0 0
        %7441 = vmatpush1.bf16.msra.mxu0 0
        %7442 = vmatprep.subr.bf16.mxu0 0
        %7443 = vmatpush1.bf16.msra.mxu0 0
        %7444 = vmatprep.subr.bf16.mxu0 0
        %7445 = vmatpush1.bf16.msra.mxu0 0
        %7446 = vmatprep.subr.bf16.mxu0 0
        %7447 = vmatpush1.bf16.msra.mxu0 0
        %7448 = vmatprep.mubr.bf16.mxu0 0
        %7449 = vmatmul.mubr.bf16.gmra.mrb[0].mxu0 %v6594
        %v7450 = vpop.f32.mrb[0].mxu0
        %v7451 = vadd.f32 %v5316, %v7450
        %v7452 = vpop.f32.mrb[0].mxu0
        %v7453 = vadd.f32 %v5320, %v7452
        %v7454 = vpop.f32.mrb[0].mxu0
        %v7455 = vpop.f32.mrb[0].mxu0
        %7456 = vdwg.mxu0
        %7457 = vmatprep.subr.bf16.mxu0 %v6156
        %7458 = vmatpush1.bf16.msra.mxu0 %v6155
        %7459 = vmatprep.subr.bf16.mxu0 %v6204
        %7460 = vmatpush1.bf16.msra.mxu0 %v6203
        %7461 = vmatprep.subr.bf16.mxu0 %v6252
        %7462 = vmatpush1.bf16.msra.mxu0 %v6251
        %7463 = vmatprep.subr.bf16.mxu0 %v6300
        %7464 = vmatpush1.bf16.msra.mxu0 %v6299
        %7465 = vmatprep.subr.bf16.mxu0 %v6348
        %7466 = vmatpush1.bf16.msra.mxu0 %v6347
        %7467 = vmatprep.subr.bf16.mxu0 0
        %7468 = vmatpush1.bf16.msra.mxu0 0
        %7469 = vmatprep.subr.bf16.mxu0 0
        %7470 = vmatpush1.bf16.msra.mxu0 0
        %7471 = vmatprep.subr.bf16.mxu0 0
        %7472 = vmatpush1.bf16.msra.mxu0 0
        %7473 = vmatprep.subr.bf16.mxu0 0
        %7474 = vmatpush1.bf16.msra.mxu0 0
        %7475 = vmatprep.subr.bf16.mxu0 0
        %7476 = vmatpush1.bf16.msra.mxu0 0
        %7477 = vmatprep.subr.bf16.mxu0 0
        %7478 = vmatpush1.bf16.msra.mxu0 0
        %7479 = vmatprep.subr.bf16.mxu0 0
        %7480 = vmatpush1.bf16.msra.mxu0 0
        %7481 = vmatprep.subr.bf16.mxu0 0
        %7482 = vmatpush1.bf16.msra.mxu0 0
        %7483 = vmatprep.subr.bf16.mxu0 0
        %7484 = vmatpush1.bf16.msra.mxu0 0
        %7485 = vmatprep.subr.bf16.mxu0 0
        %7486 = vmatpush1.bf16.msra.mxu0 0
        %7487 = vmatprep.subr.bf16.mxu0 0
        %7488 = vmatpush1.bf16.msra.mxu0 0
        %7489 = vmatprep.mubr.bf16.mxu0 0
        %7490 = vmatmul.mubr.bf16.gmra.mrb[0].mxu0 %v6594
        %v7491 = vpop.f32.mrb[0].mxu0
        %v7492 = vadd.f32 %v5324, %v7491
        %v7493 = vpop.f32.mrb[0].mxu0
        %v7494 = vadd.f32 %v5328, %v7493
        %v7495 = vpop.f32.mrb[0].mxu0
        %v7496 = vpop.f32.mrb[0].mxu0
        %7497 = vdwg.mxu0
        %7498 = vmatprep.subr.bf16.mxu0 %v6158
        %7499 = vmatpush1.bf16.msra.mxu0 %v6157
        %7500 = vmatprep.subr.bf16.mxu0 %v6206
        %7501 = vmatpush1.bf16.msra.mxu0 %v6205
        %7502 = vmatprep.subr.bf16.mxu0 %v6254
        %7503 = vmatpush1.bf16.msra.mxu0 %v6253
        %7504 = vmatprep.subr.bf16.mxu0 %v6302
        %7505 = vmatpush1.bf16.msra.mxu0 %v6301
        %7506 = vmatprep.subr.bf16.mxu0 %v6350
        %7507 = vmatpush1.bf16.msra.mxu0 %v6349
        %7508 = vmatprep.subr.bf16.mxu0 0
        %7509 = vmatpush1.bf16.msra.mxu0 0
        %7510 = vmatprep.subr.bf16.mxu0 0
        %7511 = vmatpush1.bf16.msra.mxu0 0
        %7512 = vmatprep.subr.bf16.mxu0 0
        %7513 = vmatpush1.bf16.msra.mxu0 0
        %7514 = vmatprep.subr.bf16.mxu0 0
        %7515 = vmatpush1.bf16.msra.mxu0 0
        %7516 = vmatprep.subr.bf16.mxu0 0
        %7517 = vmatpush1.bf16.msra.mxu0 0
        %7518 = vmatprep.subr.bf16.mxu0 0
        %7519 = vmatpush1.bf16.msra.mxu0 0
        %7520 = vmatprep.subr.bf16.mxu0 0
        %7521 = vmatpush1.bf16.msra.mxu0 0
        %7522 = vmatprep.subr.bf16.mxu0 0
        %7523 = vmatpush1.bf16.msra.mxu0 0
        %7524 = vmatprep.subr.bf16.mxu0 0
        %7525 = vmatpush1.bf16.msra.mxu0 0
        %7526 = vmatprep.subr.bf16.mxu0 0
        %7527 = vmatpush1.bf16.msra.mxu0 0
        %7528 = vmatprep.subr.bf16.mxu0 0
        %7529 = vmatpush1.bf16.msra.mxu0 0
        %7530 = vmatprep.mubr.bf16.mxu0 0
        %7531 = vmatmul.mubr.bf16.gmra.mrb[0].mxu0 %v6594
        %v7532 = vpop.f32.mrb[0].mxu0
        %v7533 = vadd.f32 %v5332, %v7532
        %v7534 = vpop.f32.mrb[0].mxu0
        %v7535 = vadd.f32 %v5336, %v7534
        %v7536 = vpop.f32.mrb[0].mxu0
        %v7537 = vpop.f32.mrb[0].mxu0
        %7538 = vdwg.mxu0
        %7539 = vmatprep.subr.bf16.mxu0 %v6160
        %7540 = vmatpush1.bf16.msra.mxu0 %v6159
        %7541 = vmatprep.subr.bf16.mxu0 %v6208
        %7542 = vmatpush1.bf16.msra.mxu0 %v6207
        %7543 = vmatprep.subr.bf16.mxu0 %v6256
        %7544 = vmatpush1.bf16.msra.mxu0 %v6255
        %7545 = vmatprep.subr.bf16.mxu0 %v6304
        %7546 = vmatpush1.bf16.msra.mxu0 %v6303
        %7547 = vmatprep.subr.bf16.mxu0 %v6352
        %7548 = vmatpush1.bf16.msra.mxu0 %v6351
        %7549 = vmatprep.subr.bf16.mxu0 0
        %7550 = vmatpush1.bf16.msra.mxu0 0
        %7551 = vmatprep.subr.bf16.mxu0 0
        %7552 = vmatpush1.bf16.msra.mxu0 0
        %7553 = vmatprep.subr.bf16.mxu0 0
        %7554 = vmatpush1.bf16.msra.mxu0 0
        %7555 = vmatprep.subr.bf16.mxu0 0
        %7556 = vmatpush1.bf16.msra.mxu0 0
        %7557 = vmatprep.subr.bf16.mxu0 0
        %7558 = vmatpush1.bf16.msra.mxu0 0
        %7559 = vmatprep.subr.bf16.mxu0 0
        %7560 = vmatpush1.bf16.msra.mxu0 0
        %7561 = vmatprep.subr.bf16.mxu0 0
        %7562 = vmatpush1.bf16.msra.mxu0 0
        %7563 = vmatprep.subr.bf16.mxu0 0
        %7564 = vmatpush1.bf16.msra.mxu0 0
        %7565 = vmatprep.subr.bf16.mxu0 0
        %7566 = vmatpush1.bf16.msra.mxu0 0
        %7567 = vmatprep.subr.bf16.mxu0 0
        %7568 = vmatpush1.bf16.msra.mxu0 0
        %7569 = vmatprep.subr.bf16.mxu0 0
        %7570 = vmatpush1.bf16.msra.mxu0 0
        %7571 = vmatprep.mubr.bf16.mxu0 0
        %7572 = vmatmul.mubr.bf16.gmra.mrb[0].mxu0 %v6594
        %v7573 = vpop.f32.mrb[0].mxu0
        %v7574 = vadd.f32 %v5340, %v7573
        %v7575 = vpop.f32.mrb[0].mxu0
        %v7576 = vadd.f32 %v5344, %v7575
        %v7577 = vpop.f32.mrb[0].mxu0
        %v7578 = vpop.f32.mrb[0].mxu0
        %7579 = vdwg.mxu0
        %7580 = vst [vmem:[%s762] sm:$0xff] %v6631
        %7581 = vst [vmem:[%s762 + $0x8] sm:$0xff] %v6633
        %7582 = vst [vmem:[%s762 + $0x10] sm:$0xff] %v6672
        %7583 = vst [vmem:[%s762 + $0x18] sm:$0xff] %v6674
        %7584 = vst [vmem:[%s762 + $0x20] sm:$0xff] %v6713
        %7585 = vst [vmem:[%s762 + $0x28] sm:$0xff] %v6715
        %7586 = vst [vmem:[%s762 + $0x30] sm:$0xff] %v6754
        %7587 = vst [vmem:[%s762 + $0x38] sm:$0xff] %v6756
        %7588 = vst [vmem:[%s762 + $0x40] sm:$0xff] %v6795
        %7589 = vst [vmem:[%s762 + $0x48] sm:$0xff] %v6797
        %7590 = vst [vmem:[%s762 + $0x50] sm:$0xff] %v6836
        %7591 = vst [vmem:[%s762 + $0x58] sm:$0xff] %v6838
        %7592 = vst [vmem:[%s762 + $0x60] sm:$0xff] %v6877
        %7593 = vst [vmem:[%s762 + $0x68] sm:$0xff] %v6879
        %7594 = vst [vmem:[%s762 + $0x70] sm:$0xff] %v6918
        %7595 = vst [vmem:[%s762 + $0x78] sm:$0xff] %v6920
        %7596 = vst [vmem:[%s762 + $0x80] sm:$0xff] %v6959
        %7597 = vst [vmem:[%s762 + $0x88] sm:$0xff] %v6961
        %7598 = vst [vmem:[%s762 + $0x90] sm:$0xff] %v7000
        %7599 = vst [vmem:[%s762 + $0x98] sm:$0xff] %v7002
        %7600 = vst [vmem:[%s762 + $0xa0] sm:$0xff] %v7041
        %7601 = vst [vmem:[%s762 + $0xa8] sm:$0xff] %v7043
        %7602 = vst [vmem:[%s762 + $0xb0] sm:$0xff] %v7082
        %7603 = vst [vmem:[%s762 + $0xb8] sm:$0xff] %v7084
        %7604 = vst [vmem:[%s762 + $0xc0] sm:$0xff] %v7123
        %7605 = vst [vmem:[%s762 + $0xc8] sm:$0xff] %v7125
        %7606 = vst [vmem:[%s762 + $0xd0] sm:$0xff] %v7164
        %7607 = vst [vmem:[%s762 + $0xd8] sm:$0xff] %v7166
        %7608 = vst [vmem:[%s762 + $0xe0] sm:$0xff] %v7205
        %7609 = vst [vmem:[%s762 + $0xe8] sm:$0xff] %v7207
        %7610 = vst [vmem:[%s762 + $0xf0] sm:$0xff] %v7246
        %7611 = vst [vmem:[%s762 + $0xf8] sm:$0xff] %v7248
        %7612 = vst [vmem:[%s762 + $0x100] sm:$0xff] %v7287
        %7613 = vst [vmem:[%s762 + $0x108] sm:$0xff] %v7289
        %7614 = vst [vmem:[%s762 + $0x110] sm:$0xff] %v7328
        %7615 = vst [vmem:[%s762 + $0x118] sm:$0xff] %v7330
        %7616 = vst [vmem:[%s762 + $0x120] sm:$0xff] %v7369
        %7617 = vst [vmem:[%s762 + $0x128] sm:$0xff] %v7371
        %7618 = vst [vmem:[%s762 + $0x130] sm:$0xff] %v7410
        %7619 = vst [vmem:[%s762 + $0x138] sm:$0xff] %v7412
        %7620 = vst [vmem:[%s762 + $0x140] sm:$0xff] %v7451
        %7621 = vst [vmem:[%s762 + $0x148] sm:$0xff] %v7453
        %7622 = vst [vmem:[%s762 + $0x150] sm:$0xff] %v7492
        %7623 = vst [vmem:[%s762 + $0x158] sm:$0xff] %v7494
        %7624 = vst [vmem:[%s762 + $0x160] sm:$0xff] %v7533
        %7625 = vst [vmem:[%s762 + $0x168] sm:$0xff] %v7535
        %7626 = vst [vmem:[%s762 + $0x170] sm:$0xff] %v7574
        %7627 = vst [vmem:[%s762 + $0x178] sm:$0xff] %v7576
        %s7628 = sand.u32 %s454, 1
        %s7629 = scalar_lea.sflag [#allocation4], %s7628
        %s7630 = sand.u32 %s454, 1
        %s7631 = smul.addr %s7630, 384
        %s7632 = scalar_lea.vmem [#allocation22], %s7631
        // Predicated region
        $region145: #{tpu_custom_call.1} parent=95 // pred_check
          %p7633 = pneg %p464
        $region146: #{tpu_custom_call.1} parent=95 // pred_check_branch
          %7635 = sbr.rel (%p7633) target = $region148
        $region147: #{tpu_custom_call.1} parent=95 // pred_region
          %s7637 = ssub.s32 6144, 6144
          %7638 = vsyncadd %s7629, %s7637
          %s7639 = smul.addr %s42, 48
          %s7640 = smul.addr %s7639, 128
          %s7641 = scalar_lea.hbm %s19, %s7640
          %s7643 = sshll.u32 %s7632, 4
          %s7644 = int_to_ptr.vmem [resolvable:$true] %s7643
          %7646 = dma.vmem_to_hbm [thread:$0]  %s7644, 6144, %s7641, %s7629
        $region148: #{tpu_custom_call.1} parent=95 // pred_fallthru
          _
      $region96: #{tpu_custom_call.1} parent=5 // pred_fallthru
        _
      %p7647 = scmp.le.s32.totalorder 2, %s37
      // Predicated region
      $region149: #{tpu_custom_call.1} parent=5 // pred_check
        %p7648 = pneg %p7647
      $region150: #{tpu_custom_call.1} parent=5 // pred_check_branch
        %7650 = sbr.rel (%p7648) target = $region152
      $region151: #{tpu_custom_call.1} parent=5 // pred_region
        %s7651 = ssub.s32 %s37, 2
        // Predicated region
        $region153: #{tpu_custom_call.1} parent=151 // pred_check
          %p7652 = pneg %p470
        $region154: #{tpu_custom_call.1} parent=151 // pred_check_branch
          %7654 = sbr.rel (%p7652) target = $region156
        $region155: #{tpu_custom_call.1} parent=151 // pred_region
          %s7655 = sand.u32 %s455, 1
          %s7656 = scalar_lea.sflag [#allocation4], %s7655
          %s7657 = sand.u32 %s455, 1
          %s7658 = smul.addr %s7657, 384
          %s7659 = scalar_lea.vmem [#allocation22], %s7658
          %7660 = dma.done %s7656, 6144
        $region156: #{tpu_custom_call.1} parent=151 // pred_fallthru
          _
      $region152: #{tpu_custom_call.1} parent=5 // pred_fallthru
        _
    $region6: #{tpu_custom_call.1} parent=1 // loop_footer
      %s41 = sadd.s32 1, %s37
    $region7: #{tpu_custom_call.1} parent=1 // loop_footer_branch
      %36 = sbr.rel target = $region3
    $region8: #{tpu_custom_call.1} parent=1 // loop_exit
      _
    %7661 = vsyncpa [#allocation3], 1
    %s7662 = scalar_lea.sflag [#allocation3], 1
    %7663 = vsyncpa %s7662, 1
    %7664 = vsyncpa [#allocation6], 1
    %7665 = vsyncpa [#allocation9], 1
    %7666 = vsyncpa [#allocation12], 1
    %7667 = vsyncpa [#allocation15], 1
    %7668 = vsyncpa [#allocation18], 1
    %7669 = vsyncpa [#allocation21], 1
    %7670 = vsyncpa [#allocation4], 1
    %s7671 = scalar_lea.sflag [#allocation4], 1
    %7672 = vsyncpa %s7671, 1

</llo_original>
